<compile_context>
chip_gen: v7x
topology: tpu7x:2x2x1
jax: 0.10.0
libtpu: 0.0.40
codegen_flags: <defaults>
</compile_context>

<pallas_src>
import functools

import jax
import jax.numpy as jnp
from jax import lax
from jax.experimental import pallas as pl
from jax.experimental.pallas import tpu as pltpu

EPS = 1e-5


# ----------------------------------------------------------------------------
# Bilinear interpolation matrices (align_corners=True), with F.pad folded in.
# ----------------------------------------------------------------------------
def _bilinear_matrix(n_in: int, n_out: int) -> jnp.ndarray:
    if n_out == 1:
        src = jnp.zeros((1,), jnp.float32)
    else:
        src = jnp.arange(n_out, dtype=jnp.float32) * (n_in - 1) / (n_out - 1)
    i0 = jnp.clip(jnp.floor(src).astype(jnp.int32), 0, n_in - 1)
    i1 = jnp.clip(i0 + 1, 0, n_in - 1)
    w1 = src - i0.astype(jnp.float32)
    w0 = 1.0 - w1
    rows = jnp.arange(n_out)
    m = jnp.zeros((n_out, n_in), jnp.float32)
    m = m.at[rows, i0].add(w0)
    m = m.at[rows, i1].add(w1)
    return m


def _padded_bilinear_matrix(n_in: int, n_out: int, n_pad: int) -> jnp.ndarray:
    """(n_pad, n_in): bilinear upsample to n_out rows, embedded at row offset
    (n_pad - n_out)//2 with zero rows elsewhere (folds F.pad into the interp)."""
    m = _bilinear_matrix(n_in, n_out)
    d = n_pad - n_out
    assert d >= 0, "skip smaller than upsampled input is not supported"
    lo = d // 2
    out = jnp.zeros((n_pad, n_in), jnp.float32)
    return out.at[lo:lo + n_out, :].set(m)


# ----------------------------------------------------------------------------
# Kernel 1: separable bilinear x2 (+ folded pad) as two 2D MXU dots, lane-flat.
#   x1_flat = A_pad @ x_flat @ kron(B_pad^T, I_Cx)
# ----------------------------------------------------------------------------
def _upsample_kernel(x_ref, a_ref, kw_ref, o_ref):
    # x_ref: (1, H, W*Cx) f32   a_ref: (Hs, H) f32   kw_ref: (W*Cx, Ws*Cx) f32
    # o_ref: (1, Hs, Ws*Cx) in the conv compute dtype (single rounding).
    xh = jnp.dot(a_ref[...], x_ref[0], preferred_element_type=jnp.float32)
    x1 = jnp.dot(xh, kw_ref[...], preferred_element_type=jnp.float32)
    o_ref[0] = x1.astype(o_ref.dtype)


def _upsample(x2d, a_pad, kw, out_dtype):
    N, H, WC = x2d.shape
    Hs = a_pad.shape[0]
    WsC = kw.shape[1]
    return pl.pallas_call(
        _upsample_kernel,
        out_shape=jax.ShapeDtypeStruct((N, Hs, WsC), out_dtype),
        grid_spec=pltpu.PrefetchScalarGridSpec(
            num_scalar_prefetch=0,
            grid=(N,),
            in_specs=[
                pl.BlockSpec((1, H, WC), lambda n: (n, 0, 0)),
                pl.BlockSpec((Hs, H), lambda n: (0, 0)),
                pl.BlockSpec((WC, WsC), lambda n: (0, 0)),
            ],
            out_specs=pl.BlockSpec((1, Hs, WsC), lambda n: (n, 0, 0)),
        ),
        compiler_params=pltpu.CompilerParams(dimension_semantics=("parallel",)),
    )(x2d, a_pad, kw)


# ----------------------------------------------------------------------------
# Kernel 2: concat + (conv3x3 + BN + ReLU) x 2 with register-accumulated taps.
# ----------------------------------------------------------------------------
def _decoder_conv_kernel(ws, pad, skip_ref, x1_ref, valid_ref,
                         w1_ref, s1_ref, b1_ref, w2_ref, s2_ref, b2_ref,
                         o_ref, buf_ref):
    _, m, cs = skip_ref.shape
    cin = w1_ref.shape[1]
    mid = w1_ref.shape[2]
    cdt = w1_ref.dtype

    # Stage the channel-concat [skip || x1] once into a zero-halo buffer.
    # (Casts happen exactly once per MXU operand: skip here, h below; x1 is
    #  already in the compute dtype from kernel 1.)
    zeros_halo = jnp.zeros((pad, cin), cdt)
    buf_ref[pl.ds(0, pad), :] = zeros_halo
    buf_ref[pl.ds(pad + m, pad), :] = zeros_halo
    buf_ref[pl.ds(pad, m), 0:cs] = skip_ref[0].astype(cdt)
    buf_ref[pl.ds(pad, m), cs:cin] = x1_ref[0]

    def conv3x3(ncols, w_ref):
        # 3x3 SAME conv over the flattened (Hs*Ws) spatial axis: each tap is a
        # full-size (M, ncols) operand = shifted static slice of the padded
        # buffer * 0/1 boundary mask, accumulated in an f32 register value
        # (no zero-init, no VMEM RMW, no per-tap reshapes).
        acc = None
        for dy in range(3):
            for dx in range(3):
                t = dy * 3 + dx
                d = (dy - 1) * ws + (dx - 1)
                op = buf_ref[pl.ds(pad + d, m), :ncols]
                if d != 0:
                    op = op * valid_ref[t]
                c = jnp.dot(op, w_ref[t], preferred_element_type=jnp.float32)
                acc = c if acc is None else acc + c
        return acc

    # conv1 + folded BatchNorm(eval) + bias + ReLU
    a1 = conv3x3(cin, w1_ref)
    h = jnp.maximum(a1 * s1_ref[...] + b1_ref[...], 0.0).astype(cdt)

    # conv2 reuses the same staging buffer (halo rows are already zero).
    buf_ref[pl.ds(pad, m), 0:mid] = h
    a2 = conv3x3(mid, w2_ref)
    o_ref[0] = jnp.maximum(a2 * s2_ref[...] + b2_ref[...], 0.0).astype(o_ref.dtype)


def _decoder_conv(skipf, x1f, valid, wp, ws, pad):
    N, M, Cs = skipf.shape
    Cx = x1f.shape[-1]
    w1, w2 = wp["w1"], wp["w2"]
    Cin, mid = w1.shape[1], w1.shape[2]
    Cout = w2.shape[2]
    cdt = w1.dtype
    kernel = functools.partial(_decoder_conv_kernel, ws, pad)
    return pl.pallas_call(
        kernel,
        out_shape=jax.ShapeDtypeStruct((N, M, Cout), jnp.float32),
        grid_spec=pltpu.PrefetchScalarGridSpec(
            num_scalar_prefetch=0,
            grid=(N,),
            in_specs=[
                pl.BlockSpec((1, M, Cs), lambda n: (n, 0, 0)),
                pl.BlockSpec((1, M, Cx), lambda n: (n, 0, 0)),
                pl.BlockSpec((9, M, 1), lambda n: (0, 0, 0)),
                pl.BlockSpec((9, Cin, mid), lambda n: (0, 0, 0)),
                pl.BlockSpec((1, mid), lambda n: (0, 0)),
                pl.BlockSpec((1, mid), lambda n: (0, 0)),
                pl.BlockSpec((9, mid, Cout), lambda n: (0, 0, 0)),
                pl.BlockSpec((1, Cout), lambda n: (0, 0)),
                pl.BlockSpec((1, Cout), lambda n: (0, 0)),
            ],
            out_specs=pl.BlockSpec((1, M, Cout), lambda n: (n, 0, 0)),
            scratch_shapes=[pltpu.VMEM((M + 2 * pad, Cin), cdt)],
        ),
        compiler_params=pltpu.CompilerParams(dimension_semantics=("parallel",)),
    )(skipf, x1f, valid, w1, wp["s1"], wp["b1"], w2, wp["s2"], wp["b2"])


# ----------------------------------------------------------------------------
# Parameters: raw init, one-time preparation (fold/cast), forward.
# ----------------------------------------------------------------------------
def init_decoder_params(key, input_dim, output_dim):
    mid = input_dim // 2
    ks = jax.random.split(key, 6)

    def bn(k, c):
        k1, k2, k3, k4 = jax.random.split(k, 4)
        return dict(
            gamma=1.0 + 0.1 * jax.random.normal(k1, (c,), jnp.float32),
            beta=0.1 * jax.random.normal(k2, (c,), jnp.float32),
            mean=0.05 * jax.random.normal(k3, (c,), jnp.float32),
            var=1.0 + 0.1 * jnp.abs(jax.random.normal(k4, (c,), jnp.float32)),
        )

    return dict(
        w1=0.1 * jax.random.normal(ks[0], (3, 3, input_dim, mid), jnp.float32),
        b1=0.1 * jax.random.normal(ks[1], (mid,), jnp.float32),
        bn1=bn(ks[2], mid),
        w2=0.1 * jax.random.normal(ks[3], (3, 3, mid, output_dim), jnp.float32),
        b2=0.1 * jax.random.normal(ks[4], (output_dim,), jnp.float32),
        bn2=bn(ks[5], output_dim),
    )


def prepare_decoder_params(params, compute_dtype=jnp.bfloat16):
    """One-time constant prep: fold conv bias + BatchNorm(eval) into a per-channel
    f32 scale/bias, flatten 3x3 weights to (9, Cin, Cout) tap matrices (concat
    channel order [skip, x1] preserved) and cast MXU operands to compute_dtype."""
    w1 = params["w1"]                 # (3, 3, Cs + Cx, mid), HWIO
    _, _, cin, mid = w1.shape
    w2 = params["w2"]
    cout = w2.shape[-1]

    def fold(conv_b, bn):
        scale = bn["gamma"] / jnp.sqrt(bn["var"] + EPS)
        bias = bn["beta"] + (conv_b - bn["mean"]) * scale
        return scale, bias

    s1, b1 = fold(params["b1"], params["bn1"])
    s2, b2 = fold(params["b2"], params["bn2"])
    return dict(
        w1=w1.reshape(9, cin, mid).astype(compute_dtype),
        w2=w2.reshape(9, mid, cout).astype(compute_dtype),
        s1=s1.reshape(1, mid).astype(jnp.float32),
        b1=b1.reshape(1, mid).astype(jnp.float32),
        s2=s2.reshape(1, cout).astype(jnp.float32),
        b2=b2.reshape(1, cout).astype(jnp.float32),
    )


def decoder_block_forward(prepared, x_nchw, skip_nchw):
    N, Cx, H, W = x_nchw.shape
    _, Cs, Hs, Ws = skip_nchw.shape
    cdt = prepared["w1"].dtype
    Cout = prepared["w2"].shape[-1]

    # Separable bilinear x2 (align_corners=True) with F.pad folded in as zero rows.
    a_pad = _padded_bilinear_matrix(H, 2 * H, Hs)                     # (Hs, H)
    b_pad = _padded_bilinear_matrix(W, 2 * W, Ws)                     # (Ws, W)
    kw = jnp.kron(b_pad.T, jnp.eye(Cx, dtype=jnp.float32))           # (W*Cx, Ws*Cx)

    # Kernel 1: both interpolation axes as two 2D MXU dots; lane-dense flat output.
    x2d = jnp.transpose(x_nchw, (0, 2, 3, 1)).reshape(N, H, W * Cx)
    x1flat = _upsample(x2d, a_pad, kw, cdt)                           # (N, Hs, Ws*Cx)
    x1 = x1flat.reshape(N, Hs * Ws, Cx)                               # free reshape

    skipf = jnp.transpose(skip_nchw, (0, 2, 3, 1)).reshape(N, Hs * Ws, Cs)

    # 0/1 validity of each of the 9 conv taps per flattened output position
    # (constant, VMEM-resident; shared by both convs).
    pp = jnp.arange(Hs)[:, None]
    qq = jnp.arange(Ws)[None, :]
    masks = []
    for dy in range(3):
        for dx in range(3):
            ok = ((pp + dy - 1 >= 0) & (pp + dy - 1 < Hs) &
                  (qq + dx - 1 >= 0) & (qq + dx - 1 < Ws))
            masks.append(ok.reshape(Hs * Ws, 1))
    valid = jnp.stack(masks).astype(cdt)                              # (9, Hs*Ws, 1)

    pad = (Ws + 1 + 7) // 8 * 8                                       # aligned halo
    out = _decoder_conv(skipf, x1, valid, prepared, Ws, pad)          # (N, Hs*Ws, Cout)
    return jnp.transpose(out.reshape(N, Hs, Ws, Cout), (0, 3, 1, 2))  # back to NCHW


# ----------------------------------------------------------------------------
# Pure-JAX reference for correctness checking
# ----------------------------------------------------------------------------
def _ref_forward(params, x_nchw, skip_nchw):
    x = jnp.transpose(x_nchw, (0, 2, 3, 1))
    skip = jnp.transpose(skip_nchw, (0, 2, 3, 1))
    N, H, W, C = x.shape
    A = _bilinear_matrix(H, 2 * H)
    B = _bilinear_matrix(W, 2 * W)
    x1 = jnp.einsum("ph,qw,nhwc->npqc", A, B, x)
    dy = skip.shape[1] - x1.shape[1]
    dx = skip.shape[2] - x1.shape[2]
    if dy != 0 or dx != 0:
        x1 = jnp.pad(x1, ((0, 0), (dy // 2, dy - dy // 2),
                          (dx // 2, dx - dx // 2), (0, 0)))
    xc = jnp.concatenate([skip, x1], axis=-1)

    def cbr(t, w, b, bn):
        y = lax.conv_general_dilated(
            t, w, (1, 1), "SAME",
            dimension_numbers=("NHWC", "HWIO", "NHWC")) + b
        s = bn["gamma"] / jnp.sqrt(bn["var"] + EPS)
        y = (y - bn["mean"]) * s + bn["beta"]
        return jnp.maximum(y, 0.0)

    h = cbr(xc, params["w1"], params["b1"], params["bn1"])
    o = cbr(h, params["w2"], params["b2"], params["bn2"])
    return jnp.transpose(o, (0, 3, 1, 2))


if __name__ == "__main__":
    key = jax.random.PRNGKey(0)
    k_x, k_s, k_p = jax.random.split(key, 3)

    input_dim, output_dim = 8, 8
    N, H, W = 2, 8, 8
    c_in = input_dim // 2            # channels of `input` (bilinear path keeps them)
    c_skip = input_dim - c_in        # skip channels so the concat has input_dim

    x = jax.random.normal(k_x, (N, c_in, H, W), jnp.float32)          # NCHW
    skip = jax.random.normal(k_s, (N, c_skip, 2 * H, 2 * W), jnp.float32)
    params = init_decoder_params(k_p, input_dim, output_dim)
    ref = jax.block_until_ready(_ref_forward(params, x, skip))

    fwd = jax.jit(decoder_block_forward)

    # f32 compute path: tight check against the pure-JAX reference.
    prep32 = prepare_decoder_params(params, jnp.float32)
    out32 = jax.block_until_ready(fwd(prep32, x, skip))
    assert out32.shape == (N, output_dim, 2 * H, 2 * W), out32.shape
    assert jnp.allclose(out32, ref, atol=1e-3, rtol=1e-3), float(
        jnp.max(jnp.abs(out32 - ref)))

    # bf16 MXU path (default perf config): tolerance sized for bf16 operands.
    prep16 = prepare_decoder_params(params, jnp.bfloat16)
    out16 = jax.block_until_ready(fwd(prep16, x, skip))
    assert jnp.allclose(out16, ref, atol=5e-2, rtol=5e-2), float(
        jnp.max(jnp.abs(out16 - ref)))

    # Skip larger than the upsampled input (exercises the folded F.pad path).
    skip_b = jax.random.normal(k_s, (N, c_skip, 2 * H + 2, 2 * W + 2), jnp.float32)
    ref_b = jax.block_until_ready(_ref_forward(params, x, skip_b))
    out_b = jax.block_until_ready(fwd(prep32, x, skip_b))
    assert jnp.allclose(out_b, ref_b, atol=1e-3, rtol=1e-3), float(
        jnp.max(jnp.abs(out_b - ref_b)))

    print("KERNEL_OK")
</pallas_src>

<mosaic_0001>
module attributes {stable_mosaic.version = 11 : i64} {
  func.func private @main(%arg0: i32) attributes {dimension_semantics = [#tpu.dimension_semantics<core_parallel>], iteration_bounds = array<i64: 2>, tpu.core_type = #tpu.core_type<sc_scalar_subcore>, window_params = []} {
    return
  }
}

module attributes {stable_mosaic.version = 11 : i64} {
  func.func private @main(%arg0: i32) attributes {dimension_semantics = [#tpu.dimension_semantics<core_parallel>], iteration_bounds = array<i64: 2>, tpu.core_type = #tpu.core_type<sc_scalar_subcore>, window_params = []} {
    return
  }
}

module attributes {stable_mosaic.version = 11 : i64} {
  func.func @_decoder_conv_kernel(%arg0: i32, %arg1: memref<1x256x4xf32, #tpu.memory_space<vmem>>, %arg2: memref<1x256x4xf32, #tpu.memory_space<vmem>>, %arg3: memref<9x256x1xf32, #tpu.memory_space<vmem>>, %arg4: memref<9x8x4xf32, #tpu.memory_space<vmem>>, %arg5: memref<1x4xf32, #tpu.memory_space<vmem>>, %arg6: memref<1x4xf32, #tpu.memory_space<vmem>>, %arg7: memref<9x4x8xf32, #tpu.memory_space<vmem>>, %arg8: memref<1x8xf32, #tpu.memory_space<vmem>>, %arg9: memref<1x8xf32, #tpu.memory_space<vmem>>, %arg10: memref<1x256x8xf32, #tpu.memory_space<vmem>>, %arg11: memref<304x8xf32, #tpu.memory_space<vmem>>) attributes {dimension_semantics = [#tpu.dimension_semantics<parallel>], iteration_bounds = array<i64: 2>, scalar_prefetch = 0 : i64, scratch_operands = 1 : i64, tpu.core_type = #tpu.core_type<tc>, window_params = [{transform_indices = @transform_0, window_bounds = array<i64: 1, 256, 4>}, {transform_indices = @transform_1, window_bounds = array<i64: 1, 256, 4>}, {pipeline_mode = #tpu.pipeline_mode<synchronous>, transform_indices = @transform_2, window_bounds = array<i64: 9, 256, 1>}, {pipeline_mode = #tpu.pipeline_mode<synchronous>, transform_indices = @transform_3, window_bounds = array<i64: 9, 8, 4>}, {pipeline_mode = #tpu.pipeline_mode<synchronous>, transform_indices = @transform_4, window_bounds = array<i64: 1, 4>}, {pipeline_mode = #tpu.pipeline_mode<synchronous>, transform_indices = @transform_5, window_bounds = array<i64: 1, 4>}, {pipeline_mode = #tpu.pipeline_mode<synchronous>, transform_indices = @transform_6, window_bounds = array<i64: 9, 4, 8>}, {pipeline_mode = #tpu.pipeline_mode<synchronous>, transform_indices = @transform_7, window_bounds = array<i64: 1, 8>}, {pipeline_mode = #tpu.pipeline_mode<synchronous>, transform_indices = @transform_8, window_bounds = array<i64: 1, 8>}, {transform_indices = @transform_9, window_bounds = array<i64: 1, 256, 8>}]} {
    %cst = arith.constant 0.000000e+00 : f32
    %0 = vector.broadcast %cst : f32 to vector<24x8xf32>
    %c0 = arith.constant 0 : index
    %c0_0 = arith.constant 0 : index
    %1 = vector.load %arg11[%c0, %c0_0] : memref<304x8xf32, #tpu.memory_space<vmem>>, vector<24x8xf32>
    tpu.vector_store %arg11[%c0, %c0_0], %0 {strides = array<i32>} : memref<304x8xf32, #tpu.memory_space<vmem>>, vector<24x8xf32>,
    %c280 = arith.constant 280 : index
    %c0_1 = arith.constant 0 : index
    %2 = vector.load %arg11[%c280, %c0_1] : memref<304x8xf32, #tpu.memory_space<vmem>>, vector<24x8xf32>
    tpu.vector_store %arg11[%c280, %c0_1], %0 {strides = array<i32>} : memref<304x8xf32, #tpu.memory_space<vmem>>, vector<24x8xf32>,
    %c0_2 = arith.constant 0 : index
    %c0_3 = arith.constant 0 : index
    %c0_4 = arith.constant 0 : index
    %3 = vector.load %arg1[%c0_2, %c0_3, %c0_4] : memref<1x256x4xf32, #tpu.memory_space<vmem>>, vector<1x256x4xf32>
    %4 = vector.shape_cast %3 : vector<1x256x4xf32> to vector<256x4xf32>
    %c24 = arith.constant 24 : index
    %c0_5 = arith.constant 0 : index
    %5 = vector.load %arg11[%c24, %c0_5] : memref<304x8xf32, #tpu.memory_space<vmem>>, vector<256x4xf32>
    tpu.vector_store %arg11[%c24, %c0_5], %4 {strides = array<i32>} : memref<304x8xf32, #tpu.memory_space<vmem>>, vector<256x4xf32>,
    %c0_6 = arith.constant 0 : index
    %c0_7 = arith.constant 0 : index
    %c0_8 = arith.constant 0 : index
    %6 = vector.load %arg2[%c0_6, %c0_7, %c0_8] : memref<1x256x4xf32, #tpu.memory_space<vmem>>, vector<1x256x4xf32>
    %7 = vector.shape_cast %6 : vector<1x256x4xf32> to vector<256x4xf32>
    %c24_9 = arith.constant 24 : index
    %c4 = arith.constant 4 : index
    %8 = vector.load %arg11[%c24_9, %c4] : memref<304x8xf32, #tpu.memory_space<vmem>>, vector<256x4xf32>
    tpu.vector_store %arg11[%c24_9, %c4], %7 {strides = array<i32>} : memref<304x8xf32, #tpu.memory_space<vmem>>, vector<256x4xf32>,
    %c7 = arith.constant 7 : index
    %c0_10 = arith.constant 0 : index
    %9 = vector.load %arg11[%c7, %c0_10] : memref<304x8xf32, #tpu.memory_space<vmem>>, vector<256x8xf32>
    %c0_11 = arith.constant 0 : index
    %c0_12 = arith.constant 0 : index
    %c0_13 = arith.constant 0 : index
    %10 = vector.load %arg3[%c0_11, %c0_12, %c0_13] : memref<9x256x1xf32, #tpu.memory_space<vmem>>, vector<1x256x1xf32>
    %11 = vector.shape_cast %10 : vector<1x256x1xf32> to vector<256x1xf32>
    %12 = vector.broadcast %11 : vector<256x1xf32> to vector<256x8xf32>
    %13 = arith.mulf %9, %12 : vector<256x8xf32>
    %c0_14 = arith.constant 0 : index
    %c0_15 = arith.constant 0 : index
    %c0_16 = arith.constant 0 : index
    %14 = vector.load %arg4[%c0_14, %c0_15, %c0_16] : memref<9x8x4xf32, #tpu.memory_space<vmem>>, vector<1x8x4xf32>
    %15 = vector.shape_cast %14 : vector<1x8x4xf32> to vector<8x4xf32>
    %cst_17 = arith.constant dense<0.000000e+00> : vector<256x4xf32>
    %16 = tpu.matmul %13, %15, %cst_17 {dimension_numbers = #tpu.dot_dimension_numbers<[1], [0], [0], [1], [0, 0, 1, 1], [], []>} : vector<256x8xf32>, vector<8x4xf32>, vector<256x4xf32> -> vector<256x4xf32>
    %c8 = arith.constant 8 : index
    %c0_18 = arith.constant 0 : index
    %17 = vector.load %arg11[%c8, %c0_18] : memref<304x8xf32, #tpu.memory_space<vmem>>, vector<256x8xf32>
    %c1 = arith.constant 1 : index
    %c0_19 = arith.constant 0 : index
    %c0_20 = arith.constant 0 : index
    %18 = vector.load %arg3[%c1, %c0_19, %c0_20] : memref<9x256x1xf32, #tpu.memory_space<vmem>>, vector<1x256x1xf32>
    %19 = vector.shape_cast %18 : vector<1x256x1xf32> to vector<256x1xf32>
    %20 = vector.broadcast %19 : vector<256x1xf32> to vector<256x8xf32>
    %21 = arith.mulf %17, %20 : vector<256x8xf32>
    %c1_21 = arith.constant 1 : index
    %c0_22 = arith.constant 0 : index
    %c0_23 = arith.constant 0 : index
    %22 = vector.load %arg4[%c1_21, %c0_22, %c0_23] : memref<9x8x4xf32, #tpu.memory_space<vmem>>, vector<1x8x4xf32>
    %23 = vector.shape_cast %22 : vector<1x8x4xf32> to vector<8x4xf32>
    %cst_24 = arith.constant dense<0.000000e+00> : vector<256x4xf32>
    %24 = tpu.matmul %21, %23, %cst_24 {dimension_numbers = #tpu.dot_dimension_numbers<[1], [0], [0], [1], [0, 0, 1, 1], [], []>} : vector<256x8xf32>, vector<8x4xf32>, vector<256x4xf32> -> vector<256x4xf32>
    %25 = arith.addf %16, %24 : vector<256x4xf32>
    %c9 = arith.constant 9 : index
    %c0_25 = arith.constant 0 : index
    %26 = vector.load %arg11[%c9, %c0_25] : memref<304x8xf32, #tpu.memory_space<vmem>>, vector<256x8xf32>
    %c2 = arith.constant 2 : index
    %c0_26 = arith.constant 0 : index
    %c0_27 = arith.constant 0 : index
    %27 = vector.load %arg3[%c2, %c0_26, %c0_27] : memref<9x256x1xf32, #tpu.memory_space<vmem>>, vector<1x256x1xf32>
    %28 = vector.shape_cast %27 : vector<1x256x1xf32> to vector<256x1xf32>
    %29 = vector.broadcast %28 : vector<256x1xf32> to vector<256x8xf32>
    %30 = arith.mulf %26, %29 : vector<256x8xf32>
    %c2_28 = arith.constant 2 : index
    %c0_29 = arith.constant 0 : index
    %c0_30 = arith.constant 0 : index
    %31 = vector.load %arg4[%c2_28, %c0_29, %c0_30] : memref<9x8x4xf32, #tpu.memory_space<vmem>>, vector<1x8x4xf32>
    %32 = vector.shape_cast %31 : vector<1x8x4xf32> to vector<8x4xf32>
    %cst_31 = arith.constant dense<0.000000e+00> : vector<256x4xf32>
    %33 = tpu.matmul %30, %32, %cst_31 {dimension_numbers = #tpu.dot_dimension_numbers<[1], [0], [0], [1], [0, 0, 1, 1], [], []>} : vector<256x8xf32>, vector<8x4xf32>, vector<256x4xf32> -> vector<256x4xf32>
    %34 = arith.addf %25, %33 : vector<256x4xf32>
    %c23 = arith.constant 23 : index
    %c0_32 = arith.constant 0 : index
    %35 = vector.load %arg11[%c23, %c0_32] : memref<304x8xf32, #tpu.memory_space<vmem>>, vector<256x8xf32>
    %c3 = arith.constant 3 : index
    %c0_33 = arith.constant 0 : index
    %c0_34 = arith.constant 0 : index
    %36 = vector.load %arg3[%c3, %c0_33, %c0_34] : memref<9x256x1xf32, #tpu.memory_space<vmem>>, vector<1x256x1xf32>
    %37 = vector.shape_cast %36 : vector<1x256x1xf32> to vector<256x1xf32>
    %38 = vector.broadcast %37 : vector<256x1xf32> to vector<256x8xf32>
    %39 = arith.mulf %35, %38 : vector<256x8xf32>
    %c3_35 = arith.constant 3 : index
    %c0_36 = arith.constant 0 : index
    %c0_37 = arith.constant 0 : index
    %40 = vector.load %arg4[%c3_35, %c0_36, %c0_37] : memref<9x8x4xf32, #tpu.memory_space<vmem>>, vector<1x8x4xf32>
    %41 = vector.shape_cast %40 : vector<1x8x4xf32> to vector<8x4xf32>
    %cst_38 = arith.constant dense<0.000000e+00> : vector<256x4xf32>
    %42 = tpu.matmul %39, %41, %cst_38 {dimension_numbers = #tpu.dot_dimension_numbers<[1], [0], [0], [1], [0, 0, 1, 1], [], []>} : vector<256x8xf32>, vector<8x4xf32>, vector<256x4xf32> -> vector<256x4xf32>
    %43 = arith.addf %34, %42 : vector<256x4xf32>
    %c24_39 = arith.constant 24 : index
    %c0_40 = arith.constant 0 : index
    %44 = vector.load %arg11[%c24_39, %c0_40] : memref<304x8xf32, #tpu.memory_space<vmem>>, vector<256x8xf32>
    %c4_41 = arith.constant 4 : index
    %c0_42 = arith.constant 0 : index
    %c0_43 = arith.constant 0 : index
    %45 = vector.load %arg4[%c4_41, %c0_42, %c0_43] : memref<9x8x4xf32, #tpu.memory_space<vmem>>, vector<1x8x4xf32>
    %46 = vector.shape_cast %45 : vector<1x8x4xf32> to vector<8x4xf32>
    %cst_44 = arith.constant dense<0.000000e+00> : vector<256x4xf32>
    %47 = tpu.matmul %44, %46, %cst_44 {dimension_numbers = #tpu.dot_dimension_numbers<[1], [0], [0], [1], [0, 0, 1, 1], [], []>} : vector<256x8xf32>, vector<8x4xf32>, vector<256x4xf32> -> vector<256x4xf32>
    %48 = arith.addf %43, %47 : vector<256x4xf32>
    %c25 = arith.constant 25 : index
    %c0_45 = arith.constant 0 : index
    %49 = vector.load %arg11[%c25, %c0_45] : memref<304x8xf32, #tpu.memory_space<vmem>>, vector<256x8xf32>
    %c5 = arith.constant 5 : index
    %c0_46 = arith.constant 0 : index
    %c0_47 = arith.constant 0 : index
    %50 = vector.load %arg3[%c5, %c0_46, %c0_47] : memref<9x256x1xf32, #tpu.memory_space<vmem>>, vector<1x256x1xf32>
    %51 = vector.shape_cast %50 : vector<1x256x1xf32> to vector<256x1xf32>
    %52 = vector.broadcast %51 : vector<256x1xf32> to vector<256x8xf32>
    %53 = arith.mulf %49, %52 : vector<256x8xf32>
    %c5_48 = arith.constant 5 : index
    %c0_49 = arith.constant 0 : index
    %c0_50 = arith.constant 0 : index
    %54 = vector.load %arg4[%c5_48, %c0_49, %c0_50] : memref<9x8x4xf32, #tpu.memory_space<vmem>>, vector<1x8x4xf32>
    %55 = vector.shape_cast %54 : vector<1x8x4xf32> to vector<8x4xf32>
    %cst_51 = arith.constant dense<0.000000e+00> : vector<256x4xf32>
    %56 = tpu.matmul %53, %55, %cst_51 {dimension_numbers = #tpu.dot_dimension_numbers<[1], [0], [0], [1], [0, 0, 1, 1], [], []>} : vector<256x8xf32>, vector<8x4xf32>, vector<256x4xf32> -> vector<256x4xf32>
    %57 = arith.addf %48, %56 : vector<256x4xf32>
    %c39 = arith.constant 39 : index
    %c0_52 = arith.constant 0 : index
    %58 = vector.load %arg11[%c39, %c0_52] : memref<304x8xf32, #tpu.memory_space<vmem>>, vector<256x8xf32>
    %c6 = arith.constant 6 : index
    %c0_53 = arith.constant 0 : index
    %c0_54 = arith.constant 0 : index
    %59 = vector.load %arg3[%c6, %c0_53, %c0_54] : memref<9x256x1xf32, #tpu.memory_space<vmem>>, vector<1x256x1xf32>
    %60 = vector.shape_cast %59 : vector<1x256x1xf32> to vector<256x1xf32>
    %61 = vector.broadcast %60 : vector<256x1xf32> to vector<256x8xf32>
    %62 = arith.mulf %58, %61 : vector<256x8xf32>
    %c6_55 = arith.constant 6 : index
    %c0_56 = arith.constant 0 : index
    %c0_57 = arith.constant 0 : index
    %63 = vector.load %arg4[%c6_55, %c0_56, %c0_57] : memref<9x8x4xf32, #tpu.memory_space<vmem>>, vector<1x8x4xf32>
    %64 = vector.shape_cast %63 : vector<1x8x4xf32> to vector<8x4xf32>
    %cst_58 = arith.constant dense<0.000000e+00> : vector<256x4xf32>
    %65 = tpu.matmul %62, %64, %cst_58 {dimension_numbers = #tpu.dot_dimension_numbers<[1], [0], [0], [1], [0, 0, 1, 1], [], []>} : vector<256x8xf32>, vector<8x4xf32>, vector<256x4xf32> -> vector<256x4xf32>
    %66 = arith.addf %57, %65 : vector<256x4xf32>
    %c40 = arith.constant 40 : index
    %c0_59 = arith.constant 0 : index
    %67 = vector.load %arg11[%c40, %c0_59] : memref<304x8xf32, #tpu.memory_space<vmem>>, vector<256x8xf32>
    %c7_60 = arith.constant 7 : index
    %c0_61 = arith.constant 0 : index
    %c0_62 = arith.constant 0 : index
    %68 = vector.load %arg3[%c7_60, %c0_61, %c0_62] : memref<9x256x1xf32, #tpu.memory_space<vmem>>, vector<1x256x1xf32>
    %69 = vector.shape_cast %68 : vector<1x256x1xf32> to vector<256x1xf32>
    %70 = vector.broadcast %69 : vector<256x1xf32> to vector<256x8xf32>
    %71 = arith.mulf %67, %70 : vector<256x8xf32>
    %c7_63 = arith.constant 7 : index
    %c0_64 = arith.constant 0 : index
    %c0_65 = arith.constant 0 : index
    %72 = vector.load %arg4[%c7_63, %c0_64, %c0_65] : memref<9x8x4xf32, #tpu.memory_space<vmem>>, vector<1x8x4xf32>
    %73 = vector.shape_cast %72 : vector<1x8x4xf32> to vector<8x4xf32>
    %cst_66 = arith.constant dense<0.000000e+00> : vector<256x4xf32>
    %74 = tpu.matmul %71, %73, %cst_66 {dimension_numbers = #tpu.dot_dimension_numbers<[1], [0], [0], [1], [0, 0, 1, 1], [], []>} : vector<256x8xf32>, vector<8x4xf32>, vector<256x4xf32> -> vector<256x4xf32>
    %75 = arith.addf %66, %74 : vector<256x4xf32>
    %c41 = arith.constant 41 : index
    %c0_67 = arith.constant 0 : index
    %76 = vector.load %arg11[%c41, %c0_67] : memref<304x8xf32, #tpu.memory_space<vmem>>, vector<256x8xf32>
    %c8_68 = arith.constant 8 : index
    %c0_69 = arith.constant 0 : index
    %c0_70 = arith.constant 0 : index
    %77 = vector.load %arg3[%c8_68, %c0_69, %c0_70] : memref<9x256x1xf32, #tpu.memory_space<vmem>>, vector<1x256x1xf32>
    %78 = vector.shape_cast %77 : vector<1x256x1xf32> to vector<256x1xf32>
    %79 = vector.broadcast %78 : vector<256x1xf32> to vector<256x8xf32>
    %80 = arith.mulf %76, %79 : vector<256x8xf32>
    %c8_71 = arith.constant 8 : index
    %c0_72 = arith.constant 0 : index
    %c0_73 = arith.constant 0 : index
    %81 = vector.load %arg4[%c8_71, %c0_72, %c0_73] : memref<9x8x4xf32, #tpu.memory_space<vmem>>, vector<1x8x4xf32>
    %82 = vector.shape_cast %81 : vector<1x8x4xf32> to vector<8x4xf32>
    %cst_74 = arith.constant dense<0.000000e+00> : vector<256x4xf32>
    %83 = tpu.matmul %80, %82, %cst_74 {dimension_numbers = #tpu.dot_dimension_numbers<[1], [0], [0], [1], [0, 0, 1, 1], [], []>} : vector<256x8xf32>, vector<8x4xf32>, vector<256x4xf32> -> vector<256x4xf32>
    %84 = arith.addf %75, %83 : vector<256x4xf32>
    %c0_75 = arith.constant 0 : index
    %c0_76 = arith.constant 0 : index
    %85 = vector.load %arg5[%c0_75, %c0_76] : memref<1x4xf32, #tpu.memory_space<vmem>>, vector<1x4xf32>
    %86 = vector.broadcast %85 : vector<1x4xf32> to vector<256x4xf32>
    %87 = arith.mulf %84, %86 : vector<256x4xf32>
    %c0_77 = arith.constant 0 : index
    %c0_78 = arith.constant 0 : index
    %88 = vector.load %arg6[%c0_77, %c0_78] : memref<1x4xf32, #tpu.memory_space<vmem>>, vector<1x4xf32>
    %89 = vector.broadcast %88 : vector<1x4xf32> to vector<256x4xf32>
    %90 = arith.addf %87, %89 : vector<256x4xf32>
    %cst_79 = arith.constant 0.000000e+00 : f32
    %91 = vector.broadcast %cst_79 : f32 to vector<256x4xf32>
    %92 = arith.maximumf %90, %91 : vector<256x4xf32>
    %c24_80 = arith.constant 24 : index
    %c0_81 = arith.constant 0 : index
    %93 = vector.load %arg11[%c24_80, %c0_81] : memref<304x8xf32, #tpu.memory_space<vmem>>, vector<256x4xf32>
    tpu.vector_store %arg11[%c24_80, %c0_81], %92 {strides = array<i32>} : memref<304x8xf32, #tpu.memory_space<vmem>>, vector<256x4xf32>,
    %c7_82 = arith.constant 7 : index
    %c0_83 = arith.constant 0 : index
    %94 = vector.load %arg11[%c7_82, %c0_83] : memref<304x8xf32, #tpu.memory_space<vmem>>, vector<256x4xf32>
    %c0_84 = arith.constant 0 : index
    %c0_85 = arith.constant 0 : index
    %c0_86 = arith.constant 0 : index
    %95 = vector.load %arg3[%c0_84, %c0_85, %c0_86] : memref<9x256x1xf32, #tpu.memory_space<vmem>>, vector<1x256x1xf32>
    %96 = vector.shape_cast %95 : vector<1x256x1xf32> to vector<256x1xf32>
    %97 = vector.broadcast %96 : vector<256x1xf32> to vector<256x4xf32>
    %98 = arith.mulf %94, %97 : vector<256x4xf32>
    %c0_87 = arith.constant 0 : index
    %c0_88 = arith.constant 0 : index
    %c0_89 = arith.constant 0 : index
    %99 = vector.load %arg7[%c0_87, %c0_88, %c0_89] : memref<9x4x8xf32, #tpu.memory_space<vmem>>, vector<1x4x8xf32>
    %100 = vector.shape_cast %99 : vector<1x4x8xf32> to vector<4x8xf32>
    %cst_90 = arith.constant dense<0.000000e+00> : vector<256x8xf32>
    %101 = tpu.matmul %98, %100, %cst_90 {dimension_numbers = #tpu.dot_dimension_numbers<[1], [0], [0], [1], [0, 0, 1, 1], [], []>} : vector<256x4xf32>, vector<4x8xf32>, vector<256x8xf32> -> vector<256x8xf32>
    %c8_91 = arith.constant 8 : index
    %c0_92 = arith.constant 0 : index
    %102 = vector.load %arg11[%c8_91, %c0_92] : memref<304x8xf32, #tpu.memory_space<vmem>>, vector<256x4xf32>
    %c1_93 = arith.constant 1 : index
    %c0_94 = arith.constant 0 : index
    %c0_95 = arith.constant 0 : index
    %103 = vector.load %arg3[%c1_93, %c0_94, %c0_95] : memref<9x256x1xf32, #tpu.memory_space<vmem>>, vector<1x256x1xf32>
    %104 = vector.shape_cast %103 : vector<1x256x1xf32> to vector<256x1xf32>
    %105 = vector.broadcast %104 : vector<256x1xf32> to vector<256x4xf32>
    %106 = arith.mulf %102, %105 : vector<256x4xf32>
    %c1_96 = arith.constant 1 : index
    %c0_97 = arith.constant 0 : index
    %c0_98 = arith.constant 0 : index
    %107 = vector.load %arg7[%c1_96, %c0_97, %c0_98] : memref<9x4x8xf32, #tpu.memory_space<vmem>>, vector<1x4x8xf32>
    %108 = vector.shape_cast %107 : vector<1x4x8xf32> to vector<4x8xf32>
    %cst_99 = arith.constant dense<0.000000e+00> : vector<256x8xf32>
    %109 = tpu.matmul %106, %108, %cst_99 {dimension_numbers = #tpu.dot_dimension_numbers<[1], [0], [0], [1], [0, 0, 1, 1], [], []>} : vector<256x4xf32>, vector<4x8xf32>, vector<256x8xf32> -> vector<256x8xf32>
    %110 = arith.addf %101, %109 : vector<256x8xf32>
    %c9_100 = arith.constant 9 : index
    %c0_101 = arith.constant 0 : index
    %111 = vector.load %arg11[%c9_100, %c0_101] : memref<304x8xf32, #tpu.memory_space<vmem>>, vector<256x4xf32>
    %c2_102 = arith.constant 2 : index
    %c0_103 = arith.constant 0 : index
    %c0_104 = arith.constant 0 : index
    %112 = vector.load %arg3[%c2_102, %c0_103, %c0_104] : memref<9x256x1xf32, #tpu.memory_space<vmem>>, vector<1x256x1xf32>
    %113 = vector.shape_cast %112 : vector<1x256x1xf32> to vector<256x1xf32>
    %114 = vector.broadcast %113 : vector<256x1xf32> to vector<256x4xf32>
    %115 = arith.mulf %111, %114 : vector<256x4xf32>
    %c2_105 = arith.constant 2 : index
    %c0_106 = arith.constant 0 : index
    %c0_107 = arith.constant 0 : index
    %116 = vector.load %arg7[%c2_105, %c0_106, %c0_107] : memref<9x4x8xf32, #tpu.memory_space<vmem>>, vector<1x4x8xf32>
    %117 = vector.shape_cast %116 : vector<1x4x8xf32> to vector<4x8xf32>
    %cst_108 = arith.constant dense<0.000000e+00> : vector<256x8xf32>
    %118 = tpu.matmul %115, %117, %cst_108 {dimension_numbers = #tpu.dot_dimension_numbers<[1], [0], [0], [1], [0, 0, 1, 1], [], []>} : vector<256x4xf32>, vector<4x8xf32>, vector<256x8xf32> -> vector<256x8xf32>
    %119 = arith.addf %110, %118 : vector<256x8xf32>
    %c23_109 = arith.constant 23 : index
    %c0_110 = arith.constant 0 : index
    %120 = vector.load %arg11[%c23_109, %c0_110] : memref<304x8xf32, #tpu.memory_space<vmem>>, vector<256x4xf32>
    %c3_111 = arith.constant 3 : index
    %c0_112 = arith.constant 0 : index
    %c0_113 = arith.constant 0 : index
    %121 = vector.load %arg3[%c3_111, %c0_112, %c0_113] : memref<9x256x1xf32, #tpu.memory_space<vmem>>, vector<1x256x1xf32>
    %122 = vector.shape_cast %121 : vector<1x256x1xf32> to vector<256x1xf32>
    %123 = vector.broadcast %122 : vector<256x1xf32> to vector<256x4xf32>
    %124 = arith.mulf %120, %123 : vector<256x4xf32>
    %c3_114 = arith.constant 3 : index
    %c0_115 = arith.constant 0 : index
    %c0_116 = arith.constant 0 : index
    %125 = vector.load %arg7[%c3_114, %c0_115, %c0_116] : memref<9x4x8xf32, #tpu.memory_space<vmem>>, vector<1x4x8xf32>
    %126 = vector.shape_cast %125 : vector<1x4x8xf32> to vector<4x8xf32>
    %cst_117 = arith.constant dense<0.000000e+00> : vector<256x8xf32>
    %127 = tpu.matmul %124, %126, %cst_117 {dimension_numbers = #tpu.dot_dimension_numbers<[1], [0], [0], [1], [0, 0, 1, 1], [], []>} : vector<256x4xf32>, vector<4x8xf32>, vector<256x8xf32> -> vector<256x8xf32>
    %128 = arith.addf %119, %127 : vector<256x8xf32>
    %c24_118 = arith.constant 24 : index
    %c0_119 = arith.constant 0 : index
    %129 = vector.load %arg11[%c24_118, %c0_119] : memref<304x8xf32, #tpu.memory_space<vmem>>, vector<256x4xf32>
    %c4_120 = arith.constant 4 : index
    %c0_121 = arith.constant 0 : index
    %c0_122 = arith.constant 0 : index
    %130 = vector.load %arg7[%c4_120, %c0_121, %c0_122] : memref<9x4x8xf32, #tpu.memory_space<vmem>>, vector<1x4x8xf32>
    %131 = vector.shape_cast %130 : vector<1x4x8xf32> to vector<4x8xf32>
    %cst_123 = arith.constant dense<0.000000e+00> : vector<256x8xf32>
    %132 = tpu.matmul %129, %131, %cst_123 {dimension_numbers = #tpu.dot_dimension_numbers<[1], [0], [0], [1], [0, 0, 1, 1], [], []>} : vector<256x4xf32>, vector<4x8xf32>, vector<256x8xf32> -> vector<256x8xf32>
    %133 = arith.addf %128, %132 : vector<256x8xf32>
    %c25_124 = arith.constant 25 : index
    %c0_125 = arith.constant 0 : index
    %134 = vector.load %arg11[%c25_124, %c0_125] : memref<304x8xf32, #tpu.memory_space<vmem>>, vector<256x4xf32>
    %c5_126 = arith.constant 5 : index
    %c0_127 = arith.constant 0 : index
    %c0_128 = arith.constant 0 : index
    %135 = vector.load %arg3[%c5_126, %c0_127, %c0_128] : memref<9x256x1xf32, #tpu.memory_space<vmem>>, vector<1x256x1xf32>
    %136 = vector.shape_cast %135 : vector<1x256x1xf32> to vector<256x1xf32>
    %137 = vector.broadcast %136 : vector<256x1xf32> to vector<256x4xf32>
    %138 = arith.mulf %134, %137 : vector<256x4xf32>
    %c5_129 = arith.constant 5 : index
    %c0_130 = arith.constant 0 : index
    %c0_131 = arith.constant 0 : index
    %139 = vector.load %arg7[%c5_129, %c0_130, %c0_131] : memref<9x4x8xf32, #tpu.memory_space<vmem>>, vector<1x4x8xf32>
    %140 = vector.shape_cast %139 : vector<1x4x8xf32> to vector<4x8xf32>
    %cst_132 = arith.constant dense<0.000000e+00> : vector<256x8xf32>
    %141 = tpu.matmul %138, %140, %cst_132 {dimension_numbers = #tpu.dot_dimension_numbers<[1], [0], [0], [1], [0, 0, 1, 1], [], []>} : vector<256x4xf32>, vector<4x8xf32>, vector<256x8xf32> -> vector<256x8xf32>
    %142 = arith.addf %133, %141 : vector<256x8xf32>
    %c39_133 = arith.constant 39 : index
    %c0_134 = arith.constant 0 : index
    %143 = vector.load %arg11[%c39_133, %c0_134] : memref<304x8xf32, #tpu.memory_space<vmem>>, vector<256x4xf32>
    %c6_135 = arith.constant 6 : index
    %c0_136 = arith.constant 0 : index
    %c0_137 = arith.constant 0 : index
    %144 = vector.load %arg3[%c6_135, %c0_136, %c0_137] : memref<9x256x1xf32, #tpu.memory_space<vmem>>, vector<1x256x1xf32>
    %145 = vector.shape_cast %144 : vector<1x256x1xf32> to vector<256x1xf32>
    %146 = vector.broadcast %145 : vector<256x1xf32> to vector<256x4xf32>
    %147 = arith.mulf %143, %146 : vector<256x4xf32>
    %c6_138 = arith.constant 6 : index
    %c0_139 = arith.constant 0 : index
    %c0_140 = arith.constant 0 : index
    %148 = vector.load %arg7[%c6_138, %c0_139, %c0_140] : memref<9x4x8xf32, #tpu.memory_space<vmem>>, vector<1x4x8xf32>
    %149 = vector.shape_cast %148 : vector<1x4x8xf32> to vector<4x8xf32>
    %cst_141 = arith.constant dense<0.000000e+00> : vector<256x8xf32>
    %150 = tpu.matmul %147, %149, %cst_141 {dimension_numbers = #tpu.dot_dimension_numbers<[1], [0], [0], [1], [0, 0, 1, 1], [], []>} : vector<256x4xf32>, vector<4x8xf32>, vector<256x8xf32> -> vector<256x8xf32>
    %151 = arith.addf %142, %150 : vector<256x8xf32>
    %c40_142 = arith.constant 40 : index
    %c0_143 = arith.constant 0 : index
    %152 = vector.load %arg11[%c40_142, %c0_143] : memref<304x8xf32, #tpu.memory_space<vmem>>, vector<256x4xf32>
    %c7_144 = arith.constant 7 : index
    %c0_145 = arith.constant 0 : index
    %c0_146 = arith.constant 0 : index
    %153 = vector.load %arg3[%c7_144, %c0_145, %c0_146] : memref<9x256x1xf32, #tpu.memory_space<vmem>>, vector<1x256x1xf32>
    %154 = vector.shape_cast %153 : vector<1x256x1xf32> to vector<256x1xf32>
    %155 = vector.broadcast %154 : vector<256x1xf32> to vector<256x4xf32>
    %156 = arith.mulf %152, %155 : vector<256x4xf32>
    %c7_147 = arith.constant 7 : index
    %c0_148 = arith.constant 0 : index
    %c0_149 = arith.constant 0 : index
    %157 = vector.load %arg7[%c7_147, %c0_148, %c0_149] : memref<9x4x8xf32, #tpu.memory_space<vmem>>, vector<1x4x8xf32>
    %158 = vector.shape_cast %157 : vector<1x4x8xf32> to vector<4x8xf32>
    %cst_150 = arith.constant dense<0.000000e+00> : vector<256x8xf32>
    %159 = tpu.matmul %156, %158, %cst_150 {dimension_numbers = #tpu.dot_dimension_numbers<[1], [0], [0], [1], [0, 0, 1, 1], [], []>} : vector<256x4xf32>, vector<4x8xf32>, vector<256x8xf32> -> vector<256x8xf32>
    %160 = arith.addf %151, %159 : vector<256x8xf32>
    %c41_151 = arith.constant 41 : index
    %c0_152 = arith.constant 0 : index
    %161 = vector.load %arg11[%c41_151, %c0_152] : memref<304x8xf32, #tpu.memory_space<vmem>>, vector<256x4xf32>
    %c8_153 = arith.constant 8 : index
    %c0_154 = arith.constant 0 : index
    %c0_155 = arith.constant 0 : index
    %162 = vector.load %arg3[%c8_153, %c0_154, %c0_155] : memref<9x256x1xf32, #tpu.memory_space<vmem>>, vector<1x256x1xf32>
    %163 = vector.shape_cast %162 : vector<1x256x1xf32> to vector<256x1xf32>
    %164 = vector.broadcast %163 : vector<256x1xf32> to vector<256x4xf32>
    %165 = arith.mulf %161, %164 : vector<256x4xf32>
    %c8_156 = arith.constant 8 : index
    %c0_157 = arith.constant 0 : index
    %c0_158 = arith.constant 0 : index
    %166 = vector.load %arg7[%c8_156, %c0_157, %c0_158] : memref<9x4x8xf32, #tpu.memory_space<vmem>>, vector<1x4x8xf32>
    %167 = vector.shape_cast %166 : vector<1x4x8xf32> to vector<4x8xf32>
    %cst_159 = arith.constant dense<0.000000e+00> : vector<256x8xf32>
    %168 = tpu.matmul %165, %167, %cst_159 {dimension_numbers = #tpu.dot_dimension_numbers<[1], [0], [0], [1], [0, 0, 1, 1], [], []>} : vector<256x4xf32>, vector<4x8xf32>, vector<256x8xf32> -> vector<256x8xf32>
    %169 = arith.addf %160, %168 : vector<256x8xf32>
    %c0_160 = arith.constant 0 : index
    %c0_161 = arith.constant 0 : index
    %170 = vector.load %arg8[%c0_160, %c0_161] : memref<1x8xf32, #tpu.memory_space<vmem>>, vector<1x8xf32>
    %171 = vector.broadcast %170 : vector<1x8xf32> to vector<256x8xf32>
    %172 = arith.mulf %169, %171 : vector<256x8xf32>
    %c0_162 = arith.constant 0 : index
    %c0_163 = arith.constant 0 : index
    %173 = vector.load %arg9[%c0_162, %c0_163] : memref<1x8xf32, #tpu.memory_space<vmem>>, vector<1x8xf32>
    %174 = vector.broadcast %173 : vector<1x8xf32> to vector<256x8xf32>
    %175 = arith.addf %172, %174 : vector<256x8xf32>
    %cst_164 = arith.constant 0.000000e+00 : f32
    %176 = vector.broadcast %cst_164 : f32 to vector<256x8xf32>
    %177 = arith.maximumf %175, %176 : vector<256x8xf32>
    %c0_165 = arith.constant 0 : index
    %c0_166 = arith.constant 0 : index
    %c0_167 = arith.constant 0 : index
    %178 = vector.load %arg10[%c0_165, %c0_166, %c0_167] : memref<1x256x8xf32, #tpu.memory_space<vmem>>, vector<1x256x8xf32>
    %179 = vector.shape_cast %178 : vector<1x256x8xf32> to vector<256x8xf32>
    %180 = vector.shape_cast %177 : vector<256x8xf32> to vector<1x256x8xf32>
    tpu.vector_store %arg10[%c0_165, %c0_166, %c0_167], %180 {strides = array<i32>} : memref<1x256x8xf32, #tpu.memory_space<vmem>>, vector<1x256x8xf32>,
    return
  }
  func.func @transform_0(%arg0: i32) -> (i32, i32, i32) {
    %c0_i32 = arith.constant 0 : i32
    %c0_i32_0 = arith.constant 0 : i32
    %c0_i32_1 = arith.constant 0 : i32
    return %arg0, %c0_i32, %c0_i32_0 : i32, i32, i32
  }
  func.func @transform_1(%arg0: i32) -> (i32, i32, i32) {
    %c0_i32 = arith.constant 0 : i32
    %c0_i32_0 = arith.constant 0 : i32
    %c0_i32_1 = arith.constant 0 : i32
    return %arg0, %c0_i32, %c0_i32_0 : i32, i32, i32
  }
  func.func @transform_2(%arg0: i32) -> (i32, i32, i32) {
    %c0_i32 = arith.constant 0 : i32
    %c0_i32_0 = arith.constant 0 : i32
    %c0_i32_1 = arith.constant 0 : i32
    %c0_i32_2 = arith.constant 0 : i32
    return %c0_i32, %c0_i32_0, %c0_i32_1 : i32, i32, i32
  }
  func.func @transform_3(%arg0: i32) -> (i32, i32, i32) {
    %c0_i32 = arith.constant 0 : i32
    %c0_i32_0 = arith.constant 0 : i32
    %c0_i32_1 = arith.constant 0 : i32
    %c0_i32_2 = arith.constant 0 : i32
    return %c0_i32, %c0_i32_0, %c0_i32_1 : i32, i32, i32
  }
  func.func @transform_4(%arg0: i32) -> (i32, i32) {
    %c0_i32 = arith.constant 0 : i32
    %c0_i32_0 = arith.constant 0 : i32
    %c0_i32_1 = arith.constant 0 : i32
    return %c0_i32, %c0_i32_0 : i32, i32
  }
  func.func @transform_5(%arg0: i32) -> (i32, i32) {
    %c0_i32 = arith.constant 0 : i32
    %c0_i32_0 = arith.constant 0 : i32
    %c0_i32_1 = arith.constant 0 : i32
    return %c0_i32, %c0_i32_0 : i32, i32
  }
  func.func @transform_6(%arg0: i32) -> (i32, i32, i32) {
    %c0_i32 = arith.constant 0 : i32
    %c0_i32_0 = arith.constant 0 : i32
    %c0_i32_1 = arith.constant 0 : i32
    %c0_i32_2 = arith.constant 0 : i32
    return %c0_i32, %c0_i32_0, %c0_i32_1 : i32, i32, i32
  }
  func.func @transform_7(%arg0: i32) -> (i32, i32) {
    %c0_i32 = arith.constant 0 : i32
    %c0_i32_0 = arith.constant 0 : i32
    %c0_i32_1 = arith.constant 0 : i32
    return %c0_i32, %c0_i32_0 : i32, i32
  }
  func.func @transform_8(%arg0: i32) -> (i32, i32) {
    %c0_i32 = arith.constant 0 : i32
    %c0_i32_0 = arith.constant 0 : i32
    %c0_i32_1 = arith.constant 0 : i32
    return %c0_i32, %c0_i32_0 : i32, i32
  }
  func.func @transform_9(%arg0: i32) -> (i32, i32, i32) {
    %c0_i32 = arith.constant 0 : i32
    %c0_i32_0 = arith.constant 0 : i32
    %c0_i32_1 = arith.constant 0 : i32
    return %arg0, %c0_i32, %c0_i32_0 : i32, i32, i32
  }
}

module attributes {stable_mosaic.version = 11 : i64} {
  func.func @_upsample_kernel(%arg0: i32, %arg1: memref<1x8x32xf32, #tpu.memory_space<vmem>>, %arg2: memref<16x8xf32, #tpu.memory_space<vmem>>, %arg3: memref<32x64xf32, #tpu.memory_space<vmem>>, %arg4: memref<1x16x64xf32, #tpu.memory_space<vmem>>) attributes {dimension_semantics = [#tpu.dimension_semantics<parallel>], iteration_bounds = array<i64: 2>, scalar_prefetch = 0 : i64, scratch_operands = 0 : i64, tpu.core_type = #tpu.core_type<tc>, window_params = [{transform_indices = @transform_0, window_bounds = array<i64: 1, 8, 32>}, {pipeline_mode = #tpu.pipeline_mode<synchronous>, transform_indices = @transform_1, window_bounds = array<i64: 16, 8>}, {pipeline_mode = #tpu.pipeline_mode<synchronous>, transform_indices = @transform_2, window_bounds = array<i64: 32, 64>}, {transform_indices = @transform_3, window_bounds = array<i64: 1, 16, 64>}]} {
    %c0 = arith.constant 0 : index
    %c0_0 = arith.constant 0 : index
    %0 = vector.load %arg2[%c0, %c0_0] : memref<16x8xf32, #tpu.memory_space<vmem>>, vector<16x8xf32>
    %c0_1 = arith.constant 0 : index
    %c0_2 = arith.constant 0 : index
    %c0_3 = arith.constant 0 : index
    %1 = vector.load %arg1[%c0_1, %c0_2, %c0_3] : memref<1x8x32xf32, #tpu.memory_space<vmem>>, vector<1x8x32xf32>
    %2 = vector.shape_cast %1 : vector<1x8x32xf32> to vector<8x32xf32>
    %cst = arith.constant dense<0.000000e+00> : vector<16x32xf32>
    %3 = tpu.matmul %0, %2, %cst {dimension_numbers = #tpu.dot_dimension_numbers<[1], [0], [0], [1], [0, 0, 1, 1], [], []>} : vector<16x8xf32>, vector<8x32xf32>, vector<16x32xf32> -> vector<16x32xf32>
    %c0_4 = arith.constant 0 : index
    %c0_5 = arith.constant 0 : index
    %4 = vector.load %arg3[%c0_4, %c0_5] : memref<32x64xf32, #tpu.memory_space<vmem>>, vector<32x64xf32>
    %cst_6 = arith.constant dense<0.000000e+00> : vector<16x64xf32>
    %5 = tpu.matmul %3, %4, %cst_6 {dimension_numbers = #tpu.dot_dimension_numbers<[1], [0], [0], [1], [0, 0, 1, 1], [], []>} : vector<16x32xf32>, vector<32x64xf32>, vector<16x64xf32> -> vector<16x64xf32>
    %c0_7 = arith.constant 0 : index
    %c0_8 = arith.constant 0 : index
    %c0_9 = arith.constant 0 : index
    %6 = vector.load %arg4[%c0_7, %c0_8, %c0_9] : memref<1x16x64xf32, #tpu.memory_space<vmem>>, vector<1x16x64xf32>
    %7 = vector.shape_cast %6 : vector<1x16x64xf32> to vector<16x64xf32>
    %8 = vector.shape_cast %5 : vector<16x64xf32> to vector<1x16x64xf32>
    tpu.vector_store %arg4[%c0_7, %c0_8, %c0_9], %8 {strides = array<i32>} : memref<1x16x64xf32, #tpu.memory_space<vmem>>, vector<1x16x64xf32>,
    return
  }
  func.func @transform_0(%arg0: i32) -> (i32, i32, i32) {
    %c0_i32 = arith.constant 0 : i32
    %c0_i32_0 = arith.constant 0 : i32
    %c0_i32_1 = arith.constant 0 : i32
    return %arg0, %c0_i32, %c0_i32_0 : i32, i32, i32
  }
  func.func @transform_1(%arg0: i32) -> (i32, i32) {
    %c0_i32 = arith.constant 0 : i32
    %c0_i32_0 = arith.constant 0 : i32
    %c0_i32_1 = arith.constant 0 : i32
    return %c0_i32, %c0_i32_0 : i32, i32
  }
  func.func @transform_2(%arg0: i32) -> (i32, i32) {
    %c0_i32 = arith.constant 0 : i32
    %c0_i32_0 = arith.constant 0 : i32
    %c0_i32_1 = arith.constant 0 : i32
    return %c0_i32, %c0_i32_0 : i32, i32
  }
  func.func @transform_3(%arg0: i32) -> (i32, i32, i32) {
    %c0_i32 = arith.constant 0 : i32
    %c0_i32_0 = arith.constant 0 : i32
    %c0_i32_1 = arith.constant 0 : i32
    return %arg0, %c0_i32, %c0_i32_0 : i32, i32, i32
  }
}

</mosaic_0001>

<llo_original>
// kernel: decoder_block_forward.2
$region0: #{decoder_block_forward.2}
  #allocation0 [shape = 'u32[]', space=smem, size = 0x4, offset = 0x4, fixed_abs, tag = 'smem constant byte address 0x4 - core index']
  #allocation1 [shape = 'u32[144,128]{1,0:T(1,128)}', space=vmem, size = 0x12000, scoped, tag = 'internal scratch']
  %s0 = inlined_call_operand.vmem [shape: f32[2,8,32], index: 0, kind: input, shape index: {}]
  %s1 = inlined_call_operand.vmem [shape: f32[16,8], index: 1, kind: input, shape index: {}]
  %s2 = inlined_call_operand.vmem [shape: f32[32,64], index: 2, kind: input, shape index: {}]
  %s3 = inlined_call_operand.vmem [shape: f32[2,16,64], index: 3, kind: output, shape index: {}]
  %s4 = sld [smem:[#allocation0]]
  $region45: #{decoder_block_forward.2} parent=0
    _
  %s6 = ssub.s32 1, %s4
  %s7 = scalar_select 0, %s6, %s4
  loop: start=0, step=1, limit=4
  $region2: #{decoder_block_forward.2} parent=0 // loop_pre_header
    _
  $region3: #{decoder_block_forward.2} parent=0 // loop_header
    %s9 = sphi 0, %s13
    %p10 = scmp.ge.s32.totalorder %s9, 4
    %s19 = sphi 0, %s21
    %s22 = sphi 0, %s19
    %s23 = sphi 0, %s22
    %s39 = sphi 0, %s23
    %s43 = sphi 0, %s43
    %s45 = sphi 0, %s43
    %s46 = sphi 0, %s45
    %s60 = sphi 0, %s46
    %s64 = sphi 0, %s64
    %s66 = sphi 0, %s64
    %s67 = sphi 0, %s66
    %s81 = sphi 0, %s67
    %s87 = sphi 0, %s89
    %s90 = sphi 0, %s87
    %s91 = sphi 0, %s90
    %s107 = sphi 0, %s91
  $region4: #{decoder_block_forward.2} parent=0 // loop_header_branch
    %12 = sbr.rel (%p10) target = $region8
  $region5: #{decoder_block_forward.2} parent=0 // loop_body
    %s14 = ssub.s32 %s9, 1
    %s15 = ssub.s32 %s9, 2
    %s16 = sadd.s32 %s9, 1
    %s17 = ssub.s32 %s9, %s16
    %p18 = scmp.eq.s32.totalorder %s17, 0
    %s20 = sadd.s32 %s19, 1
    %s21 = scalar_select %p18, %s19, %s20
    %p24 = pneg %p18
    %p25 = scmp.eq.s32.totalorder %s9, 1
    %p26 = por %p24, %p25
    %p27 = scmp.ne.s32.totalorder %s19, %s22
    %p28 = scmp.eq.s32.totalorder %s9, 0
    %p29 = por %p27, %p28
    %p30 = scmp.ne.s32.totalorder %s19, %s22
    %p31 = scmp.eq.s32.totalorder %s14, 1
    %p32 = por %p30, %p31
    %p33 = scmp.ne.s32.totalorder %s22, %s23
    %p34 = scmp.eq.s32.totalorder %s14, 0
    %p35 = por %p33, %p34
    %p36 = scmp.ne.s32.totalorder %s22, %s23
    %p37 = scmp.eq.s32.totalorder %s15, 1
    %p38 = por %p36, %p37
    %p40 = scmp.ne.s32.totalorder %s23, %s39
    %p41 = scmp.eq.s32.totalorder %s15, 0
    %p42 = por %p40, %p41
    %s44 = sadd.s32 %s43, 1
    %p47 = scmp.eq.s32.totalorder %s9, 1
    %p48 = scmp.ne.s32.totalorder %s43, %s45
    %p49 = scmp.eq.s32.totalorder %s9, 0
    %p50 = por %p48, %p49
    %p51 = scmp.ne.s32.totalorder %s43, %s45
    %p52 = scmp.eq.s32.totalorder %s14, 1
    %p53 = por %p51, %p52
    %p54 = scmp.ne.s32.totalorder %s45, %s46
    %p55 = scmp.eq.s32.totalorder %s14, 0
    %p56 = por %p54, %p55
    %p57 = scmp.ne.s32.totalorder %s45, %s46
    %p58 = scmp.eq.s32.totalorder %s15, 1
    %p59 = por %p57, %p58
    %p61 = scmp.ne.s32.totalorder %s46, %s60
    %p62 = scmp.eq.s32.totalorder %s15, 0
    %p63 = por %p61, %p62
    %s65 = sadd.s32 %s64, 1
    %p68 = scmp.eq.s32.totalorder %s9, 1
    %p69 = scmp.ne.s32.totalorder %s64, %s66
    %p70 = scmp.eq.s32.totalorder %s9, 0
    %p71 = por %p69, %p70
    %p72 = scmp.ne.s32.totalorder %s64, %s66
    %p73 = scmp.eq.s32.totalorder %s14, 1
    %p74 = por %p72, %p73
    %p75 = scmp.ne.s32.totalorder %s66, %s67
    %p76 = scmp.eq.s32.totalorder %s14, 0
    %p77 = por %p75, %p76
    %p78 = scmp.ne.s32.totalorder %s66, %s67
    %p79 = scmp.eq.s32.totalorder %s15, 1
    %p80 = por %p78, %p79
    %p82 = scmp.ne.s32.totalorder %s67, %s81
    %p83 = scmp.eq.s32.totalorder %s15, 0
    %p84 = por %p82, %p83
    %s85 = ssub.s32 %s9, %s16
    %p86 = scmp.eq.s32.totalorder %s85, 0
    %s88 = sadd.s32 %s87, 1
    %s89 = scalar_select %p86, %s87, %s88
    %p92 = pneg %p86
    %p93 = scmp.eq.s32.totalorder %s9, 1
    %p94 = por %p92, %p93
    %p95 = scmp.ne.s32.totalorder %s87, %s90
    %p96 = scmp.eq.s32.totalorder %s9, 0
    %p97 = por %p95, %p96
    %p98 = scmp.ne.s32.totalorder %s87, %s90
    %p99 = scmp.eq.s32.totalorder %s14, 1
    %p100 = por %p98, %p99
    %p101 = scmp.ne.s32.totalorder %s90, %s91
    %p102 = scmp.eq.s32.totalorder %s14, 0
    %p103 = por %p101, %p102
    %p104 = scmp.ne.s32.totalorder %s90, %s91
    %p105 = scmp.eq.s32.totalorder %s15, 1
    %p106 = por %p104, %p105
    %p108 = scmp.ne.s32.totalorder %s91, %s107
    %p109 = scmp.eq.s32.totalorder %s15, 0
    %p110 = por %p108, %p109
    %p111 = scmp.le.s32.totalorder 1, %s9
    %p112 = scmp.lt.s32.totalorder %s9, 3
    %p113 = pnand %p111, %p112
    %p114 = pneg %p113
    // Predicated region
    $region9: #{decoder_block_forward.2} parent=5 // pred_check
      _
    $region10: #{decoder_block_forward.2} parent=5 // pred_check_branch
      %116 = sbr.rel (%p113) target = $region12
    $region11: #{decoder_block_forward.2} parent=5 // pred_region
      %s117 = ssub.s32 %s9, 1
      // Predicated region
      $region13: #{decoder_block_forward.2} parent=11 // pred_check
        %p118 = pneg %p56
      $region14: #{decoder_block_forward.2} parent=11 // pred_check_branch
        %120 = sbr.rel (%p118) target = $region16
      $region15: #{decoder_block_forward.2} parent=11 // pred_region
        _
      $region16: #{decoder_block_forward.2} parent=11 // pred_fallthru
        _
      // Predicated region
      $region17: #{decoder_block_forward.2} parent=11 // pred_check
        %p121 = pneg %p77
      $region18: #{decoder_block_forward.2} parent=11 // pred_check_branch
        %123 = sbr.rel (%p121) target = $region20
      $region19: #{decoder_block_forward.2} parent=11 // pred_region
        _
      $region20: #{decoder_block_forward.2} parent=11 // pred_fallthru
        _
    $region12: #{decoder_block_forward.2} parent=5 // pred_fallthru
      _
    %p124 = scmp.lt.s32.totalorder %s9, 2
    // Predicated region
    $region21: #{decoder_block_forward.2} parent=5 // pred_check
      %p125 = pneg %p124
    $region22: #{decoder_block_forward.2} parent=5 // pred_check_branch
      %127 = sbr.rel (%p125) target = $region24
    $region23: #{decoder_block_forward.2} parent=5 // pred_region
      // Predicated region
      $region25: #{decoder_block_forward.2} parent=23 // pred_check
        %p128 = pneg %p29
      $region26: #{decoder_block_forward.2} parent=23 // pred_check_branch
        %130 = sbr.rel (%p128) target = $region28
      $region27: #{decoder_block_forward.2} parent=23 // pred_region
        %p131 = scmp.lt.s32.totalorder %s9, 1
        %s132 = scalar_select %p131, %s9, 1
        %s133 = smul.addr %s132, 8
        %s134 = scalar_lea.vmem %s0, %s133
      $region28: #{decoder_block_forward.2} parent=23 // pred_fallthru
        _
    $region24: #{decoder_block_forward.2} parent=5 // pred_fallthru
      _
    %p135 = scmp.le.s32.totalorder 1, %s9
    %p136 = scmp.lt.s32.totalorder %s9, 3
    %p137 = pnand %p135, %p136
    %p138 = pneg %p137
    // Predicated region
    $region29: #{decoder_block_forward.2} parent=5 // pred_check
      _
    $region30: #{decoder_block_forward.2} parent=5 // pred_check_branch
      %140 = sbr.rel (%p137) target = $region32
    $region31: #{decoder_block_forward.2} parent=5 // pred_region
      %s141 = ssub.s32 %s9, 1
      %p142 = scmp.lt.s32.totalorder %s14, 1
      %s143 = scalar_select %p142, %s14, 1
      %s144 = smul.addr %s143, 8
      %s145 = scalar_lea.vmem %s0, %s144
      %p146 = pneg %p35
      %p147 = pneg %p32
      %p148 = pneg %p56
      %p149 = pneg %p53
      %p150 = pneg %p77
      %p151 = pneg %p74
      %p152 = pneg %p103
      %p153 = pneg %p100
      %p154 = scmp.lt.s32.totalorder %s14, 1
      %s155 = scalar_select %p154, %s14, 1
      %s156 = smul.addr %s155, 2
      %s157 = smul.addr %s156, 8
      %s158 = scalar_lea.vmem %s3, %s157
      %p159 = scmp.lt.s32.totalorder %s14, 1
      %s160 = scalar_select %p159, %s14, 1
      %s161 = smul.addr %s160, 8
      %s162 = scalar_lea.vmem %s0, %s161
      %p163 = scmp.lt.s32.totalorder %s14, 1
      %s164 = scalar_select %p163, %s14, 1
      %s165 = smul.addr %s164, 2
      %s166 = smul.addr %s165, 8
      %s167 = scalar_lea.vmem %s3, %s166
      %v168 = vld [vmem:[%s1] sm:$0xff]
      %v169 = vld [vmem:[%s1 + $0x8] sm:$0xff]
      %v170 = vld [vmem:[%s162] sm:$0xff]
      %vm171 = vcmask 64512
      %v173 = vsel %vm171, %v168, 0
      %v176 = vsel %vm171, %v169, 0
      %178 = vmatprep.subr.mxu0 0.0
      %179 = vmatpush1.msra.mxu0 %v170
      %180 = vmatprep.subr.mxu0 0.0
      %181 = vmatpush1.msra.mxu0 0.0
      %182 = vmatprep.subr.mxu0 0.0
      %183 = vmatpush1.msra.mxu0 0.0
      %184 = vmatprep.subr.mxu0 0.0
      %185 = vmatpush1.msra.mxu0 0.0
      %186 = vmatprep.subr.mxu0 0.0
      %187 = vmatpush1.msra.mxu0 0.0
      %188 = vmatprep.subr.mxu0 0.0
      %189 = vmatpush1.msra.mxu0 0.0
      %190 = vmatprep.subr.mxu0 0.0
      %191 = vmatpush1.msra.mxu0 0.0
      %192 = vmatprep.subr.mxu0 0.0
      %193 = vmatpush1.msra.mxu0 0.0
      %194 = vmatprep.subr.mxu0 0.0
      %195 = vmatpush1.msra.mxu0 0.0
      %196 = vmatprep.subr.mxu0 0.0
      %197 = vmatpush1.msra.mxu0 0.0
      %198 = vmatprep.subr.mxu0 0.0
      %199 = vmatpush1.msra.mxu0 0.0
      %200 = vmatprep.subr.mxu0 0.0
      %201 = vmatpush1.msra.mxu0 0.0
      %202 = vmatprep.subr.mxu0 0.0
      %203 = vmatpush1.msra.mxu0 0.0
      %204 = vmatprep.subr.mxu0 0.0
      %205 = vmatpush1.msra.mxu0 0.0
      %206 = vmatprep.subr.mxu0 0.0
      %207 = vmatpush1.msra.mxu0 0.0
      %208 = vmatprep.subr.mxu0 0.0
      %209 = vmatpush1.msra.mxu0 0.0
      %210 = vmatprep.subr.mxu0 0.0
      %211 = vmatpush1.msra.mxu0 0.0
      %212 = vmatprep.subr.mxu0 0.0
      %213 = vmatpush1.msra.mxu0 0.0
      %214 = vmatprep.subr.mxu0 0.0
      %215 = vmatpush1.msra.mxu0 0.0
      %216 = vmatprep.subr.mxu0 0.0
      %217 = vmatpush1.msra.mxu0 0.0
      %218 = vmatprep.subr.mxu0 0.0
      %219 = vmatpush1.msra.mxu0 0.0
      %220 = vmatprep.subr.mxu0 0.0
      %221 = vmatpush1.msra.mxu0 0.0
      %222 = vmatprep.subr.mxu0 0.0
      %223 = vmatpush1.msra.mxu0 0.0
      %224 = vmatprep.subr.mxu0 0.0
      %225 = vmatpush1.msra.mxu0 0.0
      %226 = vmatprep.subr.mxu0 0.0
      %227 = vmatpush1.msra.mxu0 0.0
      %228 = vmatprep.subr.mxu0 0.0
      %229 = vmatpush1.msra.mxu0 0.0
      %230 = vmatprep.subr.mxu0 0.0
      %231 = vmatpush1.msra.mxu0 0.0
      %232 = vmatprep.subr.mxu0 0.0
      %233 = vmatpush1.msra.mxu0 0.0
      %234 = vmatprep.subr.mxu0 0.0
      %235 = vmatpush1.msra.mxu0 0.0
      %236 = vmatprep.subr.mxu0 0.0
      %237 = vmatpush1.msra.mxu0 0.0
      %238 = vmatprep.subr.mxu0 0.0
      %239 = vmatpush1.msra.mxu0 0.0
      %240 = vmatprep.subr.mxu0 0.0
      %241 = vmatpush1.msra.mxu0 0.0
      %242 = vmatprep.mubr.f32.mxu0 0.0
      %243 = vmatmul.mubr.f32.gmra.mrb[0].mxu0 %v173
      %v244 = vpop.f32.mrb[0].mxu0
      %v245 = vadd.f32 0.0, %v244
      %v246 = vpop.f32.mrb[0].mxu0
      %247 = vmatprep.mubr.f32.mxu0 0.0
      %248 = vmatmul.mubr.f32.gmra.mrb[0].mxu0 %v176
      %v249 = vpop.f32.mrb[0].mxu0
      %v250 = vadd.f32 0.0, %v249
      %v251 = vpop.f32.mrb[0].mxu0
      %252 = vdwg.mxu0
      %v253 = vld [vmem:[%s2] sm:$0xff]
      %v254 = vld [vmem:[%s2 + $0x8] sm:$0xff]
      %v255 = vld [vmem:[%s2 + $0x10] sm:$0xff]
      %v256 = vld [vmem:[%s2 + $0x18] sm:$0xff]
      %vm257 = vcmask 261120
      %v259 = vsel %vm257, %v245, 0
      %v262 = vsel %vm257, %v250, 0
      %264 = vmatprep.subr.mxu0 0.0
      %265 = vmatpush1.msra.mxu0 %v253
      %266 = vmatprep.subr.mxu0 0.0
      %267 = vmatpush1.msra.mxu0 %v254
      %268 = vmatprep.subr.mxu0 0.0
      %269 = vmatpush1.msra.mxu0 %v255
      %270 = vmatprep.subr.mxu0 0.0
      %271 = vmatpush1.msra.mxu0 %v256
      %272 = vmatprep.subr.mxu0 0.0
      %273 = vmatpush1.msra.mxu0 0.0
      %274 = vmatprep.subr.mxu0 0.0
      %275 = vmatpush1.msra.mxu0 0.0
      %276 = vmatprep.subr.mxu0 0.0
      %277 = vmatpush1.msra.mxu0 0.0
      %278 = vmatprep.subr.mxu0 0.0
      %279 = vmatpush1.msra.mxu0 0.0
      %280 = vmatprep.subr.mxu0 0.0
      %281 = vmatpush1.msra.mxu0 0.0
      %282 = vmatprep.subr.mxu0 0.0
      %283 = vmatpush1.msra.mxu0 0.0
      %284 = vmatprep.subr.mxu0 0.0
      %285 = vmatpush1.msra.mxu0 0.0
      %286 = vmatprep.subr.mxu0 0.0
      %287 = vmatpush1.msra.mxu0 0.0
      %288 = vmatprep.subr.mxu0 0.0
      %289 = vmatpush1.msra.mxu0 0.0
      %290 = vmatprep.subr.mxu0 0.0
      %291 = vmatpush1.msra.mxu0 0.0
      %292 = vmatprep.subr.mxu0 0.0
      %293 = vmatpush1.msra.mxu0 0.0
      %294 = vmatprep.subr.mxu0 0.0
      %295 = vmatpush1.msra.mxu0 0.0
      %296 = vmatprep.subr.mxu0 0.0
      %297 = vmatpush1.msra.mxu0 0.0
      %298 = vmatprep.subr.mxu0 0.0
      %299 = vmatpush1.msra.mxu0 0.0
      %300 = vmatprep.subr.mxu0 0.0
      %301 = vmatpush1.msra.mxu0 0.0
      %302 = vmatprep.subr.mxu0 0.0
      %303 = vmatpush1.msra.mxu0 0.0
      %304 = vmatprep.subr.mxu0 0.0
      %305 = vmatpush1.msra.mxu0 0.0
      %306 = vmatprep.subr.mxu0 0.0
      %307 = vmatpush1.msra.mxu0 0.0
      %308 = vmatprep.subr.mxu0 0.0
      %309 = vmatpush1.msra.mxu0 0.0
      %310 = vmatprep.subr.mxu0 0.0
      %311 = vmatpush1.msra.mxu0 0.0
      %312 = vmatprep.subr.mxu0 0.0
      %313 = vmatpush1.msra.mxu0 0.0
      %314 = vmatprep.subr.mxu0 0.0
      %315 = vmatpush1.msra.mxu0 0.0
      %316 = vmatprep.subr.mxu0 0.0
      %317 = vmatpush1.msra.mxu0 0.0
      %318 = vmatprep.subr.mxu0 0.0
      %319 = vmatpush1.msra.mxu0 0.0
      %320 = vmatprep.subr.mxu0 0.0
      %321 = vmatpush1.msra.mxu0 0.0
      %322 = vmatprep.subr.mxu0 0.0
      %323 = vmatpush1.msra.mxu0 0.0
      %324 = vmatprep.subr.mxu0 0.0
      %325 = vmatpush1.msra.mxu0 0.0
      %326 = vmatprep.subr.mxu0 0.0
      %327 = vmatpush1.msra.mxu0 0.0
      %328 = vmatprep.mubr.f32.mxu0 0.0
      %329 = vmatmul.mubr.f32.gmra.mrb[0].mxu0 %v259
      %v330 = vpop.f32.mrb[0].mxu0
      %v331 = vadd.f32 0.0, %v330
      %v332 = vpop.f32.mrb[0].mxu0
      %333 = vmatprep.mubr.f32.mxu0 0.0
      %334 = vmatmul.mubr.f32.gmra.mrb[0].mxu0 %v262
      %v335 = vpop.f32.mrb[0].mxu0
      %v336 = vadd.f32 0.0, %v335
      %v337 = vpop.f32.mrb[0].mxu0
      %338 = vdwg.mxu0
      %vm339 = vcmask 523264
      %340 = vst.msk [vmem:[%s167] sm:$0xff] %vm339, %v331
      %341 = vst.msk [vmem:[%s167 + $0x8] sm:$0xff] %vm339, %v336
      %p342 = scmp.lt.s32.totalorder %s14, 1
      %s343 = scalar_select %p342, %s14, 1
      %s344 = smul.addr %s343, 2
      %s345 = smul.addr %s344, 8
      %s346 = scalar_lea.vmem %s3, %s345
      // Predicated region
      $region33: #{decoder_block_forward.2} parent=31 // pred_check
        %p347 = pneg %p100
      $region34: #{decoder_block_forward.2} parent=31 // pred_check_branch
        %349 = sbr.rel (%p347) target = $region36
      $region35: #{decoder_block_forward.2} parent=31 // pred_region
        _
      $region36: #{decoder_block_forward.2} parent=31 // pred_fallthru
        _
    $region32: #{decoder_block_forward.2} parent=5 // pred_fallthru
      _
    %p350 = scmp.le.s32.totalorder 2, %s9
    // Predicated region
    $region37: #{decoder_block_forward.2} parent=5 // pred_check
      %p351 = pneg %p350
    $region38: #{decoder_block_forward.2} parent=5 // pred_check_branch
      %353 = sbr.rel (%p351) target = $region40
    $region39: #{decoder_block_forward.2} parent=5 // pred_region
      %s354 = ssub.s32 %s9, 2
      // Predicated region
      $region41: #{decoder_block_forward.2} parent=39 // pred_check
        %p355 = pneg %p106
      $region42: #{decoder_block_forward.2} parent=39 // pred_check_branch
        %357 = sbr.rel (%p355) target = $region44
      $region43: #{decoder_block_forward.2} parent=39 // pred_region
        %p358 = scmp.lt.s32.totalorder %s15, 1
        %s359 = scalar_select %p358, %s15, 1
        %s360 = smul.addr %s359, 2
        %s361 = smul.addr %s360, 8
        %s362 = scalar_lea.vmem %s3, %s361
      $region44: #{decoder_block_forward.2} parent=39 // pred_fallthru
        _
    $region40: #{decoder_block_forward.2} parent=5 // pred_fallthru
      _
  $region6: #{decoder_block_forward.2} parent=0 // loop_footer
    %s13 = sadd.s32 1, %s9
  $region7: #{decoder_block_forward.2} parent=0 // loop_footer_branch
    %8 = sbr.rel target = $region3
  $region8: #{decoder_block_forward.2} parent=0 // loop_exit
    _

// kernel: decoder_block_forward.3
$region0: #{decoder_block_forward.3}
  #allocation0 [shape = 'u32[]', space=smem, size = 0x4, offset = 0x4, fixed_abs, tag = 'smem constant byte address 0x4 - core index']
  #allocation1 [shape = 'u32[144,128]{1,0:T(1,128)}', space=vmem, size = 0x12000, scoped, tag = 'internal scratch']
  #allocation2 [shape = 'f32[304,8]{1,0:T(8,128)}', space=vmem, size = 0x26000, scoped, tag = 'scratch operand']
  %s0 = inlined_call_operand.vmem [shape: f32[2,256,4], index: 0, kind: input, shape index: {}]
  %s1 = inlined_call_operand.vmem [shape: f32[2,256,4], index: 1, kind: input, shape index: {}]
  %s2 = inlined_call_operand.vmem [shape: f32[9,256,1], index: 2, kind: input, shape index: {}]
  %s3 = inlined_call_operand.vmem [shape: f32[9,8,4], index: 3, kind: input, shape index: {}]
  %s4 = inlined_call_operand.vmem [shape: f32[1,4], index: 4, kind: input, shape index: {}]
  %s5 = inlined_call_operand.vmem [shape: f32[1,4], index: 5, kind: input, shape index: {}]
  %s6 = inlined_call_operand.vmem [shape: f32[9,4,8], index: 6, kind: input, shape index: {}]
  %s7 = inlined_call_operand.vmem [shape: f32[1,8], index: 7, kind: input, shape index: {}]
  %s8 = inlined_call_operand.vmem [shape: f32[1,8], index: 8, kind: input, shape index: {}]
  %s9 = inlined_call_operand.vmem [shape: f32[2,256,8], index: 9, kind: output, shape index: {}]
  %s10 = sld [smem:[#allocation0]]
  $region69: #{decoder_block_forward.3} parent=0
    _
  %s12 = ssub.s32 1, %s10
  %s13 = scalar_select 0, %s12, %s10
  loop: start=0, step=1, limit=4
  $region2: #{decoder_block_forward.3} parent=0 // loop_pre_header
    _
  $region3: #{decoder_block_forward.3} parent=0 // loop_header
    %s15 = sphi 0, %s19
    %p16 = scmp.ge.s32.totalorder %s15, 4
    %s25 = sphi 0, %s27
    %s28 = sphi 0, %s25
    %s29 = sphi 0, %s28
    %s45 = sphi 0, %s29
    %s51 = sphi 0, %s53
    %s54 = sphi 0, %s51
    %s55 = sphi 0, %s54
    %s71 = sphi 0, %s55
    %s75 = sphi 0, %s75
    %s77 = sphi 0, %s75
    %s78 = sphi 0, %s77
    %s92 = sphi 0, %s78
    %s96 = sphi 0, %s96
    %s98 = sphi 0, %s96
    %s99 = sphi 0, %s98
    %s113 = sphi 0, %s99
    %s117 = sphi 0, %s117
    %s119 = sphi 0, %s117
    %s120 = sphi 0, %s119
    %s134 = sphi 0, %s120
    %s138 = sphi 0, %s138
    %s140 = sphi 0, %s138
    %s141 = sphi 0, %s140
    %s155 = sphi 0, %s141
    %s159 = sphi 0, %s159
    %s161 = sphi 0, %s159
    %s162 = sphi 0, %s161
    %s176 = sphi 0, %s162
    %s180 = sphi 0, %s180
    %s182 = sphi 0, %s180
    %s183 = sphi 0, %s182
    %s197 = sphi 0, %s183
    %s201 = sphi 0, %s201
    %s203 = sphi 0, %s201
    %s204 = sphi 0, %s203
    %s218 = sphi 0, %s204
    %s224 = sphi 0, %s226
    %s227 = sphi 0, %s224
    %s228 = sphi 0, %s227
    %s244 = sphi 0, %s228
  $region4: #{decoder_block_forward.3} parent=0 // loop_header_branch
    %18 = sbr.rel (%p16) target = $region8
  $region5: #{decoder_block_forward.3} parent=0 // loop_body
    %s20 = ssub.s32 %s15, 1
    %s21 = ssub.s32 %s15, 2
    %s22 = sadd.s32 %s15, 1
    %s23 = ssub.s32 %s15, %s22
    %p24 = scmp.eq.s32.totalorder %s23, 0
    %s26 = sadd.s32 %s25, 1
    %s27 = scalar_select %p24, %s25, %s26
    %p30 = pneg %p24
    %p31 = scmp.eq.s32.totalorder %s15, 1
    %p32 = por %p30, %p31
    %p33 = scmp.ne.s32.totalorder %s25, %s28
    %p34 = scmp.eq.s32.totalorder %s15, 0
    %p35 = por %p33, %p34
    %p36 = scmp.ne.s32.totalorder %s25, %s28
    %p37 = scmp.eq.s32.totalorder %s20, 1
    %p38 = por %p36, %p37
    %p39 = scmp.ne.s32.totalorder %s28, %s29
    %p40 = scmp.eq.s32.totalorder %s20, 0
    %p41 = por %p39, %p40
    %p42 = scmp.ne.s32.totalorder %s28, %s29
    %p43 = scmp.eq.s32.totalorder %s21, 1
    %p44 = por %p42, %p43
    %p46 = scmp.ne.s32.totalorder %s29, %s45
    %p47 = scmp.eq.s32.totalorder %s21, 0
    %p48 = por %p46, %p47
    %s49 = ssub.s32 %s15, %s22
    %p50 = scmp.eq.s32.totalorder %s49, 0
    %s52 = sadd.s32 %s51, 1
    %s53 = scalar_select %p50, %s51, %s52
    %p56 = pneg %p50
    %p57 = scmp.eq.s32.totalorder %s15, 1
    %p58 = por %p56, %p57
    %p59 = scmp.ne.s32.totalorder %s51, %s54
    %p60 = scmp.eq.s32.totalorder %s15, 0
    %p61 = por %p59, %p60
    %p62 = scmp.ne.s32.totalorder %s51, %s54
    %p63 = scmp.eq.s32.totalorder %s20, 1
    %p64 = por %p62, %p63
    %p65 = scmp.ne.s32.totalorder %s54, %s55
    %p66 = scmp.eq.s32.totalorder %s20, 0
    %p67 = por %p65, %p66
    %p68 = scmp.ne.s32.totalorder %s54, %s55
    %p69 = scmp.eq.s32.totalorder %s21, 1
    %p70 = por %p68, %p69
    %p72 = scmp.ne.s32.totalorder %s55, %s71
    %p73 = scmp.eq.s32.totalorder %s21, 0
    %p74 = por %p72, %p73
    %s76 = sadd.s32 %s75, 1
    %p79 = scmp.eq.s32.totalorder %s15, 1
    %p80 = scmp.ne.s32.totalorder %s75, %s77
    %p81 = scmp.eq.s32.totalorder %s15, 0
    %p82 = por %p80, %p81
    %p83 = scmp.ne.s32.totalorder %s75, %s77
    %p84 = scmp.eq.s32.totalorder %s20, 1
    %p85 = por %p83, %p84
    %p86 = scmp.ne.s32.totalorder %s77, %s78
    %p87 = scmp.eq.s32.totalorder %s20, 0
    %p88 = por %p86, %p87
    %p89 = scmp.ne.s32.totalorder %s77, %s78
    %p90 = scmp.eq.s32.totalorder %s21, 1
    %p91 = por %p89, %p90
    %p93 = scmp.ne.s32.totalorder %s78, %s92
    %p94 = scmp.eq.s32.totalorder %s21, 0
    %p95 = por %p93, %p94
    %s97 = sadd.s32 %s96, 1
    %p100 = scmp.eq.s32.totalorder %s15, 1
    %p101 = scmp.ne.s32.totalorder %s96, %s98
    %p102 = scmp.eq.s32.totalorder %s15, 0
    %p103 = por %p101, %p102
    %p104 = scmp.ne.s32.totalorder %s96, %s98
    %p105 = scmp.eq.s32.totalorder %s20, 1
    %p106 = por %p104, %p105
    %p107 = scmp.ne.s32.totalorder %s98, %s99
    %p108 = scmp.eq.s32.totalorder %s20, 0
    %p109 = por %p107, %p108
    %p110 = scmp.ne.s32.totalorder %s98, %s99
    %p111 = scmp.eq.s32.totalorder %s21, 1
    %p112 = por %p110, %p111
    %p114 = scmp.ne.s32.totalorder %s99, %s113
    %p115 = scmp.eq.s32.totalorder %s21, 0
    %p116 = por %p114, %p115
    %s118 = sadd.s32 %s117, 1
    %p121 = scmp.eq.s32.totalorder %s15, 1
    %p122 = scmp.ne.s32.totalorder %s117, %s119
    %p123 = scmp.eq.s32.totalorder %s15, 0
    %p124 = por %p122, %p123
    %p125 = scmp.ne.s32.totalorder %s117, %s119
    %p126 = scmp.eq.s32.totalorder %s20, 1
    %p127 = por %p125, %p126
    %p128 = scmp.ne.s32.totalorder %s119, %s120
    %p129 = scmp.eq.s32.totalorder %s20, 0
    %p130 = por %p128, %p129
    %p131 = scmp.ne.s32.totalorder %s119, %s120
    %p132 = scmp.eq.s32.totalorder %s21, 1
    %p133 = por %p131, %p132
    %p135 = scmp.ne.s32.totalorder %s120, %s134
    %p136 = scmp.eq.s32.totalorder %s21, 0
    %p137 = por %p135, %p136
    %s139 = sadd.s32 %s138, 1
    %p142 = scmp.eq.s32.totalorder %s15, 1
    %p143 = scmp.ne.s32.totalorder %s138, %s140
    %p144 = scmp.eq.s32.totalorder %s15, 0
    %p145 = por %p143, %p144
    %p146 = scmp.ne.s32.totalorder %s138, %s140
    %p147 = scmp.eq.s32.totalorder %s20, 1
    %p148 = por %p146, %p147
    %p149 = scmp.ne.s32.totalorder %s140, %s141
    %p150 = scmp.eq.s32.totalorder %s20, 0
    %p151 = por %p149, %p150
    %p152 = scmp.ne.s32.totalorder %s140, %s141
    %p153 = scmp.eq.s32.totalorder %s21, 1
    %p154 = por %p152, %p153
    %p156 = scmp.ne.s32.totalorder %s141, %s155
    %p157 = scmp.eq.s32.totalorder %s21, 0
    %p158 = por %p156, %p157
    %s160 = sadd.s32 %s159, 1
    %p163 = scmp.eq.s32.totalorder %s15, 1
    %p164 = scmp.ne.s32.totalorder %s159, %s161
    %p165 = scmp.eq.s32.totalorder %s15, 0
    %p166 = por %p164, %p165
    %p167 = scmp.ne.s32.totalorder %s159, %s161
    %p168 = scmp.eq.s32.totalorder %s20, 1
    %p169 = por %p167, %p168
    %p170 = scmp.ne.s32.totalorder %s161, %s162
    %p171 = scmp.eq.s32.totalorder %s20, 0
    %p172 = por %p170, %p171
    %p173 = scmp.ne.s32.totalorder %s161, %s162
    %p174 = scmp.eq.s32.totalorder %s21, 1
    %p175 = por %p173, %p174
    %p177 = scmp.ne.s32.totalorder %s162, %s176
    %p178 = scmp.eq.s32.totalorder %s21, 0
    %p179 = por %p177, %p178
    %s181 = sadd.s32 %s180, 1
    %p184 = scmp.eq.s32.totalorder %s15, 1
    %p185 = scmp.ne.s32.totalorder %s180, %s182
    %p186 = scmp.eq.s32.totalorder %s15, 0
    %p187 = por %p185, %p186
    %p188 = scmp.ne.s32.totalorder %s180, %s182
    %p189 = scmp.eq.s32.totalorder %s20, 1
    %p190 = por %p188, %p189
    %p191 = scmp.ne.s32.totalorder %s182, %s183
    %p192 = scmp.eq.s32.totalorder %s20, 0
    %p193 = por %p191, %p192
    %p194 = scmp.ne.s32.totalorder %s182, %s183
    %p195 = scmp.eq.s32.totalorder %s21, 1
    %p196 = por %p194, %p195
    %p198 = scmp.ne.s32.totalorder %s183, %s197
    %p199 = scmp.eq.s32.totalorder %s21, 0
    %p200 = por %p198, %p199
    %s202 = sadd.s32 %s201, 1
    %p205 = scmp.eq.s32.totalorder %s15, 1
    %p206 = scmp.ne.s32.totalorder %s201, %s203
    %p207 = scmp.eq.s32.totalorder %s15, 0
    %p208 = por %p206, %p207
    %p209 = scmp.ne.s32.totalorder %s201, %s203
    %p210 = scmp.eq.s32.totalorder %s20, 1
    %p211 = por %p209, %p210
    %p212 = scmp.ne.s32.totalorder %s203, %s204
    %p213 = scmp.eq.s32.totalorder %s20, 0
    %p214 = por %p212, %p213
    %p215 = scmp.ne.s32.totalorder %s203, %s204
    %p216 = scmp.eq.s32.totalorder %s21, 1
    %p217 = por %p215, %p216
    %p219 = scmp.ne.s32.totalorder %s204, %s218
    %p220 = scmp.eq.s32.totalorder %s21, 0
    %p221 = por %p219, %p220
    %s222 = ssub.s32 %s15, %s22
    %p223 = scmp.eq.s32.totalorder %s222, 0
    %s225 = sadd.s32 %s224, 1
    %s226 = scalar_select %p223, %s224, %s225
    %p229 = pneg %p223
    %p230 = scmp.eq.s32.totalorder %s15, 1
    %p231 = por %p229, %p230
    %p232 = scmp.ne.s32.totalorder %s224, %s227
    %p233 = scmp.eq.s32.totalorder %s15, 0
    %p234 = por %p232, %p233
    %p235 = scmp.ne.s32.totalorder %s224, %s227
    %p236 = scmp.eq.s32.totalorder %s20, 1
    %p237 = por %p235, %p236
    %p238 = scmp.ne.s32.totalorder %s227, %s228
    %p239 = scmp.eq.s32.totalorder %s20, 0
    %p240 = por %p238, %p239
    %p241 = scmp.ne.s32.totalorder %s227, %s228
    %p242 = scmp.eq.s32.totalorder %s21, 1
    %p243 = por %p241, %p242
    %p245 = scmp.ne.s32.totalorder %s228, %s244
    %p246 = scmp.eq.s32.totalorder %s21, 0
    %p247 = por %p245, %p246
    %p248 = scmp.le.s32.totalorder 1, %s15
    %p249 = scmp.lt.s32.totalorder %s15, 3
    %p250 = pnand %p248, %p249
    %p251 = pneg %p250
    // Predicated region
    $region9: #{decoder_block_forward.3} parent=5 // pred_check
      _
    $region10: #{decoder_block_forward.3} parent=5 // pred_check_branch
      %253 = sbr.rel (%p250) target = $region12
    $region11: #{decoder_block_forward.3} parent=5 // pred_region
      %s254 = ssub.s32 %s15, 1
      // Predicated region
      $region13: #{decoder_block_forward.3} parent=11 // pred_check
        %p255 = pneg %p88
      $region14: #{decoder_block_forward.3} parent=11 // pred_check_branch
        %257 = sbr.rel (%p255) target = $region16
      $region15: #{decoder_block_forward.3} parent=11 // pred_region
        _
      $region16: #{decoder_block_forward.3} parent=11 // pred_fallthru
        _
      // Predicated region
      $region17: #{decoder_block_forward.3} parent=11 // pred_check
        %p258 = pneg %p109
      $region18: #{decoder_block_forward.3} parent=11 // pred_check_branch
        %260 = sbr.rel (%p258) target = $region20
      $region19: #{decoder_block_forward.3} parent=11 // pred_region
        _
      $region20: #{decoder_block_forward.3} parent=11 // pred_fallthru
        _
      // Predicated region
      $region21: #{decoder_block_forward.3} parent=11 // pred_check
        %p261 = pneg %p130
      $region22: #{decoder_block_forward.3} parent=11 // pred_check_branch
        %263 = sbr.rel (%p261) target = $region24
      $region23: #{decoder_block_forward.3} parent=11 // pred_region
        _
      $region24: #{decoder_block_forward.3} parent=11 // pred_fallthru
        _
      // Predicated region
      $region25: #{decoder_block_forward.3} parent=11 // pred_check
        %p264 = pneg %p151
      $region26: #{decoder_block_forward.3} parent=11 // pred_check_branch
        %266 = sbr.rel (%p264) target = $region28
      $region27: #{decoder_block_forward.3} parent=11 // pred_region
        _
      $region28: #{decoder_block_forward.3} parent=11 // pred_fallthru
        _
      // Predicated region
      $region29: #{decoder_block_forward.3} parent=11 // pred_check
        %p267 = pneg %p172
      $region30: #{decoder_block_forward.3} parent=11 // pred_check_branch
        %269 = sbr.rel (%p267) target = $region32
      $region31: #{decoder_block_forward.3} parent=11 // pred_region
        _
      $region32: #{decoder_block_forward.3} parent=11 // pred_fallthru
        _
      // Predicated region
      $region33: #{decoder_block_forward.3} parent=11 // pred_check
        %p270 = pneg %p193
      $region34: #{decoder_block_forward.3} parent=11 // pred_check_branch
        %272 = sbr.rel (%p270) target = $region36
      $region35: #{decoder_block_forward.3} parent=11 // pred_region
        _
      $region36: #{decoder_block_forward.3} parent=11 // pred_fallthru
        _
      // Predicated region
      $region37: #{decoder_block_forward.3} parent=11 // pred_check
        %p273 = pneg %p214
      $region38: #{decoder_block_forward.3} parent=11 // pred_check_branch
        %275 = sbr.rel (%p273) target = $region40
      $region39: #{decoder_block_forward.3} parent=11 // pred_region
        _
      $region40: #{decoder_block_forward.3} parent=11 // pred_fallthru
        _
    $region12: #{decoder_block_forward.3} parent=5 // pred_fallthru
      _
    %p276 = scmp.lt.s32.totalorder %s15, 2
    // Predicated region
    $region41: #{decoder_block_forward.3} parent=5 // pred_check
      %p277 = pneg %p276
    $region42: #{decoder_block_forward.3} parent=5 // pred_check_branch
      %279 = sbr.rel (%p277) target = $region44
    $region43: #{decoder_block_forward.3} parent=5 // pred_region
      // Predicated region
      $region45: #{decoder_block_forward.3} parent=43 // pred_check
        %p280 = pneg %p35
      $region46: #{decoder_block_forward.3} parent=43 // pred_check_branch
        %282 = sbr.rel (%p280) target = $region48
      $region47: #{decoder_block_forward.3} parent=43 // pred_region
        %p283 = scmp.lt.s32.totalorder %s15, 1
        %s284 = scalar_select %p283, %s15, 1
        %s285 = smul.addr %s284, 32
        %s286 = smul.addr %s285, 8
        %s287 = scalar_lea.vmem %s0, %s286
      $region48: #{decoder_block_forward.3} parent=43 // pred_fallthru
        _
      // Predicated region
      $region49: #{decoder_block_forward.3} parent=43 // pred_check
        %p288 = pneg %p61
      $region50: #{decoder_block_forward.3} parent=43 // pred_check_branch
        %290 = sbr.rel (%p288) target = $region52
      $region51: #{decoder_block_forward.3} parent=43 // pred_region
        %p291 = scmp.lt.s32.totalorder %s15, 1
        %s292 = scalar_select %p291, %s15, 1
        %s293 = smul.addr %s292, 32
        %s294 = smul.addr %s293, 8
        %s295 = scalar_lea.vmem %s1, %s294
      $region52: #{decoder_block_forward.3} parent=43 // pred_fallthru
        _
    $region44: #{decoder_block_forward.3} parent=5 // pred_fallthru
      _
    %p296 = scmp.le.s32.totalorder 1, %s15
    %p297 = scmp.lt.s32.totalorder %s15, 3
    %p298 = pnand %p296, %p297
    %p299 = pneg %p298
    // Predicated region
    $region53: #{decoder_block_forward.3} parent=5 // pred_check
      _
    $region54: #{decoder_block_forward.3} parent=5 // pred_check_branch
      %301 = sbr.rel (%p298) target = $region56
    $region55: #{decoder_block_forward.3} parent=5 // pred_region
      %s302 = ssub.s32 %s15, 1
      %p303 = scmp.lt.s32.totalorder %s20, 1
      %s304 = scalar_select %p303, %s20, 1
      %s305 = smul.addr %s304, 32
      %s306 = smul.addr %s305, 8
      %s307 = scalar_lea.vmem %s0, %s306
      %p308 = pneg %p41
      %p309 = pneg %p38
      %p310 = scmp.lt.s32.totalorder %s20, 1
      %s311 = scalar_select %p310, %s20, 1
      %s312 = smul.addr %s311, 32
      %s313 = smul.addr %s312, 8
      %s314 = scalar_lea.vmem %s1, %s313
      %p315 = pneg %p67
      %p316 = pneg %p64
      %p317 = pneg %p88
      %p318 = pneg %p85
      %p319 = pneg %p109
      %p320 = pneg %p106
      %p321 = pneg %p130
      %p322 = pneg %p127
      %p323 = pneg %p151
      %p324 = pneg %p148
      %p325 = pneg %p172
      %p326 = pneg %p169
      %p327 = pneg %p193
      %p328 = pneg %p190
      %p329 = pneg %p214
      %p330 = pneg %p211
      %p331 = pneg %p240
      %p332 = pneg %p237
      %p333 = scmp.lt.s32.totalorder %s20, 1
      %s334 = scalar_select %p333, %s20, 1
      %s335 = smul.addr %s334, 32
      %s336 = smul.addr %s335, 8
      %s337 = scalar_lea.vmem %s9, %s336
      %p338 = scmp.lt.s32.totalorder %s20, 1
      %s339 = scalar_select %p338, %s20, 1
      %s340 = smul.addr %s339, 32
      %s341 = smul.addr %s340, 8
      %s342 = scalar_lea.vmem %s0, %s341
      %p343 = scmp.lt.s32.totalorder %s20, 1
      %s344 = scalar_select %p343, %s20, 1
      %s345 = smul.addr %s344, 32
      %s346 = smul.addr %s345, 8
      %s347 = scalar_lea.vmem %s1, %s346
      %p348 = scmp.lt.s32.totalorder %s20, 1
      %s349 = scalar_select %p348, %s20, 1
      %s350 = smul.addr %s349, 32
      %s351 = smul.addr %s350, 8
      %s352 = scalar_lea.vmem %s9, %s351
      %vm353 = vcmask 64512
      %354 = vst.msk [vmem:[#allocation2] sm:$0xff] %vm353, 0.0
      %355 = vst.msk [vmem:[#allocation2 + $0x8] sm:$0xff] %vm353, 0.0
      %356 = vst.msk [vmem:[#allocation2 + $0x10] sm:$0xff] %vm353, 0.0
      %357 = vst.msk [vmem:[#allocation2 + $0x118] sm:$0xff] %vm353, 0.0
      %358 = vst.msk [vmem:[#allocation2 + $0x120] sm:$0xff] %vm353, 0.0
      %359 = vst.msk [vmem:[#allocation2 + $0x128] sm:$0xff] %vm353, 0.0
      %v360 = vld [vmem:[%s342] sm:$0xff]
      %v361 = vld [vmem:[%s342 + $0x8] sm:$0xff]
      %v362 = vld [vmem:[%s342 + $0x10] sm:$0xff]
      %v363 = vld [vmem:[%s342 + $0x18] sm:$0xff]
      %v364 = vld [vmem:[%s342 + $0x20] sm:$0xff]
      %v365 = vld [vmem:[%s342 + $0x28] sm:$0xff]
      %v366 = vld [vmem:[%s342 + $0x30] sm:$0xff]
      %v367 = vld [vmem:[%s342 + $0x38] sm:$0xff]
      %v368 = vld [vmem:[%s342 + $0x40] sm:$0xff]
      %v369 = vld [vmem:[%s342 + $0x48] sm:$0xff]
      %v370 = vld [vmem:[%s342 + $0x50] sm:$0xff]
      %v371 = vld [vmem:[%s342 + $0x58] sm:$0xff]
      %v372 = vld [vmem:[%s342 + $0x60] sm:$0xff]
      %v373 = vld [vmem:[%s342 + $0x68] sm:$0xff]
      %v374 = vld [vmem:[%s342 + $0x70] sm:$0xff]
      %v375 = vld [vmem:[%s342 + $0x78] sm:$0xff]
      %v376 = vld [vmem:[%s342 + $0x80] sm:$0xff]
      %v377 = vld [vmem:[%s342 + $0x88] sm:$0xff]
      %v378 = vld [vmem:[%s342 + $0x90] sm:$0xff]
      %v379 = vld [vmem:[%s342 + $0x98] sm:$0xff]
      %v380 = vld [vmem:[%s342 + $0xa0] sm:$0xff]
      %v381 = vld [vmem:[%s342 + $0xa8] sm:$0xff]
      %v382 = vld [vmem:[%s342 + $0xb0] sm:$0xff]
      %v383 = vld [vmem:[%s342 + $0xb8] sm:$0xff]
      %v384 = vld [vmem:[%s342 + $0xc0] sm:$0xff]
      %v385 = vld [vmem:[%s342 + $0xc8] sm:$0xff]
      %v386 = vld [vmem:[%s342 + $0xd0] sm:$0xff]
      %v387 = vld [vmem:[%s342 + $0xd8] sm:$0xff]
      %v388 = vld [vmem:[%s342 + $0xe0] sm:$0xff]
      %v389 = vld [vmem:[%s342 + $0xe8] sm:$0xff]
      %v390 = vld [vmem:[%s342 + $0xf0] sm:$0xff]
      %v391 = vld [vmem:[%s342 + $0xf8] sm:$0xff]
      %vm392 = vcmask 31744
      %393 = vst.msk [vmem:[#allocation2 + $0x18] sm:$0xff] %vm392, %v360
      %394 = vst.msk [vmem:[#allocation2 + $0x20] sm:$0xff] %vm392, %v361
      %395 = vst.msk [vmem:[#allocation2 + $0x28] sm:$0xff] %vm392, %v362
      %396 = vst.msk [vmem:[#allocation2 + $0x30] sm:$0xff] %vm392, %v363
      %397 = vst.msk [vmem:[#allocation2 + $0x38] sm:$0xff] %vm392, %v364
      %398 = vst.msk [vmem:[#allocation2 + $0x40] sm:$0xff] %vm392, %v365
      %399 = vst.msk [vmem:[#allocation2 + $0x48] sm:$0xff] %vm392, %v366
      %400 = vst.msk [vmem:[#allocation2 + $0x50] sm:$0xff] %vm392, %v367
      %401 = vst.msk [vmem:[#allocation2 + $0x58] sm:$0xff] %vm392, %v368
      %402 = vst.msk [vmem:[#allocation2 + $0x60] sm:$0xff] %vm392, %v369
      %403 = vst.msk [vmem:[#allocation2 + $0x68] sm:$0xff] %vm392, %v370
      %404 = vst.msk [vmem:[#allocation2 + $0x70] sm:$0xff] %vm392, %v371
      %405 = vst.msk [vmem:[#allocation2 + $0x78] sm:$0xff] %vm392, %v372
      %406 = vst.msk [vmem:[#allocation2 + $0x80] sm:$0xff] %vm392, %v373
      %407 = vst.msk [vmem:[#allocation2 + $0x88] sm:$0xff] %vm392, %v374
      %408 = vst.msk [vmem:[#allocation2 + $0x90] sm:$0xff] %vm392, %v375
      %409 = vst.msk [vmem:[#allocation2 + $0x98] sm:$0xff] %vm392, %v376
      %410 = vst.msk [vmem:[#allocation2 + $0xa0] sm:$0xff] %vm392, %v377
      %411 = vst.msk [vmem:[#allocation2 + $0xa8] sm:$0xff] %vm392, %v378
      %412 = vst.msk [vmem:[#allocation2 + $0xb0] sm:$0xff] %vm392, %v379
      %413 = vst.msk [vmem:[#allocation2 + $0xb8] sm:$0xff] %vm392, %v380
      %414 = vst.msk [vmem:[#allocation2 + $0xc0] sm:$0xff] %vm392, %v381
      %415 = vst.msk [vmem:[#allocation2 + $0xc8] sm:$0xff] %vm392, %v382
      %416 = vst.msk [vmem:[#allocation2 + $0xd0] sm:$0xff] %vm392, %v383
      %417 = vst.msk [vmem:[#allocation2 + $0xd8] sm:$0xff] %vm392, %v384
      %418 = vst.msk [vmem:[#allocation2 + $0xe0] sm:$0xff] %vm392, %v385
      %419 = vst.msk [vmem:[#allocation2 + $0xe8] sm:$0xff] %vm392, %v386
      %420 = vst.msk [vmem:[#allocation2 + $0xf0] sm:$0xff] %vm392, %v387
      %421 = vst.msk [vmem:[#allocation2 + $0xf8] sm:$0xff] %vm392, %v388
      %422 = vst.msk [vmem:[#allocation2 + $0x100] sm:$0xff] %vm392, %v389
      %423 = vst.msk [vmem:[#allocation2 + $0x108] sm:$0xff] %vm392, %v390
      %424 = vst.msk [vmem:[#allocation2 + $0x110] sm:$0xff] %vm392, %v391
      %v425 = vld [vmem:[%s347] sm:$0xff]
      %v426 = vld [vmem:[%s347 + $0x8] sm:$0xff]
      %v427 = vld [vmem:[%s347 + $0x10] sm:$0xff]
      %v428 = vld [vmem:[%s347 + $0x18] sm:$0xff]
      %v429 = vld [vmem:[%s347 + $0x20] sm:$0xff]
      %v430 = vld [vmem:[%s347 + $0x28] sm:$0xff]
      %v431 = vld [vmem:[%s347 + $0x30] sm:$0xff]
      %v432 = vld [vmem:[%s347 + $0x38] sm:$0xff]
      %v433 = vld [vmem:[%s347 + $0x40] sm:$0xff]
      %v434 = vld [vmem:[%s347 + $0x48] sm:$0xff]
      %v435 = vld [vmem:[%s347 + $0x50] sm:$0xff]
      %v436 = vld [vmem:[%s347 + $0x58] sm:$0xff]
      %v437 = vld [vmem:[%s347 + $0x60] sm:$0xff]
      %v438 = vld [vmem:[%s347 + $0x68] sm:$0xff]
      %v439 = vld [vmem:[%s347 + $0x70] sm:$0xff]
      %v440 = vld [vmem:[%s347 + $0x78] sm:$0xff]
      %v441 = vld [vmem:[%s347 + $0x80] sm:$0xff]
      %v442 = vld [vmem:[%s347 + $0x88] sm:$0xff]
      %v443 = vld [vmem:[%s347 + $0x90] sm:$0xff]
      %v444 = vld [vmem:[%s347 + $0x98] sm:$0xff]
      %v445 = vld [vmem:[%s347 + $0xa0] sm:$0xff]
      %v446 = vld [vmem:[%s347 + $0xa8] sm:$0xff]
      %v447 = vld [vmem:[%s347 + $0xb0] sm:$0xff]
      %v448 = vld [vmem:[%s347 + $0xb8] sm:$0xff]
      %v449 = vld [vmem:[%s347 + $0xc0] sm:$0xff]
      %v450 = vld [vmem:[%s347 + $0xc8] sm:$0xff]
      %v451 = vld [vmem:[%s347 + $0xd0] sm:$0xff]
      %v452 = vld [vmem:[%s347 + $0xd8] sm:$0xff]
      %v453 = vld [vmem:[%s347 + $0xe0] sm:$0xff]
      %v454 = vld [vmem:[%s347 + $0xe8] sm:$0xff]
      %v455 = vld [vmem:[%s347 + $0xf0] sm:$0xff]
      %v456 = vld [vmem:[%s347 + $0xf8] sm:$0xff]
      %489 = vrot.lane.b32.xlu0 %v425, 4
      %v490 = vpop.permute.xlu0 %489
      %491 = vrot.lane.b32.xlu0 %v426, 4
      %v492 = vpop.permute.xlu0 %491
      %493 = vrot.lane.b32.xlu0 %v427, 4
      %v494 = vpop.permute.xlu0 %493
      %495 = vrot.lane.b32.xlu0 %v428, 4
      %v496 = vpop.permute.xlu0 %495
      %497 = vrot.lane.b32.xlu0 %v429, 4
      %v498 = vpop.permute.xlu0 %497
      %499 = vrot.lane.b32.xlu0 %v430, 4
      %v500 = vpop.permute.xlu0 %499
      %501 = vrot.lane.b32.xlu0 %v431, 4
      %v502 = vpop.permute.xlu0 %501
      %503 = vrot.lane.b32.xlu0 %v432, 4
      %v504 = vpop.permute.xlu0 %503
      %505 = vrot.lane.b32.xlu0 %v433, 4
      %v506 = vpop.permute.xlu0 %505
      %507 = vrot.lane.b32.xlu0 %v434, 4
      %v508 = vpop.permute.xlu0 %507
      %509 = vrot.lane.b32.xlu0 %v435, 4
      %v510 = vpop.permute.xlu0 %509
      %511 = vrot.lane.b32.xlu0 %v436, 4
      %v512 = vpop.permute.xlu0 %511
      %513 = vrot.lane.b32.xlu0 %v437, 4
      %v514 = vpop.permute.xlu0 %513
      %515 = vrot.lane.b32.xlu0 %v438, 4
      %v516 = vpop.permute.xlu0 %515
      %517 = vrot.lane.b32.xlu0 %v439, 4
      %v518 = vpop.permute.xlu0 %517
      %519 = vrot.lane.b32.xlu0 %v440, 4
      %v520 = vpop.permute.xlu0 %519
      %521 = vrot.lane.b32.xlu0 %v441, 4
      %v522 = vpop.permute.xlu0 %521
      %523 = vrot.lane.b32.xlu0 %v442, 4
      %v524 = vpop.permute.xlu0 %523
      %525 = vrot.lane.b32.xlu0 %v443, 4
      %v526 = vpop.permute.xlu0 %525
      %527 = vrot.lane.b32.xlu0 %v444, 4
      %v528 = vpop.permute.xlu0 %527
      %529 = vrot.lane.b32.xlu0 %v445, 4
      %v530 = vpop.permute.xlu0 %529
      %531 = vrot.lane.b32.xlu0 %v446, 4
      %v532 = vpop.permute.xlu0 %531
      %533 = vrot.lane.b32.xlu0 %v447, 4
      %v534 = vpop.permute.xlu0 %533
      %535 = vrot.lane.b32.xlu0 %v448, 4
      %v536 = vpop.permute.xlu0 %535
      %537 = vrot.lane.b32.xlu0 %v449, 4
      %v538 = vpop.permute.xlu0 %537
      %539 = vrot.lane.b32.xlu0 %v450, 4
      %v540 = vpop.permute.xlu0 %539
      %541 = vrot.lane.b32.xlu0 %v451, 4
      %v542 = vpop.permute.xlu0 %541
      %543 = vrot.lane.b32.xlu0 %v452, 4
      %v544 = vpop.permute.xlu0 %543
      %545 = vrot.lane.b32.xlu0 %v453, 4
      %v546 = vpop.permute.xlu0 %545
      %547 = vrot.lane.b32.xlu0 %v454, 4
      %v548 = vpop.permute.xlu0 %547
      %549 = vrot.lane.b32.xlu0 %v455, 4
      %v550 = vpop.permute.xlu0 %549
      %551 = vrot.lane.b32.xlu0 %v456, 4
      %v552 = vpop.permute.xlu0 %551
      %vm585 = vcmask 64544
      %586 = vst.msk [vmem:[#allocation2 + $0x18] sm:$0xff] %vm585, %v490
      %587 = vst.msk [vmem:[#allocation2 + $0x20] sm:$0xff] %vm585, %v492
      %588 = vst.msk [vmem:[#allocation2 + $0x28] sm:$0xff] %vm585, %v494
      %589 = vst.msk [vmem:[#allocation2 + $0x30] sm:$0xff] %vm585, %v496
      %590 = vst.msk [vmem:[#allocation2 + $0x38] sm:$0xff] %vm585, %v498
      %591 = vst.msk [vmem:[#allocation2 + $0x40] sm:$0xff] %vm585, %v500
      %592 = vst.msk [vmem:[#allocation2 + $0x48] sm:$0xff] %vm585, %v502
      %593 = vst.msk [vmem:[#allocation2 + $0x50] sm:$0xff] %vm585, %v504
      %594 = vst.msk [vmem:[#allocation2 + $0x58] sm:$0xff] %vm585, %v506
      %595 = vst.msk [vmem:[#allocation2 + $0x60] sm:$0xff] %vm585, %v508
      %596 = vst.msk [vmem:[#allocation2 + $0x68] sm:$0xff] %vm585, %v510
      %597 = vst.msk [vmem:[#allocation2 + $0x70] sm:$0xff] %vm585, %v512
      %598 = vst.msk [vmem:[#allocation2 + $0x78] sm:$0xff] %vm585, %v514
      %599 = vst.msk [vmem:[#allocation2 + $0x80] sm:$0xff] %vm585, %v516
      %600 = vst.msk [vmem:[#allocation2 + $0x88] sm:$0xff] %vm585, %v518
      %601 = vst.msk [vmem:[#allocation2 + $0x90] sm:$0xff] %vm585, %v520
      %602 = vst.msk [vmem:[#allocation2 + $0x98] sm:$0xff] %vm585, %v522
      %603 = vst.msk [vmem:[#allocation2 + $0xa0] sm:$0xff] %vm585, %v524
      %604 = vst.msk [vmem:[#allocation2 + $0xa8] sm:$0xff] %vm585, %v526
      %605 = vst.msk [vmem:[#allocation2 + $0xb0] sm:$0xff] %vm585, %v528
      %606 = vst.msk [vmem:[#allocation2 + $0xb8] sm:$0xff] %vm585, %v530
      %607 = vst.msk [vmem:[#allocation2 + $0xc0] sm:$0xff] %vm585, %v532
      %608 = vst.msk [vmem:[#allocation2 + $0xc8] sm:$0xff] %vm585, %v534
      %609 = vst.msk [vmem:[#allocation2 + $0xd0] sm:$0xff] %vm585, %v536
      %610 = vst.msk [vmem:[#allocation2 + $0xd8] sm:$0xff] %vm585, %v538
      %611 = vst.msk [vmem:[#allocation2 + $0xe0] sm:$0xff] %vm585, %v540
      %612 = vst.msk [vmem:[#allocation2 + $0xe8] sm:$0xff] %vm585, %v542
      %613 = vst.msk [vmem:[#allocation2 + $0xf0] sm:$0xff] %vm585, %v544
      %614 = vst.msk [vmem:[#allocation2 + $0xf8] sm:$0xff] %vm585, %v546
      %615 = vst.msk [vmem:[#allocation2 + $0x100] sm:$0xff] %vm585, %v548
      %616 = vst.msk [vmem:[#allocation2 + $0x108] sm:$0xff] %vm585, %v550
      %617 = vst.msk [vmem:[#allocation2 + $0x110] sm:$0xff] %vm585, %v552
      %v618 = vld [vmem:[#allocation2 + $0x7] sm:$0xff]
      %v619 = vld [vmem:[#allocation2 + $0xf] sm:$0xff]
      %v620 = vld [vmem:[#allocation2 + $0x17] sm:$0xff]
      %v621 = vld [vmem:[#allocation2 + $0x1f] sm:$0xff]
      %v622 = vld [vmem:[#allocation2 + $0x27] sm:$0xff]
      %v623 = vld [vmem:[#allocation2 + $0x2f] sm:$0xff]
      %v624 = vld [vmem:[#allocation2 + $0x37] sm:$0xff]
      %v625 = vld [vmem:[#allocation2 + $0x3f] sm:$0xff]
      %v626 = vld [vmem:[#allocation2 + $0x47] sm:$0xff]
      %v627 = vld [vmem:[#allocation2 + $0x4f] sm:$0xff]
      %v628 = vld [vmem:[#allocation2 + $0x57] sm:$0xff]
      %v629 = vld [vmem:[#allocation2 + $0x5f] sm:$0xff]
      %v630 = vld [vmem:[#allocation2 + $0x67] sm:$0xff]
      %v631 = vld [vmem:[#allocation2 + $0x6f] sm:$0xff]
      %v632 = vld [vmem:[#allocation2 + $0x77] sm:$0xff]
      %v633 = vld [vmem:[#allocation2 + $0x7f] sm:$0xff]
      %v634 = vld [vmem:[#allocation2 + $0x87] sm:$0xff]
      %v635 = vld [vmem:[#allocation2 + $0x8f] sm:$0xff]
      %v636 = vld [vmem:[#allocation2 + $0x97] sm:$0xff]
      %v637 = vld [vmem:[#allocation2 + $0x9f] sm:$0xff]
      %v638 = vld [vmem:[#allocation2 + $0xa7] sm:$0xff]
      %v639 = vld [vmem:[#allocation2 + $0xaf] sm:$0xff]
      %v640 = vld [vmem:[#allocation2 + $0xb7] sm:$0xff]
      %v641 = vld [vmem:[#allocation2 + $0xbf] sm:$0xff]
      %v642 = vld [vmem:[#allocation2 + $0xc7] sm:$0xff]
      %v643 = vld [vmem:[#allocation2 + $0xcf] sm:$0xff]
      %v644 = vld [vmem:[#allocation2 + $0xd7] sm:$0xff]
      %v645 = vld [vmem:[#allocation2 + $0xdf] sm:$0xff]
      %v646 = vld [vmem:[#allocation2 + $0xe7] sm:$0xff]
      %v647 = vld [vmem:[#allocation2 + $0xef] sm:$0xff]
      %v648 = vld [vmem:[#allocation2 + $0xf7] sm:$0xff]
      %v649 = vld [vmem:[#allocation2 + $0xff] sm:$0xff]
      %v650 = vld [vmem:[%s2] sm:$0xff]
      %v651 = vld [vmem:[%s2 + $0x8] sm:$0xff]
      %v652 = vld [vmem:[%s2 + $0x10] sm:$0xff]
      %v653 = vld [vmem:[%s2 + $0x18] sm:$0xff]
      %v654 = vld [vmem:[%s2 + $0x20] sm:$0xff]
      %v655 = vld [vmem:[%s2 + $0x28] sm:$0xff]
      %v656 = vld [vmem:[%s2 + $0x30] sm:$0xff]
      %v657 = vld [vmem:[%s2 + $0x38] sm:$0xff]
      %v658 = vld [vmem:[%s2 + $0x40] sm:$0xff]
      %v659 = vld [vmem:[%s2 + $0x48] sm:$0xff]
      %v660 = vld [vmem:[%s2 + $0x50] sm:$0xff]
      %v661 = vld [vmem:[%s2 + $0x58] sm:$0xff]
      %v662 = vld [vmem:[%s2 + $0x60] sm:$0xff]
      %v663 = vld [vmem:[%s2 + $0x68] sm:$0xff]
      %v664 = vld [vmem:[%s2 + $0x70] sm:$0xff]
      %v665 = vld [vmem:[%s2 + $0x78] sm:$0xff]
      %v666 = vld [vmem:[%s2 + $0x80] sm:$0xff]
      %v667 = vld [vmem:[%s2 + $0x88] sm:$0xff]
      %v668 = vld [vmem:[%s2 + $0x90] sm:$0xff]
      %v669 = vld [vmem:[%s2 + $0x98] sm:$0xff]
      %v670 = vld [vmem:[%s2 + $0xa0] sm:$0xff]
      %v671 = vld [vmem:[%s2 + $0xa8] sm:$0xff]
      %v672 = vld [vmem:[%s2 + $0xb0] sm:$0xff]
      %v673 = vld [vmem:[%s2 + $0xb8] sm:$0xff]
      %v674 = vld [vmem:[%s2 + $0xc0] sm:$0xff]
      %v675 = vld [vmem:[%s2 + $0xc8] sm:$0xff]
      %v676 = vld [vmem:[%s2 + $0xd0] sm:$0xff]
      %v677 = vld [vmem:[%s2 + $0xd8] sm:$0xff]
      %v678 = vld [vmem:[%s2 + $0xe0] sm:$0xff]
      %v679 = vld [vmem:[%s2 + $0xe8] sm:$0xff]
      %v680 = vld [vmem:[%s2 + $0xf0] sm:$0xff]
      %v681 = vld [vmem:[%s2 + $0xf8] sm:$0xff]
      %683 = vset.pattern.permute.xlu0 0
      %684 = vperm.xlu0 %683, %v650
      %v685 = vpop.permute.xlu0 %684
      %688 = vset.pattern.permute.xlu0 0
      %689 = vperm.xlu0 %688, %v651
      %v690 = vpop.permute.xlu0 %689
      %693 = vset.pattern.permute.xlu0 0
      %694 = vperm.xlu0 %693, %v652
      %v695 = vpop.permute.xlu0 %694
      %698 = vset.pattern.permute.xlu0 0
      %699 = vperm.xlu0 %698, %v653
      %v700 = vpop.permute.xlu0 %699
      %703 = vset.pattern.permute.xlu0 0
      %704 = vperm.xlu0 %703, %v654
      %v705 = vpop.permute.xlu0 %704
      %708 = vset.pattern.permute.xlu0 0
      %709 = vperm.xlu0 %708, %v655
      %v710 = vpop.permute.xlu0 %709
      %713 = vset.pattern.permute.xlu0 0
      %714 = vperm.xlu0 %713, %v656
      %v715 = vpop.permute.xlu0 %714
      %718 = vset.pattern.permute.xlu0 0
      %719 = vperm.xlu0 %718, %v657
      %v720 = vpop.permute.xlu0 %719
      %723 = vset.pattern.permute.xlu0 0
      %724 = vperm.xlu0 %723, %v658
      %v725 = vpop.permute.xlu0 %724
      %728 = vset.pattern.permute.xlu0 0
      %729 = vperm.xlu0 %728, %v659
      %v730 = vpop.permute.xlu0 %729
      %733 = vset.pattern.permute.xlu0 0
      %734 = vperm.xlu0 %733, %v660
      %v735 = vpop.permute.xlu0 %734
      %738 = vset.pattern.permute.xlu0 0
      %739 = vperm.xlu0 %738, %v661
      %v740 = vpop.permute.xlu0 %739
      %743 = vset.pattern.permute.xlu0 0
      %744 = vperm.xlu0 %743, %v662
      %v745 = vpop.permute.xlu0 %744
      %748 = vset.pattern.permute.xlu0 0
      %749 = vperm.xlu0 %748, %v663
      %v750 = vpop.permute.xlu0 %749
      %753 = vset.pattern.permute.xlu0 0
      %754 = vperm.xlu0 %753, %v664
      %v755 = vpop.permute.xlu0 %754
      %758 = vset.pattern.permute.xlu0 0
      %759 = vperm.xlu0 %758, %v665
      %v760 = vpop.permute.xlu0 %759
      %763 = vset.pattern.permute.xlu0 0
      %764 = vperm.xlu0 %763, %v666
      %v765 = vpop.permute.xlu0 %764
      %768 = vset.pattern.permute.xlu0 0
      %769 = vperm.xlu0 %768, %v667
      %v770 = vpop.permute.xlu0 %769
      %773 = vset.pattern.permute.xlu0 0
      %774 = vperm.xlu0 %773, %v668
      %v775 = vpop.permute.xlu0 %774
      %778 = vset.pattern.permute.xlu0 0
      %779 = vperm.xlu0 %778, %v669
      %v780 = vpop.permute.xlu0 %779
      %783 = vset.pattern.permute.xlu0 0
      %784 = vperm.xlu0 %783, %v670
      %v785 = vpop.permute.xlu0 %784
      %788 = vset.pattern.permute.xlu0 0
      %789 = vperm.xlu0 %788, %v671
      %v790 = vpop.permute.xlu0 %789
      %793 = vset.pattern.permute.xlu0 0
      %794 = vperm.xlu0 %793, %v672
      %v795 = vpop.permute.xlu0 %794
      %798 = vset.pattern.permute.xlu0 0
      %799 = vperm.xlu0 %798, %v673
      %v800 = vpop.permute.xlu0 %799
      %803 = vset.pattern.permute.xlu0 0
      %804 = vperm.xlu0 %803, %v674
      %v805 = vpop.permute.xlu0 %804
      %808 = vset.pattern.permute.xlu0 0
      %809 = vperm.xlu0 %808, %v675
      %v810 = vpop.permute.xlu0 %809
      %813 = vset.pattern.permute.xlu0 0
      %814 = vperm.xlu0 %813, %v676
      %v815 = vpop.permute.xlu0 %814
      %818 = vset.pattern.permute.xlu0 0
      %819 = vperm.xlu0 %818, %v677
      %v820 = vpop.permute.xlu0 %819
      %823 = vset.pattern.permute.xlu0 0
      %824 = vperm.xlu0 %823, %v678
      %v825 = vpop.permute.xlu0 %824
      %828 = vset.pattern.permute.xlu0 0
      %829 = vperm.xlu0 %828, %v679
      %v830 = vpop.permute.xlu0 %829
      %833 = vset.pattern.permute.xlu0 0
      %834 = vperm.xlu0 %833, %v680
      %v835 = vpop.permute.xlu0 %834
      %838 = vset.pattern.permute.xlu0 0
      %839 = vperm.xlu0 %838, %v681
      %v840 = vpop.permute.xlu0 %839
      %v842 = vmul.f32 %v618, %v685
      %v843 = vmul.f32 %v619, %v690
      %v844 = vmul.f32 %v620, %v695
      %v845 = vmul.f32 %v621, %v700
      %v846 = vmul.f32 %v622, %v705
      %v847 = vmul.f32 %v623, %v710
      %v848 = vmul.f32 %v624, %v715
      %v849 = vmul.f32 %v625, %v720
      %v850 = vmul.f32 %v626, %v725
      %v851 = vmul.f32 %v627, %v730
      %v852 = vmul.f32 %v628, %v735
      %v853 = vmul.f32 %v629, %v740
      %v854 = vmul.f32 %v630, %v745
      %v855 = vmul.f32 %v631, %v750
      %v856 = vmul.f32 %v632, %v755
      %v857 = vmul.f32 %v633, %v760
      %v858 = vmul.f32 %v634, %v765
      %v859 = vmul.f32 %v635, %v770
      %v860 = vmul.f32 %v636, %v775
      %v861 = vmul.f32 %v637, %v780
      %v862 = vmul.f32 %v638, %v785
      %v863 = vmul.f32 %v639, %v790
      %v864 = vmul.f32 %v640, %v795
      %v865 = vmul.f32 %v641, %v800
      %v866 = vmul.f32 %v642, %v805
      %v867 = vmul.f32 %v643, %v810
      %v868 = vmul.f32 %v644, %v815
      %v869 = vmul.f32 %v645, %v820
      %v870 = vmul.f32 %v646, %v825
      %v871 = vmul.f32 %v647, %v830
      %v872 = vmul.f32 %v648, %v835
      %v873 = vmul.f32 %v649, %v840
      %v874 = vld [vmem:[%s3] sm:$0xff]
      %v875 = vld [vmem:[#allocation2 + $0x8] sm:$0xff]
      %v876 = vld [vmem:[#allocation2 + $0x10] sm:$0xff]
      %v877 = vld [vmem:[#allocation2 + $0x18] sm:$0xff]
      %v878 = vld [vmem:[#allocation2 + $0x20] sm:$0xff]
      %v879 = vld [vmem:[#allocation2 + $0x28] sm:$0xff]
      %v880 = vld [vmem:[#allocation2 + $0x30] sm:$0xff]
      %v881 = vld [vmem:[#allocation2 + $0x38] sm:$0xff]
      %v882 = vld [vmem:[#allocation2 + $0x40] sm:$0xff]
      %v883 = vld [vmem:[#allocation2 + $0x48] sm:$0xff]
      %v884 = vld [vmem:[#allocation2 + $0x50] sm:$0xff]
      %v885 = vld [vmem:[#allocation2 + $0x58] sm:$0xff]
      %v886 = vld [vmem:[#allocation2 + $0x60] sm:$0xff]
      %v887 = vld [vmem:[#allocation2 + $0x68] sm:$0xff]
      %v888 = vld [vmem:[#allocation2 + $0x70] sm:$0xff]
      %v889 = vld [vmem:[#allocation2 + $0x78] sm:$0xff]
      %v890 = vld [vmem:[#allocation2 + $0x80] sm:$0xff]
      %v891 = vld [vmem:[#allocation2 + $0x88] sm:$0xff]
      %v892 = vld [vmem:[#allocation2 + $0x90] sm:$0xff]
      %v893 = vld [vmem:[#allocation2 + $0x98] sm:$0xff]
      %v894 = vld [vmem:[#allocation2 + $0xa0] sm:$0xff]
      %v895 = vld [vmem:[#allocation2 + $0xa8] sm:$0xff]
      %v896 = vld [vmem:[#allocation2 + $0xb0] sm:$0xff]
      %v897 = vld [vmem:[#allocation2 + $0xb8] sm:$0xff]
      %v898 = vld [vmem:[#allocation2 + $0xc0] sm:$0xff]
      %v899 = vld [vmem:[#allocation2 + $0xc8] sm:$0xff]
      %v900 = vld [vmem:[#allocation2 + $0xd0] sm:$0xff]
      %v901 = vld [vmem:[#allocation2 + $0xd8] sm:$0xff]
      %v902 = vld [vmem:[#allocation2 + $0xe0] sm:$0xff]
      %v903 = vld [vmem:[#allocation2 + $0xe8] sm:$0xff]
      %v904 = vld [vmem:[#allocation2 + $0xf0] sm:$0xff]
      %v905 = vld [vmem:[#allocation2 + $0xf8] sm:$0xff]
      %v906 = vld [vmem:[#allocation2 + $0x100] sm:$0xff]
      %s907 = scalar_lea.vmem %s2, 256
      %v908 = vld [vmem:[%s907] sm:$0xff]
      %v909 = vld [vmem:[%s907 + $0x8] sm:$0xff]
      %v910 = vld [vmem:[%s907 + $0x10] sm:$0xff]
      %v911 = vld [vmem:[%s907 + $0x18] sm:$0xff]
      %v912 = vld [vmem:[%s907 + $0x20] sm:$0xff]
      %v913 = vld [vmem:[%s907 + $0x28] sm:$0xff]
      %v914 = vld [vmem:[%s907 + $0x30] sm:$0xff]
      %v915 = vld [vmem:[%s907 + $0x38] sm:$0xff]
      %v916 = vld [vmem:[%s907 + $0x40] sm:$0xff]
      %v917 = vld [vmem:[%s907 + $0x48] sm:$0xff]
      %v918 = vld [vmem:[%s907 + $0x50] sm:$0xff]
      %v919 = vld [vmem:[%s907 + $0x58] sm:$0xff]
      %v920 = vld [vmem:[%s907 + $0x60] sm:$0xff]
      %v921 = vld [vmem:[%s907 + $0x68] sm:$0xff]
      %v922 = vld [vmem:[%s907 + $0x70] sm:$0xff]
      %v923 = vld [vmem:[%s907 + $0x78] sm:$0xff]
      %v924 = vld [vmem:[%s907 + $0x80] sm:$0xff]
      %v925 = vld [vmem:[%s907 + $0x88] sm:$0xff]
      %v926 = vld [vmem:[%s907 + $0x90] sm:$0xff]
      %v927 = vld [vmem:[%s907 + $0x98] sm:$0xff]
      %v928 = vld [vmem:[%s907 + $0xa0] sm:$0xff]
      %v929 = vld [vmem:[%s907 + $0xa8] sm:$0xff]
      %v930 = vld [vmem:[%s907 + $0xb0] sm:$0xff]
      %v931 = vld [vmem:[%s907 + $0xb8] sm:$0xff]
      %v932 = vld [vmem:[%s907 + $0xc0] sm:$0xff]
      %v933 = vld [vmem:[%s907 + $0xc8] sm:$0xff]
      %v934 = vld [vmem:[%s907 + $0xd0] sm:$0xff]
      %v935 = vld [vmem:[%s907 + $0xd8] sm:$0xff]
      %v936 = vld [vmem:[%s907 + $0xe0] sm:$0xff]
      %v937 = vld [vmem:[%s907 + $0xe8] sm:$0xff]
      %v938 = vld [vmem:[%s907 + $0xf0] sm:$0xff]
      %v939 = vld [vmem:[%s907 + $0xf8] sm:$0xff]
      %941 = vset.pattern.permute.xlu0 0
      %942 = vperm.xlu0 %941, %v908
      %v943 = vpop.permute.xlu0 %942
      %946 = vset.pattern.permute.xlu0 0
      %947 = vperm.xlu0 %946, %v909
      %v948 = vpop.permute.xlu0 %947
      %951 = vset.pattern.permute.xlu0 0
      %952 = vperm.xlu0 %951, %v910
      %v953 = vpop.permute.xlu0 %952
      %956 = vset.pattern.permute.xlu0 0
      %957 = vperm.xlu0 %956, %v911
      %v958 = vpop.permute.xlu0 %957
      %961 = vset.pattern.permute.xlu0 0
      %962 = vperm.xlu0 %961, %v912
      %v963 = vpop.permute.xlu0 %962
      %966 = vset.pattern.permute.xlu0 0
      %967 = vperm.xlu0 %966, %v913
      %v968 = vpop.permute.xlu0 %967
      %971 = vset.pattern.permute.xlu0 0
      %972 = vperm.xlu0 %971, %v914
      %v973 = vpop.permute.xlu0 %972
      %976 = vset.pattern.permute.xlu0 0
      %977 = vperm.xlu0 %976, %v915
      %v978 = vpop.permute.xlu0 %977
      %981 = vset.pattern.permute.xlu0 0
      %982 = vperm.xlu0 %981, %v916
      %v983 = vpop.permute.xlu0 %982
      %986 = vset.pattern.permute.xlu0 0
      %987 = vperm.xlu0 %986, %v917
      %v988 = vpop.permute.xlu0 %987
      %991 = vset.pattern.permute.xlu0 0
      %992 = vperm.xlu0 %991, %v918
      %v993 = vpop.permute.xlu0 %992
      %996 = vset.pattern.permute.xlu0 0
      %997 = vperm.xlu0 %996, %v919
      %v998 = vpop.permute.xlu0 %997
      %1001 = vset.pattern.permute.xlu0 0
      %1002 = vperm.xlu0 %1001, %v920
      %v1003 = vpop.permute.xlu0 %1002
      %1006 = vset.pattern.permute.xlu0 0
      %1007 = vperm.xlu0 %1006, %v921
      %v1008 = vpop.permute.xlu0 %1007
      %1011 = vset.pattern.permute.xlu0 0
      %1012 = vperm.xlu0 %1011, %v922
      %v1013 = vpop.permute.xlu0 %1012
      %1016 = vset.pattern.permute.xlu0 0
      %1017 = vperm.xlu0 %1016, %v923
      %v1018 = vpop.permute.xlu0 %1017
      %1021 = vset.pattern.permute.xlu0 0
      %1022 = vperm.xlu0 %1021, %v924
      %v1023 = vpop.permute.xlu0 %1022
      %1026 = vset.pattern.permute.xlu0 0
      %1027 = vperm.xlu0 %1026, %v925
      %v1028 = vpop.permute.xlu0 %1027
      %1031 = vset.pattern.permute.xlu0 0
      %1032 = vperm.xlu0 %1031, %v926
      %v1033 = vpop.permute.xlu0 %1032
      %1036 = vset.pattern.permute.xlu0 0
      %1037 = vperm.xlu0 %1036, %v927
      %v1038 = vpop.permute.xlu0 %1037
      %1041 = vset.pattern.permute.xlu0 0
      %1042 = vperm.xlu0 %1041, %v928
      %v1043 = vpop.permute.xlu0 %1042
      %1046 = vset.pattern.permute.xlu0 0
      %1047 = vperm.xlu0 %1046, %v929
      %v1048 = vpop.permute.xlu0 %1047
      %1051 = vset.pattern.permute.xlu0 0
      %1052 = vperm.xlu0 %1051, %v930
      %v1053 = vpop.permute.xlu0 %1052
      %1056 = vset.pattern.permute.xlu0 0
      %1057 = vperm.xlu0 %1056, %v931
      %v1058 = vpop.permute.xlu0 %1057
      %1061 = vset.pattern.permute.xlu0 0
      %1062 = vperm.xlu0 %1061, %v932
      %v1063 = vpop.permute.xlu0 %1062
      %1066 = vset.pattern.permute.xlu0 0
      %1067 = vperm.xlu0 %1066, %v933
      %v1068 = vpop.permute.xlu0 %1067
      %1071 = vset.pattern.permute.xlu0 0
      %1072 = vperm.xlu0 %1071, %v934
      %v1073 = vpop.permute.xlu0 %1072
      %1076 = vset.pattern.permute.xlu0 0
      %1077 = vperm.xlu0 %1076, %v935
      %v1078 = vpop.permute.xlu0 %1077
      %1081 = vset.pattern.permute.xlu0 0
      %1082 = vperm.xlu0 %1081, %v936
      %v1083 = vpop.permute.xlu0 %1082
      %1086 = vset.pattern.permute.xlu0 0
      %1087 = vperm.xlu0 %1086, %v937
      %v1088 = vpop.permute.xlu0 %1087
      %1091 = vset.pattern.permute.xlu0 0
      %1092 = vperm.xlu0 %1091, %v938
      %v1093 = vpop.permute.xlu0 %1092
      %1096 = vset.pattern.permute.xlu0 0
      %1097 = vperm.xlu0 %1096, %v939
      %v1098 = vpop.permute.xlu0 %1097
      %v1100 = vmul.f32 %v875, %v943
      %v1101 = vmul.f32 %v876, %v948
      %v1102 = vmul.f32 %v877, %v953
      %v1103 = vmul.f32 %v878, %v958
      %v1104 = vmul.f32 %v879, %v963
      %v1105 = vmul.f32 %v880, %v968
      %v1106 = vmul.f32 %v881, %v973
      %v1107 = vmul.f32 %v882, %v978
      %v1108 = vmul.f32 %v883, %v983
      %v1109 = vmul.f32 %v884, %v988
      %v1110 = vmul.f32 %v885, %v993
      %v1111 = vmul.f32 %v886, %v998
      %v1112 = vmul.f32 %v887, %v1003
      %v1113 = vmul.f32 %v888, %v1008
      %v1114 = vmul.f32 %v889, %v1013
      %v1115 = vmul.f32 %v890, %v1018
      %v1116 = vmul.f32 %v891, %v1023
      %v1117 = vmul.f32 %v892, %v1028
      %v1118 = vmul.f32 %v893, %v1033
      %v1119 = vmul.f32 %v894, %v1038
      %v1120 = vmul.f32 %v895, %v1043
      %v1121 = vmul.f32 %v896, %v1048
      %v1122 = vmul.f32 %v897, %v1053
      %v1123 = vmul.f32 %v898, %v1058
      %v1124 = vmul.f32 %v899, %v1063
      %v1125 = vmul.f32 %v900, %v1068
      %v1126 = vmul.f32 %v901, %v1073
      %v1127 = vmul.f32 %v902, %v1078
      %v1128 = vmul.f32 %v903, %v1083
      %v1129 = vmul.f32 %v904, %v1088
      %v1130 = vmul.f32 %v905, %v1093
      %v1131 = vmul.f32 %v906, %v1098
      %s1132 = scalar_lea.vmem %s3, 8
      %v1133 = vld [vmem:[%s1132] sm:$0xff]
      %v1135 = vsel %vm353, %v1100, 0
      %v1138 = vsel %vm353, %v1101, 0
      %v1141 = vsel %vm353, %v1102, 0
      %v1144 = vsel %vm353, %v1103, 0
      %v1147 = vsel %vm353, %v1104, 0
      %v1150 = vsel %vm353, %v1105, 0
      %v1153 = vsel %vm353, %v1106, 0
      %v1156 = vsel %vm353, %v1107, 0
      %v1159 = vsel %vm353, %v1108, 0
      %v1162 = vsel %vm353, %v1109, 0
      %v1165 = vsel %vm353, %v1110, 0
      %v1168 = vsel %vm353, %v1111, 0
      %v1171 = vsel %vm353, %v1112, 0
      %v1174 = vsel %vm353, %v1113, 0
      %v1177 = vsel %vm353, %v1114, 0
      %v1180 = vsel %vm353, %v1115, 0
      %v1183 = vsel %vm353, %v1116, 0
      %v1186 = vsel %vm353, %v1117, 0
      %v1189 = vsel %vm353, %v1118, 0
      %v1192 = vsel %vm353, %v1119, 0
      %v1195 = vsel %vm353, %v1120, 0
      %v1198 = vsel %vm353, %v1121, 0
      %v1201 = vsel %vm353, %v1122, 0
      %v1204 = vsel %vm353, %v1123, 0
      %v1207 = vsel %vm353, %v1124, 0
      %v1210 = vsel %vm353, %v1125, 0
      %v1213 = vsel %vm353, %v1126, 0
      %v1216 = vsel %vm353, %v1127, 0
      %v1219 = vsel %vm353, %v1128, 0
      %v1222 = vsel %vm353, %v1129, 0
      %v1225 = vsel %vm353, %v1130, 0
      %v1228 = vsel %vm353, %v1131, 0
      %1230 = vmatprep.subr.mxu0 0.0
      %1231 = vmatpush1.msra.mxu0 %v1133
      %1232 = vmatprep.subr.mxu0 0.0
      %1233 = vmatpush1.msra.mxu0 0.0
      %1234 = vmatprep.subr.mxu0 0.0
      %1235 = vmatpush1.msra.mxu0 0.0
      %1236 = vmatprep.subr.mxu0 0.0
      %1237 = vmatpush1.msra.mxu0 0.0
      %1238 = vmatprep.subr.mxu0 0.0
      %1239 = vmatpush1.msra.mxu0 0.0
      %1240 = vmatprep.subr.mxu0 0.0
      %1241 = vmatpush1.msra.mxu0 0.0
      %1242 = vmatprep.subr.mxu0 0.0
      %1243 = vmatpush1.msra.mxu0 0.0
      %1244 = vmatprep.subr.mxu0 0.0
      %1245 = vmatpush1.msra.mxu0 0.0
      %1246 = vmatprep.subr.mxu0 0.0
      %1247 = vmatpush1.msra.mxu0 0.0
      %1248 = vmatprep.subr.mxu0 0.0
      %1249 = vmatpush1.msra.mxu0 0.0
      %1250 = vmatprep.subr.mxu0 0.0
      %1251 = vmatpush1.msra.mxu0 0.0
      %1252 = vmatprep.subr.mxu0 0.0
      %1253 = vmatpush1.msra.mxu0 0.0
      %1254 = vmatprep.subr.mxu0 0.0
      %1255 = vmatpush1.msra.mxu0 0.0
      %1256 = vmatprep.subr.mxu0 0.0
      %1257 = vmatpush1.msra.mxu0 0.0
      %1258 = vmatprep.subr.mxu0 0.0
      %1259 = vmatpush1.msra.mxu0 0.0
      %1260 = vmatprep.subr.mxu0 0.0
      %1261 = vmatpush1.msra.mxu0 0.0
      %1262 = vmatprep.subr.mxu0 0.0
      %1263 = vmatpush1.msra.mxu0 0.0
      %1264 = vmatprep.subr.mxu0 0.0
      %1265 = vmatpush1.msra.mxu0 0.0
      %1266 = vmatprep.subr.mxu0 0.0
      %1267 = vmatpush1.msra.mxu0 0.0
      %1268 = vmatprep.subr.mxu0 0.0
      %1269 = vmatpush1.msra.mxu0 0.0
      %1270 = vmatprep.subr.mxu0 0.0
      %1271 = vmatpush1.msra.mxu0 0.0
      %1272 = vmatprep.subr.mxu0 0.0
      %1273 = vmatpush1.msra.mxu0 0.0
      %1274 = vmatprep.subr.mxu0 0.0
      %1275 = vmatpush1.msra.mxu0 0.0
      %1276 = vmatprep.subr.mxu0 0.0
      %1277 = vmatpush1.msra.mxu0 0.0
      %1278 = vmatprep.subr.mxu0 0.0
      %1279 = vmatpush1.msra.mxu0 0.0
      %1280 = vmatprep.subr.mxu0 0.0
      %1281 = vmatpush1.msra.mxu0 0.0
      %1282 = vmatprep.subr.mxu0 0.0
      %1283 = vmatpush1.msra.mxu0 0.0
      %1284 = vmatprep.subr.mxu0 0.0
      %1285 = vmatpush1.msra.mxu0 0.0
      %1286 = vmatprep.subr.mxu0 0.0
      %1287 = vmatpush1.msra.mxu0 0.0
      %1288 = vmatprep.subr.mxu0 0.0
      %1289 = vmatpush1.msra.mxu0 0.0
      %1290 = vmatprep.subr.mxu0 0.0
      %1291 = vmatpush1.msra.mxu0 0.0
      %1292 = vmatprep.subr.mxu0 0.0
      %1293 = vmatpush1.msra.mxu0 0.0
      %1294 = vmatprep.mubr.f32.mxu0 0.0
      %1295 = vmatmul.mubr.f32.gmra.mrb[0].mxu0 %v1135
      %v1296 = vpop.f32.mrb[0].mxu0
      %v1297 = vadd.f32 0.0, %v1296
      %v1298 = vpop.f32.mrb[0].mxu0
      %1299 = vmatprep.mubr.f32.mxu0 0.0
      %1300 = vmatmul.mubr.f32.gmra.mrb[0].mxu0 %v1138
      %v1301 = vpop.f32.mrb[0].mxu0
      %v1302 = vadd.f32 0.0, %v1301
      %v1303 = vpop.f32.mrb[0].mxu0
      %1304 = vmatprep.mubr.f32.mxu0 0.0
      %1305 = vmatmul.mubr.f32.gmra.mrb[0].mxu0 %v1141
      %v1306 = vpop.f32.mrb[0].mxu0
      %v1307 = vadd.f32 0.0, %v1306
      %v1308 = vpop.f32.mrb[0].mxu0
      %1309 = vmatprep.mubr.f32.mxu0 0.0
      %1310 = vmatmul.mubr.f32.gmra.mrb[0].mxu0 %v1144
      %v1311 = vpop.f32.mrb[0].mxu0
      %v1312 = vadd.f32 0.0, %v1311
      %v1313 = vpop.f32.mrb[0].mxu0
      %1314 = vmatprep.mubr.f32.mxu0 0.0
      %1315 = vmatmul.mubr.f32.gmra.mrb[0].mxu0 %v1147
      %v1316 = vpop.f32.mrb[0].mxu0
      %v1317 = vadd.f32 0.0, %v1316
      %v1318 = vpop.f32.mrb[0].mxu0
      %1319 = vmatprep.mubr.f32.mxu0 0.0
      %1320 = vmatmul.mubr.f32.gmra.mrb[0].mxu0 %v1150
      %v1321 = vpop.f32.mrb[0].mxu0
      %v1322 = vadd.f32 0.0, %v1321
      %v1323 = vpop.f32.mrb[0].mxu0
      %1324 = vmatprep.mubr.f32.mxu0 0.0
      %1325 = vmatmul.mubr.f32.gmra.mrb[0].mxu0 %v1153
      %v1326 = vpop.f32.mrb[0].mxu0
      %v1327 = vadd.f32 0.0, %v1326
      %v1328 = vpop.f32.mrb[0].mxu0
      %1329 = vmatprep.mubr.f32.mxu0 0.0
      %1330 = vmatmul.mubr.f32.gmra.mrb[0].mxu0 %v1156
      %v1331 = vpop.f32.mrb[0].mxu0
      %v1332 = vadd.f32 0.0, %v1331
      %v1333 = vpop.f32.mrb[0].mxu0
      %1334 = vmatprep.mubr.f32.mxu0 0.0
      %1335 = vmatmul.mubr.f32.gmra.mrb[0].mxu0 %v1159
      %v1336 = vpop.f32.mrb[0].mxu0
      %v1337 = vadd.f32 0.0, %v1336
      %v1338 = vpop.f32.mrb[0].mxu0
      %1339 = vmatprep.mubr.f32.mxu0 0.0
      %1340 = vmatmul.mubr.f32.gmra.mrb[0].mxu0 %v1162
      %v1341 = vpop.f32.mrb[0].mxu0
      %v1342 = vadd.f32 0.0, %v1341
      %v1343 = vpop.f32.mrb[0].mxu0
      %1344 = vmatprep.mubr.f32.mxu0 0.0
      %1345 = vmatmul.mubr.f32.gmra.mrb[0].mxu0 %v1165
      %v1346 = vpop.f32.mrb[0].mxu0
      %v1347 = vadd.f32 0.0, %v1346
      %v1348 = vpop.f32.mrb[0].mxu0
      %1349 = vmatprep.mubr.f32.mxu0 0.0
      %1350 = vmatmul.mubr.f32.gmra.mrb[0].mxu0 %v1168
      %v1351 = vpop.f32.mrb[0].mxu0
      %v1352 = vadd.f32 0.0, %v1351
      %v1353 = vpop.f32.mrb[0].mxu0
      %1354 = vmatprep.mubr.f32.mxu0 0.0
      %1355 = vmatmul.mubr.f32.gmra.mrb[0].mxu0 %v1171
      %v1356 = vpop.f32.mrb[0].mxu0
      %v1357 = vadd.f32 0.0, %v1356
      %v1358 = vpop.f32.mrb[0].mxu0
      %1359 = vmatprep.mubr.f32.mxu0 0.0
      %1360 = vmatmul.mubr.f32.gmra.mrb[0].mxu0 %v1174
      %v1361 = vpop.f32.mrb[0].mxu0
      %v1362 = vadd.f32 0.0, %v1361
      %v1363 = vpop.f32.mrb[0].mxu0
      %1364 = vmatprep.mubr.f32.mxu0 0.0
      %1365 = vmatmul.mubr.f32.gmra.mrb[0].mxu0 %v1177
      %v1366 = vpop.f32.mrb[0].mxu0
      %v1367 = vadd.f32 0.0, %v1366
      %v1368 = vpop.f32.mrb[0].mxu0
      %1369 = vmatprep.mubr.f32.mxu0 0.0
      %1370 = vmatmul.mubr.f32.gmra.mrb[0].mxu0 %v1180
      %v1371 = vpop.f32.mrb[0].mxu0
      %v1372 = vadd.f32 0.0, %v1371
      %v1373 = vpop.f32.mrb[0].mxu0
      %1374 = vmatprep.mubr.f32.mxu0 0.0
      %1375 = vmatmul.mubr.f32.gmra.mrb[0].mxu0 %v1183
      %v1376 = vpop.f32.mrb[0].mxu0
      %v1377 = vadd.f32 0.0, %v1376
      %v1378 = vpop.f32.mrb[0].mxu0
      %1379 = vmatprep.mubr.f32.mxu0 0.0
      %1380 = vmatmul.mubr.f32.gmra.mrb[0].mxu0 %v1186
      %v1381 = vpop.f32.mrb[0].mxu0
      %v1382 = vadd.f32 0.0, %v1381
      %v1383 = vpop.f32.mrb[0].mxu0
      %1384 = vmatprep.mubr.f32.mxu0 0.0
      %1385 = vmatmul.mubr.f32.gmra.mrb[0].mxu0 %v1189
      %v1386 = vpop.f32.mrb[0].mxu0
      %v1387 = vadd.f32 0.0, %v1386
      %v1388 = vpop.f32.mrb[0].mxu0
      %1389 = vmatprep.mubr.f32.mxu0 0.0
      %1390 = vmatmul.mubr.f32.gmra.mrb[0].mxu0 %v1192
      %v1391 = vpop.f32.mrb[0].mxu0
      %v1392 = vadd.f32 0.0, %v1391
      %v1393 = vpop.f32.mrb[0].mxu0
      %1394 = vmatprep.mubr.f32.mxu0 0.0
      %1395 = vmatmul.mubr.f32.gmra.mrb[0].mxu0 %v1195
      %v1396 = vpop.f32.mrb[0].mxu0
      %v1397 = vadd.f32 0.0, %v1396
      %v1398 = vpop.f32.mrb[0].mxu0
      %1399 = vmatprep.mubr.f32.mxu0 0.0
      %1400 = vmatmul.mubr.f32.gmra.mrb[0].mxu0 %v1198
      %v1401 = vpop.f32.mrb[0].mxu0
      %v1402 = vadd.f32 0.0, %v1401
      %v1403 = vpop.f32.mrb[0].mxu0
      %1404 = vmatprep.mubr.f32.mxu0 0.0
      %1405 = vmatmul.mubr.f32.gmra.mrb[0].mxu0 %v1201
      %v1406 = vpop.f32.mrb[0].mxu0
      %v1407 = vadd.f32 0.0, %v1406
      %v1408 = vpop.f32.mrb[0].mxu0
      %1409 = vmatprep.mubr.f32.mxu0 0.0
      %1410 = vmatmul.mubr.f32.gmra.mrb[0].mxu0 %v1204
      %v1411 = vpop.f32.mrb[0].mxu0
      %v1412 = vadd.f32 0.0, %v1411
      %v1413 = vpop.f32.mrb[0].mxu0
      %1414 = vmatprep.mubr.f32.mxu0 0.0
      %1415 = vmatmul.mubr.f32.gmra.mrb[0].mxu0 %v1207
      %v1416 = vpop.f32.mrb[0].mxu0
      %v1417 = vadd.f32 0.0, %v1416
      %v1418 = vpop.f32.mrb[0].mxu0
      %1419 = vmatprep.mubr.f32.mxu0 0.0
      %1420 = vmatmul.mubr.f32.gmra.mrb[0].mxu0 %v1210
      %v1421 = vpop.f32.mrb[0].mxu0
      %v1422 = vadd.f32 0.0, %v1421
      %v1423 = vpop.f32.mrb[0].mxu0
      %1424 = vmatprep.mubr.f32.mxu0 0.0
      %1425 = vmatmul.mubr.f32.gmra.mrb[0].mxu0 %v1213
      %v1426 = vpop.f32.mrb[0].mxu0
      %v1427 = vadd.f32 0.0, %v1426
      %v1428 = vpop.f32.mrb[0].mxu0
      %1429 = vmatprep.mubr.f32.mxu0 0.0
      %1430 = vmatmul.mubr.f32.gmra.mrb[0].mxu0 %v1216
      %v1431 = vpop.f32.mrb[0].mxu0
      %v1432 = vadd.f32 0.0, %v1431
      %v1433 = vpop.f32.mrb[0].mxu0
      %1434 = vmatprep.mubr.f32.mxu0 0.0
      %1435 = vmatmul.mubr.f32.gmra.mrb[0].mxu0 %v1219
      %v1436 = vpop.f32.mrb[0].mxu0
      %v1437 = vadd.f32 0.0, %v1436
      %v1438 = vpop.f32.mrb[0].mxu0
      %1439 = vmatprep.mubr.f32.mxu0 0.0
      %1440 = vmatmul.mubr.f32.gmra.mrb[0].mxu0 %v1222
      %v1441 = vpop.f32.mrb[0].mxu0
      %v1442 = vadd.f32 0.0, %v1441
      %v1443 = vpop.f32.mrb[0].mxu0
      %1444 = vmatprep.mubr.f32.mxu0 0.0
      %1445 = vmatmul.mubr.f32.gmra.mrb[0].mxu0 %v1225
      %v1446 = vpop.f32.mrb[0].mxu0
      %v1447 = vadd.f32 0.0, %v1446
      %v1448 = vpop.f32.mrb[0].mxu0
      %1449 = vmatprep.mubr.f32.mxu0 0.0
      %1450 = vmatmul.mubr.f32.gmra.mrb[0].mxu0 %v1228
      %v1451 = vpop.f32.mrb[0].mxu0
      %v1452 = vadd.f32 0.0, %v1451
      %v1453 = vpop.f32.mrb[0].mxu0
      %1454 = vdwg.mxu0
      %v1456 = vsel %vm353, %v842, 0
      %v1459 = vsel %vm353, %v843, 0
      %v1462 = vsel %vm353, %v844, 0
      %v1465 = vsel %vm353, %v845, 0
      %v1468 = vsel %vm353, %v846, 0
      %v1471 = vsel %vm353, %v847, 0
      %v1474 = vsel %vm353, %v848, 0
      %v1477 = vsel %vm353, %v849, 0
      %v1480 = vsel %vm353, %v850, 0
      %v1483 = vsel %vm353, %v851, 0
      %v1486 = vsel %vm353, %v852, 0
      %v1489 = vsel %vm353, %v853, 0
      %v1492 = vsel %vm353, %v854, 0
      %v1495 = vsel %vm353, %v855, 0
      %v1498 = vsel %vm353, %v856, 0
      %v1501 = vsel %vm353, %v857, 0
      %v1504 = vsel %vm353, %v858, 0
      %v1507 = vsel %vm353, %v859, 0
      %v1510 = vsel %vm353, %v860, 0
      %v1513 = vsel %vm353, %v861, 0
      %v1516 = vsel %vm353, %v862, 0
      %v1519 = vsel %vm353, %v863, 0
      %v1522 = vsel %vm353, %v864, 0
      %v1525 = vsel %vm353, %v865, 0
      %v1528 = vsel %vm353, %v866, 0
      %v1531 = vsel %vm353, %v867, 0
      %v1534 = vsel %vm353, %v868, 0
      %v1537 = vsel %vm353, %v869, 0
      %v1540 = vsel %vm353, %v870, 0
      %v1543 = vsel %vm353, %v871, 0
      %v1546 = vsel %vm353, %v872, 0
      %v1549 = vsel %vm353, %v873, 0
      %1551 = vmatprep.subr.mxu0 0.0
      %1552 = vmatpush1.msra.mxu0 %v874
      %1553 = vmatprep.subr.mxu0 0.0
      %1554 = vmatpush1.msra.mxu0 0.0
      %1555 = vmatprep.subr.mxu0 0.0
      %1556 = vmatpush1.msra.mxu0 0.0
      %1557 = vmatprep.subr.mxu0 0.0
      %1558 = vmatpush1.msra.mxu0 0.0
      %1559 = vmatprep.subr.mxu0 0.0
      %1560 = vmatpush1.msra.mxu0 0.0
      %1561 = vmatprep.subr.mxu0 0.0
      %1562 = vmatpush1.msra.mxu0 0.0
      %1563 = vmatprep.subr.mxu0 0.0
      %1564 = vmatpush1.msra.mxu0 0.0
      %1565 = vmatprep.subr.mxu0 0.0
      %1566 = vmatpush1.msra.mxu0 0.0
      %1567 = vmatprep.subr.mxu0 0.0
      %1568 = vmatpush1.msra.mxu0 0.0
      %1569 = vmatprep.subr.mxu0 0.0
      %1570 = vmatpush1.msra.mxu0 0.0
      %1571 = vmatprep.subr.mxu0 0.0
      %1572 = vmatpush1.msra.mxu0 0.0
      %1573 = vmatprep.subr.mxu0 0.0
      %1574 = vmatpush1.msra.mxu0 0.0
      %1575 = vmatprep.subr.mxu0 0.0
      %1576 = vmatpush1.msra.mxu0 0.0
      %1577 = vmatprep.subr.mxu0 0.0
      %1578 = vmatpush1.msra.mxu0 0.0
      %1579 = vmatprep.subr.mxu0 0.0
      %1580 = vmatpush1.msra.mxu0 0.0
      %1581 = vmatprep.subr.mxu0 0.0
      %1582 = vmatpush1.msra.mxu0 0.0
      %1583 = vmatprep.subr.mxu0 0.0
      %1584 = vmatpush1.msra.mxu0 0.0
      %1585 = vmatprep.subr.mxu0 0.0
      %1586 = vmatpush1.msra.mxu0 0.0
      %1587 = vmatprep.subr.mxu0 0.0
      %1588 = vmatpush1.msra.mxu0 0.0
      %1589 = vmatprep.subr.mxu0 0.0
      %1590 = vmatpush1.msra.mxu0 0.0
      %1591 = vmatprep.subr.mxu0 0.0
      %1592 = vmatpush1.msra.mxu0 0.0
      %1593 = vmatprep.subr.mxu0 0.0
      %1594 = vmatpush1.msra.mxu0 0.0
      %1595 = vmatprep.subr.mxu0 0.0
      %1596 = vmatpush1.msra.mxu0 0.0
      %1597 = vmatprep.subr.mxu0 0.0
      %1598 = vmatpush1.msra.mxu0 0.0
      %1599 = vmatprep.subr.mxu0 0.0
      %1600 = vmatpush1.msra.mxu0 0.0
      %1601 = vmatprep.subr.mxu0 0.0
      %1602 = vmatpush1.msra.mxu0 0.0
      %1603 = vmatprep.subr.mxu0 0.0
      %1604 = vmatpush1.msra.mxu0 0.0
      %1605 = vmatprep.subr.mxu0 0.0
      %1606 = vmatpush1.msra.mxu0 0.0
      %1607 = vmatprep.subr.mxu0 0.0
      %1608 = vmatpush1.msra.mxu0 0.0
      %1609 = vmatprep.subr.mxu0 0.0
      %1610 = vmatpush1.msra.mxu0 0.0
      %1611 = vmatprep.subr.mxu0 0.0
      %1612 = vmatpush1.msra.mxu0 0.0
      %1613 = vmatprep.subr.mxu0 0.0
      %1614 = vmatpush1.msra.mxu0 0.0
      %1615 = vmatprep.mubr.f32.mxu0 0.0
      %1616 = vmatmul.mubr.f32.gmra.mrb[0].mxu0 %v1456
      %v1617 = vpop.f32.mrb[0].mxu0
      %v1618 = vadd.f32 %v1297, %v1617
      %v1619 = vpop.f32.mrb[0].mxu0
      %1620 = vmatprep.mubr.f32.mxu0 0.0
      %1621 = vmatmul.mubr.f32.gmra.mrb[0].mxu0 %v1459
      %v1622 = vpop.f32.mrb[0].mxu0
      %v1623 = vadd.f32 %v1302, %v1622
      %v1624 = vpop.f32.mrb[0].mxu0
      %1625 = vmatprep.mubr.f32.mxu0 0.0
      %1626 = vmatmul.mubr.f32.gmra.mrb[0].mxu0 %v1462
      %v1627 = vpop.f32.mrb[0].mxu0
      %v1628 = vadd.f32 %v1307, %v1627
      %v1629 = vpop.f32.mrb[0].mxu0
      %1630 = vmatprep.mubr.f32.mxu0 0.0
      %1631 = vmatmul.mubr.f32.gmra.mrb[0].mxu0 %v1465
      %v1632 = vpop.f32.mrb[0].mxu0
      %v1633 = vadd.f32 %v1312, %v1632
      %v1634 = vpop.f32.mrb[0].mxu0
      %1635 = vmatprep.mubr.f32.mxu0 0.0
      %1636 = vmatmul.mubr.f32.gmra.mrb[0].mxu0 %v1468
      %v1637 = vpop.f32.mrb[0].mxu0
      %v1638 = vadd.f32 %v1317, %v1637
      %v1639 = vpop.f32.mrb[0].mxu0
      %1640 = vmatprep.mubr.f32.mxu0 0.0
      %1641 = vmatmul.mubr.f32.gmra.mrb[0].mxu0 %v1471
      %v1642 = vpop.f32.mrb[0].mxu0
      %v1643 = vadd.f32 %v1322, %v1642
      %v1644 = vpop.f32.mrb[0].mxu0
      %1645 = vmatprep.mubr.f32.mxu0 0.0
      %1646 = vmatmul.mubr.f32.gmra.mrb[0].mxu0 %v1474
      %v1647 = vpop.f32.mrb[0].mxu0
      %v1648 = vadd.f32 %v1327, %v1647
      %v1649 = vpop.f32.mrb[0].mxu0
      %1650 = vmatprep.mubr.f32.mxu0 0.0
      %1651 = vmatmul.mubr.f32.gmra.mrb[0].mxu0 %v1477
      %v1652 = vpop.f32.mrb[0].mxu0
      %v1653 = vadd.f32 %v1332, %v1652
      %v1654 = vpop.f32.mrb[0].mxu0
      %1655 = vmatprep.mubr.f32.mxu0 0.0
      %1656 = vmatmul.mubr.f32.gmra.mrb[0].mxu0 %v1480
      %v1657 = vpop.f32.mrb[0].mxu0
      %v1658 = vadd.f32 %v1337, %v1657
      %v1659 = vpop.f32.mrb[0].mxu0
      %1660 = vmatprep.mubr.f32.mxu0 0.0
      %1661 = vmatmul.mubr.f32.gmra.mrb[0].mxu0 %v1483
      %v1662 = vpop.f32.mrb[0].mxu0
      %v1663 = vadd.f32 %v1342, %v1662
      %v1664 = vpop.f32.mrb[0].mxu0
      %1665 = vmatprep.mubr.f32.mxu0 0.0
      %1666 = vmatmul.mubr.f32.gmra.mrb[0].mxu0 %v1486
      %v1667 = vpop.f32.mrb[0].mxu0
      %v1668 = vadd.f32 %v1347, %v1667
      %v1669 = vpop.f32.mrb[0].mxu0
      %1670 = vmatprep.mubr.f32.mxu0 0.0
      %1671 = vmatmul.mubr.f32.gmra.mrb[0].mxu0 %v1489
      %v1672 = vpop.f32.mrb[0].mxu0
      %v1673 = vadd.f32 %v1352, %v1672
      %v1674 = vpop.f32.mrb[0].mxu0
      %1675 = vmatprep.mubr.f32.mxu0 0.0
      %1676 = vmatmul.mubr.f32.gmra.mrb[0].mxu0 %v1492
      %v1677 = vpop.f32.mrb[0].mxu0
      %v1678 = vadd.f32 %v1357, %v1677
      %v1679 = vpop.f32.mrb[0].mxu0
      %1680 = vmatprep.mubr.f32.mxu0 0.0
      %1681 = vmatmul.mubr.f32.gmra.mrb[0].mxu0 %v1495
      %v1682 = vpop.f32.mrb[0].mxu0
      %v1683 = vadd.f32 %v1362, %v1682
      %v1684 = vpop.f32.mrb[0].mxu0
      %1685 = vmatprep.mubr.f32.mxu0 0.0
      %1686 = vmatmul.mubr.f32.gmra.mrb[0].mxu0 %v1498
      %v1687 = vpop.f32.mrb[0].mxu0
      %v1688 = vadd.f32 %v1367, %v1687
      %v1689 = vpop.f32.mrb[0].mxu0
      %1690 = vmatprep.mubr.f32.mxu0 0.0
      %1691 = vmatmul.mubr.f32.gmra.mrb[0].mxu0 %v1501
      %v1692 = vpop.f32.mrb[0].mxu0
      %v1693 = vadd.f32 %v1372, %v1692
      %v1694 = vpop.f32.mrb[0].mxu0
      %1695 = vmatprep.mubr.f32.mxu0 0.0
      %1696 = vmatmul.mubr.f32.gmra.mrb[0].mxu0 %v1504
      %v1697 = vpop.f32.mrb[0].mxu0
      %v1698 = vadd.f32 %v1377, %v1697
      %v1699 = vpop.f32.mrb[0].mxu0
      %1700 = vmatprep.mubr.f32.mxu0 0.0
      %1701 = vmatmul.mubr.f32.gmra.mrb[0].mxu0 %v1507
      %v1702 = vpop.f32.mrb[0].mxu0
      %v1703 = vadd.f32 %v1382, %v1702
      %v1704 = vpop.f32.mrb[0].mxu0
      %1705 = vmatprep.mubr.f32.mxu0 0.0
      %1706 = vmatmul.mubr.f32.gmra.mrb[0].mxu0 %v1510
      %v1707 = vpop.f32.mrb[0].mxu0
      %v1708 = vadd.f32 %v1387, %v1707
      %v1709 = vpop.f32.mrb[0].mxu0
      %1710 = vmatprep.mubr.f32.mxu0 0.0
      %1711 = vmatmul.mubr.f32.gmra.mrb[0].mxu0 %v1513
      %v1712 = vpop.f32.mrb[0].mxu0
      %v1713 = vadd.f32 %v1392, %v1712
      %v1714 = vpop.f32.mrb[0].mxu0
      %1715 = vmatprep.mubr.f32.mxu0 0.0
      %1716 = vmatmul.mubr.f32.gmra.mrb[0].mxu0 %v1516
      %v1717 = vpop.f32.mrb[0].mxu0
      %v1718 = vadd.f32 %v1397, %v1717
      %v1719 = vpop.f32.mrb[0].mxu0
      %1720 = vmatprep.mubr.f32.mxu0 0.0
      %1721 = vmatmul.mubr.f32.gmra.mrb[0].mxu0 %v1519
      %v1722 = vpop.f32.mrb[0].mxu0
      %v1723 = vadd.f32 %v1402, %v1722
      %v1724 = vpop.f32.mrb[0].mxu0
      %1725 = vmatprep.mubr.f32.mxu0 0.0
      %1726 = vmatmul.mubr.f32.gmra.mrb[0].mxu0 %v1522
      %v1727 = vpop.f32.mrb[0].mxu0
      %v1728 = vadd.f32 %v1407, %v1727
      %v1729 = vpop.f32.mrb[0].mxu0
      %1730 = vmatprep.mubr.f32.mxu0 0.0
      %1731 = vmatmul.mubr.f32.gmra.mrb[0].mxu0 %v1525
      %v1732 = vpop.f32.mrb[0].mxu0
      %v1733 = vadd.f32 %v1412, %v1732
      %v1734 = vpop.f32.mrb[0].mxu0
      %1735 = vmatprep.mubr.f32.mxu0 0.0
      %1736 = vmatmul.mubr.f32.gmra.mrb[0].mxu0 %v1528
      %v1737 = vpop.f32.mrb[0].mxu0
      %v1738 = vadd.f32 %v1417, %v1737
      %v1739 = vpop.f32.mrb[0].mxu0
      %1740 = vmatprep.mubr.f32.mxu0 0.0
      %1741 = vmatmul.mubr.f32.gmra.mrb[0].mxu0 %v1531
      %v1742 = vpop.f32.mrb[0].mxu0
      %v1743 = vadd.f32 %v1422, %v1742
      %v1744 = vpop.f32.mrb[0].mxu0
      %1745 = vmatprep.mubr.f32.mxu0 0.0
      %1746 = vmatmul.mubr.f32.gmra.mrb[0].mxu0 %v1534
      %v1747 = vpop.f32.mrb[0].mxu0
      %v1748 = vadd.f32 %v1427, %v1747
      %v1749 = vpop.f32.mrb[0].mxu0
      %1750 = vmatprep.mubr.f32.mxu0 0.0
      %1751 = vmatmul.mubr.f32.gmra.mrb[0].mxu0 %v1537
      %v1752 = vpop.f32.mrb[0].mxu0
      %v1753 = vadd.f32 %v1432, %v1752
      %v1754 = vpop.f32.mrb[0].mxu0
      %1755 = vmatprep.mubr.f32.mxu0 0.0
      %1756 = vmatmul.mubr.f32.gmra.mrb[0].mxu0 %v1540
      %v1757 = vpop.f32.mrb[0].mxu0
      %v1758 = vadd.f32 %v1437, %v1757
      %v1759 = vpop.f32.mrb[0].mxu0
      %1760 = vmatprep.mubr.f32.mxu0 0.0
      %1761 = vmatmul.mubr.f32.gmra.mrb[0].mxu0 %v1543
      %v1762 = vpop.f32.mrb[0].mxu0
      %v1763 = vadd.f32 %v1442, %v1762
      %v1764 = vpop.f32.mrb[0].mxu0
      %1765 = vmatprep.mubr.f32.mxu0 0.0
      %1766 = vmatmul.mubr.f32.gmra.mrb[0].mxu0 %v1546
      %v1767 = vpop.f32.mrb[0].mxu0
      %v1768 = vadd.f32 %v1447, %v1767
      %v1769 = vpop.f32.mrb[0].mxu0
      %1770 = vmatprep.mubr.f32.mxu0 0.0
      %1771 = vmatmul.mubr.f32.gmra.mrb[0].mxu0 %v1549
      %v1772 = vpop.f32.mrb[0].mxu0
      %v1773 = vadd.f32 %v1452, %v1772
      %v1774 = vpop.f32.mrb[0].mxu0
      %1775 = vdwg.mxu0
      %v1776 = vld [vmem:[#allocation2 + $0x9] sm:$0xff]
      %v1777 = vld [vmem:[#allocation2 + $0x11] sm:$0xff]
      %v1778 = vld [vmem:[#allocation2 + $0x19] sm:$0xff]
      %v1779 = vld [vmem:[#allocation2 + $0x21] sm:$0xff]
      %v1780 = vld [vmem:[#allocation2 + $0x29] sm:$0xff]
      %v1781 = vld [vmem:[#allocation2 + $0x31] sm:$0xff]
      %v1782 = vld [vmem:[#allocation2 + $0x39] sm:$0xff]
      %v1783 = vld [vmem:[#allocation2 + $0x41] sm:$0xff]
      %v1784 = vld [vmem:[#allocation2 + $0x49] sm:$0xff]
      %v1785 = vld [vmem:[#allocation2 + $0x51] sm:$0xff]
      %v1786 = vld [vmem:[#allocation2 + $0x59] sm:$0xff]
      %v1787 = vld [vmem:[#allocation2 + $0x61] sm:$0xff]
      %v1788 = vld [vmem:[#allocation2 + $0x69] sm:$0xff]
      %v1789 = vld [vmem:[#allocation2 + $0x71] sm:$0xff]
      %v1790 = vld [vmem:[#allocation2 + $0x79] sm:$0xff]
      %v1791 = vld [vmem:[#allocation2 + $0x81] sm:$0xff]
      %v1792 = vld [vmem:[#allocation2 + $0x89] sm:$0xff]
      %v1793 = vld [vmem:[#allocation2 + $0x91] sm:$0xff]
      %v1794 = vld [vmem:[#allocation2 + $0x99] sm:$0xff]
      %v1795 = vld [vmem:[#allocation2 + $0xa1] sm:$0xff]
      %v1796 = vld [vmem:[#allocation2 + $0xa9] sm:$0xff]
      %v1797 = vld [vmem:[#allocation2 + $0xb1] sm:$0xff]
      %v1798 = vld [vmem:[#allocation2 + $0xb9] sm:$0xff]
      %v1799 = vld [vmem:[#allocation2 + $0xc1] sm:$0xff]
      %v1800 = vld [vmem:[#allocation2 + $0xc9] sm:$0xff]
      %v1801 = vld [vmem:[#allocation2 + $0xd1] sm:$0xff]
      %v1802 = vld [vmem:[#allocation2 + $0xd9] sm:$0xff]
      %v1803 = vld [vmem:[#allocation2 + $0xe1] sm:$0xff]
      %v1804 = vld [vmem:[#allocation2 + $0xe9] sm:$0xff]
      %v1805 = vld [vmem:[#allocation2 + $0xf1] sm:$0xff]
      %v1806 = vld [vmem:[#allocation2 + $0xf9] sm:$0xff]
      %v1807 = vld [vmem:[#allocation2 + $0x101] sm:$0xff]
      %s1808 = scalar_lea.vmem %s2, 512
      %v1809 = vld [vmem:[%s1808] sm:$0xff]
      %v1810 = vld [vmem:[%s1808 + $0x8] sm:$0xff]
      %v1811 = vld [vmem:[%s1808 + $0x10] sm:$0xff]
      %v1812 = vld [vmem:[%s1808 + $0x18] sm:$0xff]
      %v1813 = vld [vmem:[%s1808 + $0x20] sm:$0xff]
      %v1814 = vld [vmem:[%s1808 + $0x28] sm:$0xff]
      %v1815 = vld [vmem:[%s1808 + $0x30] sm:$0xff]
      %v1816 = vld [vmem:[%s1808 + $0x38] sm:$0xff]
      %v1817 = vld [vmem:[%s1808 + $0x40] sm:$0xff]
      %v1818 = vld [vmem:[%s1808 + $0x48] sm:$0xff]
      %v1819 = vld [vmem:[%s1808 + $0x50] sm:$0xff]
      %v1820 = vld [vmem:[%s1808 + $0x58] sm:$0xff]
      %v1821 = vld [vmem:[%s1808 + $0x60] sm:$0xff]
      %v1822 = vld [vmem:[%s1808 + $0x68] sm:$0xff]
      %v1823 = vld [vmem:[%s1808 + $0x70] sm:$0xff]
      %v1824 = vld [vmem:[%s1808 + $0x78] sm:$0xff]
      %v1825 = vld [vmem:[%s1808 + $0x80] sm:$0xff]
      %v1826 = vld [vmem:[%s1808 + $0x88] sm:$0xff]
      %v1827 = vld [vmem:[%s1808 + $0x90] sm:$0xff]
      %v1828 = vld [vmem:[%s1808 + $0x98] sm:$0xff]
      %v1829 = vld [vmem:[%s1808 + $0xa0] sm:$0xff]
      %v1830 = vld [vmem:[%s1808 + $0xa8] sm:$0xff]
      %v1831 = vld [vmem:[%s1808 + $0xb0] sm:$0xff]
      %v1832 = vld [vmem:[%s1808 + $0xb8] sm:$0xff]
      %v1833 = vld [vmem:[%s1808 + $0xc0] sm:$0xff]
      %v1834 = vld [vmem:[%s1808 + $0xc8] sm:$0xff]
      %v1835 = vld [vmem:[%s1808 + $0xd0] sm:$0xff]
      %v1836 = vld [vmem:[%s1808 + $0xd8] sm:$0xff]
      %v1837 = vld [vmem:[%s1808 + $0xe0] sm:$0xff]
      %v1838 = vld [vmem:[%s1808 + $0xe8] sm:$0xff]
      %v1839 = vld [vmem:[%s1808 + $0xf0] sm:$0xff]
      %v1840 = vld [vmem:[%s1808 + $0xf8] sm:$0xff]
      %1842 = vset.pattern.permute.xlu0 0
      %1843 = vperm.xlu0 %1842, %v1809
      %v1844 = vpop.permute.xlu0 %1843
      %1847 = vset.pattern.permute.xlu0 0
      %1848 = vperm.xlu0 %1847, %v1810
      %v1849 = vpop.permute.xlu0 %1848
      %1852 = vset.pattern.permute.xlu0 0
      %1853 = vperm.xlu0 %1852, %v1811
      %v1854 = vpop.permute.xlu0 %1853
      %1857 = vset.pattern.permute.xlu0 0
      %1858 = vperm.xlu0 %1857, %v1812
      %v1859 = vpop.permute.xlu0 %1858
      %1862 = vset.pattern.permute.xlu0 0
      %1863 = vperm.xlu0 %1862, %v1813
      %v1864 = vpop.permute.xlu0 %1863
      %1867 = vset.pattern.permute.xlu0 0
      %1868 = vperm.xlu0 %1867, %v1814
      %v1869 = vpop.permute.xlu0 %1868
      %1872 = vset.pattern.permute.xlu0 0
      %1873 = vperm.xlu0 %1872, %v1815
      %v1874 = vpop.permute.xlu0 %1873
      %1877 = vset.pattern.permute.xlu0 0
      %1878 = vperm.xlu0 %1877, %v1816
      %v1879 = vpop.permute.xlu0 %1878
      %1882 = vset.pattern.permute.xlu0 0
      %1883 = vperm.xlu0 %1882, %v1817
      %v1884 = vpop.permute.xlu0 %1883
      %1887 = vset.pattern.permute.xlu0 0
      %1888 = vperm.xlu0 %1887, %v1818
      %v1889 = vpop.permute.xlu0 %1888
      %1892 = vset.pattern.permute.xlu0 0
      %1893 = vperm.xlu0 %1892, %v1819
      %v1894 = vpop.permute.xlu0 %1893
      %1897 = vset.pattern.permute.xlu0 0
      %1898 = vperm.xlu0 %1897, %v1820
      %v1899 = vpop.permute.xlu0 %1898
      %1902 = vset.pattern.permute.xlu0 0
      %1903 = vperm.xlu0 %1902, %v1821
      %v1904 = vpop.permute.xlu0 %1903
      %1907 = vset.pattern.permute.xlu0 0
      %1908 = vperm.xlu0 %1907, %v1822
      %v1909 = vpop.permute.xlu0 %1908
      %1912 = vset.pattern.permute.xlu0 0
      %1913 = vperm.xlu0 %1912, %v1823
      %v1914 = vpop.permute.xlu0 %1913
      %1917 = vset.pattern.permute.xlu0 0
      %1918 = vperm.xlu0 %1917, %v1824
      %v1919 = vpop.permute.xlu0 %1918
      %1922 = vset.pattern.permute.xlu0 0
      %1923 = vperm.xlu0 %1922, %v1825
      %v1924 = vpop.permute.xlu0 %1923
      %1927 = vset.pattern.permute.xlu0 0
      %1928 = vperm.xlu0 %1927, %v1826
      %v1929 = vpop.permute.xlu0 %1928
      %1932 = vset.pattern.permute.xlu0 0
      %1933 = vperm.xlu0 %1932, %v1827
      %v1934 = vpop.permute.xlu0 %1933
      %1937 = vset.pattern.permute.xlu0 0
      %1938 = vperm.xlu0 %1937, %v1828
      %v1939 = vpop.permute.xlu0 %1938
      %1942 = vset.pattern.permute.xlu0 0
      %1943 = vperm.xlu0 %1942, %v1829
      %v1944 = vpop.permute.xlu0 %1943
      %1947 = vset.pattern.permute.xlu0 0
      %1948 = vperm.xlu0 %1947, %v1830
      %v1949 = vpop.permute.xlu0 %1948
      %1952 = vset.pattern.permute.xlu0 0
      %1953 = vperm.xlu0 %1952, %v1831
      %v1954 = vpop.permute.xlu0 %1953
      %1957 = vset.pattern.permute.xlu0 0
      %1958 = vperm.xlu0 %1957, %v1832
      %v1959 = vpop.permute.xlu0 %1958
      %1962 = vset.pattern.permute.xlu0 0
      %1963 = vperm.xlu0 %1962, %v1833
      %v1964 = vpop.permute.xlu0 %1963
      %1967 = vset.pattern.permute.xlu0 0
      %1968 = vperm.xlu0 %1967, %v1834
      %v1969 = vpop.permute.xlu0 %1968
      %1972 = vset.pattern.permute.xlu0 0
      %1973 = vperm.xlu0 %1972, %v1835
      %v1974 = vpop.permute.xlu0 %1973
      %1977 = vset.pattern.permute.xlu0 0
      %1978 = vperm.xlu0 %1977, %v1836
      %v1979 = vpop.permute.xlu0 %1978
      %1982 = vset.pattern.permute.xlu0 0
      %1983 = vperm.xlu0 %1982, %v1837
      %v1984 = vpop.permute.xlu0 %1983
      %1987 = vset.pattern.permute.xlu0 0
      %1988 = vperm.xlu0 %1987, %v1838
      %v1989 = vpop.permute.xlu0 %1988
      %1992 = vset.pattern.permute.xlu0 0
      %1993 = vperm.xlu0 %1992, %v1839
      %v1994 = vpop.permute.xlu0 %1993
      %1997 = vset.pattern.permute.xlu0 0
      %1998 = vperm.xlu0 %1997, %v1840
      %v1999 = vpop.permute.xlu0 %1998
      %v2001 = vmul.f32 %v1776, %v1844
      %v2002 = vmul.f32 %v1777, %v1849
      %v2003 = vmul.f32 %v1778, %v1854
      %v2004 = vmul.f32 %v1779, %v1859
      %v2005 = vmul.f32 %v1780, %v1864
      %v2006 = vmul.f32 %v1781, %v1869
      %v2007 = vmul.f32 %v1782, %v1874
      %v2008 = vmul.f32 %v1783, %v1879
      %v2009 = vmul.f32 %v1784, %v1884
      %v2010 = vmul.f32 %v1785, %v1889
      %v2011 = vmul.f32 %v1786, %v1894
      %v2012 = vmul.f32 %v1787, %v1899
      %v2013 = vmul.f32 %v1788, %v1904
      %v2014 = vmul.f32 %v1789, %v1909
      %v2015 = vmul.f32 %v1790, %v1914
      %v2016 = vmul.f32 %v1791, %v1919
      %v2017 = vmul.f32 %v1792, %v1924
      %v2018 = vmul.f32 %v1793, %v1929
      %v2019 = vmul.f32 %v1794, %v1934
      %v2020 = vmul.f32 %v1795, %v1939
      %v2021 = vmul.f32 %v1796, %v1944
      %v2022 = vmul.f32 %v1797, %v1949
      %v2023 = vmul.f32 %v1798, %v1954
      %v2024 = vmul.f32 %v1799, %v1959
      %v2025 = vmul.f32 %v1800, %v1964
      %v2026 = vmul.f32 %v1801, %v1969
      %v2027 = vmul.f32 %v1802, %v1974
      %v2028 = vmul.f32 %v1803, %v1979
      %v2029 = vmul.f32 %v1804, %v1984
      %v2030 = vmul.f32 %v1805, %v1989
      %v2031 = vmul.f32 %v1806, %v1994
      %v2032 = vmul.f32 %v1807, %v1999
      %s2033 = scalar_lea.vmem %s3, 16
      %v2034 = vld [vmem:[%s2033] sm:$0xff]
      %v2036 = vsel %vm353, %v2001, 0
      %v2039 = vsel %vm353, %v2002, 0
      %v2042 = vsel %vm353, %v2003, 0
      %v2045 = vsel %vm353, %v2004, 0
      %v2048 = vsel %vm353, %v2005, 0
      %v2051 = vsel %vm353, %v2006, 0
      %v2054 = vsel %vm353, %v2007, 0
      %v2057 = vsel %vm353, %v2008, 0
      %v2060 = vsel %vm353, %v2009, 0
      %v2063 = vsel %vm353, %v2010, 0
      %v2066 = vsel %vm353, %v2011, 0
      %v2069 = vsel %vm353, %v2012, 0
      %v2072 = vsel %vm353, %v2013, 0
      %v2075 = vsel %vm353, %v2014, 0
      %v2078 = vsel %vm353, %v2015, 0
      %v2081 = vsel %vm353, %v2016, 0
      %v2084 = vsel %vm353, %v2017, 0
      %v2087 = vsel %vm353, %v2018, 0
      %v2090 = vsel %vm353, %v2019, 0
      %v2093 = vsel %vm353, %v2020, 0
      %v2096 = vsel %vm353, %v2021, 0
      %v2099 = vsel %vm353, %v2022, 0
      %v2102 = vsel %vm353, %v2023, 0
      %v2105 = vsel %vm353, %v2024, 0
      %v2108 = vsel %vm353, %v2025, 0
      %v2111 = vsel %vm353, %v2026, 0
      %v2114 = vsel %vm353, %v2027, 0
      %v2117 = vsel %vm353, %v2028, 0
      %v2120 = vsel %vm353, %v2029, 0
      %v2123 = vsel %vm353, %v2030, 0
      %v2126 = vsel %vm353, %v2031, 0
      %v2129 = vsel %vm353, %v2032, 0
      %2131 = vmatprep.subr.mxu0 0.0
      %2132 = vmatpush1.msra.mxu0 %v2034
      %2133 = vmatprep.subr.mxu0 0.0
      %2134 = vmatpush1.msra.mxu0 0.0
      %2135 = vmatprep.subr.mxu0 0.0
      %2136 = vmatpush1.msra.mxu0 0.0
      %2137 = vmatprep.subr.mxu0 0.0
      %2138 = vmatpush1.msra.mxu0 0.0
      %2139 = vmatprep.subr.mxu0 0.0
      %2140 = vmatpush1.msra.mxu0 0.0
      %2141 = vmatprep.subr.mxu0 0.0
      %2142 = vmatpush1.msra.mxu0 0.0
      %2143 = vmatprep.subr.mxu0 0.0
      %2144 = vmatpush1.msra.mxu0 0.0
      %2145 = vmatprep.subr.mxu0 0.0
      %2146 = vmatpush1.msra.mxu0 0.0
      %2147 = vmatprep.subr.mxu0 0.0
      %2148 = vmatpush1.msra.mxu0 0.0
      %2149 = vmatprep.subr.mxu0 0.0
      %2150 = vmatpush1.msra.mxu0 0.0
      %2151 = vmatprep.subr.mxu0 0.0
      %2152 = vmatpush1.msra.mxu0 0.0
      %2153 = vmatprep.subr.mxu0 0.0
      %2154 = vmatpush1.msra.mxu0 0.0
      %2155 = vmatprep.subr.mxu0 0.0
      %2156 = vmatpush1.msra.mxu0 0.0
      %2157 = vmatprep.subr.mxu0 0.0
      %2158 = vmatpush1.msra.mxu0 0.0
      %2159 = vmatprep.subr.mxu0 0.0
      %2160 = vmatpush1.msra.mxu0 0.0
      %2161 = vmatprep.subr.mxu0 0.0
      %2162 = vmatpush1.msra.mxu0 0.0
      %2163 = vmatprep.subr.mxu0 0.0
      %2164 = vmatpush1.msra.mxu0 0.0
      %2165 = vmatprep.subr.mxu0 0.0
      %2166 = vmatpush1.msra.mxu0 0.0
      %2167 = vmatprep.subr.mxu0 0.0
      %2168 = vmatpush1.msra.mxu0 0.0
      %2169 = vmatprep.subr.mxu0 0.0
      %2170 = vmatpush1.msra.mxu0 0.0
      %2171 = vmatprep.subr.mxu0 0.0
      %2172 = vmatpush1.msra.mxu0 0.0
      %2173 = vmatprep.subr.mxu0 0.0
      %2174 = vmatpush1.msra.mxu0 0.0
      %2175 = vmatprep.subr.mxu0 0.0
      %2176 = vmatpush1.msra.mxu0 0.0
      %2177 = vmatprep.subr.mxu0 0.0
      %2178 = vmatpush1.msra.mxu0 0.0
      %2179 = vmatprep.subr.mxu0 0.0
      %2180 = vmatpush1.msra.mxu0 0.0
      %2181 = vmatprep.subr.mxu0 0.0
      %2182 = vmatpush1.msra.mxu0 0.0
      %2183 = vmatprep.subr.mxu0 0.0
      %2184 = vmatpush1.msra.mxu0 0.0
      %2185 = vmatprep.subr.mxu0 0.0
      %2186 = vmatpush1.msra.mxu0 0.0
      %2187 = vmatprep.subr.mxu0 0.0
      %2188 = vmatpush1.msra.mxu0 0.0
      %2189 = vmatprep.subr.mxu0 0.0
      %2190 = vmatpush1.msra.mxu0 0.0
      %2191 = vmatprep.subr.mxu0 0.0
      %2192 = vmatpush1.msra.mxu0 0.0
      %2193 = vmatprep.subr.mxu0 0.0
      %2194 = vmatpush1.msra.mxu0 0.0
      %2195 = vmatprep.mubr.f32.mxu0 0.0
      %2196 = vmatmul.mubr.f32.gmra.mrb[0].mxu0 %v2036
      %v2197 = vpop.f32.mrb[0].mxu0
      %v2198 = vadd.f32 0.0, %v2197
      %v2199 = vpop.f32.mrb[0].mxu0
      %2200 = vmatprep.mubr.f32.mxu0 0.0
      %2201 = vmatmul.mubr.f32.gmra.mrb[0].mxu0 %v2039
      %v2202 = vpop.f32.mrb[0].mxu0
      %v2203 = vadd.f32 0.0, %v2202
      %v2204 = vpop.f32.mrb[0].mxu0
      %2205 = vmatprep.mubr.f32.mxu0 0.0
      %2206 = vmatmul.mubr.f32.gmra.mrb[0].mxu0 %v2042
      %v2207 = vpop.f32.mrb[0].mxu0
      %v2208 = vadd.f32 0.0, %v2207
      %v2209 = vpop.f32.mrb[0].mxu0
      %2210 = vmatprep.mubr.f32.mxu0 0.0
      %2211 = vmatmul.mubr.f32.gmra.mrb[0].mxu0 %v2045
      %v2212 = vpop.f32.mrb[0].mxu0
      %v2213 = vadd.f32 0.0, %v2212
      %v2214 = vpop.f32.mrb[0].mxu0
      %2215 = vmatprep.mubr.f32.mxu0 0.0
      %2216 = vmatmul.mubr.f32.gmra.mrb[0].mxu0 %v2048
      %v2217 = vpop.f32.mrb[0].mxu0
      %v2218 = vadd.f32 0.0, %v2217
      %v2219 = vpop.f32.mrb[0].mxu0
      %2220 = vmatprep.mubr.f32.mxu0 0.0
      %2221 = vmatmul.mubr.f32.gmra.mrb[0].mxu0 %v2051
      %v2222 = vpop.f32.mrb[0].mxu0
      %v2223 = vadd.f32 0.0, %v2222
      %v2224 = vpop.f32.mrb[0].mxu0
      %2225 = vmatprep.mubr.f32.mxu0 0.0
      %2226 = vmatmul.mubr.f32.gmra.mrb[0].mxu0 %v2054
      %v2227 = vpop.f32.mrb[0].mxu0
      %v2228 = vadd.f32 0.0, %v2227
      %v2229 = vpop.f32.mrb[0].mxu0
      %2230 = vmatprep.mubr.f32.mxu0 0.0
      %2231 = vmatmul.mubr.f32.gmra.mrb[0].mxu0 %v2057
      %v2232 = vpop.f32.mrb[0].mxu0
      %v2233 = vadd.f32 0.0, %v2232
      %v2234 = vpop.f32.mrb[0].mxu0
      %2235 = vmatprep.mubr.f32.mxu0 0.0
      %2236 = vmatmul.mubr.f32.gmra.mrb[0].mxu0 %v2060
      %v2237 = vpop.f32.mrb[0].mxu0
      %v2238 = vadd.f32 0.0, %v2237
      %v2239 = vpop.f32.mrb[0].mxu0
      %2240 = vmatprep.mubr.f32.mxu0 0.0
      %2241 = vmatmul.mubr.f32.gmra.mrb[0].mxu0 %v2063
      %v2242 = vpop.f32.mrb[0].mxu0
      %v2243 = vadd.f32 0.0, %v2242
      %v2244 = vpop.f32.mrb[0].mxu0
      %2245 = vmatprep.mubr.f32.mxu0 0.0
      %2246 = vmatmul.mubr.f32.gmra.mrb[0].mxu0 %v2066
      %v2247 = vpop.f32.mrb[0].mxu0
      %v2248 = vadd.f32 0.0, %v2247
      %v2249 = vpop.f32.mrb[0].mxu0
      %2250 = vmatprep.mubr.f32.mxu0 0.0
      %2251 = vmatmul.mubr.f32.gmra.mrb[0].mxu0 %v2069
      %v2252 = vpop.f32.mrb[0].mxu0
      %v2253 = vadd.f32 0.0, %v2252
      %v2254 = vpop.f32.mrb[0].mxu0
      %2255 = vmatprep.mubr.f32.mxu0 0.0
      %2256 = vmatmul.mubr.f32.gmra.mrb[0].mxu0 %v2072
      %v2257 = vpop.f32.mrb[0].mxu0
      %v2258 = vadd.f32 0.0, %v2257
      %v2259 = vpop.f32.mrb[0].mxu0
      %2260 = vmatprep.mubr.f32.mxu0 0.0
      %2261 = vmatmul.mubr.f32.gmra.mrb[0].mxu0 %v2075
      %v2262 = vpop.f32.mrb[0].mxu0
      %v2263 = vadd.f32 0.0, %v2262
      %v2264 = vpop.f32.mrb[0].mxu0
      %2265 = vmatprep.mubr.f32.mxu0 0.0
      %2266 = vmatmul.mubr.f32.gmra.mrb[0].mxu0 %v2078
      %v2267 = vpop.f32.mrb[0].mxu0
      %v2268 = vadd.f32 0.0, %v2267
      %v2269 = vpop.f32.mrb[0].mxu0
      %2270 = vmatprep.mubr.f32.mxu0 0.0
      %2271 = vmatmul.mubr.f32.gmra.mrb[0].mxu0 %v2081
      %v2272 = vpop.f32.mrb[0].mxu0
      %v2273 = vadd.f32 0.0, %v2272
      %v2274 = vpop.f32.mrb[0].mxu0
      %2275 = vmatprep.mubr.f32.mxu0 0.0
      %2276 = vmatmul.mubr.f32.gmra.mrb[0].mxu0 %v2084
      %v2277 = vpop.f32.mrb[0].mxu0
      %v2278 = vadd.f32 0.0, %v2277
      %v2279 = vpop.f32.mrb[0].mxu0
      %2280 = vmatprep.mubr.f32.mxu0 0.0
      %2281 = vmatmul.mubr.f32.gmra.mrb[0].mxu0 %v2087
      %v2282 = vpop.f32.mrb[0].mxu0
      %v2283 = vadd.f32 0.0, %v2282
      %v2284 = vpop.f32.mrb[0].mxu0
      %2285 = vmatprep.mubr.f32.mxu0 0.0
      %2286 = vmatmul.mubr.f32.gmra.mrb[0].mxu0 %v2090
      %v2287 = vpop.f32.mrb[0].mxu0
      %v2288 = vadd.f32 0.0, %v2287
      %v2289 = vpop.f32.mrb[0].mxu0
      %2290 = vmatprep.mubr.f32.mxu0 0.0
      %2291 = vmatmul.mubr.f32.gmra.mrb[0].mxu0 %v2093
      %v2292 = vpop.f32.mrb[0].mxu0
      %v2293 = vadd.f32 0.0, %v2292
      %v2294 = vpop.f32.mrb[0].mxu0
      %2295 = vmatprep.mubr.f32.mxu0 0.0
      %2296 = vmatmul.mubr.f32.gmra.mrb[0].mxu0 %v2096
      %v2297 = vpop.f32.mrb[0].mxu0
      %v2298 = vadd.f32 0.0, %v2297
      %v2299 = vpop.f32.mrb[0].mxu0
      %2300 = vmatprep.mubr.f32.mxu0 0.0
      %2301 = vmatmul.mubr.f32.gmra.mrb[0].mxu0 %v2099
      %v2302 = vpop.f32.mrb[0].mxu0
      %v2303 = vadd.f32 0.0, %v2302
      %v2304 = vpop.f32.mrb[0].mxu0
      %2305 = vmatprep.mubr.f32.mxu0 0.0
      %2306 = vmatmul.mubr.f32.gmra.mrb[0].mxu0 %v2102
      %v2307 = vpop.f32.mrb[0].mxu0
      %v2308 = vadd.f32 0.0, %v2307
      %v2309 = vpop.f32.mrb[0].mxu0
      %2310 = vmatprep.mubr.f32.mxu0 0.0
      %2311 = vmatmul.mubr.f32.gmra.mrb[0].mxu0 %v2105
      %v2312 = vpop.f32.mrb[0].mxu0
      %v2313 = vadd.f32 0.0, %v2312
      %v2314 = vpop.f32.mrb[0].mxu0
      %2315 = vmatprep.mubr.f32.mxu0 0.0
      %2316 = vmatmul.mubr.f32.gmra.mrb[0].mxu0 %v2108
      %v2317 = vpop.f32.mrb[0].mxu0
      %v2318 = vadd.f32 0.0, %v2317
      %v2319 = vpop.f32.mrb[0].mxu0
      %2320 = vmatprep.mubr.f32.mxu0 0.0
      %2321 = vmatmul.mubr.f32.gmra.mrb[0].mxu0 %v2111
      %v2322 = vpop.f32.mrb[0].mxu0
      %v2323 = vadd.f32 0.0, %v2322
      %v2324 = vpop.f32.mrb[0].mxu0
      %2325 = vmatprep.mubr.f32.mxu0 0.0
      %2326 = vmatmul.mubr.f32.gmra.mrb[0].mxu0 %v2114
      %v2327 = vpop.f32.mrb[0].mxu0
      %v2328 = vadd.f32 0.0, %v2327
      %v2329 = vpop.f32.mrb[0].mxu0
      %2330 = vmatprep.mubr.f32.mxu0 0.0
      %2331 = vmatmul.mubr.f32.gmra.mrb[0].mxu0 %v2117
      %v2332 = vpop.f32.mrb[0].mxu0
      %v2333 = vadd.f32 0.0, %v2332
      %v2334 = vpop.f32.mrb[0].mxu0
      %2335 = vmatprep.mubr.f32.mxu0 0.0
      %2336 = vmatmul.mubr.f32.gmra.mrb[0].mxu0 %v2120
      %v2337 = vpop.f32.mrb[0].mxu0
      %v2338 = vadd.f32 0.0, %v2337
      %v2339 = vpop.f32.mrb[0].mxu0
      %2340 = vmatprep.mubr.f32.mxu0 0.0
      %2341 = vmatmul.mubr.f32.gmra.mrb[0].mxu0 %v2123
      %v2342 = vpop.f32.mrb[0].mxu0
      %v2343 = vadd.f32 0.0, %v2342
      %v2344 = vpop.f32.mrb[0].mxu0
      %2345 = vmatprep.mubr.f32.mxu0 0.0
      %2346 = vmatmul.mubr.f32.gmra.mrb[0].mxu0 %v2126
      %v2347 = vpop.f32.mrb[0].mxu0
      %v2348 = vadd.f32 0.0, %v2347
      %v2349 = vpop.f32.mrb[0].mxu0
      %2350 = vmatprep.mubr.f32.mxu0 0.0
      %2351 = vmatmul.mubr.f32.gmra.mrb[0].mxu0 %v2129
      %v2352 = vpop.f32.mrb[0].mxu0
      %v2353 = vadd.f32 0.0, %v2352
      %v2354 = vpop.f32.mrb[0].mxu0
      %2355 = vdwg.mxu0
      %v2356 = vadd.f32 %v1618, %v2198
      %v2357 = vadd.f32 %v1623, %v2203
      %v2358 = vadd.f32 %v1628, %v2208
      %v2359 = vadd.f32 %v1633, %v2213
      %v2360 = vadd.f32 %v1638, %v2218
      %v2361 = vadd.f32 %v1643, %v2223
      %v2362 = vadd.f32 %v1648, %v2228
      %v2363 = vadd.f32 %v1653, %v2233
      %v2364 = vadd.f32 %v1658, %v2238
      %v2365 = vadd.f32 %v1663, %v2243
      %v2366 = vadd.f32 %v1668, %v2248
      %v2367 = vadd.f32 %v1673, %v2253
      %v2368 = vadd.f32 %v1678, %v2258
      %v2369 = vadd.f32 %v1683, %v2263
      %v2370 = vadd.f32 %v1688, %v2268
      %v2371 = vadd.f32 %v1693, %v2273
      %v2372 = vadd.f32 %v1698, %v2278
      %v2373 = vadd.f32 %v1703, %v2283
      %v2374 = vadd.f32 %v1708, %v2288
      %v2375 = vadd.f32 %v1713, %v2293
      %v2376 = vadd.f32 %v1718, %v2298
      %v2377 = vadd.f32 %v1723, %v2303
      %v2378 = vadd.f32 %v1728, %v2308
      %v2379 = vadd.f32 %v1733, %v2313
      %v2380 = vadd.f32 %v1738, %v2318
      %v2381 = vadd.f32 %v1743, %v2323
      %v2382 = vadd.f32 %v1748, %v2328
      %v2383 = vadd.f32 %v1753, %v2333
      %v2384 = vadd.f32 %v1758, %v2338
      %v2385 = vadd.f32 %v1763, %v2343
      %v2386 = vadd.f32 %v1768, %v2348
      %v2387 = vadd.f32 %v1773, %v2353
      %v2388 = vld [vmem:[#allocation2 + $0x17] sm:$0xff]
      %v2389 = vld [vmem:[#allocation2 + $0x1f] sm:$0xff]
      %v2390 = vld [vmem:[#allocation2 + $0x27] sm:$0xff]
      %v2391 = vld [vmem:[#allocation2 + $0x2f] sm:$0xff]
      %v2392 = vld [vmem:[#allocation2 + $0x37] sm:$0xff]
      %v2393 = vld [vmem:[#allocation2 + $0x3f] sm:$0xff]
      %v2394 = vld [vmem:[#allocation2 + $0x47] sm:$0xff]
      %v2395 = vld [vmem:[#allocation2 + $0x4f] sm:$0xff]
      %v2396 = vld [vmem:[#allocation2 + $0x57] sm:$0xff]
      %v2397 = vld [vmem:[#allocation2 + $0x5f] sm:$0xff]
      %v2398 = vld [vmem:[#allocation2 + $0x67] sm:$0xff]
      %v2399 = vld [vmem:[#allocation2 + $0x6f] sm:$0xff]
      %v2400 = vld [vmem:[#allocation2 + $0x77] sm:$0xff]
      %v2401 = vld [vmem:[#allocation2 + $0x7f] sm:$0xff]
      %v2402 = vld [vmem:[#allocation2 + $0x87] sm:$0xff]
      %v2403 = vld [vmem:[#allocation2 + $0x8f] sm:$0xff]
      %v2404 = vld [vmem:[#allocation2 + $0x97] sm:$0xff]
      %v2405 = vld [vmem:[#allocation2 + $0x9f] sm:$0xff]
      %v2406 = vld [vmem:[#allocation2 + $0xa7] sm:$0xff]
      %v2407 = vld [vmem:[#allocation2 + $0xaf] sm:$0xff]
      %v2408 = vld [vmem:[#allocation2 + $0xb7] sm:$0xff]
      %v2409 = vld [vmem:[#allocation2 + $0xbf] sm:$0xff]
      %v2410 = vld [vmem:[#allocation2 + $0xc7] sm:$0xff]
      %v2411 = vld [vmem:[#allocation2 + $0xcf] sm:$0xff]
      %v2412 = vld [vmem:[#allocation2 + $0xd7] sm:$0xff]
      %v2413 = vld [vmem:[#allocation2 + $0xdf] sm:$0xff]
      %v2414 = vld [vmem:[#allocation2 + $0xe7] sm:$0xff]
      %v2415 = vld [vmem:[#allocation2 + $0xef] sm:$0xff]
      %v2416 = vld [vmem:[#allocation2 + $0xf7] sm:$0xff]
      %v2417 = vld [vmem:[#allocation2 + $0xff] sm:$0xff]
      %v2418 = vld [vmem:[#allocation2 + $0x107] sm:$0xff]
      %v2419 = vld [vmem:[#allocation2 + $0x10f] sm:$0xff]
      %s2420 = scalar_lea.vmem %s2, 768
      %v2421 = vld [vmem:[%s2420] sm:$0xff]
      %v2422 = vld [vmem:[%s2420 + $0x8] sm:$0xff]
      %v2423 = vld [vmem:[%s2420 + $0x10] sm:$0xff]
      %v2424 = vld [vmem:[%s2420 + $0x18] sm:$0xff]
      %v2425 = vld [vmem:[%s2420 + $0x20] sm:$0xff]
      %v2426 = vld [vmem:[%s2420 + $0x28] sm:$0xff]
      %v2427 = vld [vmem:[%s2420 + $0x30] sm:$0xff]
      %v2428 = vld [vmem:[%s2420 + $0x38] sm:$0xff]
      %v2429 = vld [vmem:[%s2420 + $0x40] sm:$0xff]
      %v2430 = vld [vmem:[%s2420 + $0x48] sm:$0xff]
      %v2431 = vld [vmem:[%s2420 + $0x50] sm:$0xff]
      %v2432 = vld [vmem:[%s2420 + $0x58] sm:$0xff]
      %v2433 = vld [vmem:[%s2420 + $0x60] sm:$0xff]
      %v2434 = vld [vmem:[%s2420 + $0x68] sm:$0xff]
      %v2435 = vld [vmem:[%s2420 + $0x70] sm:$0xff]
      %v2436 = vld [vmem:[%s2420 + $0x78] sm:$0xff]
      %v2437 = vld [vmem:[%s2420 + $0x80] sm:$0xff]
      %v2438 = vld [vmem:[%s2420 + $0x88] sm:$0xff]
      %v2439 = vld [vmem:[%s2420 + $0x90] sm:$0xff]
      %v2440 = vld [vmem:[%s2420 + $0x98] sm:$0xff]
      %v2441 = vld [vmem:[%s2420 + $0xa0] sm:$0xff]
      %v2442 = vld [vmem:[%s2420 + $0xa8] sm:$0xff]
      %v2443 = vld [vmem:[%s2420 + $0xb0] sm:$0xff]
      %v2444 = vld [vmem:[%s2420 + $0xb8] sm:$0xff]
      %v2445 = vld [vmem:[%s2420 + $0xc0] sm:$0xff]
      %v2446 = vld [vmem:[%s2420 + $0xc8] sm:$0xff]
      %v2447 = vld [vmem:[%s2420 + $0xd0] sm:$0xff]
      %v2448 = vld [vmem:[%s2420 + $0xd8] sm:$0xff]
      %v2449 = vld [vmem:[%s2420 + $0xe0] sm:$0xff]
      %v2450 = vld [vmem:[%s2420 + $0xe8] sm:$0xff]
      %v2451 = vld [vmem:[%s2420 + $0xf0] sm:$0xff]
      %v2452 = vld [vmem:[%s2420 + $0xf8] sm:$0xff]
      %2454 = vset.pattern.permute.xlu0 0
      %2455 = vperm.xlu0 %2454, %v2421
      %v2456 = vpop.permute.xlu0 %2455
      %2459 = vset.pattern.permute.xlu0 0
      %2460 = vperm.xlu0 %2459, %v2422
      %v2461 = vpop.permute.xlu0 %2460
      %2464 = vset.pattern.permute.xlu0 0
      %2465 = vperm.xlu0 %2464, %v2423
      %v2466 = vpop.permute.xlu0 %2465
      %2469 = vset.pattern.permute.xlu0 0
      %2470 = vperm.xlu0 %2469, %v2424
      %v2471 = vpop.permute.xlu0 %2470
      %2474 = vset.pattern.permute.xlu0 0
      %2475 = vperm.xlu0 %2474, %v2425
      %v2476 = vpop.permute.xlu0 %2475
      %2479 = vset.pattern.permute.xlu0 0
      %2480 = vperm.xlu0 %2479, %v2426
      %v2481 = vpop.permute.xlu0 %2480
      %2484 = vset.pattern.permute.xlu0 0
      %2485 = vperm.xlu0 %2484, %v2427
      %v2486 = vpop.permute.xlu0 %2485
      %2489 = vset.pattern.permute.xlu0 0
      %2490 = vperm.xlu0 %2489, %v2428
      %v2491 = vpop.permute.xlu0 %2490
      %2494 = vset.pattern.permute.xlu0 0
      %2495 = vperm.xlu0 %2494, %v2429
      %v2496 = vpop.permute.xlu0 %2495
      %2499 = vset.pattern.permute.xlu0 0
      %2500 = vperm.xlu0 %2499, %v2430
      %v2501 = vpop.permute.xlu0 %2500
      %2504 = vset.pattern.permute.xlu0 0
      %2505 = vperm.xlu0 %2504, %v2431
      %v2506 = vpop.permute.xlu0 %2505
      %2509 = vset.pattern.permute.xlu0 0
      %2510 = vperm.xlu0 %2509, %v2432
      %v2511 = vpop.permute.xlu0 %2510
      %2514 = vset.pattern.permute.xlu0 0
      %2515 = vperm.xlu0 %2514, %v2433
      %v2516 = vpop.permute.xlu0 %2515
      %2519 = vset.pattern.permute.xlu0 0
      %2520 = vperm.xlu0 %2519, %v2434
      %v2521 = vpop.permute.xlu0 %2520
      %2524 = vset.pattern.permute.xlu0 0
      %2525 = vperm.xlu0 %2524, %v2435
      %v2526 = vpop.permute.xlu0 %2525
      %2529 = vset.pattern.permute.xlu0 0
      %2530 = vperm.xlu0 %2529, %v2436
      %v2531 = vpop.permute.xlu0 %2530
      %2534 = vset.pattern.permute.xlu0 0
      %2535 = vperm.xlu0 %2534, %v2437
      %v2536 = vpop.permute.xlu0 %2535
      %2539 = vset.pattern.permute.xlu0 0
      %2540 = vperm.xlu0 %2539, %v2438
      %v2541 = vpop.permute.xlu0 %2540
      %2544 = vset.pattern.permute.xlu0 0
      %2545 = vperm.xlu0 %2544, %v2439
      %v2546 = vpop.permute.xlu0 %2545
      %2549 = vset.pattern.permute.xlu0 0
      %2550 = vperm.xlu0 %2549, %v2440
      %v2551 = vpop.permute.xlu0 %2550
      %2554 = vset.pattern.permute.xlu0 0
      %2555 = vperm.xlu0 %2554, %v2441
      %v2556 = vpop.permute.xlu0 %2555
      %2559 = vset.pattern.permute.xlu0 0
      %2560 = vperm.xlu0 %2559, %v2442
      %v2561 = vpop.permute.xlu0 %2560
      %2564 = vset.pattern.permute.xlu0 0
      %2565 = vperm.xlu0 %2564, %v2443
      %v2566 = vpop.permute.xlu0 %2565
      %2569 = vset.pattern.permute.xlu0 0
      %2570 = vperm.xlu0 %2569, %v2444
      %v2571 = vpop.permute.xlu0 %2570
      %2574 = vset.pattern.permute.xlu0 0
      %2575 = vperm.xlu0 %2574, %v2445
      %v2576 = vpop.permute.xlu0 %2575
      %2579 = vset.pattern.permute.xlu0 0
      %2580 = vperm.xlu0 %2579, %v2446
      %v2581 = vpop.permute.xlu0 %2580
      %2584 = vset.pattern.permute.xlu0 0
      %2585 = vperm.xlu0 %2584, %v2447
      %v2586 = vpop.permute.xlu0 %2585
      %2589 = vset.pattern.permute.xlu0 0
      %2590 = vperm.xlu0 %2589, %v2448
      %v2591 = vpop.permute.xlu0 %2590
      %2594 = vset.pattern.permute.xlu0 0
      %2595 = vperm.xlu0 %2594, %v2449
      %v2596 = vpop.permute.xlu0 %2595
      %2599 = vset.pattern.permute.xlu0 0
      %2600 = vperm.xlu0 %2599, %v2450
      %v2601 = vpop.permute.xlu0 %2600
      %2604 = vset.pattern.permute.xlu0 0
      %2605 = vperm.xlu0 %2604, %v2451
      %v2606 = vpop.permute.xlu0 %2605
      %2609 = vset.pattern.permute.xlu0 0
      %2610 = vperm.xlu0 %2609, %v2452
      %v2611 = vpop.permute.xlu0 %2610
      %v2613 = vmul.f32 %v2388, %v2456
      %v2614 = vmul.f32 %v2389, %v2461
      %v2615 = vmul.f32 %v2390, %v2466
      %v2616 = vmul.f32 %v2391, %v2471
      %v2617 = vmul.f32 %v2392, %v2476
      %v2618 = vmul.f32 %v2393, %v2481
      %v2619 = vmul.f32 %v2394, %v2486
      %v2620 = vmul.f32 %v2395, %v2491
      %v2621 = vmul.f32 %v2396, %v2496
      %v2622 = vmul.f32 %v2397, %v2501
      %v2623 = vmul.f32 %v2398, %v2506
      %v2624 = vmul.f32 %v2399, %v2511
      %v2625 = vmul.f32 %v2400, %v2516
      %v2626 = vmul.f32 %v2401, %v2521
      %v2627 = vmul.f32 %v2402, %v2526
      %v2628 = vmul.f32 %v2403, %v2531
      %v2629 = vmul.f32 %v2404, %v2536
      %v2630 = vmul.f32 %v2405, %v2541
      %v2631 = vmul.f32 %v2406, %v2546
      %v2632 = vmul.f32 %v2407, %v2551
      %v2633 = vmul.f32 %v2408, %v2556
      %v2634 = vmul.f32 %v2409, %v2561
      %v2635 = vmul.f32 %v2410, %v2566
      %v2636 = vmul.f32 %v2411, %v2571
      %v2637 = vmul.f32 %v2412, %v2576
      %v2638 = vmul.f32 %v2413, %v2581
      %v2639 = vmul.f32 %v2414, %v2586
      %v2640 = vmul.f32 %v2415, %v2591
      %v2641 = vmul.f32 %v2416, %v2596
      %v2642 = vmul.f32 %v2417, %v2601
      %v2643 = vmul.f32 %v2418, %v2606
      %v2644 = vmul.f32 %v2419, %v2611
      %s2645 = scalar_lea.vmem %s3, 24
      %v2646 = vld [vmem:[%s2645] sm:$0xff]
      %v2648 = vsel %vm353, %v2613, 0
      %v2651 = vsel %vm353, %v2614, 0
      %v2654 = vsel %vm353, %v2615, 0
      %v2657 = vsel %vm353, %v2616, 0
      %v2660 = vsel %vm353, %v2617, 0
      %v2663 = vsel %vm353, %v2618, 0
      %v2666 = vsel %vm353, %v2619, 0
      %v2669 = vsel %vm353, %v2620, 0
      %v2672 = vsel %vm353, %v2621, 0
      %v2675 = vsel %vm353, %v2622, 0
      %v2678 = vsel %vm353, %v2623, 0
      %v2681 = vsel %vm353, %v2624, 0
      %v2684 = vsel %vm353, %v2625, 0
      %v2687 = vsel %vm353, %v2626, 0
      %v2690 = vsel %vm353, %v2627, 0
      %v2693 = vsel %vm353, %v2628, 0
      %v2696 = vsel %vm353, %v2629, 0
      %v2699 = vsel %vm353, %v2630, 0
      %v2702 = vsel %vm353, %v2631, 0
      %v2705 = vsel %vm353, %v2632, 0
      %v2708 = vsel %vm353, %v2633, 0
      %v2711 = vsel %vm353, %v2634, 0
      %v2714 = vsel %vm353, %v2635, 0
      %v2717 = vsel %vm353, %v2636, 0
      %v2720 = vsel %vm353, %v2637, 0
      %v2723 = vsel %vm353, %v2638, 0
      %v2726 = vsel %vm353, %v2639, 0
      %v2729 = vsel %vm353, %v2640, 0
      %v2732 = vsel %vm353, %v2641, 0
      %v2735 = vsel %vm353, %v2642, 0
      %v2738 = vsel %vm353, %v2643, 0
      %v2741 = vsel %vm353, %v2644, 0
      %2743 = vmatprep.subr.mxu0 0.0
      %2744 = vmatpush1.msra.mxu0 %v2646
      %2745 = vmatprep.subr.mxu0 0.0
      %2746 = vmatpush1.msra.mxu0 0.0
      %2747 = vmatprep.subr.mxu0 0.0
      %2748 = vmatpush1.msra.mxu0 0.0
      %2749 = vmatprep.subr.mxu0 0.0
      %2750 = vmatpush1.msra.mxu0 0.0
      %2751 = vmatprep.subr.mxu0 0.0
      %2752 = vmatpush1.msra.mxu0 0.0
      %2753 = vmatprep.subr.mxu0 0.0
      %2754 = vmatpush1.msra.mxu0 0.0
      %2755 = vmatprep.subr.mxu0 0.0
      %2756 = vmatpush1.msra.mxu0 0.0
      %2757 = vmatprep.subr.mxu0 0.0
      %2758 = vmatpush1.msra.mxu0 0.0
      %2759 = vmatprep.subr.mxu0 0.0
      %2760 = vmatpush1.msra.mxu0 0.0
      %2761 = vmatprep.subr.mxu0 0.0
      %2762 = vmatpush1.msra.mxu0 0.0
      %2763 = vmatprep.subr.mxu0 0.0
      %2764 = vmatpush1.msra.mxu0 0.0
      %2765 = vmatprep.subr.mxu0 0.0
      %2766 = vmatpush1.msra.mxu0 0.0
      %2767 = vmatprep.subr.mxu0 0.0
      %2768 = vmatpush1.msra.mxu0 0.0
      %2769 = vmatprep.subr.mxu0 0.0
      %2770 = vmatpush1.msra.mxu0 0.0
      %2771 = vmatprep.subr.mxu0 0.0
      %2772 = vmatpush1.msra.mxu0 0.0
      %2773 = vmatprep.subr.mxu0 0.0
      %2774 = vmatpush1.msra.mxu0 0.0
      %2775 = vmatprep.subr.mxu0 0.0
      %2776 = vmatpush1.msra.mxu0 0.0
      %2777 = vmatprep.subr.mxu0 0.0
      %2778 = vmatpush1.msra.mxu0 0.0
      %2779 = vmatprep.subr.mxu0 0.0
      %2780 = vmatpush1.msra.mxu0 0.0
      %2781 = vmatprep.subr.mxu0 0.0
      %2782 = vmatpush1.msra.mxu0 0.0
      %2783 = vmatprep.subr.mxu0 0.0
      %2784 = vmatpush1.msra.mxu0 0.0
      %2785 = vmatprep.subr.mxu0 0.0
      %2786 = vmatpush1.msra.mxu0 0.0
      %2787 = vmatprep.subr.mxu0 0.0
      %2788 = vmatpush1.msra.mxu0 0.0
      %2789 = vmatprep.subr.mxu0 0.0
      %2790 = vmatpush1.msra.mxu0 0.0
      %2791 = vmatprep.subr.mxu0 0.0
      %2792 = vmatpush1.msra.mxu0 0.0
      %2793 = vmatprep.subr.mxu0 0.0
      %2794 = vmatpush1.msra.mxu0 0.0
      %2795 = vmatprep.subr.mxu0 0.0
      %2796 = vmatpush1.msra.mxu0 0.0
      %2797 = vmatprep.subr.mxu0 0.0
      %2798 = vmatpush1.msra.mxu0 0.0
      %2799 = vmatprep.subr.mxu0 0.0
      %2800 = vmatpush1.msra.mxu0 0.0
      %2801 = vmatprep.subr.mxu0 0.0
      %2802 = vmatpush1.msra.mxu0 0.0
      %2803 = vmatprep.subr.mxu0 0.0
      %2804 = vmatpush1.msra.mxu0 0.0
      %2805 = vmatprep.subr.mxu0 0.0
      %2806 = vmatpush1.msra.mxu0 0.0
      %2807 = vmatprep.mubr.f32.mxu0 0.0
      %2808 = vmatmul.mubr.f32.gmra.mrb[0].mxu0 %v2648
      %v2809 = vpop.f32.mrb[0].mxu0
      %v2810 = vadd.f32 0.0, %v2809
      %v2811 = vpop.f32.mrb[0].mxu0
      %2812 = vmatprep.mubr.f32.mxu0 0.0
      %2813 = vmatmul.mubr.f32.gmra.mrb[0].mxu0 %v2651
      %v2814 = vpop.f32.mrb[0].mxu0
      %v2815 = vadd.f32 0.0, %v2814
      %v2816 = vpop.f32.mrb[0].mxu0
      %2817 = vmatprep.mubr.f32.mxu0 0.0
      %2818 = vmatmul.mubr.f32.gmra.mrb[0].mxu0 %v2654
      %v2819 = vpop.f32.mrb[0].mxu0
      %v2820 = vadd.f32 0.0, %v2819
      %v2821 = vpop.f32.mrb[0].mxu0
      %2822 = vmatprep.mubr.f32.mxu0 0.0
      %2823 = vmatmul.mubr.f32.gmra.mrb[0].mxu0 %v2657
      %v2824 = vpop.f32.mrb[0].mxu0
      %v2825 = vadd.f32 0.0, %v2824
      %v2826 = vpop.f32.mrb[0].mxu0
      %2827 = vmatprep.mubr.f32.mxu0 0.0
      %2828 = vmatmul.mubr.f32.gmra.mrb[0].mxu0 %v2660
      %v2829 = vpop.f32.mrb[0].mxu0
      %v2830 = vadd.f32 0.0, %v2829
      %v2831 = vpop.f32.mrb[0].mxu0
      %2832 = vmatprep.mubr.f32.mxu0 0.0
      %2833 = vmatmul.mubr.f32.gmra.mrb[0].mxu0 %v2663
      %v2834 = vpop.f32.mrb[0].mxu0
      %v2835 = vadd.f32 0.0, %v2834
      %v2836 = vpop.f32.mrb[0].mxu0
      %2837 = vmatprep.mubr.f32.mxu0 0.0
      %2838 = vmatmul.mubr.f32.gmra.mrb[0].mxu0 %v2666
      %v2839 = vpop.f32.mrb[0].mxu0
      %v2840 = vadd.f32 0.0, %v2839
      %v2841 = vpop.f32.mrb[0].mxu0
      %2842 = vmatprep.mubr.f32.mxu0 0.0
      %2843 = vmatmul.mubr.f32.gmra.mrb[0].mxu0 %v2669
      %v2844 = vpop.f32.mrb[0].mxu0
      %v2845 = vadd.f32 0.0, %v2844
      %v2846 = vpop.f32.mrb[0].mxu0
      %2847 = vmatprep.mubr.f32.mxu0 0.0
      %2848 = vmatmul.mubr.f32.gmra.mrb[0].mxu0 %v2672
      %v2849 = vpop.f32.mrb[0].mxu0
      %v2850 = vadd.f32 0.0, %v2849
      %v2851 = vpop.f32.mrb[0].mxu0
      %2852 = vmatprep.mubr.f32.mxu0 0.0
      %2853 = vmatmul.mubr.f32.gmra.mrb[0].mxu0 %v2675
      %v2854 = vpop.f32.mrb[0].mxu0
      %v2855 = vadd.f32 0.0, %v2854
      %v2856 = vpop.f32.mrb[0].mxu0
      %2857 = vmatprep.mubr.f32.mxu0 0.0
      %2858 = vmatmul.mubr.f32.gmra.mrb[0].mxu0 %v2678
      %v2859 = vpop.f32.mrb[0].mxu0
      %v2860 = vadd.f32 0.0, %v2859
      %v2861 = vpop.f32.mrb[0].mxu0
      %2862 = vmatprep.mubr.f32.mxu0 0.0
      %2863 = vmatmul.mubr.f32.gmra.mrb[0].mxu0 %v2681
      %v2864 = vpop.f32.mrb[0].mxu0
      %v2865 = vadd.f32 0.0, %v2864
      %v2866 = vpop.f32.mrb[0].mxu0
      %2867 = vmatprep.mubr.f32.mxu0 0.0
      %2868 = vmatmul.mubr.f32.gmra.mrb[0].mxu0 %v2684
      %v2869 = vpop.f32.mrb[0].mxu0
      %v2870 = vadd.f32 0.0, %v2869
      %v2871 = vpop.f32.mrb[0].mxu0
      %2872 = vmatprep.mubr.f32.mxu0 0.0
      %2873 = vmatmul.mubr.f32.gmra.mrb[0].mxu0 %v2687
      %v2874 = vpop.f32.mrb[0].mxu0
      %v2875 = vadd.f32 0.0, %v2874
      %v2876 = vpop.f32.mrb[0].mxu0
      %2877 = vmatprep.mubr.f32.mxu0 0.0
      %2878 = vmatmul.mubr.f32.gmra.mrb[0].mxu0 %v2690
      %v2879 = vpop.f32.mrb[0].mxu0
      %v2880 = vadd.f32 0.0, %v2879
      %v2881 = vpop.f32.mrb[0].mxu0
      %2882 = vmatprep.mubr.f32.mxu0 0.0
      %2883 = vmatmul.mubr.f32.gmra.mrb[0].mxu0 %v2693
      %v2884 = vpop.f32.mrb[0].mxu0
      %v2885 = vadd.f32 0.0, %v2884
      %v2886 = vpop.f32.mrb[0].mxu0
      %2887 = vmatprep.mubr.f32.mxu0 0.0
      %2888 = vmatmul.mubr.f32.gmra.mrb[0].mxu0 %v2696
      %v2889 = vpop.f32.mrb[0].mxu0
      %v2890 = vadd.f32 0.0, %v2889
      %v2891 = vpop.f32.mrb[0].mxu0
      %2892 = vmatprep.mubr.f32.mxu0 0.0
      %2893 = vmatmul.mubr.f32.gmra.mrb[0].mxu0 %v2699
      %v2894 = vpop.f32.mrb[0].mxu0
      %v2895 = vadd.f32 0.0, %v2894
      %v2896 = vpop.f32.mrb[0].mxu0
      %2897 = vmatprep.mubr.f32.mxu0 0.0
      %2898 = vmatmul.mubr.f32.gmra.mrb[0].mxu0 %v2702
      %v2899 = vpop.f32.mrb[0].mxu0
      %v2900 = vadd.f32 0.0, %v2899
      %v2901 = vpop.f32.mrb[0].mxu0
      %2902 = vmatprep.mubr.f32.mxu0 0.0
      %2903 = vmatmul.mubr.f32.gmra.mrb[0].mxu0 %v2705
      %v2904 = vpop.f32.mrb[0].mxu0
      %v2905 = vadd.f32 0.0, %v2904
      %v2906 = vpop.f32.mrb[0].mxu0
      %2907 = vmatprep.mubr.f32.mxu0 0.0
      %2908 = vmatmul.mubr.f32.gmra.mrb[0].mxu0 %v2708
      %v2909 = vpop.f32.mrb[0].mxu0
      %v2910 = vadd.f32 0.0, %v2909
      %v2911 = vpop.f32.mrb[0].mxu0
      %2912 = vmatprep.mubr.f32.mxu0 0.0
      %2913 = vmatmul.mubr.f32.gmra.mrb[0].mxu0 %v2711
      %v2914 = vpop.f32.mrb[0].mxu0
      %v2915 = vadd.f32 0.0, %v2914
      %v2916 = vpop.f32.mrb[0].mxu0
      %2917 = vmatprep.mubr.f32.mxu0 0.0
      %2918 = vmatmul.mubr.f32.gmra.mrb[0].mxu0 %v2714
      %v2919 = vpop.f32.mrb[0].mxu0
      %v2920 = vadd.f32 0.0, %v2919
      %v2921 = vpop.f32.mrb[0].mxu0
      %2922 = vmatprep.mubr.f32.mxu0 0.0
      %2923 = vmatmul.mubr.f32.gmra.mrb[0].mxu0 %v2717
      %v2924 = vpop.f32.mrb[0].mxu0
      %v2925 = vadd.f32 0.0, %v2924
      %v2926 = vpop.f32.mrb[0].mxu0
      %2927 = vmatprep.mubr.f32.mxu0 0.0
      %2928 = vmatmul.mubr.f32.gmra.mrb[0].mxu0 %v2720
      %v2929 = vpop.f32.mrb[0].mxu0
      %v2930 = vadd.f32 0.0, %v2929
      %v2931 = vpop.f32.mrb[0].mxu0
      %2932 = vmatprep.mubr.f32.mxu0 0.0
      %2933 = vmatmul.mubr.f32.gmra.mrb[0].mxu0 %v2723
      %v2934 = vpop.f32.mrb[0].mxu0
      %v2935 = vadd.f32 0.0, %v2934
      %v2936 = vpop.f32.mrb[0].mxu0
      %2937 = vmatprep.mubr.f32.mxu0 0.0
      %2938 = vmatmul.mubr.f32.gmra.mrb[0].mxu0 %v2726
      %v2939 = vpop.f32.mrb[0].mxu0
      %v2940 = vadd.f32 0.0, %v2939
      %v2941 = vpop.f32.mrb[0].mxu0
      %2942 = vmatprep.mubr.f32.mxu0 0.0
      %2943 = vmatmul.mubr.f32.gmra.mrb[0].mxu0 %v2729
      %v2944 = vpop.f32.mrb[0].mxu0
      %v2945 = vadd.f32 0.0, %v2944
      %v2946 = vpop.f32.mrb[0].mxu0
      %2947 = vmatprep.mubr.f32.mxu0 0.0
      %2948 = vmatmul.mubr.f32.gmra.mrb[0].mxu0 %v2732
      %v2949 = vpop.f32.mrb[0].mxu0
      %v2950 = vadd.f32 0.0, %v2949
      %v2951 = vpop.f32.mrb[0].mxu0
      %2952 = vmatprep.mubr.f32.mxu0 0.0
      %2953 = vmatmul.mubr.f32.gmra.mrb[0].mxu0 %v2735
      %v2954 = vpop.f32.mrb[0].mxu0
      %v2955 = vadd.f32 0.0, %v2954
      %v2956 = vpop.f32.mrb[0].mxu0
      %2957 = vmatprep.mubr.f32.mxu0 0.0
      %2958 = vmatmul.mubr.f32.gmra.mrb[0].mxu0 %v2738
      %v2959 = vpop.f32.mrb[0].mxu0
      %v2960 = vadd.f32 0.0, %v2959
      %v2961 = vpop.f32.mrb[0].mxu0
      %2962 = vmatprep.mubr.f32.mxu0 0.0
      %2963 = vmatmul.mubr.f32.gmra.mrb[0].mxu0 %v2741
      %v2964 = vpop.f32.mrb[0].mxu0
      %v2965 = vadd.f32 0.0, %v2964
      %v2966 = vpop.f32.mrb[0].mxu0
      %2967 = vdwg.mxu0
      %v2968 = vadd.f32 %v2356, %v2810
      %v2969 = vadd.f32 %v2357, %v2815
      %v2970 = vadd.f32 %v2358, %v2820
      %v2971 = vadd.f32 %v2359, %v2825
      %v2972 = vadd.f32 %v2360, %v2830
      %v2973 = vadd.f32 %v2361, %v2835
      %v2974 = vadd.f32 %v2362, %v2840
      %v2975 = vadd.f32 %v2363, %v2845
      %v2976 = vadd.f32 %v2364, %v2850
      %v2977 = vadd.f32 %v2365, %v2855
      %v2978 = vadd.f32 %v2366, %v2860
      %v2979 = vadd.f32 %v2367, %v2865
      %v2980 = vadd.f32 %v2368, %v2870
      %v2981 = vadd.f32 %v2369, %v2875
      %v2982 = vadd.f32 %v2370, %v2880
      %v2983 = vadd.f32 %v2371, %v2885
      %v2984 = vadd.f32 %v2372, %v2890
      %v2985 = vadd.f32 %v2373, %v2895
      %v2986 = vadd.f32 %v2374, %v2900
      %v2987 = vadd.f32 %v2375, %v2905
      %v2988 = vadd.f32 %v2376, %v2910
      %v2989 = vadd.f32 %v2377, %v2915
      %v2990 = vadd.f32 %v2378, %v2920
      %v2991 = vadd.f32 %v2379, %v2925
      %v2992 = vadd.f32 %v2380, %v2930
      %v2993 = vadd.f32 %v2381, %v2935
      %v2994 = vadd.f32 %v2382, %v2940
      %v2995 = vadd.f32 %v2383, %v2945
      %v2996 = vadd.f32 %v2384, %v2950
      %v2997 = vadd.f32 %v2385, %v2955
      %v2998 = vadd.f32 %v2386, %v2960
      %v2999 = vadd.f32 %v2387, %v2965
      %v3000 = vld [vmem:[#allocation2 + $0x18] sm:$0xff]
      %v3001 = vld [vmem:[#allocation2 + $0x20] sm:$0xff]
      %v3002 = vld [vmem:[#allocation2 + $0x28] sm:$0xff]
      %v3003 = vld [vmem:[#allocation2 + $0x30] sm:$0xff]
      %v3004 = vld [vmem:[#allocation2 + $0x38] sm:$0xff]
      %v3005 = vld [vmem:[#allocation2 + $0x40] sm:$0xff]
      %v3006 = vld [vmem:[#allocation2 + $0x48] sm:$0xff]
      %v3007 = vld [vmem:[#allocation2 + $0x50] sm:$0xff]
      %v3008 = vld [vmem:[#allocation2 + $0x58] sm:$0xff]
      %v3009 = vld [vmem:[#allocation2 + $0x60] sm:$0xff]
      %v3010 = vld [vmem:[#allocation2 + $0x68] sm:$0xff]
      %v3011 = vld [vmem:[#allocation2 + $0x70] sm:$0xff]
      %v3012 = vld [vmem:[#allocation2 + $0x78] sm:$0xff]
      %v3013 = vld [vmem:[#allocation2 + $0x80] sm:$0xff]
      %v3014 = vld [vmem:[#allocation2 + $0x88] sm:$0xff]
      %v3015 = vld [vmem:[#allocation2 + $0x90] sm:$0xff]
      %v3016 = vld [vmem:[#allocation2 + $0x98] sm:$0xff]
      %v3017 = vld [vmem:[#allocation2 + $0xa0] sm:$0xff]
      %v3018 = vld [vmem:[#allocation2 + $0xa8] sm:$0xff]
      %v3019 = vld [vmem:[#allocation2 + $0xb0] sm:$0xff]
      %v3020 = vld [vmem:[#allocation2 + $0xb8] sm:$0xff]
      %v3021 = vld [vmem:[#allocation2 + $0xc0] sm:$0xff]
      %v3022 = vld [vmem:[#allocation2 + $0xc8] sm:$0xff]
      %v3023 = vld [vmem:[#allocation2 + $0xd0] sm:$0xff]
      %v3024 = vld [vmem:[#allocation2 + $0xd8] sm:$0xff]
      %v3025 = vld [vmem:[#allocation2 + $0xe0] sm:$0xff]
      %v3026 = vld [vmem:[#allocation2 + $0xe8] sm:$0xff]
      %v3027 = vld [vmem:[#allocation2 + $0xf0] sm:$0xff]
      %v3028 = vld [vmem:[#allocation2 + $0xf8] sm:$0xff]
      %v3029 = vld [vmem:[#allocation2 + $0x100] sm:$0xff]
      %v3030 = vld [vmem:[#allocation2 + $0x108] sm:$0xff]
      %v3031 = vld [vmem:[#allocation2 + $0x110] sm:$0xff]
      %s3032 = scalar_lea.vmem %s3, 32
      %v3033 = vld [vmem:[%s3032] sm:$0xff]
      %v3035 = vsel %vm353, %v3000, 0
      %v3038 = vsel %vm353, %v3001, 0
      %v3041 = vsel %vm353, %v3002, 0
      %v3044 = vsel %vm353, %v3003, 0
      %v3047 = vsel %vm353, %v3004, 0
      %v3050 = vsel %vm353, %v3005, 0
      %v3053 = vsel %vm353, %v3006, 0
      %v3056 = vsel %vm353, %v3007, 0
      %v3059 = vsel %vm353, %v3008, 0
      %v3062 = vsel %vm353, %v3009, 0
      %v3065 = vsel %vm353, %v3010, 0
      %v3068 = vsel %vm353, %v3011, 0
      %v3071 = vsel %vm353, %v3012, 0
      %v3074 = vsel %vm353, %v3013, 0
      %v3077 = vsel %vm353, %v3014, 0
      %v3080 = vsel %vm353, %v3015, 0
      %v3083 = vsel %vm353, %v3016, 0
      %v3086 = vsel %vm353, %v3017, 0
      %v3089 = vsel %vm353, %v3018, 0
      %v3092 = vsel %vm353, %v3019, 0
      %v3095 = vsel %vm353, %v3020, 0
      %v3098 = vsel %vm353, %v3021, 0
      %v3101 = vsel %vm353, %v3022, 0
      %v3104 = vsel %vm353, %v3023, 0
      %v3107 = vsel %vm353, %v3024, 0
      %v3110 = vsel %vm353, %v3025, 0
      %v3113 = vsel %vm353, %v3026, 0
      %v3116 = vsel %vm353, %v3027, 0
      %v3119 = vsel %vm353, %v3028, 0
      %v3122 = vsel %vm353, %v3029, 0
      %v3125 = vsel %vm353, %v3030, 0
      %v3128 = vsel %vm353, %v3031, 0
      %3130 = vmatprep.subr.mxu0 0.0
      %3131 = vmatpush1.msra.mxu0 %v3033
      %3132 = vmatprep.subr.mxu0 0.0
      %3133 = vmatpush1.msra.mxu0 0.0
      %3134 = vmatprep.subr.mxu0 0.0
      %3135 = vmatpush1.msra.mxu0 0.0
      %3136 = vmatprep.subr.mxu0 0.0
      %3137 = vmatpush1.msra.mxu0 0.0
      %3138 = vmatprep.subr.mxu0 0.0
      %3139 = vmatpush1.msra.mxu0 0.0
      %3140 = vmatprep.subr.mxu0 0.0
      %3141 = vmatpush1.msra.mxu0 0.0
      %3142 = vmatprep.subr.mxu0 0.0
      %3143 = vmatpush1.msra.mxu0 0.0
      %3144 = vmatprep.subr.mxu0 0.0
      %3145 = vmatpush1.msra.mxu0 0.0
      %3146 = vmatprep.subr.mxu0 0.0
      %3147 = vmatpush1.msra.mxu0 0.0
      %3148 = vmatprep.subr.mxu0 0.0
      %3149 = vmatpush1.msra.mxu0 0.0
      %3150 = vmatprep.subr.mxu0 0.0
      %3151 = vmatpush1.msra.mxu0 0.0
      %3152 = vmatprep.subr.mxu0 0.0
      %3153 = vmatpush1.msra.mxu0 0.0
      %3154 = vmatprep.subr.mxu0 0.0
      %3155 = vmatpush1.msra.mxu0 0.0
      %3156 = vmatprep.subr.mxu0 0.0
      %3157 = vmatpush1.msra.mxu0 0.0
      %3158 = vmatprep.subr.mxu0 0.0
      %3159 = vmatpush1.msra.mxu0 0.0
      %3160 = vmatprep.subr.mxu0 0.0
      %3161 = vmatpush1.msra.mxu0 0.0
      %3162 = vmatprep.subr.mxu0 0.0
      %3163 = vmatpush1.msra.mxu0 0.0
      %3164 = vmatprep.subr.mxu0 0.0
      %3165 = vmatpush1.msra.mxu0 0.0
      %3166 = vmatprep.subr.mxu0 0.0
      %3167 = vmatpush1.msra.mxu0 0.0
      %3168 = vmatprep.subr.mxu0 0.0
      %3169 = vmatpush1.msra.mxu0 0.0
      %3170 = vmatprep.subr.mxu0 0.0
      %3171 = vmatpush1.msra.mxu0 0.0
      %3172 = vmatprep.subr.mxu0 0.0
      %3173 = vmatpush1.msra.mxu0 0.0
      %3174 = vmatprep.subr.mxu0 0.0
      %3175 = vmatpush1.msra.mxu0 0.0
      %3176 = vmatprep.subr.mxu0 0.0
      %3177 = vmatpush1.msra.mxu0 0.0
      %3178 = vmatprep.subr.mxu0 0.0
      %3179 = vmatpush1.msra.mxu0 0.0
      %3180 = vmatprep.subr.mxu0 0.0
      %3181 = vmatpush1.msra.mxu0 0.0
      %3182 = vmatprep.subr.mxu0 0.0
      %3183 = vmatpush1.msra.mxu0 0.0
      %3184 = vmatprep.subr.mxu0 0.0
      %3185 = vmatpush1.msra.mxu0 0.0
      %3186 = vmatprep.subr.mxu0 0.0
      %3187 = vmatpush1.msra.mxu0 0.0
      %3188 = vmatprep.subr.mxu0 0.0
      %3189 = vmatpush1.msra.mxu0 0.0
      %3190 = vmatprep.subr.mxu0 0.0
      %3191 = vmatpush1.msra.mxu0 0.0
      %3192 = vmatprep.subr.mxu0 0.0
      %3193 = vmatpush1.msra.mxu0 0.0
      %3194 = vmatprep.mubr.f32.mxu0 0.0
      %3195 = vmatmul.mubr.f32.gmra.mrb[0].mxu0 %v3035
      %v3196 = vpop.f32.mrb[0].mxu0
      %v3197 = vadd.f32 0.0, %v3196
      %v3198 = vpop.f32.mrb[0].mxu0
      %3199 = vmatprep.mubr.f32.mxu0 0.0
      %3200 = vmatmul.mubr.f32.gmra.mrb[0].mxu0 %v3038
      %v3201 = vpop.f32.mrb[0].mxu0
      %v3202 = vadd.f32 0.0, %v3201
      %v3203 = vpop.f32.mrb[0].mxu0
      %3204 = vmatprep.mubr.f32.mxu0 0.0
      %3205 = vmatmul.mubr.f32.gmra.mrb[0].mxu0 %v3041
      %v3206 = vpop.f32.mrb[0].mxu0
      %v3207 = vadd.f32 0.0, %v3206
      %v3208 = vpop.f32.mrb[0].mxu0
      %3209 = vmatprep.mubr.f32.mxu0 0.0
      %3210 = vmatmul.mubr.f32.gmra.mrb[0].mxu0 %v3044
      %v3211 = vpop.f32.mrb[0].mxu0
      %v3212 = vadd.f32 0.0, %v3211
      %v3213 = vpop.f32.mrb[0].mxu0
      %3214 = vmatprep.mubr.f32.mxu0 0.0
      %3215 = vmatmul.mubr.f32.gmra.mrb[0].mxu0 %v3047
      %v3216 = vpop.f32.mrb[0].mxu0
      %v3217 = vadd.f32 0.0, %v3216
      %v3218 = vpop.f32.mrb[0].mxu0
      %3219 = vmatprep.mubr.f32.mxu0 0.0
      %3220 = vmatmul.mubr.f32.gmra.mrb[0].mxu0 %v3050
      %v3221 = vpop.f32.mrb[0].mxu0
      %v3222 = vadd.f32 0.0, %v3221
      %v3223 = vpop.f32.mrb[0].mxu0
      %3224 = vmatprep.mubr.f32.mxu0 0.0
      %3225 = vmatmul.mubr.f32.gmra.mrb[0].mxu0 %v3053
      %v3226 = vpop.f32.mrb[0].mxu0
      %v3227 = vadd.f32 0.0, %v3226
      %v3228 = vpop.f32.mrb[0].mxu0
      %3229 = vmatprep.mubr.f32.mxu0 0.0
      %3230 = vmatmul.mubr.f32.gmra.mrb[0].mxu0 %v3056
      %v3231 = vpop.f32.mrb[0].mxu0
      %v3232 = vadd.f32 0.0, %v3231
      %v3233 = vpop.f32.mrb[0].mxu0
      %3234 = vmatprep.mubr.f32.mxu0 0.0
      %3235 = vmatmul.mubr.f32.gmra.mrb[0].mxu0 %v3059
      %v3236 = vpop.f32.mrb[0].mxu0
      %v3237 = vadd.f32 0.0, %v3236
      %v3238 = vpop.f32.mrb[0].mxu0
      %3239 = vmatprep.mubr.f32.mxu0 0.0
      %3240 = vmatmul.mubr.f32.gmra.mrb[0].mxu0 %v3062
      %v3241 = vpop.f32.mrb[0].mxu0
      %v3242 = vadd.f32 0.0, %v3241
      %v3243 = vpop.f32.mrb[0].mxu0
      %3244 = vmatprep.mubr.f32.mxu0 0.0
      %3245 = vmatmul.mubr.f32.gmra.mrb[0].mxu0 %v3065
      %v3246 = vpop.f32.mrb[0].mxu0
      %v3247 = vadd.f32 0.0, %v3246
      %v3248 = vpop.f32.mrb[0].mxu0
      %3249 = vmatprep.mubr.f32.mxu0 0.0
      %3250 = vmatmul.mubr.f32.gmra.mrb[0].mxu0 %v3068
      %v3251 = vpop.f32.mrb[0].mxu0
      %v3252 = vadd.f32 0.0, %v3251
      %v3253 = vpop.f32.mrb[0].mxu0
      %3254 = vmatprep.mubr.f32.mxu0 0.0
      %3255 = vmatmul.mubr.f32.gmra.mrb[0].mxu0 %v3071
      %v3256 = vpop.f32.mrb[0].mxu0
      %v3257 = vadd.f32 0.0, %v3256
      %v3258 = vpop.f32.mrb[0].mxu0
      %3259 = vmatprep.mubr.f32.mxu0 0.0
      %3260 = vmatmul.mubr.f32.gmra.mrb[0].mxu0 %v3074
      %v3261 = vpop.f32.mrb[0].mxu0
      %v3262 = vadd.f32 0.0, %v3261
      %v3263 = vpop.f32.mrb[0].mxu0
      %3264 = vmatprep.mubr.f32.mxu0 0.0
      %3265 = vmatmul.mubr.f32.gmra.mrb[0].mxu0 %v3077
      %v3266 = vpop.f32.mrb[0].mxu0
      %v3267 = vadd.f32 0.0, %v3266
      %v3268 = vpop.f32.mrb[0].mxu0
      %3269 = vmatprep.mubr.f32.mxu0 0.0
      %3270 = vmatmul.mubr.f32.gmra.mrb[0].mxu0 %v3080
      %v3271 = vpop.f32.mrb[0].mxu0
      %v3272 = vadd.f32 0.0, %v3271
      %v3273 = vpop.f32.mrb[0].mxu0
      %3274 = vmatprep.mubr.f32.mxu0 0.0
      %3275 = vmatmul.mubr.f32.gmra.mrb[0].mxu0 %v3083
      %v3276 = vpop.f32.mrb[0].mxu0
      %v3277 = vadd.f32 0.0, %v3276
      %v3278 = vpop.f32.mrb[0].mxu0
      %3279 = vmatprep.mubr.f32.mxu0 0.0
      %3280 = vmatmul.mubr.f32.gmra.mrb[0].mxu0 %v3086
      %v3281 = vpop.f32.mrb[0].mxu0
      %v3282 = vadd.f32 0.0, %v3281
      %v3283 = vpop.f32.mrb[0].mxu0
      %3284 = vmatprep.mubr.f32.mxu0 0.0
      %3285 = vmatmul.mubr.f32.gmra.mrb[0].mxu0 %v3089
      %v3286 = vpop.f32.mrb[0].mxu0
      %v3287 = vadd.f32 0.0, %v3286
      %v3288 = vpop.f32.mrb[0].mxu0
      %3289 = vmatprep.mubr.f32.mxu0 0.0
      %3290 = vmatmul.mubr.f32.gmra.mrb[0].mxu0 %v3092
      %v3291 = vpop.f32.mrb[0].mxu0
      %v3292 = vadd.f32 0.0, %v3291
      %v3293 = vpop.f32.mrb[0].mxu0
      %3294 = vmatprep.mubr.f32.mxu0 0.0
      %3295 = vmatmul.mubr.f32.gmra.mrb[0].mxu0 %v3095
      %v3296 = vpop.f32.mrb[0].mxu0
      %v3297 = vadd.f32 0.0, %v3296
      %v3298 = vpop.f32.mrb[0].mxu0
      %3299 = vmatprep.mubr.f32.mxu0 0.0
      %3300 = vmatmul.mubr.f32.gmra.mrb[0].mxu0 %v3098
      %v3301 = vpop.f32.mrb[0].mxu0
      %v3302 = vadd.f32 0.0, %v3301
      %v3303 = vpop.f32.mrb[0].mxu0
      %3304 = vmatprep.mubr.f32.mxu0 0.0
      %3305 = vmatmul.mubr.f32.gmra.mrb[0].mxu0 %v3101
      %v3306 = vpop.f32.mrb[0].mxu0
      %v3307 = vadd.f32 0.0, %v3306
      %v3308 = vpop.f32.mrb[0].mxu0
      %3309 = vmatprep.mubr.f32.mxu0 0.0
      %3310 = vmatmul.mubr.f32.gmra.mrb[0].mxu0 %v3104
      %v3311 = vpop.f32.mrb[0].mxu0
      %v3312 = vadd.f32 0.0, %v3311
      %v3313 = vpop.f32.mrb[0].mxu0
      %3314 = vmatprep.mubr.f32.mxu0 0.0
      %3315 = vmatmul.mubr.f32.gmra.mrb[0].mxu0 %v3107
      %v3316 = vpop.f32.mrb[0].mxu0
      %v3317 = vadd.f32 0.0, %v3316
      %v3318 = vpop.f32.mrb[0].mxu0
      %3319 = vmatprep.mubr.f32.mxu0 0.0
      %3320 = vmatmul.mubr.f32.gmra.mrb[0].mxu0 %v3110
      %v3321 = vpop.f32.mrb[0].mxu0
      %v3322 = vadd.f32 0.0, %v3321
      %v3323 = vpop.f32.mrb[0].mxu0
      %3324 = vmatprep.mubr.f32.mxu0 0.0
      %3325 = vmatmul.mubr.f32.gmra.mrb[0].mxu0 %v3113
      %v3326 = vpop.f32.mrb[0].mxu0
      %v3327 = vadd.f32 0.0, %v3326
      %v3328 = vpop.f32.mrb[0].mxu0
      %3329 = vmatprep.mubr.f32.mxu0 0.0
      %3330 = vmatmul.mubr.f32.gmra.mrb[0].mxu0 %v3116
      %v3331 = vpop.f32.mrb[0].mxu0
      %v3332 = vadd.f32 0.0, %v3331
      %v3333 = vpop.f32.mrb[0].mxu0
      %3334 = vmatprep.mubr.f32.mxu0 0.0
      %3335 = vmatmul.mubr.f32.gmra.mrb[0].mxu0 %v3119
      %v3336 = vpop.f32.mrb[0].mxu0
      %v3337 = vadd.f32 0.0, %v3336
      %v3338 = vpop.f32.mrb[0].mxu0
      %3339 = vmatprep.mubr.f32.mxu0 0.0
      %3340 = vmatmul.mubr.f32.gmra.mrb[0].mxu0 %v3122
      %v3341 = vpop.f32.mrb[0].mxu0
      %v3342 = vadd.f32 0.0, %v3341
      %v3343 = vpop.f32.mrb[0].mxu0
      %3344 = vmatprep.mubr.f32.mxu0 0.0
      %3345 = vmatmul.mubr.f32.gmra.mrb[0].mxu0 %v3125
      %v3346 = vpop.f32.mrb[0].mxu0
      %v3347 = vadd.f32 0.0, %v3346
      %v3348 = vpop.f32.mrb[0].mxu0
      %3349 = vmatprep.mubr.f32.mxu0 0.0
      %3350 = vmatmul.mubr.f32.gmra.mrb[0].mxu0 %v3128
      %v3351 = vpop.f32.mrb[0].mxu0
      %v3352 = vadd.f32 0.0, %v3351
      %v3353 = vpop.f32.mrb[0].mxu0
      %3354 = vdwg.mxu0
      %v3355 = vadd.f32 %v2968, %v3197
      %v3356 = vadd.f32 %v2969, %v3202
      %v3357 = vadd.f32 %v2970, %v3207
      %v3358 = vadd.f32 %v2971, %v3212
      %v3359 = vadd.f32 %v2972, %v3217
      %v3360 = vadd.f32 %v2973, %v3222
      %v3361 = vadd.f32 %v2974, %v3227
      %v3362 = vadd.f32 %v2975, %v3232
      %v3363 = vadd.f32 %v2976, %v3237
      %v3364 = vadd.f32 %v2977, %v3242
      %v3365 = vadd.f32 %v2978, %v3247
      %v3366 = vadd.f32 %v2979, %v3252
      %v3367 = vadd.f32 %v2980, %v3257
      %v3368 = vadd.f32 %v2981, %v3262
      %v3369 = vadd.f32 %v2982, %v3267
      %v3370 = vadd.f32 %v2983, %v3272
      %v3371 = vadd.f32 %v2984, %v3277
      %v3372 = vadd.f32 %v2985, %v3282
      %v3373 = vadd.f32 %v2986, %v3287
      %v3374 = vadd.f32 %v2987, %v3292
      %v3375 = vadd.f32 %v2988, %v3297
      %v3376 = vadd.f32 %v2989, %v3302
      %v3377 = vadd.f32 %v2990, %v3307
      %v3378 = vadd.f32 %v2991, %v3312
      %v3379 = vadd.f32 %v2992, %v3317
      %v3380 = vadd.f32 %v2993, %v3322
      %v3381 = vadd.f32 %v2994, %v3327
      %v3382 = vadd.f32 %v2995, %v3332
      %v3383 = vadd.f32 %v2996, %v3337
      %v3384 = vadd.f32 %v2997, %v3342
      %v3385 = vadd.f32 %v2998, %v3347
      %v3386 = vadd.f32 %v2999, %v3352
      %v3387 = vld [vmem:[#allocation2 + $0x19] sm:$0xff]
      %v3388 = vld [vmem:[#allocation2 + $0x21] sm:$0xff]
      %v3389 = vld [vmem:[#allocation2 + $0x29] sm:$0xff]
      %v3390 = vld [vmem:[#allocation2 + $0x31] sm:$0xff]
      %v3391 = vld [vmem:[#allocation2 + $0x39] sm:$0xff]
      %v3392 = vld [vmem:[#allocation2 + $0x41] sm:$0xff]
      %v3393 = vld [vmem:[#allocation2 + $0x49] sm:$0xff]
      %v3394 = vld [vmem:[#allocation2 + $0x51] sm:$0xff]
      %v3395 = vld [vmem:[#allocation2 + $0x59] sm:$0xff]
      %v3396 = vld [vmem:[#allocation2 + $0x61] sm:$0xff]
      %v3397 = vld [vmem:[#allocation2 + $0x69] sm:$0xff]
      %v3398 = vld [vmem:[#allocation2 + $0x71] sm:$0xff]
      %v3399 = vld [vmem:[#allocation2 + $0x79] sm:$0xff]
      %v3400 = vld [vmem:[#allocation2 + $0x81] sm:$0xff]
      %v3401 = vld [vmem:[#allocation2 + $0x89] sm:$0xff]
      %v3402 = vld [vmem:[#allocation2 + $0x91] sm:$0xff]
      %v3403 = vld [vmem:[#allocation2 + $0x99] sm:$0xff]
      %v3404 = vld [vmem:[#allocation2 + $0xa1] sm:$0xff]
      %v3405 = vld [vmem:[#allocation2 + $0xa9] sm:$0xff]
      %v3406 = vld [vmem:[#allocation2 + $0xb1] sm:$0xff]
      %v3407 = vld [vmem:[#allocation2 + $0xb9] sm:$0xff]
      %v3408 = vld [vmem:[#allocation2 + $0xc1] sm:$0xff]
      %v3409 = vld [vmem:[#allocation2 + $0xc9] sm:$0xff]
      %v3410 = vld [vmem:[#allocation2 + $0xd1] sm:$0xff]
      %v3411 = vld [vmem:[#allocation2 + $0xd9] sm:$0xff]
      %v3412 = vld [vmem:[#allocation2 + $0xe1] sm:$0xff]
      %v3413 = vld [vmem:[#allocation2 + $0xe9] sm:$0xff]
      %v3414 = vld [vmem:[#allocation2 + $0xf1] sm:$0xff]
      %v3415 = vld [vmem:[#allocation2 + $0xf9] sm:$0xff]
      %v3416 = vld [vmem:[#allocation2 + $0x101] sm:$0xff]
      %v3417 = vld [vmem:[#allocation2 + $0x109] sm:$0xff]
      %v3418 = vld [vmem:[#allocation2 + $0x111] sm:$0xff]
      %s3419 = scalar_lea.vmem %s2, 1280
      %v3420 = vld [vmem:[%s3419] sm:$0xff]
      %v3421 = vld [vmem:[%s3419 + $0x8] sm:$0xff]
      %v3422 = vld [vmem:[%s3419 + $0x10] sm:$0xff]
      %v3423 = vld [vmem:[%s3419 + $0x18] sm:$0xff]
      %v3424 = vld [vmem:[%s3419 + $0x20] sm:$0xff]
      %v3425 = vld [vmem:[%s3419 + $0x28] sm:$0xff]
      %v3426 = vld [vmem:[%s3419 + $0x30] sm:$0xff]
      %v3427 = vld [vmem:[%s3419 + $0x38] sm:$0xff]
      %v3428 = vld [vmem:[%s3419 + $0x40] sm:$0xff]
      %v3429 = vld [vmem:[%s3419 + $0x48] sm:$0xff]
      %v3430 = vld [vmem:[%s3419 + $0x50] sm:$0xff]
      %v3431 = vld [vmem:[%s3419 + $0x58] sm:$0xff]
      %v3432 = vld [vmem:[%s3419 + $0x60] sm:$0xff]
      %v3433 = vld [vmem:[%s3419 + $0x68] sm:$0xff]
      %v3434 = vld [vmem:[%s3419 + $0x70] sm:$0xff]
      %v3435 = vld [vmem:[%s3419 + $0x78] sm:$0xff]
      %v3436 = vld [vmem:[%s3419 + $0x80] sm:$0xff]
      %v3437 = vld [vmem:[%s3419 + $0x88] sm:$0xff]
      %v3438 = vld [vmem:[%s3419 + $0x90] sm:$0xff]
      %v3439 = vld [vmem:[%s3419 + $0x98] sm:$0xff]
      %v3440 = vld [vmem:[%s3419 + $0xa0] sm:$0xff]
      %v3441 = vld [vmem:[%s3419 + $0xa8] sm:$0xff]
      %v3442 = vld [vmem:[%s3419 + $0xb0] sm:$0xff]
      %v3443 = vld [vmem:[%s3419 + $0xb8] sm:$0xff]
      %v3444 = vld [vmem:[%s3419 + $0xc0] sm:$0xff]
      %v3445 = vld [vmem:[%s3419 + $0xc8] sm:$0xff]
      %v3446 = vld [vmem:[%s3419 + $0xd0] sm:$0xff]
      %v3447 = vld [vmem:[%s3419 + $0xd8] sm:$0xff]
      %v3448 = vld [vmem:[%s3419 + $0xe0] sm:$0xff]
      %v3449 = vld [vmem:[%s3419 + $0xe8] sm:$0xff]
      %v3450 = vld [vmem:[%s3419 + $0xf0] sm:$0xff]
      %v3451 = vld [vmem:[%s3419 + $0xf8] sm:$0xff]
      %3453 = vset.pattern.permute.xlu0 0
      %3454 = vperm.xlu0 %3453, %v3420
      %v3455 = vpop.permute.xlu0 %3454
      %3458 = vset.pattern.permute.xlu0 0
      %3459 = vperm.xlu0 %3458, %v3421
      %v3460 = vpop.permute.xlu0 %3459
      %3463 = vset.pattern.permute.xlu0 0
      %3464 = vperm.xlu0 %3463, %v3422
      %v3465 = vpop.permute.xlu0 %3464
      %3468 = vset.pattern.permute.xlu0 0
      %3469 = vperm.xlu0 %3468, %v3423
      %v3470 = vpop.permute.xlu0 %3469
      %3473 = vset.pattern.permute.xlu0 0
      %3474 = vperm.xlu0 %3473, %v3424
      %v3475 = vpop.permute.xlu0 %3474
      %3478 = vset.pattern.permute.xlu0 0
      %3479 = vperm.xlu0 %3478, %v3425
      %v3480 = vpop.permute.xlu0 %3479
      %3483 = vset.pattern.permute.xlu0 0
      %3484 = vperm.xlu0 %3483, %v3426
      %v3485 = vpop.permute.xlu0 %3484
      %3488 = vset.pattern.permute.xlu0 0
      %3489 = vperm.xlu0 %3488, %v3427
      %v3490 = vpop.permute.xlu0 %3489
      %3493 = vset.pattern.permute.xlu0 0
      %3494 = vperm.xlu0 %3493, %v3428
      %v3495 = vpop.permute.xlu0 %3494
      %3498 = vset.pattern.permute.xlu0 0
      %3499 = vperm.xlu0 %3498, %v3429
      %v3500 = vpop.permute.xlu0 %3499
      %3503 = vset.pattern.permute.xlu0 0
      %3504 = vperm.xlu0 %3503, %v3430
      %v3505 = vpop.permute.xlu0 %3504
      %3508 = vset.pattern.permute.xlu0 0
      %3509 = vperm.xlu0 %3508, %v3431
      %v3510 = vpop.permute.xlu0 %3509
      %3513 = vset.pattern.permute.xlu0 0
      %3514 = vperm.xlu0 %3513, %v3432
      %v3515 = vpop.permute.xlu0 %3514
      %3518 = vset.pattern.permute.xlu0 0
      %3519 = vperm.xlu0 %3518, %v3433
      %v3520 = vpop.permute.xlu0 %3519
      %3523 = vset.pattern.permute.xlu0 0
      %3524 = vperm.xlu0 %3523, %v3434
      %v3525 = vpop.permute.xlu0 %3524
      %3528 = vset.pattern.permute.xlu0 0
      %3529 = vperm.xlu0 %3528, %v3435
      %v3530 = vpop.permute.xlu0 %3529
      %3533 = vset.pattern.permute.xlu0 0
      %3534 = vperm.xlu0 %3533, %v3436
      %v3535 = vpop.permute.xlu0 %3534
      %3538 = vset.pattern.permute.xlu0 0
      %3539 = vperm.xlu0 %3538, %v3437
      %v3540 = vpop.permute.xlu0 %3539
      %3543 = vset.pattern.permute.xlu0 0
      %3544 = vperm.xlu0 %3543, %v3438
      %v3545 = vpop.permute.xlu0 %3544
      %3548 = vset.pattern.permute.xlu0 0
      %3549 = vperm.xlu0 %3548, %v3439
      %v3550 = vpop.permute.xlu0 %3549
      %3553 = vset.pattern.permute.xlu0 0
      %3554 = vperm.xlu0 %3553, %v3440
      %v3555 = vpop.permute.xlu0 %3554
      %3558 = vset.pattern.permute.xlu0 0
      %3559 = vperm.xlu0 %3558, %v3441
      %v3560 = vpop.permute.xlu0 %3559
      %3563 = vset.pattern.permute.xlu0 0
      %3564 = vperm.xlu0 %3563, %v3442
      %v3565 = vpop.permute.xlu0 %3564
      %3568 = vset.pattern.permute.xlu0 0
      %3569 = vperm.xlu0 %3568, %v3443
      %v3570 = vpop.permute.xlu0 %3569
      %3573 = vset.pattern.permute.xlu0 0
      %3574 = vperm.xlu0 %3573, %v3444
      %v3575 = vpop.permute.xlu0 %3574
      %3578 = vset.pattern.permute.xlu0 0
      %3579 = vperm.xlu0 %3578, %v3445
      %v3580 = vpop.permute.xlu0 %3579
      %3583 = vset.pattern.permute.xlu0 0
      %3584 = vperm.xlu0 %3583, %v3446
      %v3585 = vpop.permute.xlu0 %3584
      %3588 = vset.pattern.permute.xlu0 0
      %3589 = vperm.xlu0 %3588, %v3447
      %v3590 = vpop.permute.xlu0 %3589
      %3593 = vset.pattern.permute.xlu0 0
      %3594 = vperm.xlu0 %3593, %v3448
      %v3595 = vpop.permute.xlu0 %3594
      %3598 = vset.pattern.permute.xlu0 0
      %3599 = vperm.xlu0 %3598, %v3449
      %v3600 = vpop.permute.xlu0 %3599
      %3603 = vset.pattern.permute.xlu0 0
      %3604 = vperm.xlu0 %3603, %v3450
      %v3605 = vpop.permute.xlu0 %3604
      %3608 = vset.pattern.permute.xlu0 0
      %3609 = vperm.xlu0 %3608, %v3451
      %v3610 = vpop.permute.xlu0 %3609
      %v3612 = vmul.f32 %v3387, %v3455
      %v3613 = vmul.f32 %v3388, %v3460
      %v3614 = vmul.f32 %v3389, %v3465
      %v3615 = vmul.f32 %v3390, %v3470
      %v3616 = vmul.f32 %v3391, %v3475
      %v3617 = vmul.f32 %v3392, %v3480
      %v3618 = vmul.f32 %v3393, %v3485
      %v3619 = vmul.f32 %v3394, %v3490
      %v3620 = vmul.f32 %v3395, %v3495
      %v3621 = vmul.f32 %v3396, %v3500
      %v3622 = vmul.f32 %v3397, %v3505
      %v3623 = vmul.f32 %v3398, %v3510
      %v3624 = vmul.f32 %v3399, %v3515
      %v3625 = vmul.f32 %v3400, %v3520
      %v3626 = vmul.f32 %v3401, %v3525
      %v3627 = vmul.f32 %v3402, %v3530
      %v3628 = vmul.f32 %v3403, %v3535
      %v3629 = vmul.f32 %v3404, %v3540
      %v3630 = vmul.f32 %v3405, %v3545
      %v3631 = vmul.f32 %v3406, %v3550
      %v3632 = vmul.f32 %v3407, %v3555
      %v3633 = vmul.f32 %v3408, %v3560
      %v3634 = vmul.f32 %v3409, %v3565
      %v3635 = vmul.f32 %v3410, %v3570
      %v3636 = vmul.f32 %v3411, %v3575
      %v3637 = vmul.f32 %v3412, %v3580
      %v3638 = vmul.f32 %v3413, %v3585
      %v3639 = vmul.f32 %v3414, %v3590
      %v3640 = vmul.f32 %v3415, %v3595
      %v3641 = vmul.f32 %v3416, %v3600
      %v3642 = vmul.f32 %v3417, %v3605
      %v3643 = vmul.f32 %v3418, %v3610
      %s3644 = scalar_lea.vmem %s3, 40
      %v3645 = vld [vmem:[%s3644] sm:$0xff]
      %v3647 = vsel %vm353, %v3612, 0
      %v3650 = vsel %vm353, %v3613, 0
      %v3653 = vsel %vm353, %v3614, 0
      %v3656 = vsel %vm353, %v3615, 0
      %v3659 = vsel %vm353, %v3616, 0
      %v3662 = vsel %vm353, %v3617, 0
      %v3665 = vsel %vm353, %v3618, 0
      %v3668 = vsel %vm353, %v3619, 0
      %v3671 = vsel %vm353, %v3620, 0
      %v3674 = vsel %vm353, %v3621, 0
      %v3677 = vsel %vm353, %v3622, 0
      %v3680 = vsel %vm353, %v3623, 0
      %v3683 = vsel %vm353, %v3624, 0
      %v3686 = vsel %vm353, %v3625, 0
      %v3689 = vsel %vm353, %v3626, 0
      %v3692 = vsel %vm353, %v3627, 0
      %v3695 = vsel %vm353, %v3628, 0
      %v3698 = vsel %vm353, %v3629, 0
      %v3701 = vsel %vm353, %v3630, 0
      %v3704 = vsel %vm353, %v3631, 0
      %v3707 = vsel %vm353, %v3632, 0
      %v3710 = vsel %vm353, %v3633, 0
      %v3713 = vsel %vm353, %v3634, 0
      %v3716 = vsel %vm353, %v3635, 0
      %v3719 = vsel %vm353, %v3636, 0
      %v3722 = vsel %vm353, %v3637, 0
      %v3725 = vsel %vm353, %v3638, 0
      %v3728 = vsel %vm353, %v3639, 0
      %v3731 = vsel %vm353, %v3640, 0
      %v3734 = vsel %vm353, %v3641, 0
      %v3737 = vsel %vm353, %v3642, 0
      %v3740 = vsel %vm353, %v3643, 0
      %3742 = vmatprep.subr.mxu0 0.0
      %3743 = vmatpush1.msra.mxu0 %v3645
      %3744 = vmatprep.subr.mxu0 0.0
      %3745 = vmatpush1.msra.mxu0 0.0
      %3746 = vmatprep.subr.mxu0 0.0
      %3747 = vmatpush1.msra.mxu0 0.0
      %3748 = vmatprep.subr.mxu0 0.0
      %3749 = vmatpush1.msra.mxu0 0.0
      %3750 = vmatprep.subr.mxu0 0.0
      %3751 = vmatpush1.msra.mxu0 0.0
      %3752 = vmatprep.subr.mxu0 0.0
      %3753 = vmatpush1.msra.mxu0 0.0
      %3754 = vmatprep.subr.mxu0 0.0
      %3755 = vmatpush1.msra.mxu0 0.0
      %3756 = vmatprep.subr.mxu0 0.0
      %3757 = vmatpush1.msra.mxu0 0.0
      %3758 = vmatprep.subr.mxu0 0.0
      %3759 = vmatpush1.msra.mxu0 0.0
      %3760 = vmatprep.subr.mxu0 0.0
      %3761 = vmatpush1.msra.mxu0 0.0
      %3762 = vmatprep.subr.mxu0 0.0
      %3763 = vmatpush1.msra.mxu0 0.0
      %3764 = vmatprep.subr.mxu0 0.0
      %3765 = vmatpush1.msra.mxu0 0.0
      %3766 = vmatprep.subr.mxu0 0.0
      %3767 = vmatpush1.msra.mxu0 0.0
      %3768 = vmatprep.subr.mxu0 0.0
      %3769 = vmatpush1.msra.mxu0 0.0
      %3770 = vmatprep.subr.mxu0 0.0
      %3771 = vmatpush1.msra.mxu0 0.0
      %3772 = vmatprep.subr.mxu0 0.0
      %3773 = vmatpush1.msra.mxu0 0.0
      %3774 = vmatprep.subr.mxu0 0.0
      %3775 = vmatpush1.msra.mxu0 0.0
      %3776 = vmatprep.subr.mxu0 0.0
      %3777 = vmatpush1.msra.mxu0 0.0
      %3778 = vmatprep.subr.mxu0 0.0
      %3779 = vmatpush1.msra.mxu0 0.0
      %3780 = vmatprep.subr.mxu0 0.0
      %3781 = vmatpush1.msra.mxu0 0.0
      %3782 = vmatprep.subr.mxu0 0.0
      %3783 = vmatpush1.msra.mxu0 0.0
      %3784 = vmatprep.subr.mxu0 0.0
      %3785 = vmatpush1.msra.mxu0 0.0
      %3786 = vmatprep.subr.mxu0 0.0
      %3787 = vmatpush1.msra.mxu0 0.0
      %3788 = vmatprep.subr.mxu0 0.0
      %3789 = vmatpush1.msra.mxu0 0.0
      %3790 = vmatprep.subr.mxu0 0.0
      %3791 = vmatpush1.msra.mxu0 0.0
      %3792 = vmatprep.subr.mxu0 0.0
      %3793 = vmatpush1.msra.mxu0 0.0
      %3794 = vmatprep.subr.mxu0 0.0
      %3795 = vmatpush1.msra.mxu0 0.0
      %3796 = vmatprep.subr.mxu0 0.0
      %3797 = vmatpush1.msra.mxu0 0.0
      %3798 = vmatprep.subr.mxu0 0.0
      %3799 = vmatpush1.msra.mxu0 0.0
      %3800 = vmatprep.subr.mxu0 0.0
      %3801 = vmatpush1.msra.mxu0 0.0
      %3802 = vmatprep.subr.mxu0 0.0
      %3803 = vmatpush1.msra.mxu0 0.0
      %3804 = vmatprep.subr.mxu0 0.0
      %3805 = vmatpush1.msra.mxu0 0.0
      %3806 = vmatprep.mubr.f32.mxu0 0.0
      %3807 = vmatmul.mubr.f32.gmra.mrb[0].mxu0 %v3647
      %v3808 = vpop.f32.mrb[0].mxu0
      %v3809 = vadd.f32 0.0, %v3808
      %v3810 = vpop.f32.mrb[0].mxu0
      %3811 = vmatprep.mubr.f32.mxu0 0.0
      %3812 = vmatmul.mubr.f32.gmra.mrb[0].mxu0 %v3650
      %v3813 = vpop.f32.mrb[0].mxu0
      %v3814 = vadd.f32 0.0, %v3813
      %v3815 = vpop.f32.mrb[0].mxu0
      %3816 = vmatprep.mubr.f32.mxu0 0.0
      %3817 = vmatmul.mubr.f32.gmra.mrb[0].mxu0 %v3653
      %v3818 = vpop.f32.mrb[0].mxu0
      %v3819 = vadd.f32 0.0, %v3818
      %v3820 = vpop.f32.mrb[0].mxu0
      %3821 = vmatprep.mubr.f32.mxu0 0.0
      %3822 = vmatmul.mubr.f32.gmra.mrb[0].mxu0 %v3656
      %v3823 = vpop.f32.mrb[0].mxu0
      %v3824 = vadd.f32 0.0, %v3823
      %v3825 = vpop.f32.mrb[0].mxu0
      %3826 = vmatprep.mubr.f32.mxu0 0.0
      %3827 = vmatmul.mubr.f32.gmra.mrb[0].mxu0 %v3659
      %v3828 = vpop.f32.mrb[0].mxu0
      %v3829 = vadd.f32 0.0, %v3828
      %v3830 = vpop.f32.mrb[0].mxu0
      %3831 = vmatprep.mubr.f32.mxu0 0.0
      %3832 = vmatmul.mubr.f32.gmra.mrb[0].mxu0 %v3662
      %v3833 = vpop.f32.mrb[0].mxu0
      %v3834 = vadd.f32 0.0, %v3833
      %v3835 = vpop.f32.mrb[0].mxu0
      %3836 = vmatprep.mubr.f32.mxu0 0.0
      %3837 = vmatmul.mubr.f32.gmra.mrb[0].mxu0 %v3665
      %v3838 = vpop.f32.mrb[0].mxu0
      %v3839 = vadd.f32 0.0, %v3838
      %v3840 = vpop.f32.mrb[0].mxu0
      %3841 = vmatprep.mubr.f32.mxu0 0.0
      %3842 = vmatmul.mubr.f32.gmra.mrb[0].mxu0 %v3668
      %v3843 = vpop.f32.mrb[0].mxu0
      %v3844 = vadd.f32 0.0, %v3843
      %v3845 = vpop.f32.mrb[0].mxu0
      %3846 = vmatprep.mubr.f32.mxu0 0.0
      %3847 = vmatmul.mubr.f32.gmra.mrb[0].mxu0 %v3671
      %v3848 = vpop.f32.mrb[0].mxu0
      %v3849 = vadd.f32 0.0, %v3848
      %v3850 = vpop.f32.mrb[0].mxu0
      %3851 = vmatprep.mubr.f32.mxu0 0.0
      %3852 = vmatmul.mubr.f32.gmra.mrb[0].mxu0 %v3674
      %v3853 = vpop.f32.mrb[0].mxu0
      %v3854 = vadd.f32 0.0, %v3853
      %v3855 = vpop.f32.mrb[0].mxu0
      %3856 = vmatprep.mubr.f32.mxu0 0.0
      %3857 = vmatmul.mubr.f32.gmra.mrb[0].mxu0 %v3677
      %v3858 = vpop.f32.mrb[0].mxu0
      %v3859 = vadd.f32 0.0, %v3858
      %v3860 = vpop.f32.mrb[0].mxu0
      %3861 = vmatprep.mubr.f32.mxu0 0.0
      %3862 = vmatmul.mubr.f32.gmra.mrb[0].mxu0 %v3680
      %v3863 = vpop.f32.mrb[0].mxu0
      %v3864 = vadd.f32 0.0, %v3863
      %v3865 = vpop.f32.mrb[0].mxu0
      %3866 = vmatprep.mubr.f32.mxu0 0.0
      %3867 = vmatmul.mubr.f32.gmra.mrb[0].mxu0 %v3683
      %v3868 = vpop.f32.mrb[0].mxu0
      %v3869 = vadd.f32 0.0, %v3868
      %v3870 = vpop.f32.mrb[0].mxu0
      %3871 = vmatprep.mubr.f32.mxu0 0.0
      %3872 = vmatmul.mubr.f32.gmra.mrb[0].mxu0 %v3686
      %v3873 = vpop.f32.mrb[0].mxu0
      %v3874 = vadd.f32 0.0, %v3873
      %v3875 = vpop.f32.mrb[0].mxu0
      %3876 = vmatprep.mubr.f32.mxu0 0.0
      %3877 = vmatmul.mubr.f32.gmra.mrb[0].mxu0 %v3689
      %v3878 = vpop.f32.mrb[0].mxu0
      %v3879 = vadd.f32 0.0, %v3878
      %v3880 = vpop.f32.mrb[0].mxu0
      %3881 = vmatprep.mubr.f32.mxu0 0.0
      %3882 = vmatmul.mubr.f32.gmra.mrb[0].mxu0 %v3692
      %v3883 = vpop.f32.mrb[0].mxu0
      %v3884 = vadd.f32 0.0, %v3883
      %v3885 = vpop.f32.mrb[0].mxu0
      %3886 = vmatprep.mubr.f32.mxu0 0.0
      %3887 = vmatmul.mubr.f32.gmra.mrb[0].mxu0 %v3695
      %v3888 = vpop.f32.mrb[0].mxu0
      %v3889 = vadd.f32 0.0, %v3888
      %v3890 = vpop.f32.mrb[0].mxu0
      %3891 = vmatprep.mubr.f32.mxu0 0.0
      %3892 = vmatmul.mubr.f32.gmra.mrb[0].mxu0 %v3698
      %v3893 = vpop.f32.mrb[0].mxu0
      %v3894 = vadd.f32 0.0, %v3893
      %v3895 = vpop.f32.mrb[0].mxu0
      %3896 = vmatprep.mubr.f32.mxu0 0.0
      %3897 = vmatmul.mubr.f32.gmra.mrb[0].mxu0 %v3701
      %v3898 = vpop.f32.mrb[0].mxu0
      %v3899 = vadd.f32 0.0, %v3898
      %v3900 = vpop.f32.mrb[0].mxu0
      %3901 = vmatprep.mubr.f32.mxu0 0.0
      %3902 = vmatmul.mubr.f32.gmra.mrb[0].mxu0 %v3704
      %v3903 = vpop.f32.mrb[0].mxu0
      %v3904 = vadd.f32 0.0, %v3903
      %v3905 = vpop.f32.mrb[0].mxu0
      %3906 = vmatprep.mubr.f32.mxu0 0.0
      %3907 = vmatmul.mubr.f32.gmra.mrb[0].mxu0 %v3707
      %v3908 = vpop.f32.mrb[0].mxu0
      %v3909 = vadd.f32 0.0, %v3908
      %v3910 = vpop.f32.mrb[0].mxu0
      %3911 = vmatprep.mubr.f32.mxu0 0.0
      %3912 = vmatmul.mubr.f32.gmra.mrb[0].mxu0 %v3710
      %v3913 = vpop.f32.mrb[0].mxu0
      %v3914 = vadd.f32 0.0, %v3913
      %v3915 = vpop.f32.mrb[0].mxu0
      %3916 = vmatprep.mubr.f32.mxu0 0.0
      %3917 = vmatmul.mubr.f32.gmra.mrb[0].mxu0 %v3713
      %v3918 = vpop.f32.mrb[0].mxu0
      %v3919 = vadd.f32 0.0, %v3918
      %v3920 = vpop.f32.mrb[0].mxu0
      %3921 = vmatprep.mubr.f32.mxu0 0.0
      %3922 = vmatmul.mubr.f32.gmra.mrb[0].mxu0 %v3716
      %v3923 = vpop.f32.mrb[0].mxu0
      %v3924 = vadd.f32 0.0, %v3923
      %v3925 = vpop.f32.mrb[0].mxu0
      %3926 = vmatprep.mubr.f32.mxu0 0.0
      %3927 = vmatmul.mubr.f32.gmra.mrb[0].mxu0 %v3719
      %v3928 = vpop.f32.mrb[0].mxu0
      %v3929 = vadd.f32 0.0, %v3928
      %v3930 = vpop.f32.mrb[0].mxu0
      %3931 = vmatprep.mubr.f32.mxu0 0.0
      %3932 = vmatmul.mubr.f32.gmra.mrb[0].mxu0 %v3722
      %v3933 = vpop.f32.mrb[0].mxu0
      %v3934 = vadd.f32 0.0, %v3933
      %v3935 = vpop.f32.mrb[0].mxu0
      %3936 = vmatprep.mubr.f32.mxu0 0.0
      %3937 = vmatmul.mubr.f32.gmra.mrb[0].mxu0 %v3725
      %v3938 = vpop.f32.mrb[0].mxu0
      %v3939 = vadd.f32 0.0, %v3938
      %v3940 = vpop.f32.mrb[0].mxu0
      %3941 = vmatprep.mubr.f32.mxu0 0.0
      %3942 = vmatmul.mubr.f32.gmra.mrb[0].mxu0 %v3728
      %v3943 = vpop.f32.mrb[0].mxu0
      %v3944 = vadd.f32 0.0, %v3943
      %v3945 = vpop.f32.mrb[0].mxu0
      %3946 = vmatprep.mubr.f32.mxu0 0.0
      %3947 = vmatmul.mubr.f32.gmra.mrb[0].mxu0 %v3731
      %v3948 = vpop.f32.mrb[0].mxu0
      %v3949 = vadd.f32 0.0, %v3948
      %v3950 = vpop.f32.mrb[0].mxu0
      %3951 = vmatprep.mubr.f32.mxu0 0.0
      %3952 = vmatmul.mubr.f32.gmra.mrb[0].mxu0 %v3734
      %v3953 = vpop.f32.mrb[0].mxu0
      %v3954 = vadd.f32 0.0, %v3953
      %v3955 = vpop.f32.mrb[0].mxu0
      %3956 = vmatprep.mubr.f32.mxu0 0.0
      %3957 = vmatmul.mubr.f32.gmra.mrb[0].mxu0 %v3737
      %v3958 = vpop.f32.mrb[0].mxu0
      %v3959 = vadd.f32 0.0, %v3958
      %v3960 = vpop.f32.mrb[0].mxu0
      %3961 = vmatprep.mubr.f32.mxu0 0.0
      %3962 = vmatmul.mubr.f32.gmra.mrb[0].mxu0 %v3740
      %v3963 = vpop.f32.mrb[0].mxu0
      %v3964 = vadd.f32 0.0, %v3963
      %v3965 = vpop.f32.mrb[0].mxu0
      %3966 = vdwg.mxu0
      %v3967 = vadd.f32 %v3355, %v3809
      %v3968 = vadd.f32 %v3356, %v3814
      %v3969 = vadd.f32 %v3357, %v3819
      %v3970 = vadd.f32 %v3358, %v3824
      %v3971 = vadd.f32 %v3359, %v3829
      %v3972 = vadd.f32 %v3360, %v3834
      %v3973 = vadd.f32 %v3361, %v3839
      %v3974 = vadd.f32 %v3362, %v3844
      %v3975 = vadd.f32 %v3363, %v3849
      %v3976 = vadd.f32 %v3364, %v3854
      %v3977 = vadd.f32 %v3365, %v3859
      %v3978 = vadd.f32 %v3366, %v3864
      %v3979 = vadd.f32 %v3367, %v3869
      %v3980 = vadd.f32 %v3368, %v3874
      %v3981 = vadd.f32 %v3369, %v3879
      %v3982 = vadd.f32 %v3370, %v3884
      %v3983 = vadd.f32 %v3371, %v3889
      %v3984 = vadd.f32 %v3372, %v3894
      %v3985 = vadd.f32 %v3373, %v3899
      %v3986 = vadd.f32 %v3374, %v3904
      %v3987 = vadd.f32 %v3375, %v3909
      %v3988 = vadd.f32 %v3376, %v3914
      %v3989 = vadd.f32 %v3377, %v3919
      %v3990 = vadd.f32 %v3378, %v3924
      %v3991 = vadd.f32 %v3379, %v3929
      %v3992 = vadd.f32 %v3380, %v3934
      %v3993 = vadd.f32 %v3381, %v3939
      %v3994 = vadd.f32 %v3382, %v3944
      %v3995 = vadd.f32 %v3383, %v3949
      %v3996 = vadd.f32 %v3384, %v3954
      %v3997 = vadd.f32 %v3385, %v3959
      %v3998 = vadd.f32 %v3386, %v3964
      %v3999 = vld [vmem:[#allocation2 + $0x27] sm:$0xff]
      %v4000 = vld [vmem:[#allocation2 + $0x2f] sm:$0xff]
      %v4001 = vld [vmem:[#allocation2 + $0x37] sm:$0xff]
      %v4002 = vld [vmem:[#allocation2 + $0x3f] sm:$0xff]
      %v4003 = vld [vmem:[#allocation2 + $0x47] sm:$0xff]
      %v4004 = vld [vmem:[#allocation2 + $0x4f] sm:$0xff]
      %v4005 = vld [vmem:[#allocation2 + $0x57] sm:$0xff]
      %v4006 = vld [vmem:[#allocation2 + $0x5f] sm:$0xff]
      %v4007 = vld [vmem:[#allocation2 + $0x67] sm:$0xff]
      %v4008 = vld [vmem:[#allocation2 + $0x6f] sm:$0xff]
      %v4009 = vld [vmem:[#allocation2 + $0x77] sm:$0xff]
      %v4010 = vld [vmem:[#allocation2 + $0x7f] sm:$0xff]
      %v4011 = vld [vmem:[#allocation2 + $0x87] sm:$0xff]
      %v4012 = vld [vmem:[#allocation2 + $0x8f] sm:$0xff]
      %v4013 = vld [vmem:[#allocation2 + $0x97] sm:$0xff]
      %v4014 = vld [vmem:[#allocation2 + $0x9f] sm:$0xff]
      %v4015 = vld [vmem:[#allocation2 + $0xa7] sm:$0xff]
      %v4016 = vld [vmem:[#allocation2 + $0xaf] sm:$0xff]
      %v4017 = vld [vmem:[#allocation2 + $0xb7] sm:$0xff]
      %v4018 = vld [vmem:[#allocation2 + $0xbf] sm:$0xff]
      %v4019 = vld [vmem:[#allocation2 + $0xc7] sm:$0xff]
      %v4020 = vld [vmem:[#allocation2 + $0xcf] sm:$0xff]
      %v4021 = vld [vmem:[#allocation2 + $0xd7] sm:$0xff]
      %v4022 = vld [vmem:[#allocation2 + $0xdf] sm:$0xff]
      %v4023 = vld [vmem:[#allocation2 + $0xe7] sm:$0xff]
      %v4024 = vld [vmem:[#allocation2 + $0xef] sm:$0xff]
      %v4025 = vld [vmem:[#allocation2 + $0xf7] sm:$0xff]
      %v4026 = vld [vmem:[#allocation2 + $0xff] sm:$0xff]
      %v4027 = vld [vmem:[#allocation2 + $0x107] sm:$0xff]
      %v4028 = vld [vmem:[#allocation2 + $0x10f] sm:$0xff]
      %v4029 = vld [vmem:[#allocation2 + $0x117] sm:$0xff]
      %v4030 = vld [vmem:[#allocation2 + $0x11f] sm:$0xff]
      %s4031 = scalar_lea.vmem %s2, 1536
      %v4032 = vld [vmem:[%s4031] sm:$0xff]
      %v4033 = vld [vmem:[%s4031 + $0x8] sm:$0xff]
      %v4034 = vld [vmem:[%s4031 + $0x10] sm:$0xff]
      %v4035 = vld [vmem:[%s4031 + $0x18] sm:$0xff]
      %v4036 = vld [vmem:[%s4031 + $0x20] sm:$0xff]
      %v4037 = vld [vmem:[%s4031 + $0x28] sm:$0xff]
      %v4038 = vld [vmem:[%s4031 + $0x30] sm:$0xff]
      %v4039 = vld [vmem:[%s4031 + $0x38] sm:$0xff]
      %v4040 = vld [vmem:[%s4031 + $0x40] sm:$0xff]
      %v4041 = vld [vmem:[%s4031 + $0x48] sm:$0xff]
      %v4042 = vld [vmem:[%s4031 + $0x50] sm:$0xff]
      %v4043 = vld [vmem:[%s4031 + $0x58] sm:$0xff]
      %v4044 = vld [vmem:[%s4031 + $0x60] sm:$0xff]
      %v4045 = vld [vmem:[%s4031 + $0x68] sm:$0xff]
      %v4046 = vld [vmem:[%s4031 + $0x70] sm:$0xff]
      %v4047 = vld [vmem:[%s4031 + $0x78] sm:$0xff]
      %v4048 = vld [vmem:[%s4031 + $0x80] sm:$0xff]
      %v4049 = vld [vmem:[%s4031 + $0x88] sm:$0xff]
      %v4050 = vld [vmem:[%s4031 + $0x90] sm:$0xff]
      %v4051 = vld [vmem:[%s4031 + $0x98] sm:$0xff]
      %v4052 = vld [vmem:[%s4031 + $0xa0] sm:$0xff]
      %v4053 = vld [vmem:[%s4031 + $0xa8] sm:$0xff]
      %v4054 = vld [vmem:[%s4031 + $0xb0] sm:$0xff]
      %v4055 = vld [vmem:[%s4031 + $0xb8] sm:$0xff]
      %v4056 = vld [vmem:[%s4031 + $0xc0] sm:$0xff]
      %v4057 = vld [vmem:[%s4031 + $0xc8] sm:$0xff]
      %v4058 = vld [vmem:[%s4031 + $0xd0] sm:$0xff]
      %v4059 = vld [vmem:[%s4031 + $0xd8] sm:$0xff]
      %v4060 = vld [vmem:[%s4031 + $0xe0] sm:$0xff]
      %v4061 = vld [vmem:[%s4031 + $0xe8] sm:$0xff]
      %v4062 = vld [vmem:[%s4031 + $0xf0] sm:$0xff]
      %v4063 = vld [vmem:[%s4031 + $0xf8] sm:$0xff]
      %4065 = vset.pattern.permute.xlu0 0
      %4066 = vperm.xlu0 %4065, %v4032
      %v4067 = vpop.permute.xlu0 %4066
      %4070 = vset.pattern.permute.xlu0 0
      %4071 = vperm.xlu0 %4070, %v4033
      %v4072 = vpop.permute.xlu0 %4071
      %4075 = vset.pattern.permute.xlu0 0
      %4076 = vperm.xlu0 %4075, %v4034
      %v4077 = vpop.permute.xlu0 %4076
      %4080 = vset.pattern.permute.xlu0 0
      %4081 = vperm.xlu0 %4080, %v4035
      %v4082 = vpop.permute.xlu0 %4081
      %4085 = vset.pattern.permute.xlu0 0
      %4086 = vperm.xlu0 %4085, %v4036
      %v4087 = vpop.permute.xlu0 %4086
      %4090 = vset.pattern.permute.xlu0 0
      %4091 = vperm.xlu0 %4090, %v4037
      %v4092 = vpop.permute.xlu0 %4091
      %4095 = vset.pattern.permute.xlu0 0
      %4096 = vperm.xlu0 %4095, %v4038
      %v4097 = vpop.permute.xlu0 %4096
      %4100 = vset.pattern.permute.xlu0 0
      %4101 = vperm.xlu0 %4100, %v4039
      %v4102 = vpop.permute.xlu0 %4101
      %4105 = vset.pattern.permute.xlu0 0
      %4106 = vperm.xlu0 %4105, %v4040
      %v4107 = vpop.permute.xlu0 %4106
      %4110 = vset.pattern.permute.xlu0 0
      %4111 = vperm.xlu0 %4110, %v4041
      %v4112 = vpop.permute.xlu0 %4111
      %4115 = vset.pattern.permute.xlu0 0
      %4116 = vperm.xlu0 %4115, %v4042
      %v4117 = vpop.permute.xlu0 %4116
      %4120 = vset.pattern.permute.xlu0 0
      %4121 = vperm.xlu0 %4120, %v4043
      %v4122 = vpop.permute.xlu0 %4121
      %4125 = vset.pattern.permute.xlu0 0
      %4126 = vperm.xlu0 %4125, %v4044
      %v4127 = vpop.permute.xlu0 %4126
      %4130 = vset.pattern.permute.xlu0 0
      %4131 = vperm.xlu0 %4130, %v4045
      %v4132 = vpop.permute.xlu0 %4131
      %4135 = vset.pattern.permute.xlu0 0
      %4136 = vperm.xlu0 %4135, %v4046
      %v4137 = vpop.permute.xlu0 %4136
      %4140 = vset.pattern.permute.xlu0 0
      %4141 = vperm.xlu0 %4140, %v4047
      %v4142 = vpop.permute.xlu0 %4141
      %4145 = vset.pattern.permute.xlu0 0
      %4146 = vperm.xlu0 %4145, %v4048
      %v4147 = vpop.permute.xlu0 %4146
      %4150 = vset.pattern.permute.xlu0 0
      %4151 = vperm.xlu0 %4150, %v4049
      %v4152 = vpop.permute.xlu0 %4151
      %4155 = vset.pattern.permute.xlu0 0
      %4156 = vperm.xlu0 %4155, %v4050
      %v4157 = vpop.permute.xlu0 %4156
      %4160 = vset.pattern.permute.xlu0 0
      %4161 = vperm.xlu0 %4160, %v4051
      %v4162 = vpop.permute.xlu0 %4161
      %4165 = vset.pattern.permute.xlu0 0
      %4166 = vperm.xlu0 %4165, %v4052
      %v4167 = vpop.permute.xlu0 %4166
      %4170 = vset.pattern.permute.xlu0 0
      %4171 = vperm.xlu0 %4170, %v4053
      %v4172 = vpop.permute.xlu0 %4171
      %4175 = vset.pattern.permute.xlu0 0
      %4176 = vperm.xlu0 %4175, %v4054
      %v4177 = vpop.permute.xlu0 %4176
      %4180 = vset.pattern.permute.xlu0 0
      %4181 = vperm.xlu0 %4180, %v4055
      %v4182 = vpop.permute.xlu0 %4181
      %4185 = vset.pattern.permute.xlu0 0
      %4186 = vperm.xlu0 %4185, %v4056
      %v4187 = vpop.permute.xlu0 %4186
      %4190 = vset.pattern.permute.xlu0 0
      %4191 = vperm.xlu0 %4190, %v4057
      %v4192 = vpop.permute.xlu0 %4191
      %4195 = vset.pattern.permute.xlu0 0
      %4196 = vperm.xlu0 %4195, %v4058
      %v4197 = vpop.permute.xlu0 %4196
      %4200 = vset.pattern.permute.xlu0 0
      %4201 = vperm.xlu0 %4200, %v4059
      %v4202 = vpop.permute.xlu0 %4201
      %4205 = vset.pattern.permute.xlu0 0
      %4206 = vperm.xlu0 %4205, %v4060
      %v4207 = vpop.permute.xlu0 %4206
      %4210 = vset.pattern.permute.xlu0 0
      %4211 = vperm.xlu0 %4210, %v4061
      %v4212 = vpop.permute.xlu0 %4211
      %4215 = vset.pattern.permute.xlu0 0
      %4216 = vperm.xlu0 %4215, %v4062
      %v4217 = vpop.permute.xlu0 %4216
      %4220 = vset.pattern.permute.xlu0 0
      %4221 = vperm.xlu0 %4220, %v4063
      %v4222 = vpop.permute.xlu0 %4221
      %v4224 = vmul.f32 %v3999, %v4067
      %v4225 = vmul.f32 %v4000, %v4072
      %v4226 = vmul.f32 %v4001, %v4077
      %v4227 = vmul.f32 %v4002, %v4082
      %v4228 = vmul.f32 %v4003, %v4087
      %v4229 = vmul.f32 %v4004, %v4092
      %v4230 = vmul.f32 %v4005, %v4097
      %v4231 = vmul.f32 %v4006, %v4102
      %v4232 = vmul.f32 %v4007, %v4107
      %v4233 = vmul.f32 %v4008, %v4112
      %v4234 = vmul.f32 %v4009, %v4117
      %v4235 = vmul.f32 %v4010, %v4122
      %v4236 = vmul.f32 %v4011, %v4127
      %v4237 = vmul.f32 %v4012, %v4132
      %v4238 = vmul.f32 %v4013, %v4137
      %v4239 = vmul.f32 %v4014, %v4142
      %v4240 = vmul.f32 %v4015, %v4147
      %v4241 = vmul.f32 %v4016, %v4152
      %v4242 = vmul.f32 %v4017, %v4157
      %v4243 = vmul.f32 %v4018, %v4162
      %v4244 = vmul.f32 %v4019, %v4167
      %v4245 = vmul.f32 %v4020, %v4172
      %v4246 = vmul.f32 %v4021, %v4177
      %v4247 = vmul.f32 %v4022, %v4182
      %v4248 = vmul.f32 %v4023, %v4187
      %v4249 = vmul.f32 %v4024, %v4192
      %v4250 = vmul.f32 %v4025, %v4197
      %v4251 = vmul.f32 %v4026, %v4202
      %v4252 = vmul.f32 %v4027, %v4207
      %v4253 = vmul.f32 %v4028, %v4212
      %v4254 = vmul.f32 %v4029, %v4217
      %v4255 = vmul.f32 %v4030, %v4222
      %s4256 = scalar_lea.vmem %s3, 48
      %v4257 = vld [vmem:[%s4256] sm:$0xff]
      %v4259 = vsel %vm353, %v4224, 0
      %v4262 = vsel %vm353, %v4225, 0
      %v4265 = vsel %vm353, %v4226, 0
      %v4268 = vsel %vm353, %v4227, 0
      %v4271 = vsel %vm353, %v4228, 0
      %v4274 = vsel %vm353, %v4229, 0
      %v4277 = vsel %vm353, %v4230, 0
      %v4280 = vsel %vm353, %v4231, 0
      %v4283 = vsel %vm353, %v4232, 0
      %v4286 = vsel %vm353, %v4233, 0
      %v4289 = vsel %vm353, %v4234, 0
      %v4292 = vsel %vm353, %v4235, 0
      %v4295 = vsel %vm353, %v4236, 0
      %v4298 = vsel %vm353, %v4237, 0
      %v4301 = vsel %vm353, %v4238, 0
      %v4304 = vsel %vm353, %v4239, 0
      %v4307 = vsel %vm353, %v4240, 0
      %v4310 = vsel %vm353, %v4241, 0
      %v4313 = vsel %vm353, %v4242, 0
      %v4316 = vsel %vm353, %v4243, 0
      %v4319 = vsel %vm353, %v4244, 0
      %v4322 = vsel %vm353, %v4245, 0
      %v4325 = vsel %vm353, %v4246, 0
      %v4328 = vsel %vm353, %v4247, 0
      %v4331 = vsel %vm353, %v4248, 0
      %v4334 = vsel %vm353, %v4249, 0
      %v4337 = vsel %vm353, %v4250, 0
      %v4340 = vsel %vm353, %v4251, 0
      %v4343 = vsel %vm353, %v4252, 0
      %v4346 = vsel %vm353, %v4253, 0
      %v4349 = vsel %vm353, %v4254, 0
      %v4352 = vsel %vm353, %v4255, 0
      %4354 = vmatprep.subr.mxu0 0.0
      %4355 = vmatpush1.msra.mxu0 %v4257
      %4356 = vmatprep.subr.mxu0 0.0
      %4357 = vmatpush1.msra.mxu0 0.0
      %4358 = vmatprep.subr.mxu0 0.0
      %4359 = vmatpush1.msra.mxu0 0.0
      %4360 = vmatprep.subr.mxu0 0.0
      %4361 = vmatpush1.msra.mxu0 0.0
      %4362 = vmatprep.subr.mxu0 0.0
      %4363 = vmatpush1.msra.mxu0 0.0
      %4364 = vmatprep.subr.mxu0 0.0
      %4365 = vmatpush1.msra.mxu0 0.0
      %4366 = vmatprep.subr.mxu0 0.0
      %4367 = vmatpush1.msra.mxu0 0.0
      %4368 = vmatprep.subr.mxu0 0.0
      %4369 = vmatpush1.msra.mxu0 0.0
      %4370 = vmatprep.subr.mxu0 0.0
      %4371 = vmatpush1.msra.mxu0 0.0
      %4372 = vmatprep.subr.mxu0 0.0
      %4373 = vmatpush1.msra.mxu0 0.0
      %4374 = vmatprep.subr.mxu0 0.0
      %4375 = vmatpush1.msra.mxu0 0.0
      %4376 = vmatprep.subr.mxu0 0.0
      %4377 = vmatpush1.msra.mxu0 0.0
      %4378 = vmatprep.subr.mxu0 0.0
      %4379 = vmatpush1.msra.mxu0 0.0
      %4380 = vmatprep.subr.mxu0 0.0
      %4381 = vmatpush1.msra.mxu0 0.0
      %4382 = vmatprep.subr.mxu0 0.0
      %4383 = vmatpush1.msra.mxu0 0.0
      %4384 = vmatprep.subr.mxu0 0.0
      %4385 = vmatpush1.msra.mxu0 0.0
      %4386 = vmatprep.subr.mxu0 0.0
      %4387 = vmatpush1.msra.mxu0 0.0
      %4388 = vmatprep.subr.mxu0 0.0
      %4389 = vmatpush1.msra.mxu0 0.0
      %4390 = vmatprep.subr.mxu0 0.0
      %4391 = vmatpush1.msra.mxu0 0.0
      %4392 = vmatprep.subr.mxu0 0.0
      %4393 = vmatpush1.msra.mxu0 0.0
      %4394 = vmatprep.subr.mxu0 0.0
      %4395 = vmatpush1.msra.mxu0 0.0
      %4396 = vmatprep.subr.mxu0 0.0
      %4397 = vmatpush1.msra.mxu0 0.0
      %4398 = vmatprep.subr.mxu0 0.0
      %4399 = vmatpush1.msra.mxu0 0.0
      %4400 = vmatprep.subr.mxu0 0.0
      %4401 = vmatpush1.msra.mxu0 0.0
      %4402 = vmatprep.subr.mxu0 0.0
      %4403 = vmatpush1.msra.mxu0 0.0
      %4404 = vmatprep.subr.mxu0 0.0
      %4405 = vmatpush1.msra.mxu0 0.0
      %4406 = vmatprep.subr.mxu0 0.0
      %4407 = vmatpush1.msra.mxu0 0.0
      %4408 = vmatprep.subr.mxu0 0.0
      %4409 = vmatpush1.msra.mxu0 0.0
      %4410 = vmatprep.subr.mxu0 0.0
      %4411 = vmatpush1.msra.mxu0 0.0
      %4412 = vmatprep.subr.mxu0 0.0
      %4413 = vmatpush1.msra.mxu0 0.0
      %4414 = vmatprep.subr.mxu0 0.0
      %4415 = vmatpush1.msra.mxu0 0.0
      %4416 = vmatprep.subr.mxu0 0.0
      %4417 = vmatpush1.msra.mxu0 0.0
      %4418 = vmatprep.mubr.f32.mxu0 0.0
      %4419 = vmatmul.mubr.f32.gmra.mrb[0].mxu0 %v4259
      %v4420 = vpop.f32.mrb[0].mxu0
      %v4421 = vadd.f32 0.0, %v4420
      %v4422 = vpop.f32.mrb[0].mxu0
      %4423 = vmatprep.mubr.f32.mxu0 0.0
      %4424 = vmatmul.mubr.f32.gmra.mrb[0].mxu0 %v4262
      %v4425 = vpop.f32.mrb[0].mxu0
      %v4426 = vadd.f32 0.0, %v4425
      %v4427 = vpop.f32.mrb[0].mxu0
      %4428 = vmatprep.mubr.f32.mxu0 0.0
      %4429 = vmatmul.mubr.f32.gmra.mrb[0].mxu0 %v4265
      %v4430 = vpop.f32.mrb[0].mxu0
      %v4431 = vadd.f32 0.0, %v4430
      %v4432 = vpop.f32.mrb[0].mxu0
      %4433 = vmatprep.mubr.f32.mxu0 0.0
      %4434 = vmatmul.mubr.f32.gmra.mrb[0].mxu0 %v4268
      %v4435 = vpop.f32.mrb[0].mxu0
      %v4436 = vadd.f32 0.0, %v4435
      %v4437 = vpop.f32.mrb[0].mxu0
      %4438 = vmatprep.mubr.f32.mxu0 0.0
      %4439 = vmatmul.mubr.f32.gmra.mrb[0].mxu0 %v4271
      %v4440 = vpop.f32.mrb[0].mxu0
      %v4441 = vadd.f32 0.0, %v4440
      %v4442 = vpop.f32.mrb[0].mxu0
      %4443 = vmatprep.mubr.f32.mxu0 0.0
      %4444 = vmatmul.mubr.f32.gmra.mrb[0].mxu0 %v4274
      %v4445 = vpop.f32.mrb[0].mxu0
      %v4446 = vadd.f32 0.0, %v4445
      %v4447 = vpop.f32.mrb[0].mxu0
      %4448 = vmatprep.mubr.f32.mxu0 0.0
      %4449 = vmatmul.mubr.f32.gmra.mrb[0].mxu0 %v4277
      %v4450 = vpop.f32.mrb[0].mxu0
      %v4451 = vadd.f32 0.0, %v4450
      %v4452 = vpop.f32.mrb[0].mxu0
      %4453 = vmatprep.mubr.f32.mxu0 0.0
      %4454 = vmatmul.mubr.f32.gmra.mrb[0].mxu0 %v4280
      %v4455 = vpop.f32.mrb[0].mxu0
      %v4456 = vadd.f32 0.0, %v4455
      %v4457 = vpop.f32.mrb[0].mxu0
      %4458 = vmatprep.mubr.f32.mxu0 0.0
      %4459 = vmatmul.mubr.f32.gmra.mrb[0].mxu0 %v4283
      %v4460 = vpop.f32.mrb[0].mxu0
      %v4461 = vadd.f32 0.0, %v4460
      %v4462 = vpop.f32.mrb[0].mxu0
      %4463 = vmatprep.mubr.f32.mxu0 0.0
      %4464 = vmatmul.mubr.f32.gmra.mrb[0].mxu0 %v4286
      %v4465 = vpop.f32.mrb[0].mxu0
      %v4466 = vadd.f32 0.0, %v4465
      %v4467 = vpop.f32.mrb[0].mxu0
      %4468 = vmatprep.mubr.f32.mxu0 0.0
      %4469 = vmatmul.mubr.f32.gmra.mrb[0].mxu0 %v4289
      %v4470 = vpop.f32.mrb[0].mxu0
      %v4471 = vadd.f32 0.0, %v4470
      %v4472 = vpop.f32.mrb[0].mxu0
      %4473 = vmatprep.mubr.f32.mxu0 0.0
      %4474 = vmatmul.mubr.f32.gmra.mrb[0].mxu0 %v4292
      %v4475 = vpop.f32.mrb[0].mxu0
      %v4476 = vadd.f32 0.0, %v4475
      %v4477 = vpop.f32.mrb[0].mxu0
      %4478 = vmatprep.mubr.f32.mxu0 0.0
      %4479 = vmatmul.mubr.f32.gmra.mrb[0].mxu0 %v4295
      %v4480 = vpop.f32.mrb[0].mxu0
      %v4481 = vadd.f32 0.0, %v4480
      %v4482 = vpop.f32.mrb[0].mxu0
      %4483 = vmatprep.mubr.f32.mxu0 0.0
      %4484 = vmatmul.mubr.f32.gmra.mrb[0].mxu0 %v4298
      %v4485 = vpop.f32.mrb[0].mxu0
      %v4486 = vadd.f32 0.0, %v4485
      %v4487 = vpop.f32.mrb[0].mxu0
      %4488 = vmatprep.mubr.f32.mxu0 0.0
      %4489 = vmatmul.mubr.f32.gmra.mrb[0].mxu0 %v4301
      %v4490 = vpop.f32.mrb[0].mxu0
      %v4491 = vadd.f32 0.0, %v4490
      %v4492 = vpop.f32.mrb[0].mxu0
      %4493 = vmatprep.mubr.f32.mxu0 0.0
      %4494 = vmatmul.mubr.f32.gmra.mrb[0].mxu0 %v4304
      %v4495 = vpop.f32.mrb[0].mxu0
      %v4496 = vadd.f32 0.0, %v4495
      %v4497 = vpop.f32.mrb[0].mxu0
      %4498 = vmatprep.mubr.f32.mxu0 0.0
      %4499 = vmatmul.mubr.f32.gmra.mrb[0].mxu0 %v4307
      %v4500 = vpop.f32.mrb[0].mxu0
      %v4501 = vadd.f32 0.0, %v4500
      %v4502 = vpop.f32.mrb[0].mxu0
      %4503 = vmatprep.mubr.f32.mxu0 0.0
      %4504 = vmatmul.mubr.f32.gmra.mrb[0].mxu0 %v4310
      %v4505 = vpop.f32.mrb[0].mxu0
      %v4506 = vadd.f32 0.0, %v4505
      %v4507 = vpop.f32.mrb[0].mxu0
      %4508 = vmatprep.mubr.f32.mxu0 0.0
      %4509 = vmatmul.mubr.f32.gmra.mrb[0].mxu0 %v4313
      %v4510 = vpop.f32.mrb[0].mxu0
      %v4511 = vadd.f32 0.0, %v4510
      %v4512 = vpop.f32.mrb[0].mxu0
      %4513 = vmatprep.mubr.f32.mxu0 0.0
      %4514 = vmatmul.mubr.f32.gmra.mrb[0].mxu0 %v4316
      %v4515 = vpop.f32.mrb[0].mxu0
      %v4516 = vadd.f32 0.0, %v4515
      %v4517 = vpop.f32.mrb[0].mxu0
      %4518 = vmatprep.mubr.f32.mxu0 0.0
      %4519 = vmatmul.mubr.f32.gmra.mrb[0].mxu0 %v4319
      %v4520 = vpop.f32.mrb[0].mxu0
      %v4521 = vadd.f32 0.0, %v4520
      %v4522 = vpop.f32.mrb[0].mxu0
      %4523 = vmatprep.mubr.f32.mxu0 0.0
      %4524 = vmatmul.mubr.f32.gmra.mrb[0].mxu0 %v4322
      %v4525 = vpop.f32.mrb[0].mxu0
      %v4526 = vadd.f32 0.0, %v4525
      %v4527 = vpop.f32.mrb[0].mxu0
      %4528 = vmatprep.mubr.f32.mxu0 0.0
      %4529 = vmatmul.mubr.f32.gmra.mrb[0].mxu0 %v4325
      %v4530 = vpop.f32.mrb[0].mxu0
      %v4531 = vadd.f32 0.0, %v4530
      %v4532 = vpop.f32.mrb[0].mxu0
      %4533 = vmatprep.mubr.f32.mxu0 0.0
      %4534 = vmatmul.mubr.f32.gmra.mrb[0].mxu0 %v4328
      %v4535 = vpop.f32.mrb[0].mxu0
      %v4536 = vadd.f32 0.0, %v4535
      %v4537 = vpop.f32.mrb[0].mxu0
      %4538 = vmatprep.mubr.f32.mxu0 0.0
      %4539 = vmatmul.mubr.f32.gmra.mrb[0].mxu0 %v4331
      %v4540 = vpop.f32.mrb[0].mxu0
      %v4541 = vadd.f32 0.0, %v4540
      %v4542 = vpop.f32.mrb[0].mxu0
      %4543 = vmatprep.mubr.f32.mxu0 0.0
      %4544 = vmatmul.mubr.f32.gmra.mrb[0].mxu0 %v4334
      %v4545 = vpop.f32.mrb[0].mxu0
      %v4546 = vadd.f32 0.0, %v4545
      %v4547 = vpop.f32.mrb[0].mxu0
      %4548 = vmatprep.mubr.f32.mxu0 0.0
      %4549 = vmatmul.mubr.f32.gmra.mrb[0].mxu0 %v4337
      %v4550 = vpop.f32.mrb[0].mxu0
      %v4551 = vadd.f32 0.0, %v4550
      %v4552 = vpop.f32.mrb[0].mxu0
      %4553 = vmatprep.mubr.f32.mxu0 0.0
      %4554 = vmatmul.mubr.f32.gmra.mrb[0].mxu0 %v4340
      %v4555 = vpop.f32.mrb[0].mxu0
      %v4556 = vadd.f32 0.0, %v4555
      %v4557 = vpop.f32.mrb[0].mxu0
      %4558 = vmatprep.mubr.f32.mxu0 0.0
      %4559 = vmatmul.mubr.f32.gmra.mrb[0].mxu0 %v4343
      %v4560 = vpop.f32.mrb[0].mxu0
      %v4561 = vadd.f32 0.0, %v4560
      %v4562 = vpop.f32.mrb[0].mxu0
      %4563 = vmatprep.mubr.f32.mxu0 0.0
      %4564 = vmatmul.mubr.f32.gmra.mrb[0].mxu0 %v4346
      %v4565 = vpop.f32.mrb[0].mxu0
      %v4566 = vadd.f32 0.0, %v4565
      %v4567 = vpop.f32.mrb[0].mxu0
      %4568 = vmatprep.mubr.f32.mxu0 0.0
      %4569 = vmatmul.mubr.f32.gmra.mrb[0].mxu0 %v4349
      %v4570 = vpop.f32.mrb[0].mxu0
      %v4571 = vadd.f32 0.0, %v4570
      %v4572 = vpop.f32.mrb[0].mxu0
      %4573 = vmatprep.mubr.f32.mxu0 0.0
      %4574 = vmatmul.mubr.f32.gmra.mrb[0].mxu0 %v4352
      %v4575 = vpop.f32.mrb[0].mxu0
      %v4576 = vadd.f32 0.0, %v4575
      %v4577 = vpop.f32.mrb[0].mxu0
      %4578 = vdwg.mxu0
      %v4579 = vadd.f32 %v3967, %v4421
      %v4580 = vadd.f32 %v3968, %v4426
      %v4581 = vadd.f32 %v3969, %v4431
      %v4582 = vadd.f32 %v3970, %v4436
      %v4583 = vadd.f32 %v3971, %v4441
      %v4584 = vadd.f32 %v3972, %v4446
      %v4585 = vadd.f32 %v3973, %v4451
      %v4586 = vadd.f32 %v3974, %v4456
      %v4587 = vadd.f32 %v3975, %v4461
      %v4588 = vadd.f32 %v3976, %v4466
      %v4589 = vadd.f32 %v3977, %v4471
      %v4590 = vadd.f32 %v3978, %v4476
      %v4591 = vadd.f32 %v3979, %v4481
      %v4592 = vadd.f32 %v3980, %v4486
      %v4593 = vadd.f32 %v3981, %v4491
      %v4594 = vadd.f32 %v3982, %v4496
      %v4595 = vadd.f32 %v3983, %v4501
      %v4596 = vadd.f32 %v3984, %v4506
      %v4597 = vadd.f32 %v3985, %v4511
      %v4598 = vadd.f32 %v3986, %v4516
      %v4599 = vadd.f32 %v3987, %v4521
      %v4600 = vadd.f32 %v3988, %v4526
      %v4601 = vadd.f32 %v3989, %v4531
      %v4602 = vadd.f32 %v3990, %v4536
      %v4603 = vadd.f32 %v3991, %v4541
      %v4604 = vadd.f32 %v3992, %v4546
      %v4605 = vadd.f32 %v3993, %v4551
      %v4606 = vadd.f32 %v3994, %v4556
      %v4607 = vadd.f32 %v3995, %v4561
      %v4608 = vadd.f32 %v3996, %v4566
      %v4609 = vadd.f32 %v3997, %v4571
      %v4610 = vadd.f32 %v3998, %v4576
      %v4611 = vld [vmem:[#allocation2 + $0x28] sm:$0xff]
      %v4612 = vld [vmem:[#allocation2 + $0x30] sm:$0xff]
      %v4613 = vld [vmem:[#allocation2 + $0x38] sm:$0xff]
      %v4614 = vld [vmem:[#allocation2 + $0x40] sm:$0xff]
      %v4615 = vld [vmem:[#allocation2 + $0x48] sm:$0xff]
      %v4616 = vld [vmem:[#allocation2 + $0x50] sm:$0xff]
      %v4617 = vld [vmem:[#allocation2 + $0x58] sm:$0xff]
      %v4618 = vld [vmem:[#allocation2 + $0x60] sm:$0xff]
      %v4619 = vld [vmem:[#allocation2 + $0x68] sm:$0xff]
      %v4620 = vld [vmem:[#allocation2 + $0x70] sm:$0xff]
      %v4621 = vld [vmem:[#allocation2 + $0x78] sm:$0xff]
      %v4622 = vld [vmem:[#allocation2 + $0x80] sm:$0xff]
      %v4623 = vld [vmem:[#allocation2 + $0x88] sm:$0xff]
      %v4624 = vld [vmem:[#allocation2 + $0x90] sm:$0xff]
      %v4625 = vld [vmem:[#allocation2 + $0x98] sm:$0xff]
      %v4626 = vld [vmem:[#allocation2 + $0xa0] sm:$0xff]
      %v4627 = vld [vmem:[#allocation2 + $0xa8] sm:$0xff]
      %v4628 = vld [vmem:[#allocation2 + $0xb0] sm:$0xff]
      %v4629 = vld [vmem:[#allocation2 + $0xb8] sm:$0xff]
      %v4630 = vld [vmem:[#allocation2 + $0xc0] sm:$0xff]
      %v4631 = vld [vmem:[#allocation2 + $0xc8] sm:$0xff]
      %v4632 = vld [vmem:[#allocation2 + $0xd0] sm:$0xff]
      %v4633 = vld [vmem:[#allocation2 + $0xd8] sm:$0xff]
      %v4634 = vld [vmem:[#allocation2 + $0xe0] sm:$0xff]
      %v4635 = vld [vmem:[#allocation2 + $0xe8] sm:$0xff]
      %v4636 = vld [vmem:[#allocation2 + $0xf0] sm:$0xff]
      %v4637 = vld [vmem:[#allocation2 + $0xf8] sm:$0xff]
      %v4638 = vld [vmem:[#allocation2 + $0x100] sm:$0xff]
      %v4639 = vld [vmem:[#allocation2 + $0x108] sm:$0xff]
      %v4640 = vld [vmem:[#allocation2 + $0x110] sm:$0xff]
      %v4641 = vld [vmem:[#allocation2 + $0x118] sm:$0xff]
      %v4642 = vld [vmem:[#allocation2 + $0x120] sm:$0xff]
      %s4643 = scalar_lea.vmem %s2, 1792
      %v4644 = vld [vmem:[%s4643] sm:$0xff]
      %v4645 = vld [vmem:[%s4643 + $0x8] sm:$0xff]
      %v4646 = vld [vmem:[%s4643 + $0x10] sm:$0xff]
      %v4647 = vld [vmem:[%s4643 + $0x18] sm:$0xff]
      %v4648 = vld [vmem:[%s4643 + $0x20] sm:$0xff]
      %v4649 = vld [vmem:[%s4643 + $0x28] sm:$0xff]
      %v4650 = vld [vmem:[%s4643 + $0x30] sm:$0xff]
      %v4651 = vld [vmem:[%s4643 + $0x38] sm:$0xff]
      %v4652 = vld [vmem:[%s4643 + $0x40] sm:$0xff]
      %v4653 = vld [vmem:[%s4643 + $0x48] sm:$0xff]
      %v4654 = vld [vmem:[%s4643 + $0x50] sm:$0xff]
      %v4655 = vld [vmem:[%s4643 + $0x58] sm:$0xff]
      %v4656 = vld [vmem:[%s4643 + $0x60] sm:$0xff]
      %v4657 = vld [vmem:[%s4643 + $0x68] sm:$0xff]
      %v4658 = vld [vmem:[%s4643 + $0x70] sm:$0xff]
      %v4659 = vld [vmem:[%s4643 + $0x78] sm:$0xff]
      %v4660 = vld [vmem:[%s4643 + $0x80] sm:$0xff]
      %v4661 = vld [vmem:[%s4643 + $0x88] sm:$0xff]
      %v4662 = vld [vmem:[%s4643 + $0x90] sm:$0xff]
      %v4663 = vld [vmem:[%s4643 + $0x98] sm:$0xff]
      %v4664 = vld [vmem:[%s4643 + $0xa0] sm:$0xff]
      %v4665 = vld [vmem:[%s4643 + $0xa8] sm:$0xff]
      %v4666 = vld [vmem:[%s4643 + $0xb0] sm:$0xff]
      %v4667 = vld [vmem:[%s4643 + $0xb8] sm:$0xff]
      %v4668 = vld [vmem:[%s4643 + $0xc0] sm:$0xff]
      %v4669 = vld [vmem:[%s4643 + $0xc8] sm:$0xff]
      %v4670 = vld [vmem:[%s4643 + $0xd0] sm:$0xff]
      %v4671 = vld [vmem:[%s4643 + $0xd8] sm:$0xff]
      %v4672 = vld [vmem:[%s4643 + $0xe0] sm:$0xff]
      %v4673 = vld [vmem:[%s4643 + $0xe8] sm:$0xff]
      %v4674 = vld [vmem:[%s4643 + $0xf0] sm:$0xff]
      %v4675 = vld [vmem:[%s4643 + $0xf8] sm:$0xff]
      %4677 = vset.pattern.permute.xlu0 0
      %4678 = vperm.xlu0 %4677, %v4644
      %v4679 = vpop.permute.xlu0 %4678
      %4682 = vset.pattern.permute.xlu0 0
      %4683 = vperm.xlu0 %4682, %v4645
      %v4684 = vpop.permute.xlu0 %4683
      %4687 = vset.pattern.permute.xlu0 0
      %4688 = vperm.xlu0 %4687, %v4646
      %v4689 = vpop.permute.xlu0 %4688
      %4692 = vset.pattern.permute.xlu0 0
      %4693 = vperm.xlu0 %4692, %v4647
      %v4694 = vpop.permute.xlu0 %4693
      %4697 = vset.pattern.permute.xlu0 0
      %4698 = vperm.xlu0 %4697, %v4648
      %v4699 = vpop.permute.xlu0 %4698
      %4702 = vset.pattern.permute.xlu0 0
      %4703 = vperm.xlu0 %4702, %v4649
      %v4704 = vpop.permute.xlu0 %4703
      %4707 = vset.pattern.permute.xlu0 0
      %4708 = vperm.xlu0 %4707, %v4650
      %v4709 = vpop.permute.xlu0 %4708
      %4712 = vset.pattern.permute.xlu0 0
      %4713 = vperm.xlu0 %4712, %v4651
      %v4714 = vpop.permute.xlu0 %4713
      %4717 = vset.pattern.permute.xlu0 0
      %4718 = vperm.xlu0 %4717, %v4652
      %v4719 = vpop.permute.xlu0 %4718
      %4722 = vset.pattern.permute.xlu0 0
      %4723 = vperm.xlu0 %4722, %v4653
      %v4724 = vpop.permute.xlu0 %4723
      %4727 = vset.pattern.permute.xlu0 0
      %4728 = vperm.xlu0 %4727, %v4654
      %v4729 = vpop.permute.xlu0 %4728
      %4732 = vset.pattern.permute.xlu0 0
      %4733 = vperm.xlu0 %4732, %v4655
      %v4734 = vpop.permute.xlu0 %4733
      %4737 = vset.pattern.permute.xlu0 0
      %4738 = vperm.xlu0 %4737, %v4656
      %v4739 = vpop.permute.xlu0 %4738
      %4742 = vset.pattern.permute.xlu0 0
      %4743 = vperm.xlu0 %4742, %v4657
      %v4744 = vpop.permute.xlu0 %4743
      %4747 = vset.pattern.permute.xlu0 0
      %4748 = vperm.xlu0 %4747, %v4658
      %v4749 = vpop.permute.xlu0 %4748
      %4752 = vset.pattern.permute.xlu0 0
      %4753 = vperm.xlu0 %4752, %v4659
      %v4754 = vpop.permute.xlu0 %4753
      %4757 = vset.pattern.permute.xlu0 0
      %4758 = vperm.xlu0 %4757, %v4660
      %v4759 = vpop.permute.xlu0 %4758
      %4762 = vset.pattern.permute.xlu0 0
      %4763 = vperm.xlu0 %4762, %v4661
      %v4764 = vpop.permute.xlu0 %4763
      %4767 = vset.pattern.permute.xlu0 0
      %4768 = vperm.xlu0 %4767, %v4662
      %v4769 = vpop.permute.xlu0 %4768
      %4772 = vset.pattern.permute.xlu0 0
      %4773 = vperm.xlu0 %4772, %v4663
      %v4774 = vpop.permute.xlu0 %4773
      %4777 = vset.pattern.permute.xlu0 0
      %4778 = vperm.xlu0 %4777, %v4664
      %v4779 = vpop.permute.xlu0 %4778
      %4782 = vset.pattern.permute.xlu0 0
      %4783 = vperm.xlu0 %4782, %v4665
      %v4784 = vpop.permute.xlu0 %4783
      %4787 = vset.pattern.permute.xlu0 0
      %4788 = vperm.xlu0 %4787, %v4666
      %v4789 = vpop.permute.xlu0 %4788
      %4792 = vset.pattern.permute.xlu0 0
      %4793 = vperm.xlu0 %4792, %v4667
      %v4794 = vpop.permute.xlu0 %4793
      %4797 = vset.pattern.permute.xlu0 0
      %4798 = vperm.xlu0 %4797, %v4668
      %v4799 = vpop.permute.xlu0 %4798
      %4802 = vset.pattern.permute.xlu0 0
      %4803 = vperm.xlu0 %4802, %v4669
      %v4804 = vpop.permute.xlu0 %4803
      %4807 = vset.pattern.permute.xlu0 0
      %4808 = vperm.xlu0 %4807, %v4670
      %v4809 = vpop.permute.xlu0 %4808
      %4812 = vset.pattern.permute.xlu0 0
      %4813 = vperm.xlu0 %4812, %v4671
      %v4814 = vpop.permute.xlu0 %4813
      %4817 = vset.pattern.permute.xlu0 0
      %4818 = vperm.xlu0 %4817, %v4672
      %v4819 = vpop.permute.xlu0 %4818
      %4822 = vset.pattern.permute.xlu0 0
      %4823 = vperm.xlu0 %4822, %v4673
      %v4824 = vpop.permute.xlu0 %4823
      %4827 = vset.pattern.permute.xlu0 0
      %4828 = vperm.xlu0 %4827, %v4674
      %v4829 = vpop.permute.xlu0 %4828
      %4832 = vset.pattern.permute.xlu0 0
      %4833 = vperm.xlu0 %4832, %v4675
      %v4834 = vpop.permute.xlu0 %4833
      %v4836 = vmul.f32 %v4611, %v4679
      %v4837 = vmul.f32 %v4612, %v4684
      %v4838 = vmul.f32 %v4613, %v4689
      %v4839 = vmul.f32 %v4614, %v4694
      %v4840 = vmul.f32 %v4615, %v4699
      %v4841 = vmul.f32 %v4616, %v4704
      %v4842 = vmul.f32 %v4617, %v4709
      %v4843 = vmul.f32 %v4618, %v4714
      %v4844 = vmul.f32 %v4619, %v4719
      %v4845 = vmul.f32 %v4620, %v4724
      %v4846 = vmul.f32 %v4621, %v4729
      %v4847 = vmul.f32 %v4622, %v4734
      %v4848 = vmul.f32 %v4623, %v4739
      %v4849 = vmul.f32 %v4624, %v4744
      %v4850 = vmul.f32 %v4625, %v4749
      %v4851 = vmul.f32 %v4626, %v4754
      %v4852 = vmul.f32 %v4627, %v4759
      %v4853 = vmul.f32 %v4628, %v4764
      %v4854 = vmul.f32 %v4629, %v4769
      %v4855 = vmul.f32 %v4630, %v4774
      %v4856 = vmul.f32 %v4631, %v4779
      %v4857 = vmul.f32 %v4632, %v4784
      %v4858 = vmul.f32 %v4633, %v4789
      %v4859 = vmul.f32 %v4634, %v4794
      %v4860 = vmul.f32 %v4635, %v4799
      %v4861 = vmul.f32 %v4636, %v4804
      %v4862 = vmul.f32 %v4637, %v4809
      %v4863 = vmul.f32 %v4638, %v4814
      %v4864 = vmul.f32 %v4639, %v4819
      %v4865 = vmul.f32 %v4640, %v4824
      %v4866 = vmul.f32 %v4641, %v4829
      %v4867 = vmul.f32 %v4642, %v4834
      %s4868 = scalar_lea.vmem %s3, 56
      %v4869 = vld [vmem:[%s4868] sm:$0xff]
      %v4871 = vsel %vm353, %v4836, 0
      %v4874 = vsel %vm353, %v4837, 0
      %v4877 = vsel %vm353, %v4838, 0
      %v4880 = vsel %vm353, %v4839, 0
      %v4883 = vsel %vm353, %v4840, 0
      %v4886 = vsel %vm353, %v4841, 0
      %v4889 = vsel %vm353, %v4842, 0
      %v4892 = vsel %vm353, %v4843, 0
      %v4895 = vsel %vm353, %v4844, 0
      %v4898 = vsel %vm353, %v4845, 0
      %v4901 = vsel %vm353, %v4846, 0
      %v4904 = vsel %vm353, %v4847, 0
      %v4907 = vsel %vm353, %v4848, 0
      %v4910 = vsel %vm353, %v4849, 0
      %v4913 = vsel %vm353, %v4850, 0
      %v4916 = vsel %vm353, %v4851, 0
      %v4919 = vsel %vm353, %v4852, 0
      %v4922 = vsel %vm353, %v4853, 0
      %v4925 = vsel %vm353, %v4854, 0
      %v4928 = vsel %vm353, %v4855, 0
      %v4931 = vsel %vm353, %v4856, 0
      %v4934 = vsel %vm353, %v4857, 0
      %v4937 = vsel %vm353, %v4858, 0
      %v4940 = vsel %vm353, %v4859, 0
      %v4943 = vsel %vm353, %v4860, 0
      %v4946 = vsel %vm353, %v4861, 0
      %v4949 = vsel %vm353, %v4862, 0
      %v4952 = vsel %vm353, %v4863, 0
      %v4955 = vsel %vm353, %v4864, 0
      %v4958 = vsel %vm353, %v4865, 0
      %v4961 = vsel %vm353, %v4866, 0
      %v4964 = vsel %vm353, %v4867, 0
      %4966 = vmatprep.subr.mxu0 0.0
      %4967 = vmatpush1.msra.mxu0 %v4869
      %4968 = vmatprep.subr.mxu0 0.0
      %4969 = vmatpush1.msra.mxu0 0.0
      %4970 = vmatprep.subr.mxu0 0.0
      %4971 = vmatpush1.msra.mxu0 0.0
      %4972 = vmatprep.subr.mxu0 0.0
      %4973 = vmatpush1.msra.mxu0 0.0
      %4974 = vmatprep.subr.mxu0 0.0
      %4975 = vmatpush1.msra.mxu0 0.0
      %4976 = vmatprep.subr.mxu0 0.0
      %4977 = vmatpush1.msra.mxu0 0.0
      %4978 = vmatprep.subr.mxu0 0.0
      %4979 = vmatpush1.msra.mxu0 0.0
      %4980 = vmatprep.subr.mxu0 0.0
      %4981 = vmatpush1.msra.mxu0 0.0
      %4982 = vmatprep.subr.mxu0 0.0
      %4983 = vmatpush1.msra.mxu0 0.0
      %4984 = vmatprep.subr.mxu0 0.0
      %4985 = vmatpush1.msra.mxu0 0.0
      %4986 = vmatprep.subr.mxu0 0.0
      %4987 = vmatpush1.msra.mxu0 0.0
      %4988 = vmatprep.subr.mxu0 0.0
      %4989 = vmatpush1.msra.mxu0 0.0
      %4990 = vmatprep.subr.mxu0 0.0
      %4991 = vmatpush1.msra.mxu0 0.0
      %4992 = vmatprep.subr.mxu0 0.0
      %4993 = vmatpush1.msra.mxu0 0.0
      %4994 = vmatprep.subr.mxu0 0.0
      %4995 = vmatpush1.msra.mxu0 0.0
      %4996 = vmatprep.subr.mxu0 0.0
      %4997 = vmatpush1.msra.mxu0 0.0
      %4998 = vmatprep.subr.mxu0 0.0
      %4999 = vmatpush1.msra.mxu0 0.0
      %5000 = vmatprep.subr.mxu0 0.0
      %5001 = vmatpush1.msra.mxu0 0.0
      %5002 = vmatprep.subr.mxu0 0.0
      %5003 = vmatpush1.msra.mxu0 0.0
      %5004 = vmatprep.subr.mxu0 0.0
      %5005 = vmatpush1.msra.mxu0 0.0
      %5006 = vmatprep.subr.mxu0 0.0
      %5007 = vmatpush1.msra.mxu0 0.0
      %5008 = vmatprep.subr.mxu0 0.0
      %5009 = vmatpush1.msra.mxu0 0.0
      %5010 = vmatprep.subr.mxu0 0.0
      %5011 = vmatpush1.msra.mxu0 0.0
      %5012 = vmatprep.subr.mxu0 0.0
      %5013 = vmatpush1.msra.mxu0 0.0
      %5014 = vmatprep.subr.mxu0 0.0
      %5015 = vmatpush1.msra.mxu0 0.0
      %5016 = vmatprep.subr.mxu0 0.0
      %5017 = vmatpush1.msra.mxu0 0.0
      %5018 = vmatprep.subr.mxu0 0.0
      %5019 = vmatpush1.msra.mxu0 0.0
      %5020 = vmatprep.subr.mxu0 0.0
      %5021 = vmatpush1.msra.mxu0 0.0
      %5022 = vmatprep.subr.mxu0 0.0
      %5023 = vmatpush1.msra.mxu0 0.0
      %5024 = vmatprep.subr.mxu0 0.0
      %5025 = vmatpush1.msra.mxu0 0.0
      %5026 = vmatprep.subr.mxu0 0.0
      %5027 = vmatpush1.msra.mxu0 0.0
      %5028 = vmatprep.subr.mxu0 0.0
      %5029 = vmatpush1.msra.mxu0 0.0
      %5030 = vmatprep.mubr.f32.mxu0 0.0
      %5031 = vmatmul.mubr.f32.gmra.mrb[0].mxu0 %v4871
      %v5032 = vpop.f32.mrb[0].mxu0
      %v5033 = vadd.f32 0.0, %v5032
      %v5034 = vpop.f32.mrb[0].mxu0
      %5035 = vmatprep.mubr.f32.mxu0 0.0
      %5036 = vmatmul.mubr.f32.gmra.mrb[0].mxu0 %v4874
      %v5037 = vpop.f32.mrb[0].mxu0
      %v5038 = vadd.f32 0.0, %v5037
      %v5039 = vpop.f32.mrb[0].mxu0
      %5040 = vmatprep.mubr.f32.mxu0 0.0
      %5041 = vmatmul.mubr.f32.gmra.mrb[0].mxu0 %v4877
      %v5042 = vpop.f32.mrb[0].mxu0
      %v5043 = vadd.f32 0.0, %v5042
      %v5044 = vpop.f32.mrb[0].mxu0
      %5045 = vmatprep.mubr.f32.mxu0 0.0
      %5046 = vmatmul.mubr.f32.gmra.mrb[0].mxu0 %v4880
      %v5047 = vpop.f32.mrb[0].mxu0
      %v5048 = vadd.f32 0.0, %v5047
      %v5049 = vpop.f32.mrb[0].mxu0
      %5050 = vmatprep.mubr.f32.mxu0 0.0
      %5051 = vmatmul.mubr.f32.gmra.mrb[0].mxu0 %v4883
      %v5052 = vpop.f32.mrb[0].mxu0
      %v5053 = vadd.f32 0.0, %v5052
      %v5054 = vpop.f32.mrb[0].mxu0
      %5055 = vmatprep.mubr.f32.mxu0 0.0
      %5056 = vmatmul.mubr.f32.gmra.mrb[0].mxu0 %v4886
      %v5057 = vpop.f32.mrb[0].mxu0
      %v5058 = vadd.f32 0.0, %v5057
      %v5059 = vpop.f32.mrb[0].mxu0
      %5060 = vmatprep.mubr.f32.mxu0 0.0
      %5061 = vmatmul.mubr.f32.gmra.mrb[0].mxu0 %v4889
      %v5062 = vpop.f32.mrb[0].mxu0
      %v5063 = vadd.f32 0.0, %v5062
      %v5064 = vpop.f32.mrb[0].mxu0
      %5065 = vmatprep.mubr.f32.mxu0 0.0
      %5066 = vmatmul.mubr.f32.gmra.mrb[0].mxu0 %v4892
      %v5067 = vpop.f32.mrb[0].mxu0
      %v5068 = vadd.f32 0.0, %v5067
      %v5069 = vpop.f32.mrb[0].mxu0
      %5070 = vmatprep.mubr.f32.mxu0 0.0
      %5071 = vmatmul.mubr.f32.gmra.mrb[0].mxu0 %v4895
      %v5072 = vpop.f32.mrb[0].mxu0
      %v5073 = vadd.f32 0.0, %v5072
      %v5074 = vpop.f32.mrb[0].mxu0
      %5075 = vmatprep.mubr.f32.mxu0 0.0
      %5076 = vmatmul.mubr.f32.gmra.mrb[0].mxu0 %v4898
      %v5077 = vpop.f32.mrb[0].mxu0
      %v5078 = vadd.f32 0.0, %v5077
      %v5079 = vpop.f32.mrb[0].mxu0
      %5080 = vmatprep.mubr.f32.mxu0 0.0
      %5081 = vmatmul.mubr.f32.gmra.mrb[0].mxu0 %v4901
      %v5082 = vpop.f32.mrb[0].mxu0
      %v5083 = vadd.f32 0.0, %v5082
      %v5084 = vpop.f32.mrb[0].mxu0
      %5085 = vmatprep.mubr.f32.mxu0 0.0
      %5086 = vmatmul.mubr.f32.gmra.mrb[0].mxu0 %v4904
      %v5087 = vpop.f32.mrb[0].mxu0
      %v5088 = vadd.f32 0.0, %v5087
      %v5089 = vpop.f32.mrb[0].mxu0
      %5090 = vmatprep.mubr.f32.mxu0 0.0
      %5091 = vmatmul.mubr.f32.gmra.mrb[0].mxu0 %v4907
      %v5092 = vpop.f32.mrb[0].mxu0
      %v5093 = vadd.f32 0.0, %v5092
      %v5094 = vpop.f32.mrb[0].mxu0
      %5095 = vmatprep.mubr.f32.mxu0 0.0
      %5096 = vmatmul.mubr.f32.gmra.mrb[0].mxu0 %v4910
      %v5097 = vpop.f32.mrb[0].mxu0
      %v5098 = vadd.f32 0.0, %v5097
      %v5099 = vpop.f32.mrb[0].mxu0
      %5100 = vmatprep.mubr.f32.mxu0 0.0
      %5101 = vmatmul.mubr.f32.gmra.mrb[0].mxu0 %v4913
      %v5102 = vpop.f32.mrb[0].mxu0
      %v5103 = vadd.f32 0.0, %v5102
      %v5104 = vpop.f32.mrb[0].mxu0
      %5105 = vmatprep.mubr.f32.mxu0 0.0
      %5106 = vmatmul.mubr.f32.gmra.mrb[0].mxu0 %v4916
      %v5107 = vpop.f32.mrb[0].mxu0
      %v5108 = vadd.f32 0.0, %v5107
      %v5109 = vpop.f32.mrb[0].mxu0
      %5110 = vmatprep.mubr.f32.mxu0 0.0
      %5111 = vmatmul.mubr.f32.gmra.mrb[0].mxu0 %v4919
      %v5112 = vpop.f32.mrb[0].mxu0
      %v5113 = vadd.f32 0.0, %v5112
      %v5114 = vpop.f32.mrb[0].mxu0
      %5115 = vmatprep.mubr.f32.mxu0 0.0
      %5116 = vmatmul.mubr.f32.gmra.mrb[0].mxu0 %v4922
      %v5117 = vpop.f32.mrb[0].mxu0
      %v5118 = vadd.f32 0.0, %v5117
      %v5119 = vpop.f32.mrb[0].mxu0
      %5120 = vmatprep.mubr.f32.mxu0 0.0
      %5121 = vmatmul.mubr.f32.gmra.mrb[0].mxu0 %v4925
      %v5122 = vpop.f32.mrb[0].mxu0
      %v5123 = vadd.f32 0.0, %v5122
      %v5124 = vpop.f32.mrb[0].mxu0
      %5125 = vmatprep.mubr.f32.mxu0 0.0
      %5126 = vmatmul.mubr.f32.gmra.mrb[0].mxu0 %v4928
      %v5127 = vpop.f32.mrb[0].mxu0
      %v5128 = vadd.f32 0.0, %v5127
      %v5129 = vpop.f32.mrb[0].mxu0
      %5130 = vmatprep.mubr.f32.mxu0 0.0
      %5131 = vmatmul.mubr.f32.gmra.mrb[0].mxu0 %v4931
      %v5132 = vpop.f32.mrb[0].mxu0
      %v5133 = vadd.f32 0.0, %v5132
      %v5134 = vpop.f32.mrb[0].mxu0
      %5135 = vmatprep.mubr.f32.mxu0 0.0
      %5136 = vmatmul.mubr.f32.gmra.mrb[0].mxu0 %v4934
      %v5137 = vpop.f32.mrb[0].mxu0
      %v5138 = vadd.f32 0.0, %v5137
      %v5139 = vpop.f32.mrb[0].mxu0
      %5140 = vmatprep.mubr.f32.mxu0 0.0
      %5141 = vmatmul.mubr.f32.gmra.mrb[0].mxu0 %v4937
      %v5142 = vpop.f32.mrb[0].mxu0
      %v5143 = vadd.f32 0.0, %v5142
      %v5144 = vpop.f32.mrb[0].mxu0
      %5145 = vmatprep.mubr.f32.mxu0 0.0
      %5146 = vmatmul.mubr.f32.gmra.mrb[0].mxu0 %v4940
      %v5147 = vpop.f32.mrb[0].mxu0
      %v5148 = vadd.f32 0.0, %v5147
      %v5149 = vpop.f32.mrb[0].mxu0
      %5150 = vmatprep.mubr.f32.mxu0 0.0
      %5151 = vmatmul.mubr.f32.gmra.mrb[0].mxu0 %v4943
      %v5152 = vpop.f32.mrb[0].mxu0
      %v5153 = vadd.f32 0.0, %v5152
      %v5154 = vpop.f32.mrb[0].mxu0
      %5155 = vmatprep.mubr.f32.mxu0 0.0
      %5156 = vmatmul.mubr.f32.gmra.mrb[0].mxu0 %v4946
      %v5157 = vpop.f32.mrb[0].mxu0
      %v5158 = vadd.f32 0.0, %v5157
      %v5159 = vpop.f32.mrb[0].mxu0
      %5160 = vmatprep.mubr.f32.mxu0 0.0
      %5161 = vmatmul.mubr.f32.gmra.mrb[0].mxu0 %v4949
      %v5162 = vpop.f32.mrb[0].mxu0
      %v5163 = vadd.f32 0.0, %v5162
      %v5164 = vpop.f32.mrb[0].mxu0
      %5165 = vmatprep.mubr.f32.mxu0 0.0
      %5166 = vmatmul.mubr.f32.gmra.mrb[0].mxu0 %v4952
      %v5167 = vpop.f32.mrb[0].mxu0
      %v5168 = vadd.f32 0.0, %v5167
      %v5169 = vpop.f32.mrb[0].mxu0
      %5170 = vmatprep.mubr.f32.mxu0 0.0
      %5171 = vmatmul.mubr.f32.gmra.mrb[0].mxu0 %v4955
      %v5172 = vpop.f32.mrb[0].mxu0
      %v5173 = vadd.f32 0.0, %v5172
      %v5174 = vpop.f32.mrb[0].mxu0
      %5175 = vmatprep.mubr.f32.mxu0 0.0
      %5176 = vmatmul.mubr.f32.gmra.mrb[0].mxu0 %v4958
      %v5177 = vpop.f32.mrb[0].mxu0
      %v5178 = vadd.f32 0.0, %v5177
      %v5179 = vpop.f32.mrb[0].mxu0
      %5180 = vmatprep.mubr.f32.mxu0 0.0
      %5181 = vmatmul.mubr.f32.gmra.mrb[0].mxu0 %v4961
      %v5182 = vpop.f32.mrb[0].mxu0
      %v5183 = vadd.f32 0.0, %v5182
      %v5184 = vpop.f32.mrb[0].mxu0
      %5185 = vmatprep.mubr.f32.mxu0 0.0
      %5186 = vmatmul.mubr.f32.gmra.mrb[0].mxu0 %v4964
      %v5187 = vpop.f32.mrb[0].mxu0
      %v5188 = vadd.f32 0.0, %v5187
      %v5189 = vpop.f32.mrb[0].mxu0
      %5190 = vdwg.mxu0
      %v5191 = vadd.f32 %v4579, %v5033
      %v5192 = vadd.f32 %v4580, %v5038
      %v5193 = vadd.f32 %v4581, %v5043
      %v5194 = vadd.f32 %v4582, %v5048
      %v5195 = vadd.f32 %v4583, %v5053
      %v5196 = vadd.f32 %v4584, %v5058
      %v5197 = vadd.f32 %v4585, %v5063
      %v5198 = vadd.f32 %v4586, %v5068
      %v5199 = vadd.f32 %v4587, %v5073
      %v5200 = vadd.f32 %v4588, %v5078
      %v5201 = vadd.f32 %v4589, %v5083
      %v5202 = vadd.f32 %v4590, %v5088
      %v5203 = vadd.f32 %v4591, %v5093
      %v5204 = vadd.f32 %v4592, %v5098
      %v5205 = vadd.f32 %v4593, %v5103
      %v5206 = vadd.f32 %v4594, %v5108
      %v5207 = vadd.f32 %v4595, %v5113
      %v5208 = vadd.f32 %v4596, %v5118
      %v5209 = vadd.f32 %v4597, %v5123
      %v5210 = vadd.f32 %v4598, %v5128
      %v5211 = vadd.f32 %v4599, %v5133
      %v5212 = vadd.f32 %v4600, %v5138
      %v5213 = vadd.f32 %v4601, %v5143
      %v5214 = vadd.f32 %v4602, %v5148
      %v5215 = vadd.f32 %v4603, %v5153
      %v5216 = vadd.f32 %v4604, %v5158
      %v5217 = vadd.f32 %v4605, %v5163
      %v5218 = vadd.f32 %v4606, %v5168
      %v5219 = vadd.f32 %v4607, %v5173
      %v5220 = vadd.f32 %v4608, %v5178
      %v5221 = vadd.f32 %v4609, %v5183
      %v5222 = vadd.f32 %v4610, %v5188
      %v5223 = vld [vmem:[#allocation2 + $0x29] sm:$0xff]
      %v5224 = vld [vmem:[#allocation2 + $0x31] sm:$0xff]
      %v5225 = vld [vmem:[#allocation2 + $0x39] sm:$0xff]
      %v5226 = vld [vmem:[#allocation2 + $0x41] sm:$0xff]
      %v5227 = vld [vmem:[#allocation2 + $0x49] sm:$0xff]
      %v5228 = vld [vmem:[#allocation2 + $0x51] sm:$0xff]
      %v5229 = vld [vmem:[#allocation2 + $0x59] sm:$0xff]
      %v5230 = vld [vmem:[#allocation2 + $0x61] sm:$0xff]
      %v5231 = vld [vmem:[#allocation2 + $0x69] sm:$0xff]
      %v5232 = vld [vmem:[#allocation2 + $0x71] sm:$0xff]
      %v5233 = vld [vmem:[#allocation2 + $0x79] sm:$0xff]
      %v5234 = vld [vmem:[#allocation2 + $0x81] sm:$0xff]
      %v5235 = vld [vmem:[#allocation2 + $0x89] sm:$0xff]
      %v5236 = vld [vmem:[#allocation2 + $0x91] sm:$0xff]
      %v5237 = vld [vmem:[#allocation2 + $0x99] sm:$0xff]
      %v5238 = vld [vmem:[#allocation2 + $0xa1] sm:$0xff]
      %v5239 = vld [vmem:[#allocation2 + $0xa9] sm:$0xff]
      %v5240 = vld [vmem:[#allocation2 + $0xb1] sm:$0xff]
      %v5241 = vld [vmem:[#allocation2 + $0xb9] sm:$0xff]
      %v5242 = vld [vmem:[#allocation2 + $0xc1] sm:$0xff]
      %v5243 = vld [vmem:[#allocation2 + $0xc9] sm:$0xff]
      %v5244 = vld [vmem:[#allocation2 + $0xd1] sm:$0xff]
      %v5245 = vld [vmem:[#allocation2 + $0xd9] sm:$0xff]
      %v5246 = vld [vmem:[#allocation2 + $0xe1] sm:$0xff]
      %v5247 = vld [vmem:[#allocation2 + $0xe9] sm:$0xff]
      %v5248 = vld [vmem:[#allocation2 + $0xf1] sm:$0xff]
      %v5249 = vld [vmem:[#allocation2 + $0xf9] sm:$0xff]
      %v5250 = vld [vmem:[#allocation2 + $0x101] sm:$0xff]
      %v5251 = vld [vmem:[#allocation2 + $0x109] sm:$0xff]
      %v5252 = vld [vmem:[#allocation2 + $0x111] sm:$0xff]
      %v5253 = vld [vmem:[#allocation2 + $0x119] sm:$0xff]
      %v5254 = vld [vmem:[#allocation2 + $0x121] sm:$0xff]
      %s5255 = scalar_lea.vmem %s2, 2048
      %v5256 = vld [vmem:[%s5255] sm:$0xff]
      %v5257 = vld [vmem:[%s5255 + $0x8] sm:$0xff]
      %v5258 = vld [vmem:[%s5255 + $0x10] sm:$0xff]
      %v5259 = vld [vmem:[%s5255 + $0x18] sm:$0xff]
      %v5260 = vld [vmem:[%s5255 + $0x20] sm:$0xff]
      %v5261 = vld [vmem:[%s5255 + $0x28] sm:$0xff]
      %v5262 = vld [vmem:[%s5255 + $0x30] sm:$0xff]
      %v5263 = vld [vmem:[%s5255 + $0x38] sm:$0xff]
      %v5264 = vld [vmem:[%s5255 + $0x40] sm:$0xff]
      %v5265 = vld [vmem:[%s5255 + $0x48] sm:$0xff]
      %v5266 = vld [vmem:[%s5255 + $0x50] sm:$0xff]
      %v5267 = vld [vmem:[%s5255 + $0x58] sm:$0xff]
      %v5268 = vld [vmem:[%s5255 + $0x60] sm:$0xff]
      %v5269 = vld [vmem:[%s5255 + $0x68] sm:$0xff]
      %v5270 = vld [vmem:[%s5255 + $0x70] sm:$0xff]
      %v5271 = vld [vmem:[%s5255 + $0x78] sm:$0xff]
      %v5272 = vld [vmem:[%s5255 + $0x80] sm:$0xff]
      %v5273 = vld [vmem:[%s5255 + $0x88] sm:$0xff]
      %v5274 = vld [vmem:[%s5255 + $0x90] sm:$0xff]
      %v5275 = vld [vmem:[%s5255 + $0x98] sm:$0xff]
      %v5276 = vld [vmem:[%s5255 + $0xa0] sm:$0xff]
      %v5277 = vld [vmem:[%s5255 + $0xa8] sm:$0xff]
      %v5278 = vld [vmem:[%s5255 + $0xb0] sm:$0xff]
      %v5279 = vld [vmem:[%s5255 + $0xb8] sm:$0xff]
      %v5280 = vld [vmem:[%s5255 + $0xc0] sm:$0xff]
      %v5281 = vld [vmem:[%s5255 + $0xc8] sm:$0xff]
      %v5282 = vld [vmem:[%s5255 + $0xd0] sm:$0xff]
      %v5283 = vld [vmem:[%s5255 + $0xd8] sm:$0xff]
      %v5284 = vld [vmem:[%s5255 + $0xe0] sm:$0xff]
      %v5285 = vld [vmem:[%s5255 + $0xe8] sm:$0xff]
      %v5286 = vld [vmem:[%s5255 + $0xf0] sm:$0xff]
      %v5287 = vld [vmem:[%s5255 + $0xf8] sm:$0xff]
      %5289 = vset.pattern.permute.xlu0 0
      %5290 = vperm.xlu0 %5289, %v5256
      %v5291 = vpop.permute.xlu0 %5290
      %5294 = vset.pattern.permute.xlu0 0
      %5295 = vperm.xlu0 %5294, %v5257
      %v5296 = vpop.permute.xlu0 %5295
      %5299 = vset.pattern.permute.xlu0 0
      %5300 = vperm.xlu0 %5299, %v5258
      %v5301 = vpop.permute.xlu0 %5300
      %5304 = vset.pattern.permute.xlu0 0
      %5305 = vperm.xlu0 %5304, %v5259
      %v5306 = vpop.permute.xlu0 %5305
      %5309 = vset.pattern.permute.xlu0 0
      %5310 = vperm.xlu0 %5309, %v5260
      %v5311 = vpop.permute.xlu0 %5310
      %5314 = vset.pattern.permute.xlu0 0
      %5315 = vperm.xlu0 %5314, %v5261
      %v5316 = vpop.permute.xlu0 %5315
      %5319 = vset.pattern.permute.xlu0 0
      %5320 = vperm.xlu0 %5319, %v5262
      %v5321 = vpop.permute.xlu0 %5320
      %5324 = vset.pattern.permute.xlu0 0
      %5325 = vperm.xlu0 %5324, %v5263
      %v5326 = vpop.permute.xlu0 %5325
      %5329 = vset.pattern.permute.xlu0 0
      %5330 = vperm.xlu0 %5329, %v5264
      %v5331 = vpop.permute.xlu0 %5330
      %5334 = vset.pattern.permute.xlu0 0
      %5335 = vperm.xlu0 %5334, %v5265
      %v5336 = vpop.permute.xlu0 %5335
      %5339 = vset.pattern.permute.xlu0 0
      %5340 = vperm.xlu0 %5339, %v5266
      %v5341 = vpop.permute.xlu0 %5340
      %5344 = vset.pattern.permute.xlu0 0
      %5345 = vperm.xlu0 %5344, %v5267
      %v5346 = vpop.permute.xlu0 %5345
      %5349 = vset.pattern.permute.xlu0 0
      %5350 = vperm.xlu0 %5349, %v5268
      %v5351 = vpop.permute.xlu0 %5350
      %5354 = vset.pattern.permute.xlu0 0
      %5355 = vperm.xlu0 %5354, %v5269
      %v5356 = vpop.permute.xlu0 %5355
      %5359 = vset.pattern.permute.xlu0 0
      %5360 = vperm.xlu0 %5359, %v5270
      %v5361 = vpop.permute.xlu0 %5360
      %5364 = vset.pattern.permute.xlu0 0
      %5365 = vperm.xlu0 %5364, %v5271
      %v5366 = vpop.permute.xlu0 %5365
      %5369 = vset.pattern.permute.xlu0 0
      %5370 = vperm.xlu0 %5369, %v5272
      %v5371 = vpop.permute.xlu0 %5370
      %5374 = vset.pattern.permute.xlu0 0
      %5375 = vperm.xlu0 %5374, %v5273
      %v5376 = vpop.permute.xlu0 %5375
      %5379 = vset.pattern.permute.xlu0 0
      %5380 = vperm.xlu0 %5379, %v5274
      %v5381 = vpop.permute.xlu0 %5380
      %5384 = vset.pattern.permute.xlu0 0
      %5385 = vperm.xlu0 %5384, %v5275
      %v5386 = vpop.permute.xlu0 %5385
      %5389 = vset.pattern.permute.xlu0 0
      %5390 = vperm.xlu0 %5389, %v5276
      %v5391 = vpop.permute.xlu0 %5390
      %5394 = vset.pattern.permute.xlu0 0
      %5395 = vperm.xlu0 %5394, %v5277
      %v5396 = vpop.permute.xlu0 %5395
      %5399 = vset.pattern.permute.xlu0 0
      %5400 = vperm.xlu0 %5399, %v5278
      %v5401 = vpop.permute.xlu0 %5400
      %5404 = vset.pattern.permute.xlu0 0
      %5405 = vperm.xlu0 %5404, %v5279
      %v5406 = vpop.permute.xlu0 %5405
      %5409 = vset.pattern.permute.xlu0 0
      %5410 = vperm.xlu0 %5409, %v5280
      %v5411 = vpop.permute.xlu0 %5410
      %5414 = vset.pattern.permute.xlu0 0
      %5415 = vperm.xlu0 %5414, %v5281
      %v5416 = vpop.permute.xlu0 %5415
      %5419 = vset.pattern.permute.xlu0 0
      %5420 = vperm.xlu0 %5419, %v5282
      %v5421 = vpop.permute.xlu0 %5420
      %5424 = vset.pattern.permute.xlu0 0
      %5425 = vperm.xlu0 %5424, %v5283
      %v5426 = vpop.permute.xlu0 %5425
      %5429 = vset.pattern.permute.xlu0 0
      %5430 = vperm.xlu0 %5429, %v5284
      %v5431 = vpop.permute.xlu0 %5430
      %5434 = vset.pattern.permute.xlu0 0
      %5435 = vperm.xlu0 %5434, %v5285
      %v5436 = vpop.permute.xlu0 %5435
      %5439 = vset.pattern.permute.xlu0 0
      %5440 = vperm.xlu0 %5439, %v5286
      %v5441 = vpop.permute.xlu0 %5440
      %5444 = vset.pattern.permute.xlu0 0
      %5445 = vperm.xlu0 %5444, %v5287
      %v5446 = vpop.permute.xlu0 %5445
      %v5448 = vmul.f32 %v5223, %v5291
      %v5449 = vmul.f32 %v5224, %v5296
      %v5450 = vmul.f32 %v5225, %v5301
      %v5451 = vmul.f32 %v5226, %v5306
      %v5452 = vmul.f32 %v5227, %v5311
      %v5453 = vmul.f32 %v5228, %v5316
      %v5454 = vmul.f32 %v5229, %v5321
      %v5455 = vmul.f32 %v5230, %v5326
      %v5456 = vmul.f32 %v5231, %v5331
      %v5457 = vmul.f32 %v5232, %v5336
      %v5458 = vmul.f32 %v5233, %v5341
      %v5459 = vmul.f32 %v5234, %v5346
      %v5460 = vmul.f32 %v5235, %v5351
      %v5461 = vmul.f32 %v5236, %v5356
      %v5462 = vmul.f32 %v5237, %v5361
      %v5463 = vmul.f32 %v5238, %v5366
      %v5464 = vmul.f32 %v5239, %v5371
      %v5465 = vmul.f32 %v5240, %v5376
      %v5466 = vmul.f32 %v5241, %v5381
      %v5467 = vmul.f32 %v5242, %v5386
      %v5468 = vmul.f32 %v5243, %v5391
      %v5469 = vmul.f32 %v5244, %v5396
      %v5470 = vmul.f32 %v5245, %v5401
      %v5471 = vmul.f32 %v5246, %v5406
      %v5472 = vmul.f32 %v5247, %v5411
      %v5473 = vmul.f32 %v5248, %v5416
      %v5474 = vmul.f32 %v5249, %v5421
      %v5475 = vmul.f32 %v5250, %v5426
      %v5476 = vmul.f32 %v5251, %v5431
      %v5477 = vmul.f32 %v5252, %v5436
      %v5478 = vmul.f32 %v5253, %v5441
      %v5479 = vmul.f32 %v5254, %v5446
      %s5480 = scalar_lea.vmem %s3, 64
      %v5481 = vld [vmem:[%s5480] sm:$0xff]
      %v5483 = vsel %vm353, %v5448, 0
      %v5486 = vsel %vm353, %v5449, 0
      %v5489 = vsel %vm353, %v5450, 0
      %v5492 = vsel %vm353, %v5451, 0
      %v5495 = vsel %vm353, %v5452, 0
      %v5498 = vsel %vm353, %v5453, 0
      %v5501 = vsel %vm353, %v5454, 0
      %v5504 = vsel %vm353, %v5455, 0
      %v5507 = vsel %vm353, %v5456, 0
      %v5510 = vsel %vm353, %v5457, 0
      %v5513 = vsel %vm353, %v5458, 0
      %v5516 = vsel %vm353, %v5459, 0
      %v5519 = vsel %vm353, %v5460, 0
      %v5522 = vsel %vm353, %v5461, 0
      %v5525 = vsel %vm353, %v5462, 0
      %v5528 = vsel %vm353, %v5463, 0
      %v5531 = vsel %vm353, %v5464, 0
      %v5534 = vsel %vm353, %v5465, 0
      %v5537 = vsel %vm353, %v5466, 0
      %v5540 = vsel %vm353, %v5467, 0
      %v5543 = vsel %vm353, %v5468, 0
      %v5546 = vsel %vm353, %v5469, 0
      %v5549 = vsel %vm353, %v5470, 0
      %v5552 = vsel %vm353, %v5471, 0
      %v5555 = vsel %vm353, %v5472, 0
      %v5558 = vsel %vm353, %v5473, 0
      %v5561 = vsel %vm353, %v5474, 0
      %v5564 = vsel %vm353, %v5475, 0
      %v5567 = vsel %vm353, %v5476, 0
      %v5570 = vsel %vm353, %v5477, 0
      %v5573 = vsel %vm353, %v5478, 0
      %v5576 = vsel %vm353, %v5479, 0
      %5578 = vmatprep.subr.mxu0 0.0
      %5579 = vmatpush1.msra.mxu0 %v5481
      %5580 = vmatprep.subr.mxu0 0.0
      %5581 = vmatpush1.msra.mxu0 0.0
      %5582 = vmatprep.subr.mxu0 0.0
      %5583 = vmatpush1.msra.mxu0 0.0
      %5584 = vmatprep.subr.mxu0 0.0
      %5585 = vmatpush1.msra.mxu0 0.0
      %5586 = vmatprep.subr.mxu0 0.0
      %5587 = vmatpush1.msra.mxu0 0.0
      %5588 = vmatprep.subr.mxu0 0.0
      %5589 = vmatpush1.msra.mxu0 0.0
      %5590 = vmatprep.subr.mxu0 0.0
      %5591 = vmatpush1.msra.mxu0 0.0
      %5592 = vmatprep.subr.mxu0 0.0
      %5593 = vmatpush1.msra.mxu0 0.0
      %5594 = vmatprep.subr.mxu0 0.0
      %5595 = vmatpush1.msra.mxu0 0.0
      %5596 = vmatprep.subr.mxu0 0.0
      %5597 = vmatpush1.msra.mxu0 0.0
      %5598 = vmatprep.subr.mxu0 0.0
      %5599 = vmatpush1.msra.mxu0 0.0
      %5600 = vmatprep.subr.mxu0 0.0
      %5601 = vmatpush1.msra.mxu0 0.0
      %5602 = vmatprep.subr.mxu0 0.0
      %5603 = vmatpush1.msra.mxu0 0.0
      %5604 = vmatprep.subr.mxu0 0.0
      %5605 = vmatpush1.msra.mxu0 0.0
      %5606 = vmatprep.subr.mxu0 0.0
      %5607 = vmatpush1.msra.mxu0 0.0
      %5608 = vmatprep.subr.mxu0 0.0
      %5609 = vmatpush1.msra.mxu0 0.0
      %5610 = vmatprep.subr.mxu0 0.0
      %5611 = vmatpush1.msra.mxu0 0.0
      %5612 = vmatprep.subr.mxu0 0.0
      %5613 = vmatpush1.msra.mxu0 0.0
      %5614 = vmatprep.subr.mxu0 0.0
      %5615 = vmatpush1.msra.mxu0 0.0
      %5616 = vmatprep.subr.mxu0 0.0
      %5617 = vmatpush1.msra.mxu0 0.0
      %5618 = vmatprep.subr.mxu0 0.0
      %5619 = vmatpush1.msra.mxu0 0.0
      %5620 = vmatprep.subr.mxu0 0.0
      %5621 = vmatpush1.msra.mxu0 0.0
      %5622 = vmatprep.subr.mxu0 0.0
      %5623 = vmatpush1.msra.mxu0 0.0
      %5624 = vmatprep.subr.mxu0 0.0
      %5625 = vmatpush1.msra.mxu0 0.0
      %5626 = vmatprep.subr.mxu0 0.0
      %5627 = vmatpush1.msra.mxu0 0.0
      %5628 = vmatprep.subr.mxu0 0.0
      %5629 = vmatpush1.msra.mxu0 0.0
      %5630 = vmatprep.subr.mxu0 0.0
      %5631 = vmatpush1.msra.mxu0 0.0
      %5632 = vmatprep.subr.mxu0 0.0
      %5633 = vmatpush1.msra.mxu0 0.0
      %5634 = vmatprep.subr.mxu0 0.0
      %5635 = vmatpush1.msra.mxu0 0.0
      %5636 = vmatprep.subr.mxu0 0.0
      %5637 = vmatpush1.msra.mxu0 0.0
      %5638 = vmatprep.subr.mxu0 0.0
      %5639 = vmatpush1.msra.mxu0 0.0
      %5640 = vmatprep.subr.mxu0 0.0
      %5641 = vmatpush1.msra.mxu0 0.0
      %5642 = vmatprep.mubr.f32.mxu0 0.0
      %5643 = vmatmul.mubr.f32.gmra.mrb[0].mxu0 %v5483
      %v5644 = vpop.f32.mrb[0].mxu0
      %v5645 = vadd.f32 0.0, %v5644
      %v5646 = vpop.f32.mrb[0].mxu0
      %5647 = vmatprep.mubr.f32.mxu0 0.0
      %5648 = vmatmul.mubr.f32.gmra.mrb[0].mxu0 %v5486
      %v5649 = vpop.f32.mrb[0].mxu0
      %v5650 = vadd.f32 0.0, %v5649
      %v5651 = vpop.f32.mrb[0].mxu0
      %5652 = vmatprep.mubr.f32.mxu0 0.0
      %5653 = vmatmul.mubr.f32.gmra.mrb[0].mxu0 %v5489
      %v5654 = vpop.f32.mrb[0].mxu0
      %v5655 = vadd.f32 0.0, %v5654
      %v5656 = vpop.f32.mrb[0].mxu0
      %5657 = vmatprep.mubr.f32.mxu0 0.0
      %5658 = vmatmul.mubr.f32.gmra.mrb[0].mxu0 %v5492
      %v5659 = vpop.f32.mrb[0].mxu0
      %v5660 = vadd.f32 0.0, %v5659
      %v5661 = vpop.f32.mrb[0].mxu0
      %5662 = vmatprep.mubr.f32.mxu0 0.0
      %5663 = vmatmul.mubr.f32.gmra.mrb[0].mxu0 %v5495
      %v5664 = vpop.f32.mrb[0].mxu0
      %v5665 = vadd.f32 0.0, %v5664
      %v5666 = vpop.f32.mrb[0].mxu0
      %5667 = vmatprep.mubr.f32.mxu0 0.0
      %5668 = vmatmul.mubr.f32.gmra.mrb[0].mxu0 %v5498
      %v5669 = vpop.f32.mrb[0].mxu0
      %v5670 = vadd.f32 0.0, %v5669
      %v5671 = vpop.f32.mrb[0].mxu0
      %5672 = vmatprep.mubr.f32.mxu0 0.0
      %5673 = vmatmul.mubr.f32.gmra.mrb[0].mxu0 %v5501
      %v5674 = vpop.f32.mrb[0].mxu0
      %v5675 = vadd.f32 0.0, %v5674
      %v5676 = vpop.f32.mrb[0].mxu0
      %5677 = vmatprep.mubr.f32.mxu0 0.0
      %5678 = vmatmul.mubr.f32.gmra.mrb[0].mxu0 %v5504
      %v5679 = vpop.f32.mrb[0].mxu0
      %v5680 = vadd.f32 0.0, %v5679
      %v5681 = vpop.f32.mrb[0].mxu0
      %5682 = vmatprep.mubr.f32.mxu0 0.0
      %5683 = vmatmul.mubr.f32.gmra.mrb[0].mxu0 %v5507
      %v5684 = vpop.f32.mrb[0].mxu0
      %v5685 = vadd.f32 0.0, %v5684
      %v5686 = vpop.f32.mrb[0].mxu0
      %5687 = vmatprep.mubr.f32.mxu0 0.0
      %5688 = vmatmul.mubr.f32.gmra.mrb[0].mxu0 %v5510
      %v5689 = vpop.f32.mrb[0].mxu0
      %v5690 = vadd.f32 0.0, %v5689
      %v5691 = vpop.f32.mrb[0].mxu0
      %5692 = vmatprep.mubr.f32.mxu0 0.0
      %5693 = vmatmul.mubr.f32.gmra.mrb[0].mxu0 %v5513
      %v5694 = vpop.f32.mrb[0].mxu0
      %v5695 = vadd.f32 0.0, %v5694
      %v5696 = vpop.f32.mrb[0].mxu0
      %5697 = vmatprep.mubr.f32.mxu0 0.0
      %5698 = vmatmul.mubr.f32.gmra.mrb[0].mxu0 %v5516
      %v5699 = vpop.f32.mrb[0].mxu0
      %v5700 = vadd.f32 0.0, %v5699
      %v5701 = vpop.f32.mrb[0].mxu0
      %5702 = vmatprep.mubr.f32.mxu0 0.0
      %5703 = vmatmul.mubr.f32.gmra.mrb[0].mxu0 %v5519
      %v5704 = vpop.f32.mrb[0].mxu0
      %v5705 = vadd.f32 0.0, %v5704
      %v5706 = vpop.f32.mrb[0].mxu0
      %5707 = vmatprep.mubr.f32.mxu0 0.0
      %5708 = vmatmul.mubr.f32.gmra.mrb[0].mxu0 %v5522
      %v5709 = vpop.f32.mrb[0].mxu0
      %v5710 = vadd.f32 0.0, %v5709
      %v5711 = vpop.f32.mrb[0].mxu0
      %5712 = vmatprep.mubr.f32.mxu0 0.0
      %5713 = vmatmul.mubr.f32.gmra.mrb[0].mxu0 %v5525
      %v5714 = vpop.f32.mrb[0].mxu0
      %v5715 = vadd.f32 0.0, %v5714
      %v5716 = vpop.f32.mrb[0].mxu0
      %5717 = vmatprep.mubr.f32.mxu0 0.0
      %5718 = vmatmul.mubr.f32.gmra.mrb[0].mxu0 %v5528
      %v5719 = vpop.f32.mrb[0].mxu0
      %v5720 = vadd.f32 0.0, %v5719
      %v5721 = vpop.f32.mrb[0].mxu0
      %5722 = vmatprep.mubr.f32.mxu0 0.0
      %5723 = vmatmul.mubr.f32.gmra.mrb[0].mxu0 %v5531
      %v5724 = vpop.f32.mrb[0].mxu0
      %v5725 = vadd.f32 0.0, %v5724
      %v5726 = vpop.f32.mrb[0].mxu0
      %5727 = vmatprep.mubr.f32.mxu0 0.0
      %5728 = vmatmul.mubr.f32.gmra.mrb[0].mxu0 %v5534
      %v5729 = vpop.f32.mrb[0].mxu0
      %v5730 = vadd.f32 0.0, %v5729
      %v5731 = vpop.f32.mrb[0].mxu0
      %5732 = vmatprep.mubr.f32.mxu0 0.0
      %5733 = vmatmul.mubr.f32.gmra.mrb[0].mxu0 %v5537
      %v5734 = vpop.f32.mrb[0].mxu0
      %v5735 = vadd.f32 0.0, %v5734
      %v5736 = vpop.f32.mrb[0].mxu0
      %5737 = vmatprep.mubr.f32.mxu0 0.0
      %5738 = vmatmul.mubr.f32.gmra.mrb[0].mxu0 %v5540
      %v5739 = vpop.f32.mrb[0].mxu0
      %v5740 = vadd.f32 0.0, %v5739
      %v5741 = vpop.f32.mrb[0].mxu0
      %5742 = vmatprep.mubr.f32.mxu0 0.0
      %5743 = vmatmul.mubr.f32.gmra.mrb[0].mxu0 %v5543
      %v5744 = vpop.f32.mrb[0].mxu0
      %v5745 = vadd.f32 0.0, %v5744
      %v5746 = vpop.f32.mrb[0].mxu0
      %5747 = vmatprep.mubr.f32.mxu0 0.0
      %5748 = vmatmul.mubr.f32.gmra.mrb[0].mxu0 %v5546
      %v5749 = vpop.f32.mrb[0].mxu0
      %v5750 = vadd.f32 0.0, %v5749
      %v5751 = vpop.f32.mrb[0].mxu0
      %5752 = vmatprep.mubr.f32.mxu0 0.0
      %5753 = vmatmul.mubr.f32.gmra.mrb[0].mxu0 %v5549
      %v5754 = vpop.f32.mrb[0].mxu0
      %v5755 = vadd.f32 0.0, %v5754
      %v5756 = vpop.f32.mrb[0].mxu0
      %5757 = vmatprep.mubr.f32.mxu0 0.0
      %5758 = vmatmul.mubr.f32.gmra.mrb[0].mxu0 %v5552
      %v5759 = vpop.f32.mrb[0].mxu0
      %v5760 = vadd.f32 0.0, %v5759
      %v5761 = vpop.f32.mrb[0].mxu0
      %5762 = vmatprep.mubr.f32.mxu0 0.0
      %5763 = vmatmul.mubr.f32.gmra.mrb[0].mxu0 %v5555
      %v5764 = vpop.f32.mrb[0].mxu0
      %v5765 = vadd.f32 0.0, %v5764
      %v5766 = vpop.f32.mrb[0].mxu0
      %5767 = vmatprep.mubr.f32.mxu0 0.0
      %5768 = vmatmul.mubr.f32.gmra.mrb[0].mxu0 %v5558
      %v5769 = vpop.f32.mrb[0].mxu0
      %v5770 = vadd.f32 0.0, %v5769
      %v5771 = vpop.f32.mrb[0].mxu0
      %5772 = vmatprep.mubr.f32.mxu0 0.0
      %5773 = vmatmul.mubr.f32.gmra.mrb[0].mxu0 %v5561
      %v5774 = vpop.f32.mrb[0].mxu0
      %v5775 = vadd.f32 0.0, %v5774
      %v5776 = vpop.f32.mrb[0].mxu0
      %5777 = vmatprep.mubr.f32.mxu0 0.0
      %5778 = vmatmul.mubr.f32.gmra.mrb[0].mxu0 %v5564
      %v5779 = vpop.f32.mrb[0].mxu0
      %v5780 = vadd.f32 0.0, %v5779
      %v5781 = vpop.f32.mrb[0].mxu0
      %5782 = vmatprep.mubr.f32.mxu0 0.0
      %5783 = vmatmul.mubr.f32.gmra.mrb[0].mxu0 %v5567
      %v5784 = vpop.f32.mrb[0].mxu0
      %v5785 = vadd.f32 0.0, %v5784
      %v5786 = vpop.f32.mrb[0].mxu0
      %5787 = vmatprep.mubr.f32.mxu0 0.0
      %5788 = vmatmul.mubr.f32.gmra.mrb[0].mxu0 %v5570
      %v5789 = vpop.f32.mrb[0].mxu0
      %v5790 = vadd.f32 0.0, %v5789
      %v5791 = vpop.f32.mrb[0].mxu0
      %5792 = vmatprep.mubr.f32.mxu0 0.0
      %5793 = vmatmul.mubr.f32.gmra.mrb[0].mxu0 %v5573
      %v5794 = vpop.f32.mrb[0].mxu0
      %v5795 = vadd.f32 0.0, %v5794
      %v5796 = vpop.f32.mrb[0].mxu0
      %5797 = vmatprep.mubr.f32.mxu0 0.0
      %5798 = vmatmul.mubr.f32.gmra.mrb[0].mxu0 %v5576
      %v5799 = vpop.f32.mrb[0].mxu0
      %v5800 = vadd.f32 0.0, %v5799
      %v5801 = vpop.f32.mrb[0].mxu0
      %5802 = vdwg.mxu0
      %v5803 = vadd.f32 %v5191, %v5645
      %v5804 = vadd.f32 %v5192, %v5650
      %v5805 = vadd.f32 %v5193, %v5655
      %v5806 = vadd.f32 %v5194, %v5660
      %v5807 = vadd.f32 %v5195, %v5665
      %v5808 = vadd.f32 %v5196, %v5670
      %v5809 = vadd.f32 %v5197, %v5675
      %v5810 = vadd.f32 %v5198, %v5680
      %v5811 = vadd.f32 %v5199, %v5685
      %v5812 = vadd.f32 %v5200, %v5690
      %v5813 = vadd.f32 %v5201, %v5695
      %v5814 = vadd.f32 %v5202, %v5700
      %v5815 = vadd.f32 %v5203, %v5705
      %v5816 = vadd.f32 %v5204, %v5710
      %v5817 = vadd.f32 %v5205, %v5715
      %v5818 = vadd.f32 %v5206, %v5720
      %v5819 = vadd.f32 %v5207, %v5725
      %v5820 = vadd.f32 %v5208, %v5730
      %v5821 = vadd.f32 %v5209, %v5735
      %v5822 = vadd.f32 %v5210, %v5740
      %v5823 = vadd.f32 %v5211, %v5745
      %v5824 = vadd.f32 %v5212, %v5750
      %v5825 = vadd.f32 %v5213, %v5755
      %v5826 = vadd.f32 %v5214, %v5760
      %v5827 = vadd.f32 %v5215, %v5765
      %v5828 = vadd.f32 %v5216, %v5770
      %v5829 = vadd.f32 %v5217, %v5775
      %v5830 = vadd.f32 %v5218, %v5780
      %v5831 = vadd.f32 %v5219, %v5785
      %v5832 = vadd.f32 %v5220, %v5790
      %v5833 = vadd.f32 %v5221, %v5795
      %v5834 = vadd.f32 %v5222, %v5800
      %v5835 = vld [vmem:[%s4] sm:$0x1]
      %v5837 = vlaneseq
      %v5838 = vshrl.u32 %v5837, 7
      %v5839 = vsub.s32 0, %v5838
      %v5840 = vrot.slane %v5835, %v5839
      %v5842 = vmul.f32 %v5803, %v5840
      %v5843 = vmul.f32 %v5804, %v5840
      %v5844 = vmul.f32 %v5805, %v5840
      %v5845 = vmul.f32 %v5806, %v5840
      %v5846 = vmul.f32 %v5807, %v5840
      %v5847 = vmul.f32 %v5808, %v5840
      %v5848 = vmul.f32 %v5809, %v5840
      %v5849 = vmul.f32 %v5810, %v5840
      %v5850 = vmul.f32 %v5811, %v5840
      %v5851 = vmul.f32 %v5812, %v5840
      %v5852 = vmul.f32 %v5813, %v5840
      %v5853 = vmul.f32 %v5814, %v5840
      %v5854 = vmul.f32 %v5815, %v5840
      %v5855 = vmul.f32 %v5816, %v5840
      %v5856 = vmul.f32 %v5817, %v5840
      %v5857 = vmul.f32 %v5818, %v5840
      %v5858 = vmul.f32 %v5819, %v5840
      %v5859 = vmul.f32 %v5820, %v5840
      %v5860 = vmul.f32 %v5821, %v5840
      %v5861 = vmul.f32 %v5822, %v5840
      %v5862 = vmul.f32 %v5823, %v5840
      %v5863 = vmul.f32 %v5824, %v5840
      %v5864 = vmul.f32 %v5825, %v5840
      %v5865 = vmul.f32 %v5826, %v5840
      %v5866 = vmul.f32 %v5827, %v5840
      %v5867 = vmul.f32 %v5828, %v5840
      %v5868 = vmul.f32 %v5829, %v5840
      %v5869 = vmul.f32 %v5830, %v5840
      %v5870 = vmul.f32 %v5831, %v5840
      %v5871 = vmul.f32 %v5832, %v5840
      %v5872 = vmul.f32 %v5833, %v5840
      %v5873 = vmul.f32 %v5834, %v5840
      %v5874 = vld [vmem:[%s5] sm:$0x1]
      %v5876 = vlaneseq
      %v5877 = vshrl.u32 %v5876, 7
      %v5878 = vsub.s32 0, %v5877
      %v5879 = vrot.slane %v5874, %v5878
      %v5881 = vadd.f32 %v5842, %v5879
      %v5882 = vadd.f32 %v5843, %v5879
      %v5883 = vadd.f32 %v5844, %v5879
      %v5884 = vadd.f32 %v5845, %v5879
      %v5885 = vadd.f32 %v5846, %v5879
      %v5886 = vadd.f32 %v5847, %v5879
      %v5887 = vadd.f32 %v5848, %v5879
      %v5888 = vadd.f32 %v5849, %v5879
      %v5889 = vadd.f32 %v5850, %v5879
      %v5890 = vadd.f32 %v5851, %v5879
      %v5891 = vadd.f32 %v5852, %v5879
      %v5892 = vadd.f32 %v5853, %v5879
      %v5893 = vadd.f32 %v5854, %v5879
      %v5894 = vadd.f32 %v5855, %v5879
      %v5895 = vadd.f32 %v5856, %v5879
      %v5896 = vadd.f32 %v5857, %v5879
      %v5897 = vadd.f32 %v5858, %v5879
      %v5898 = vadd.f32 %v5859, %v5879
      %v5899 = vadd.f32 %v5860, %v5879
      %v5900 = vadd.f32 %v5861, %v5879
      %v5901 = vadd.f32 %v5862, %v5879
      %v5902 = vadd.f32 %v5863, %v5879
      %v5903 = vadd.f32 %v5864, %v5879
      %v5904 = vadd.f32 %v5865, %v5879
      %v5905 = vadd.f32 %v5866, %v5879
      %v5906 = vadd.f32 %v5867, %v5879
      %v5907 = vadd.f32 %v5868, %v5879
      %v5908 = vadd.f32 %v5869, %v5879
      %v5909 = vadd.f32 %v5870, %v5879
      %v5910 = vadd.f32 %v5871, %v5879
      %v5911 = vadd.f32 %v5872, %v5879
      %v5912 = vadd.f32 %v5873, %v5879
      %v5913 = vmax.f32 %v5881, 0.0
      %v5914 = vmax.f32 %v5882, 0.0
      %v5915 = vmax.f32 %v5883, 0.0
      %v5916 = vmax.f32 %v5884, 0.0
      %v5917 = vmax.f32 %v5885, 0.0
      %v5918 = vmax.f32 %v5886, 0.0
      %v5919 = vmax.f32 %v5887, 0.0
      %v5920 = vmax.f32 %v5888, 0.0
      %v5921 = vmax.f32 %v5889, 0.0
      %v5922 = vmax.f32 %v5890, 0.0
      %v5923 = vmax.f32 %v5891, 0.0
      %v5924 = vmax.f32 %v5892, 0.0
      %v5925 = vmax.f32 %v5893, 0.0
      %v5926 = vmax.f32 %v5894, 0.0
      %v5927 = vmax.f32 %v5895, 0.0
      %v5928 = vmax.f32 %v5896, 0.0
      %v5929 = vmax.f32 %v5897, 0.0
      %v5930 = vmax.f32 %v5898, 0.0
      %v5931 = vmax.f32 %v5899, 0.0
      %v5932 = vmax.f32 %v5900, 0.0
      %v5933 = vmax.f32 %v5901, 0.0
      %v5934 = vmax.f32 %v5902, 0.0
      %v5935 = vmax.f32 %v5903, 0.0
      %v5936 = vmax.f32 %v5904, 0.0
      %v5937 = vmax.f32 %v5905, 0.0
      %v5938 = vmax.f32 %v5906, 0.0
      %v5939 = vmax.f32 %v5907, 0.0
      %v5940 = vmax.f32 %v5908, 0.0
      %v5941 = vmax.f32 %v5909, 0.0
      %v5942 = vmax.f32 %v5910, 0.0
      %v5943 = vmax.f32 %v5911, 0.0
      %v5944 = vmax.f32 %v5912, 0.0
      %5945 = vst.msk [vmem:[#allocation2 + $0x18] sm:$0xff] %vm392, %v5913
      %5946 = vst.msk [vmem:[#allocation2 + $0x20] sm:$0xff] %vm392, %v5914
      %5947 = vst.msk [vmem:[#allocation2 + $0x28] sm:$0xff] %vm392, %v5915
      %5948 = vst.msk [vmem:[#allocation2 + $0x30] sm:$0xff] %vm392, %v5916
      %5949 = vst.msk [vmem:[#allocation2 + $0x38] sm:$0xff] %vm392, %v5917
      %5950 = vst.msk [vmem:[#allocation2 + $0x40] sm:$0xff] %vm392, %v5918
      %5951 = vst.msk [vmem:[#allocation2 + $0x48] sm:$0xff] %vm392, %v5919
      %5952 = vst.msk [vmem:[#allocation2 + $0x50] sm:$0xff] %vm392, %v5920
      %5953 = vst.msk [vmem:[#allocation2 + $0x58] sm:$0xff] %vm392, %v5921
      %5954 = vst.msk [vmem:[#allocation2 + $0x60] sm:$0xff] %vm392, %v5922
      %5955 = vst.msk [vmem:[#allocation2 + $0x68] sm:$0xff] %vm392, %v5923
      %5956 = vst.msk [vmem:[#allocation2 + $0x70] sm:$0xff] %vm392, %v5924
      %5957 = vst.msk [vmem:[#allocation2 + $0x78] sm:$0xff] %vm392, %v5925
      %5958 = vst.msk [vmem:[#allocation2 + $0x80] sm:$0xff] %vm392, %v5926
      %5959 = vst.msk [vmem:[#allocation2 + $0x88] sm:$0xff] %vm392, %v5927
      %5960 = vst.msk [vmem:[#allocation2 + $0x90] sm:$0xff] %vm392, %v5928
      %5961 = vst.msk [vmem:[#allocation2 + $0x98] sm:$0xff] %vm392, %v5929
      %5962 = vst.msk [vmem:[#allocation2 + $0xa0] sm:$0xff] %vm392, %v5930
      %5963 = vst.msk [vmem:[#allocation2 + $0xa8] sm:$0xff] %vm392, %v5931
      %5964 = vst.msk [vmem:[#allocation2 + $0xb0] sm:$0xff] %vm392, %v5932
      %5965 = vst.msk [vmem:[#allocation2 + $0xb8] sm:$0xff] %vm392, %v5933
      %5966 = vst.msk [vmem:[#allocation2 + $0xc0] sm:$0xff] %vm392, %v5934
      %5967 = vst.msk [vmem:[#allocation2 + $0xc8] sm:$0xff] %vm392, %v5935
      %5968 = vst.msk [vmem:[#allocation2 + $0xd0] sm:$0xff] %vm392, %v5936
      %5969 = vst.msk [vmem:[#allocation2 + $0xd8] sm:$0xff] %vm392, %v5937
      %5970 = vst.msk [vmem:[#allocation2 + $0xe0] sm:$0xff] %vm392, %v5938
      %5971 = vst.msk [vmem:[#allocation2 + $0xe8] sm:$0xff] %vm392, %v5939
      %5972 = vst.msk [vmem:[#allocation2 + $0xf0] sm:$0xff] %vm392, %v5940
      %5973 = vst.msk [vmem:[#allocation2 + $0xf8] sm:$0xff] %vm392, %v5941
      %5974 = vst.msk [vmem:[#allocation2 + $0x100] sm:$0xff] %vm392, %v5942
      %5975 = vst.msk [vmem:[#allocation2 + $0x108] sm:$0xff] %vm392, %v5943
      %5976 = vst.msk [vmem:[#allocation2 + $0x110] sm:$0xff] %vm392, %v5944
      %v5977 = vld [vmem:[#allocation2 + $0x7] sm:$0xff]
      %v5978 = vld [vmem:[#allocation2 + $0xf] sm:$0xff]
      %v5979 = vld [vmem:[#allocation2 + $0x17] sm:$0xff]
      %v5980 = vld [vmem:[#allocation2 + $0x1f] sm:$0xff]
      %v5981 = vld [vmem:[#allocation2 + $0x27] sm:$0xff]
      %v5982 = vld [vmem:[#allocation2 + $0x2f] sm:$0xff]
      %v5983 = vld [vmem:[#allocation2 + $0x37] sm:$0xff]
      %v5984 = vld [vmem:[#allocation2 + $0x3f] sm:$0xff]
      %v5985 = vld [vmem:[#allocation2 + $0x47] sm:$0xff]
      %v5986 = vld [vmem:[#allocation2 + $0x4f] sm:$0xff]
      %v5987 = vld [vmem:[#allocation2 + $0x57] sm:$0xff]
      %v5988 = vld [vmem:[#allocation2 + $0x5f] sm:$0xff]
      %v5989 = vld [vmem:[#allocation2 + $0x67] sm:$0xff]
      %v5990 = vld [vmem:[#allocation2 + $0x6f] sm:$0xff]
      %v5991 = vld [vmem:[#allocation2 + $0x77] sm:$0xff]
      %v5992 = vld [vmem:[#allocation2 + $0x7f] sm:$0xff]
      %v5993 = vld [vmem:[#allocation2 + $0x87] sm:$0xff]
      %v5994 = vld [vmem:[#allocation2 + $0x8f] sm:$0xff]
      %v5995 = vld [vmem:[#allocation2 + $0x97] sm:$0xff]
      %v5996 = vld [vmem:[#allocation2 + $0x9f] sm:$0xff]
      %v5997 = vld [vmem:[#allocation2 + $0xa7] sm:$0xff]
      %v5998 = vld [vmem:[#allocation2 + $0xaf] sm:$0xff]
      %v5999 = vld [vmem:[#allocation2 + $0xb7] sm:$0xff]
      %v6000 = vld [vmem:[#allocation2 + $0xbf] sm:$0xff]
      %v6001 = vld [vmem:[#allocation2 + $0xc7] sm:$0xff]
      %v6002 = vld [vmem:[#allocation2 + $0xcf] sm:$0xff]
      %v6003 = vld [vmem:[#allocation2 + $0xd7] sm:$0xff]
      %v6004 = vld [vmem:[#allocation2 + $0xdf] sm:$0xff]
      %v6005 = vld [vmem:[#allocation2 + $0xe7] sm:$0xff]
      %v6006 = vld [vmem:[#allocation2 + $0xef] sm:$0xff]
      %v6007 = vld [vmem:[#allocation2 + $0xf7] sm:$0xff]
      %v6008 = vld [vmem:[#allocation2 + $0xff] sm:$0xff]
      %v6009 = vld [vmem:[%s2] sm:$0xff]
      %v6010 = vld [vmem:[%s2 + $0x8] sm:$0xff]
      %v6011 = vld [vmem:[%s2 + $0x10] sm:$0xff]
      %v6012 = vld [vmem:[%s2 + $0x18] sm:$0xff]
      %v6013 = vld [vmem:[%s2 + $0x20] sm:$0xff]
      %v6014 = vld [vmem:[%s2 + $0x28] sm:$0xff]
      %v6015 = vld [vmem:[%s2 + $0x30] sm:$0xff]
      %v6016 = vld [vmem:[%s2 + $0x38] sm:$0xff]
      %v6017 = vld [vmem:[%s2 + $0x40] sm:$0xff]
      %v6018 = vld [vmem:[%s2 + $0x48] sm:$0xff]
      %v6019 = vld [vmem:[%s2 + $0x50] sm:$0xff]
      %v6020 = vld [vmem:[%s2 + $0x58] sm:$0xff]
      %v6021 = vld [vmem:[%s2 + $0x60] sm:$0xff]
      %v6022 = vld [vmem:[%s2 + $0x68] sm:$0xff]
      %v6023 = vld [vmem:[%s2 + $0x70] sm:$0xff]
      %v6024 = vld [vmem:[%s2 + $0x78] sm:$0xff]
      %v6025 = vld [vmem:[%s2 + $0x80] sm:$0xff]
      %v6026 = vld [vmem:[%s2 + $0x88] sm:$0xff]
      %v6027 = vld [vmem:[%s2 + $0x90] sm:$0xff]
      %v6028 = vld [vmem:[%s2 + $0x98] sm:$0xff]
      %v6029 = vld [vmem:[%s2 + $0xa0] sm:$0xff]
      %v6030 = vld [vmem:[%s2 + $0xa8] sm:$0xff]
      %v6031 = vld [vmem:[%s2 + $0xb0] sm:$0xff]
      %v6032 = vld [vmem:[%s2 + $0xb8] sm:$0xff]
      %v6033 = vld [vmem:[%s2 + $0xc0] sm:$0xff]
      %v6034 = vld [vmem:[%s2 + $0xc8] sm:$0xff]
      %v6035 = vld [vmem:[%s2 + $0xd0] sm:$0xff]
      %v6036 = vld [vmem:[%s2 + $0xd8] sm:$0xff]
      %v6037 = vld [vmem:[%s2 + $0xe0] sm:$0xff]
      %v6038 = vld [vmem:[%s2 + $0xe8] sm:$0xff]
      %v6039 = vld [vmem:[%s2 + $0xf0] sm:$0xff]
      %v6040 = vld [vmem:[%s2 + $0xf8] sm:$0xff]
      %6042 = vset.pattern.permute.xlu0 0
      %6043 = vperm.xlu0 %6042, %v6009
      %v6044 = vpop.permute.xlu0 %6043
      %6047 = vset.pattern.permute.xlu0 0
      %6048 = vperm.xlu0 %6047, %v6010
      %v6049 = vpop.permute.xlu0 %6048
      %6052 = vset.pattern.permute.xlu0 0
      %6053 = vperm.xlu0 %6052, %v6011
      %v6054 = vpop.permute.xlu0 %6053
      %6057 = vset.pattern.permute.xlu0 0
      %6058 = vperm.xlu0 %6057, %v6012
      %v6059 = vpop.permute.xlu0 %6058
      %6062 = vset.pattern.permute.xlu0 0
      %6063 = vperm.xlu0 %6062, %v6013
      %v6064 = vpop.permute.xlu0 %6063
      %6067 = vset.pattern.permute.xlu0 0
      %6068 = vperm.xlu0 %6067, %v6014
      %v6069 = vpop.permute.xlu0 %6068
      %6072 = vset.pattern.permute.xlu0 0
      %6073 = vperm.xlu0 %6072, %v6015
      %v6074 = vpop.permute.xlu0 %6073
      %6077 = vset.pattern.permute.xlu0 0
      %6078 = vperm.xlu0 %6077, %v6016
      %v6079 = vpop.permute.xlu0 %6078
      %6082 = vset.pattern.permute.xlu0 0
      %6083 = vperm.xlu0 %6082, %v6017
      %v6084 = vpop.permute.xlu0 %6083
      %6087 = vset.pattern.permute.xlu0 0
      %6088 = vperm.xlu0 %6087, %v6018
      %v6089 = vpop.permute.xlu0 %6088
      %6092 = vset.pattern.permute.xlu0 0
      %6093 = vperm.xlu0 %6092, %v6019
      %v6094 = vpop.permute.xlu0 %6093
      %6097 = vset.pattern.permute.xlu0 0
      %6098 = vperm.xlu0 %6097, %v6020
      %v6099 = vpop.permute.xlu0 %6098
      %6102 = vset.pattern.permute.xlu0 0
      %6103 = vperm.xlu0 %6102, %v6021
      %v6104 = vpop.permute.xlu0 %6103
      %6107 = vset.pattern.permute.xlu0 0
      %6108 = vperm.xlu0 %6107, %v6022
      %v6109 = vpop.permute.xlu0 %6108
      %6112 = vset.pattern.permute.xlu0 0
      %6113 = vperm.xlu0 %6112, %v6023
      %v6114 = vpop.permute.xlu0 %6113
      %6117 = vset.pattern.permute.xlu0 0
      %6118 = vperm.xlu0 %6117, %v6024
      %v6119 = vpop.permute.xlu0 %6118
      %6122 = vset.pattern.permute.xlu0 0
      %6123 = vperm.xlu0 %6122, %v6025
      %v6124 = vpop.permute.xlu0 %6123
      %6127 = vset.pattern.permute.xlu0 0
      %6128 = vperm.xlu0 %6127, %v6026
      %v6129 = vpop.permute.xlu0 %6128
      %6132 = vset.pattern.permute.xlu0 0
      %6133 = vperm.xlu0 %6132, %v6027
      %v6134 = vpop.permute.xlu0 %6133
      %6137 = vset.pattern.permute.xlu0 0
      %6138 = vperm.xlu0 %6137, %v6028
      %v6139 = vpop.permute.xlu0 %6138
      %6142 = vset.pattern.permute.xlu0 0
      %6143 = vperm.xlu0 %6142, %v6029
      %v6144 = vpop.permute.xlu0 %6143
      %6147 = vset.pattern.permute.xlu0 0
      %6148 = vperm.xlu0 %6147, %v6030
      %v6149 = vpop.permute.xlu0 %6148
      %6152 = vset.pattern.permute.xlu0 0
      %6153 = vperm.xlu0 %6152, %v6031
      %v6154 = vpop.permute.xlu0 %6153
      %6157 = vset.pattern.permute.xlu0 0
      %6158 = vperm.xlu0 %6157, %v6032
      %v6159 = vpop.permute.xlu0 %6158
      %6162 = vset.pattern.permute.xlu0 0
      %6163 = vperm.xlu0 %6162, %v6033
      %v6164 = vpop.permute.xlu0 %6163
      %6167 = vset.pattern.permute.xlu0 0
      %6168 = vperm.xlu0 %6167, %v6034
      %v6169 = vpop.permute.xlu0 %6168
      %6172 = vset.pattern.permute.xlu0 0
      %6173 = vperm.xlu0 %6172, %v6035
      %v6174 = vpop.permute.xlu0 %6173
      %6177 = vset.pattern.permute.xlu0 0
      %6178 = vperm.xlu0 %6177, %v6036
      %v6179 = vpop.permute.xlu0 %6178
      %6182 = vset.pattern.permute.xlu0 0
      %6183 = vperm.xlu0 %6182, %v6037
      %v6184 = vpop.permute.xlu0 %6183
      %6187 = vset.pattern.permute.xlu0 0
      %6188 = vperm.xlu0 %6187, %v6038
      %v6189 = vpop.permute.xlu0 %6188
      %6192 = vset.pattern.permute.xlu0 0
      %6193 = vperm.xlu0 %6192, %v6039
      %v6194 = vpop.permute.xlu0 %6193
      %6197 = vset.pattern.permute.xlu0 0
      %6198 = vperm.xlu0 %6197, %v6040
      %v6199 = vpop.permute.xlu0 %6198
      %v6201 = vmul.f32 %v5977, %v6044
      %v6202 = vmul.f32 %v5978, %v6049
      %v6203 = vmul.f32 %v5979, %v6054
      %v6204 = vmul.f32 %v5980, %v6059
      %v6205 = vmul.f32 %v5981, %v6064
      %v6206 = vmul.f32 %v5982, %v6069
      %v6207 = vmul.f32 %v5983, %v6074
      %v6208 = vmul.f32 %v5984, %v6079
      %v6209 = vmul.f32 %v5985, %v6084
      %v6210 = vmul.f32 %v5986, %v6089
      %v6211 = vmul.f32 %v5987, %v6094
      %v6212 = vmul.f32 %v5988, %v6099
      %v6213 = vmul.f32 %v5989, %v6104
      %v6214 = vmul.f32 %v5990, %v6109
      %v6215 = vmul.f32 %v5991, %v6114
      %v6216 = vmul.f32 %v5992, %v6119
      %v6217 = vmul.f32 %v5993, %v6124
      %v6218 = vmul.f32 %v5994, %v6129
      %v6219 = vmul.f32 %v5995, %v6134
      %v6220 = vmul.f32 %v5996, %v6139
      %v6221 = vmul.f32 %v5997, %v6144
      %v6222 = vmul.f32 %v5998, %v6149
      %v6223 = vmul.f32 %v5999, %v6154
      %v6224 = vmul.f32 %v6000, %v6159
      %v6225 = vmul.f32 %v6001, %v6164
      %v6226 = vmul.f32 %v6002, %v6169
      %v6227 = vmul.f32 %v6003, %v6174
      %v6228 = vmul.f32 %v6004, %v6179
      %v6229 = vmul.f32 %v6005, %v6184
      %v6230 = vmul.f32 %v6006, %v6189
      %v6231 = vmul.f32 %v6007, %v6194
      %v6232 = vmul.f32 %v6008, %v6199
      %v6233 = vld [vmem:[%s6] sm:$0xf]
      %v6234 = vld [vmem:[#allocation2 + $0x8] sm:$0xff]
      %v6235 = vld [vmem:[#allocation2 + $0x10] sm:$0xff]
      %v6236 = vld [vmem:[#allocation2 + $0x18] sm:$0xff]
      %v6237 = vld [vmem:[#allocation2 + $0x20] sm:$0xff]
      %v6238 = vld [vmem:[#allocation2 + $0x28] sm:$0xff]
      %v6239 = vld [vmem:[#allocation2 + $0x30] sm:$0xff]
      %v6240 = vld [vmem:[#allocation2 + $0x38] sm:$0xff]
      %v6241 = vld [vmem:[#allocation2 + $0x40] sm:$0xff]
      %v6242 = vld [vmem:[#allocation2 + $0x48] sm:$0xff]
      %v6243 = vld [vmem:[#allocation2 + $0x50] sm:$0xff]
      %v6244 = vld [vmem:[#allocation2 + $0x58] sm:$0xff]
      %v6245 = vld [vmem:[#allocation2 + $0x60] sm:$0xff]
      %v6246 = vld [vmem:[#allocation2 + $0x68] sm:$0xff]
      %v6247 = vld [vmem:[#allocation2 + $0x70] sm:$0xff]
      %v6248 = vld [vmem:[#allocation2 + $0x78] sm:$0xff]
      %v6249 = vld [vmem:[#allocation2 + $0x80] sm:$0xff]
      %v6250 = vld [vmem:[#allocation2 + $0x88] sm:$0xff]
      %v6251 = vld [vmem:[#allocation2 + $0x90] sm:$0xff]
      %v6252 = vld [vmem:[#allocation2 + $0x98] sm:$0xff]
      %v6253 = vld [vmem:[#allocation2 + $0xa0] sm:$0xff]
      %v6254 = vld [vmem:[#allocation2 + $0xa8] sm:$0xff]
      %v6255 = vld [vmem:[#allocation2 + $0xb0] sm:$0xff]
      %v6256 = vld [vmem:[#allocation2 + $0xb8] sm:$0xff]
      %v6257 = vld [vmem:[#allocation2 + $0xc0] sm:$0xff]
      %v6258 = vld [vmem:[#allocation2 + $0xc8] sm:$0xff]
      %v6259 = vld [vmem:[#allocation2 + $0xd0] sm:$0xff]
      %v6260 = vld [vmem:[#allocation2 + $0xd8] sm:$0xff]
      %v6261 = vld [vmem:[#allocation2 + $0xe0] sm:$0xff]
      %v6262 = vld [vmem:[#allocation2 + $0xe8] sm:$0xff]
      %v6263 = vld [vmem:[#allocation2 + $0xf0] sm:$0xff]
      %v6264 = vld [vmem:[#allocation2 + $0xf8] sm:$0xff]
      %v6265 = vld [vmem:[#allocation2 + $0x100] sm:$0xff]
      %v6266 = vld [vmem:[%s907] sm:$0xff]
      %v6267 = vld [vmem:[%s907 + $0x8] sm:$0xff]
      %v6268 = vld [vmem:[%s907 + $0x10] sm:$0xff]
      %v6269 = vld [vmem:[%s907 + $0x18] sm:$0xff]
      %v6270 = vld [vmem:[%s907 + $0x20] sm:$0xff]
      %v6271 = vld [vmem:[%s907 + $0x28] sm:$0xff]
      %v6272 = vld [vmem:[%s907 + $0x30] sm:$0xff]
      %v6273 = vld [vmem:[%s907 + $0x38] sm:$0xff]
      %v6274 = vld [vmem:[%s907 + $0x40] sm:$0xff]
      %v6275 = vld [vmem:[%s907 + $0x48] sm:$0xff]
      %v6276 = vld [vmem:[%s907 + $0x50] sm:$0xff]
      %v6277 = vld [vmem:[%s907 + $0x58] sm:$0xff]
      %v6278 = vld [vmem:[%s907 + $0x60] sm:$0xff]
      %v6279 = vld [vmem:[%s907 + $0x68] sm:$0xff]
      %v6280 = vld [vmem:[%s907 + $0x70] sm:$0xff]
      %v6281 = vld [vmem:[%s907 + $0x78] sm:$0xff]
      %v6282 = vld [vmem:[%s907 + $0x80] sm:$0xff]
      %v6283 = vld [vmem:[%s907 + $0x88] sm:$0xff]
      %v6284 = vld [vmem:[%s907 + $0x90] sm:$0xff]
      %v6285 = vld [vmem:[%s907 + $0x98] sm:$0xff]
      %v6286 = vld [vmem:[%s907 + $0xa0] sm:$0xff]
      %v6287 = vld [vmem:[%s907 + $0xa8] sm:$0xff]
      %v6288 = vld [vmem:[%s907 + $0xb0] sm:$0xff]
      %v6289 = vld [vmem:[%s907 + $0xb8] sm:$0xff]
      %v6290 = vld [vmem:[%s907 + $0xc0] sm:$0xff]
      %v6291 = vld [vmem:[%s907 + $0xc8] sm:$0xff]
      %v6292 = vld [vmem:[%s907 + $0xd0] sm:$0xff]
      %v6293 = vld [vmem:[%s907 + $0xd8] sm:$0xff]
      %v6294 = vld [vmem:[%s907 + $0xe0] sm:$0xff]
      %v6295 = vld [vmem:[%s907 + $0xe8] sm:$0xff]
      %v6296 = vld [vmem:[%s907 + $0xf0] sm:$0xff]
      %v6297 = vld [vmem:[%s907 + $0xf8] sm:$0xff]
      %6299 = vset.pattern.permute.xlu0 0
      %6300 = vperm.xlu0 %6299, %v6266
      %v6301 = vpop.permute.xlu0 %6300
      %6304 = vset.pattern.permute.xlu0 0
      %6305 = vperm.xlu0 %6304, %v6267
      %v6306 = vpop.permute.xlu0 %6305
      %6309 = vset.pattern.permute.xlu0 0
      %6310 = vperm.xlu0 %6309, %v6268
      %v6311 = vpop.permute.xlu0 %6310
      %6314 = vset.pattern.permute.xlu0 0
      %6315 = vperm.xlu0 %6314, %v6269
      %v6316 = vpop.permute.xlu0 %6315
      %6319 = vset.pattern.permute.xlu0 0
      %6320 = vperm.xlu0 %6319, %v6270
      %v6321 = vpop.permute.xlu0 %6320
      %6324 = vset.pattern.permute.xlu0 0
      %6325 = vperm.xlu0 %6324, %v6271
      %v6326 = vpop.permute.xlu0 %6325
      %6329 = vset.pattern.permute.xlu0 0
      %6330 = vperm.xlu0 %6329, %v6272
      %v6331 = vpop.permute.xlu0 %6330
      %6334 = vset.pattern.permute.xlu0 0
      %6335 = vperm.xlu0 %6334, %v6273
      %v6336 = vpop.permute.xlu0 %6335
      %6339 = vset.pattern.permute.xlu0 0
      %6340 = vperm.xlu0 %6339, %v6274
      %v6341 = vpop.permute.xlu0 %6340
      %6344 = vset.pattern.permute.xlu0 0
      %6345 = vperm.xlu0 %6344, %v6275
      %v6346 = vpop.permute.xlu0 %6345
      %6349 = vset.pattern.permute.xlu0 0
      %6350 = vperm.xlu0 %6349, %v6276
      %v6351 = vpop.permute.xlu0 %6350
      %6354 = vset.pattern.permute.xlu0 0
      %6355 = vperm.xlu0 %6354, %v6277
      %v6356 = vpop.permute.xlu0 %6355
      %6359 = vset.pattern.permute.xlu0 0
      %6360 = vperm.xlu0 %6359, %v6278
      %v6361 = vpop.permute.xlu0 %6360
      %6364 = vset.pattern.permute.xlu0 0
      %6365 = vperm.xlu0 %6364, %v6279
      %v6366 = vpop.permute.xlu0 %6365
      %6369 = vset.pattern.permute.xlu0 0
      %6370 = vperm.xlu0 %6369, %v6280
      %v6371 = vpop.permute.xlu0 %6370
      %6374 = vset.pattern.permute.xlu0 0
      %6375 = vperm.xlu0 %6374, %v6281
      %v6376 = vpop.permute.xlu0 %6375
      %6379 = vset.pattern.permute.xlu0 0
      %6380 = vperm.xlu0 %6379, %v6282
      %v6381 = vpop.permute.xlu0 %6380
      %6384 = vset.pattern.permute.xlu0 0
      %6385 = vperm.xlu0 %6384, %v6283
      %v6386 = vpop.permute.xlu0 %6385
      %6389 = vset.pattern.permute.xlu0 0
      %6390 = vperm.xlu0 %6389, %v6284
      %v6391 = vpop.permute.xlu0 %6390
      %6394 = vset.pattern.permute.xlu0 0
      %6395 = vperm.xlu0 %6394, %v6285
      %v6396 = vpop.permute.xlu0 %6395
      %6399 = vset.pattern.permute.xlu0 0
      %6400 = vperm.xlu0 %6399, %v6286
      %v6401 = vpop.permute.xlu0 %6400
      %6404 = vset.pattern.permute.xlu0 0
      %6405 = vperm.xlu0 %6404, %v6287
      %v6406 = vpop.permute.xlu0 %6405
      %6409 = vset.pattern.permute.xlu0 0
      %6410 = vperm.xlu0 %6409, %v6288
      %v6411 = vpop.permute.xlu0 %6410
      %6414 = vset.pattern.permute.xlu0 0
      %6415 = vperm.xlu0 %6414, %v6289
      %v6416 = vpop.permute.xlu0 %6415
      %6419 = vset.pattern.permute.xlu0 0
      %6420 = vperm.xlu0 %6419, %v6290
      %v6421 = vpop.permute.xlu0 %6420
      %6424 = vset.pattern.permute.xlu0 0
      %6425 = vperm.xlu0 %6424, %v6291
      %v6426 = vpop.permute.xlu0 %6425
      %6429 = vset.pattern.permute.xlu0 0
      %6430 = vperm.xlu0 %6429, %v6292
      %v6431 = vpop.permute.xlu0 %6430
      %6434 = vset.pattern.permute.xlu0 0
      %6435 = vperm.xlu0 %6434, %v6293
      %v6436 = vpop.permute.xlu0 %6435
      %6439 = vset.pattern.permute.xlu0 0
      %6440 = vperm.xlu0 %6439, %v6294
      %v6441 = vpop.permute.xlu0 %6440
      %6444 = vset.pattern.permute.xlu0 0
      %6445 = vperm.xlu0 %6444, %v6295
      %v6446 = vpop.permute.xlu0 %6445
      %6449 = vset.pattern.permute.xlu0 0
      %6450 = vperm.xlu0 %6449, %v6296
      %v6451 = vpop.permute.xlu0 %6450
      %6454 = vset.pattern.permute.xlu0 0
      %6455 = vperm.xlu0 %6454, %v6297
      %v6456 = vpop.permute.xlu0 %6455
      %v6458 = vmul.f32 %v6234, %v6301
      %v6459 = vmul.f32 %v6235, %v6306
      %v6460 = vmul.f32 %v6236, %v6311
      %v6461 = vmul.f32 %v6237, %v6316
      %v6462 = vmul.f32 %v6238, %v6321
      %v6463 = vmul.f32 %v6239, %v6326
      %v6464 = vmul.f32 %v6240, %v6331
      %v6465 = vmul.f32 %v6241, %v6336
      %v6466 = vmul.f32 %v6242, %v6341
      %v6467 = vmul.f32 %v6243, %v6346
      %v6468 = vmul.f32 %v6244, %v6351
      %v6469 = vmul.f32 %v6245, %v6356
      %v6470 = vmul.f32 %v6246, %v6361
      %v6471 = vmul.f32 %v6247, %v6366
      %v6472 = vmul.f32 %v6248, %v6371
      %v6473 = vmul.f32 %v6249, %v6376
      %v6474 = vmul.f32 %v6250, %v6381
      %v6475 = vmul.f32 %v6251, %v6386
      %v6476 = vmul.f32 %v6252, %v6391
      %v6477 = vmul.f32 %v6253, %v6396
      %v6478 = vmul.f32 %v6254, %v6401
      %v6479 = vmul.f32 %v6255, %v6406
      %v6480 = vmul.f32 %v6256, %v6411
      %v6481 = vmul.f32 %v6257, %v6416
      %v6482 = vmul.f32 %v6258, %v6421
      %v6483 = vmul.f32 %v6259, %v6426
      %v6484 = vmul.f32 %v6260, %v6431
      %v6485 = vmul.f32 %v6261, %v6436
      %v6486 = vmul.f32 %v6262, %v6441
      %v6487 = vmul.f32 %v6263, %v6446
      %v6488 = vmul.f32 %v6264, %v6451
      %v6489 = vmul.f32 %v6265, %v6456
      %s6490 = scalar_lea.vmem %s6, 4
      %v6491 = vld [vmem:[%s6490] sm:$0xf]
      %v6493 = vsel %vm392, %v6458, 0
      %v6496 = vsel %vm392, %v6459, 0
      %v6499 = vsel %vm392, %v6460, 0
      %v6502 = vsel %vm392, %v6461, 0
      %v6505 = vsel %vm392, %v6462, 0
      %v6508 = vsel %vm392, %v6463, 0
      %v6511 = vsel %vm392, %v6464, 0
      %v6514 = vsel %vm392, %v6465, 0
      %v6517 = vsel %vm392, %v6466, 0
      %v6520 = vsel %vm392, %v6467, 0
      %v6523 = vsel %vm392, %v6468, 0
      %v6526 = vsel %vm392, %v6469, 0
      %v6529 = vsel %vm392, %v6470, 0
      %v6532 = vsel %vm392, %v6471, 0
      %v6535 = vsel %vm392, %v6472, 0
      %v6538 = vsel %vm392, %v6473, 0
      %v6541 = vsel %vm392, %v6474, 0
      %v6544 = vsel %vm392, %v6475, 0
      %v6547 = vsel %vm392, %v6476, 0
      %v6550 = vsel %vm392, %v6477, 0
      %v6553 = vsel %vm392, %v6478, 0
      %v6556 = vsel %vm392, %v6479, 0
      %v6559 = vsel %vm392, %v6480, 0
      %v6562 = vsel %vm392, %v6481, 0
      %v6565 = vsel %vm392, %v6482, 0
      %v6568 = vsel %vm392, %v6483, 0
      %v6571 = vsel %vm392, %v6484, 0
      %v6574 = vsel %vm392, %v6485, 0
      %v6577 = vsel %vm392, %v6486, 0
      %v6580 = vsel %vm392, %v6487, 0
      %v6583 = vsel %vm392, %v6488, 0
      %v6586 = vsel %vm392, %v6489, 0
      %vm6588 = vcmask 1043456
      %v6590 = vsel %vm6588, %v6491, 0
      %6592 = vmatprep.subr.mxu0 0.0
      %6593 = vmatpush1.msra.mxu0 %v6590
      %6594 = vmatprep.subr.mxu0 0.0
      %6595 = vmatpush1.msra.mxu0 0.0
      %6596 = vmatprep.subr.mxu0 0.0
      %6597 = vmatpush1.msra.mxu0 0.0
      %6598 = vmatprep.subr.mxu0 0.0
      %6599 = vmatpush1.msra.mxu0 0.0
      %6600 = vmatprep.subr.mxu0 0.0
      %6601 = vmatpush1.msra.mxu0 0.0
      %6602 = vmatprep.subr.mxu0 0.0
      %6603 = vmatpush1.msra.mxu0 0.0
      %6604 = vmatprep.subr.mxu0 0.0
      %6605 = vmatpush1.msra.mxu0 0.0
      %6606 = vmatprep.subr.mxu0 0.0
      %6607 = vmatpush1.msra.mxu0 0.0
      %6608 = vmatprep.subr.mxu0 0.0
      %6609 = vmatpush1.msra.mxu0 0.0
      %6610 = vmatprep.subr.mxu0 0.0
      %6611 = vmatpush1.msra.mxu0 0.0
      %6612 = vmatprep.subr.mxu0 0.0
      %6613 = vmatpush1.msra.mxu0 0.0
      %6614 = vmatprep.subr.mxu0 0.0
      %6615 = vmatpush1.msra.mxu0 0.0
      %6616 = vmatprep.subr.mxu0 0.0
      %6617 = vmatpush1.msra.mxu0 0.0
      %6618 = vmatprep.subr.mxu0 0.0
      %6619 = vmatpush1.msra.mxu0 0.0
      %6620 = vmatprep.subr.mxu0 0.0
      %6621 = vmatpush1.msra.mxu0 0.0
      %6622 = vmatprep.subr.mxu0 0.0
      %6623 = vmatpush1.msra.mxu0 0.0
      %6624 = vmatprep.subr.mxu0 0.0
      %6625 = vmatpush1.msra.mxu0 0.0
      %6626 = vmatprep.subr.mxu0 0.0
      %6627 = vmatpush1.msra.mxu0 0.0
      %6628 = vmatprep.subr.mxu0 0.0
      %6629 = vmatpush1.msra.mxu0 0.0
      %6630 = vmatprep.subr.mxu0 0.0
      %6631 = vmatpush1.msra.mxu0 0.0
      %6632 = vmatprep.subr.mxu0 0.0
      %6633 = vmatpush1.msra.mxu0 0.0
      %6634 = vmatprep.subr.mxu0 0.0
      %6635 = vmatpush1.msra.mxu0 0.0
      %6636 = vmatprep.subr.mxu0 0.0
      %6637 = vmatpush1.msra.mxu0 0.0
      %6638 = vmatprep.subr.mxu0 0.0
      %6639 = vmatpush1.msra.mxu0 0.0
      %6640 = vmatprep.subr.mxu0 0.0
      %6641 = vmatpush1.msra.mxu0 0.0
      %6642 = vmatprep.subr.mxu0 0.0
      %6643 = vmatpush1.msra.mxu0 0.0
      %6644 = vmatprep.subr.mxu0 0.0
      %6645 = vmatpush1.msra.mxu0 0.0
      %6646 = vmatprep.subr.mxu0 0.0
      %6647 = vmatpush1.msra.mxu0 0.0
      %6648 = vmatprep.subr.mxu0 0.0
      %6649 = vmatpush1.msra.mxu0 0.0
      %6650 = vmatprep.subr.mxu0 0.0
      %6651 = vmatpush1.msra.mxu0 0.0
      %6652 = vmatprep.subr.mxu0 0.0
      %6653 = vmatpush1.msra.mxu0 0.0
      %6654 = vmatprep.subr.mxu0 0.0
      %6655 = vmatpush1.msra.mxu0 0.0
      %6656 = vmatprep.mubr.f32.mxu0 0.0
      %6657 = vmatmul.mubr.f32.gmra.mrb[0].mxu0 %v6493
      %v6658 = vpop.f32.mrb[0].mxu0
      %v6659 = vadd.f32 0.0, %v6658
      %v6660 = vpop.f32.mrb[0].mxu0
      %6661 = vmatprep.mubr.f32.mxu0 0.0
      %6662 = vmatmul.mubr.f32.gmra.mrb[0].mxu0 %v6496
      %v6663 = vpop.f32.mrb[0].mxu0
      %v6664 = vadd.f32 0.0, %v6663
      %v6665 = vpop.f32.mrb[0].mxu0
      %6666 = vmatprep.mubr.f32.mxu0 0.0
      %6667 = vmatmul.mubr.f32.gmra.mrb[0].mxu0 %v6499
      %v6668 = vpop.f32.mrb[0].mxu0
      %v6669 = vadd.f32 0.0, %v6668
      %v6670 = vpop.f32.mrb[0].mxu0
      %6671 = vmatprep.mubr.f32.mxu0 0.0
      %6672 = vmatmul.mubr.f32.gmra.mrb[0].mxu0 %v6502
      %v6673 = vpop.f32.mrb[0].mxu0
      %v6674 = vadd.f32 0.0, %v6673
      %v6675 = vpop.f32.mrb[0].mxu0
      %6676 = vmatprep.mubr.f32.mxu0 0.0
      %6677 = vmatmul.mubr.f32.gmra.mrb[0].mxu0 %v6505
      %v6678 = vpop.f32.mrb[0].mxu0
      %v6679 = vadd.f32 0.0, %v6678
      %v6680 = vpop.f32.mrb[0].mxu0
      %6681 = vmatprep.mubr.f32.mxu0 0.0
      %6682 = vmatmul.mubr.f32.gmra.mrb[0].mxu0 %v6508
      %v6683 = vpop.f32.mrb[0].mxu0
      %v6684 = vadd.f32 0.0, %v6683
      %v6685 = vpop.f32.mrb[0].mxu0
      %6686 = vmatprep.mubr.f32.mxu0 0.0
      %6687 = vmatmul.mubr.f32.gmra.mrb[0].mxu0 %v6511
      %v6688 = vpop.f32.mrb[0].mxu0
      %v6689 = vadd.f32 0.0, %v6688
      %v6690 = vpop.f32.mrb[0].mxu0
      %6691 = vmatprep.mubr.f32.mxu0 0.0
      %6692 = vmatmul.mubr.f32.gmra.mrb[0].mxu0 %v6514
      %v6693 = vpop.f32.mrb[0].mxu0
      %v6694 = vadd.f32 0.0, %v6693
      %v6695 = vpop.f32.mrb[0].mxu0
      %6696 = vmatprep.mubr.f32.mxu0 0.0
      %6697 = vmatmul.mubr.f32.gmra.mrb[0].mxu0 %v6517
      %v6698 = vpop.f32.mrb[0].mxu0
      %v6699 = vadd.f32 0.0, %v6698
      %v6700 = vpop.f32.mrb[0].mxu0
      %6701 = vmatprep.mubr.f32.mxu0 0.0
      %6702 = vmatmul.mubr.f32.gmra.mrb[0].mxu0 %v6520
      %v6703 = vpop.f32.mrb[0].mxu0
      %v6704 = vadd.f32 0.0, %v6703
      %v6705 = vpop.f32.mrb[0].mxu0
      %6706 = vmatprep.mubr.f32.mxu0 0.0
      %6707 = vmatmul.mubr.f32.gmra.mrb[0].mxu0 %v6523
      %v6708 = vpop.f32.mrb[0].mxu0
      %v6709 = vadd.f32 0.0, %v6708
      %v6710 = vpop.f32.mrb[0].mxu0
      %6711 = vmatprep.mubr.f32.mxu0 0.0
      %6712 = vmatmul.mubr.f32.gmra.mrb[0].mxu0 %v6526
      %v6713 = vpop.f32.mrb[0].mxu0
      %v6714 = vadd.f32 0.0, %v6713
      %v6715 = vpop.f32.mrb[0].mxu0
      %6716 = vmatprep.mubr.f32.mxu0 0.0
      %6717 = vmatmul.mubr.f32.gmra.mrb[0].mxu0 %v6529
      %v6718 = vpop.f32.mrb[0].mxu0
      %v6719 = vadd.f32 0.0, %v6718
      %v6720 = vpop.f32.mrb[0].mxu0
      %6721 = vmatprep.mubr.f32.mxu0 0.0
      %6722 = vmatmul.mubr.f32.gmra.mrb[0].mxu0 %v6532
      %v6723 = vpop.f32.mrb[0].mxu0
      %v6724 = vadd.f32 0.0, %v6723
      %v6725 = vpop.f32.mrb[0].mxu0
      %6726 = vmatprep.mubr.f32.mxu0 0.0
      %6727 = vmatmul.mubr.f32.gmra.mrb[0].mxu0 %v6535
      %v6728 = vpop.f32.mrb[0].mxu0
      %v6729 = vadd.f32 0.0, %v6728
      %v6730 = vpop.f32.mrb[0].mxu0
      %6731 = vmatprep.mubr.f32.mxu0 0.0
      %6732 = vmatmul.mubr.f32.gmra.mrb[0].mxu0 %v6538
      %v6733 = vpop.f32.mrb[0].mxu0
      %v6734 = vadd.f32 0.0, %v6733
      %v6735 = vpop.f32.mrb[0].mxu0
      %6736 = vmatprep.mubr.f32.mxu0 0.0
      %6737 = vmatmul.mubr.f32.gmra.mrb[0].mxu0 %v6541
      %v6738 = vpop.f32.mrb[0].mxu0
      %v6739 = vadd.f32 0.0, %v6738
      %v6740 = vpop.f32.mrb[0].mxu0
      %6741 = vmatprep.mubr.f32.mxu0 0.0
      %6742 = vmatmul.mubr.f32.gmra.mrb[0].mxu0 %v6544
      %v6743 = vpop.f32.mrb[0].mxu0
      %v6744 = vadd.f32 0.0, %v6743
      %v6745 = vpop.f32.mrb[0].mxu0
      %6746 = vmatprep.mubr.f32.mxu0 0.0
      %6747 = vmatmul.mubr.f32.gmra.mrb[0].mxu0 %v6547
      %v6748 = vpop.f32.mrb[0].mxu0
      %v6749 = vadd.f32 0.0, %v6748
      %v6750 = vpop.f32.mrb[0].mxu0
      %6751 = vmatprep.mubr.f32.mxu0 0.0
      %6752 = vmatmul.mubr.f32.gmra.mrb[0].mxu0 %v6550
      %v6753 = vpop.f32.mrb[0].mxu0
      %v6754 = vadd.f32 0.0, %v6753
      %v6755 = vpop.f32.mrb[0].mxu0
      %6756 = vmatprep.mubr.f32.mxu0 0.0
      %6757 = vmatmul.mubr.f32.gmra.mrb[0].mxu0 %v6553
      %v6758 = vpop.f32.mrb[0].mxu0
      %v6759 = vadd.f32 0.0, %v6758
      %v6760 = vpop.f32.mrb[0].mxu0
      %6761 = vmatprep.mubr.f32.mxu0 0.0
      %6762 = vmatmul.mubr.f32.gmra.mrb[0].mxu0 %v6556
      %v6763 = vpop.f32.mrb[0].mxu0
      %v6764 = vadd.f32 0.0, %v6763
      %v6765 = vpop.f32.mrb[0].mxu0
      %6766 = vmatprep.mubr.f32.mxu0 0.0
      %6767 = vmatmul.mubr.f32.gmra.mrb[0].mxu0 %v6559
      %v6768 = vpop.f32.mrb[0].mxu0
      %v6769 = vadd.f32 0.0, %v6768
      %v6770 = vpop.f32.mrb[0].mxu0
      %6771 = vmatprep.mubr.f32.mxu0 0.0
      %6772 = vmatmul.mubr.f32.gmra.mrb[0].mxu0 %v6562
      %v6773 = vpop.f32.mrb[0].mxu0
      %v6774 = vadd.f32 0.0, %v6773
      %v6775 = vpop.f32.mrb[0].mxu0
      %6776 = vmatprep.mubr.f32.mxu0 0.0
      %6777 = vmatmul.mubr.f32.gmra.mrb[0].mxu0 %v6565
      %v6778 = vpop.f32.mrb[0].mxu0
      %v6779 = vadd.f32 0.0, %v6778
      %v6780 = vpop.f32.mrb[0].mxu0
      %6781 = vmatprep.mubr.f32.mxu0 0.0
      %6782 = vmatmul.mubr.f32.gmra.mrb[0].mxu0 %v6568
      %v6783 = vpop.f32.mrb[0].mxu0
      %v6784 = vadd.f32 0.0, %v6783
      %v6785 = vpop.f32.mrb[0].mxu0
      %6786 = vmatprep.mubr.f32.mxu0 0.0
      %6787 = vmatmul.mubr.f32.gmra.mrb[0].mxu0 %v6571
      %v6788 = vpop.f32.mrb[0].mxu0
      %v6789 = vadd.f32 0.0, %v6788
      %v6790 = vpop.f32.mrb[0].mxu0
      %6791 = vmatprep.mubr.f32.mxu0 0.0
      %6792 = vmatmul.mubr.f32.gmra.mrb[0].mxu0 %v6574
      %v6793 = vpop.f32.mrb[0].mxu0
      %v6794 = vadd.f32 0.0, %v6793
      %v6795 = vpop.f32.mrb[0].mxu0
      %6796 = vmatprep.mubr.f32.mxu0 0.0
      %6797 = vmatmul.mubr.f32.gmra.mrb[0].mxu0 %v6577
      %v6798 = vpop.f32.mrb[0].mxu0
      %v6799 = vadd.f32 0.0, %v6798
      %v6800 = vpop.f32.mrb[0].mxu0
      %6801 = vmatprep.mubr.f32.mxu0 0.0
      %6802 = vmatmul.mubr.f32.gmra.mrb[0].mxu0 %v6580
      %v6803 = vpop.f32.mrb[0].mxu0
      %v6804 = vadd.f32 0.0, %v6803
      %v6805 = vpop.f32.mrb[0].mxu0
      %6806 = vmatprep.mubr.f32.mxu0 0.0
      %6807 = vmatmul.mubr.f32.gmra.mrb[0].mxu0 %v6583
      %v6808 = vpop.f32.mrb[0].mxu0
      %v6809 = vadd.f32 0.0, %v6808
      %v6810 = vpop.f32.mrb[0].mxu0
      %6811 = vmatprep.mubr.f32.mxu0 0.0
      %6812 = vmatmul.mubr.f32.gmra.mrb[0].mxu0 %v6586
      %v6813 = vpop.f32.mrb[0].mxu0
      %v6814 = vadd.f32 0.0, %v6813
      %v6815 = vpop.f32.mrb[0].mxu0
      %6816 = vdwg.mxu0
      %v6818 = vsel %vm392, %v6201, 0
      %v6821 = vsel %vm392, %v6202, 0
      %v6824 = vsel %vm392, %v6203, 0
      %v6827 = vsel %vm392, %v6204, 0
      %v6830 = vsel %vm392, %v6205, 0
      %v6833 = vsel %vm392, %v6206, 0
      %v6836 = vsel %vm392, %v6207, 0
      %v6839 = vsel %vm392, %v6208, 0
      %v6842 = vsel %vm392, %v6209, 0
      %v6845 = vsel %vm392, %v6210, 0
      %v6848 = vsel %vm392, %v6211, 0
      %v6851 = vsel %vm392, %v6212, 0
      %v6854 = vsel %vm392, %v6213, 0
      %v6857 = vsel %vm392, %v6214, 0
      %v6860 = vsel %vm392, %v6215, 0
      %v6863 = vsel %vm392, %v6216, 0
      %v6866 = vsel %vm392, %v6217, 0
      %v6869 = vsel %vm392, %v6218, 0
      %v6872 = vsel %vm392, %v6219, 0
      %v6875 = vsel %vm392, %v6220, 0
      %v6878 = vsel %vm392, %v6221, 0
      %v6881 = vsel %vm392, %v6222, 0
      %v6884 = vsel %vm392, %v6223, 0
      %v6887 = vsel %vm392, %v6224, 0
      %v6890 = vsel %vm392, %v6225, 0
      %v6893 = vsel %vm392, %v6226, 0
      %v6896 = vsel %vm392, %v6227, 0
      %v6899 = vsel %vm392, %v6228, 0
      %v6902 = vsel %vm392, %v6229, 0
      %v6905 = vsel %vm392, %v6230, 0
      %v6908 = vsel %vm392, %v6231, 0
      %v6911 = vsel %vm392, %v6232, 0
      %v6914 = vsel %vm6588, %v6233, 0
      %6916 = vmatprep.subr.mxu0 0.0
      %6917 = vmatpush1.msra.mxu0 %v6914
      %6918 = vmatprep.subr.mxu0 0.0
      %6919 = vmatpush1.msra.mxu0 0.0
      %6920 = vmatprep.subr.mxu0 0.0
      %6921 = vmatpush1.msra.mxu0 0.0
      %6922 = vmatprep.subr.mxu0 0.0
      %6923 = vmatpush1.msra.mxu0 0.0
      %6924 = vmatprep.subr.mxu0 0.0
      %6925 = vmatpush1.msra.mxu0 0.0
      %6926 = vmatprep.subr.mxu0 0.0
      %6927 = vmatpush1.msra.mxu0 0.0
      %6928 = vmatprep.subr.mxu0 0.0
      %6929 = vmatpush1.msra.mxu0 0.0
      %6930 = vmatprep.subr.mxu0 0.0
      %6931 = vmatpush1.msra.mxu0 0.0
      %6932 = vmatprep.subr.mxu0 0.0
      %6933 = vmatpush1.msra.mxu0 0.0
      %6934 = vmatprep.subr.mxu0 0.0
      %6935 = vmatpush1.msra.mxu0 0.0
      %6936 = vmatprep.subr.mxu0 0.0
      %6937 = vmatpush1.msra.mxu0 0.0
      %6938 = vmatprep.subr.mxu0 0.0
      %6939 = vmatpush1.msra.mxu0 0.0
      %6940 = vmatprep.subr.mxu0 0.0
      %6941 = vmatpush1.msra.mxu0 0.0
      %6942 = vmatprep.subr.mxu0 0.0
      %6943 = vmatpush1.msra.mxu0 0.0
      %6944 = vmatprep.subr.mxu0 0.0
      %6945 = vmatpush1.msra.mxu0 0.0
      %6946 = vmatprep.subr.mxu0 0.0
      %6947 = vmatpush1.msra.mxu0 0.0
      %6948 = vmatprep.subr.mxu0 0.0
      %6949 = vmatpush1.msra.mxu0 0.0
      %6950 = vmatprep.subr.mxu0 0.0
      %6951 = vmatpush1.msra.mxu0 0.0
      %6952 = vmatprep.subr.mxu0 0.0
      %6953 = vmatpush1.msra.mxu0 0.0
      %6954 = vmatprep.subr.mxu0 0.0
      %6955 = vmatpush1.msra.mxu0 0.0
      %6956 = vmatprep.subr.mxu0 0.0
      %6957 = vmatpush1.msra.mxu0 0.0
      %6958 = vmatprep.subr.mxu0 0.0
      %6959 = vmatpush1.msra.mxu0 0.0
      %6960 = vmatprep.subr.mxu0 0.0
      %6961 = vmatpush1.msra.mxu0 0.0
      %6962 = vmatprep.subr.mxu0 0.0
      %6963 = vmatpush1.msra.mxu0 0.0
      %6964 = vmatprep.subr.mxu0 0.0
      %6965 = vmatpush1.msra.mxu0 0.0
      %6966 = vmatprep.subr.mxu0 0.0
      %6967 = vmatpush1.msra.mxu0 0.0
      %6968 = vmatprep.subr.mxu0 0.0
      %6969 = vmatpush1.msra.mxu0 0.0
      %6970 = vmatprep.subr.mxu0 0.0
      %6971 = vmatpush1.msra.mxu0 0.0
      %6972 = vmatprep.subr.mxu0 0.0
      %6973 = vmatpush1.msra.mxu0 0.0
      %6974 = vmatprep.subr.mxu0 0.0
      %6975 = vmatpush1.msra.mxu0 0.0
      %6976 = vmatprep.subr.mxu0 0.0
      %6977 = vmatpush1.msra.mxu0 0.0
      %6978 = vmatprep.subr.mxu0 0.0
      %6979 = vmatpush1.msra.mxu0 0.0
      %6980 = vmatprep.mubr.f32.mxu0 0.0
      %6981 = vmatmul.mubr.f32.gmra.mrb[0].mxu0 %v6818
      %v6982 = vpop.f32.mrb[0].mxu0
      %v6983 = vadd.f32 %v6659, %v6982
      %v6984 = vpop.f32.mrb[0].mxu0
      %6985 = vmatprep.mubr.f32.mxu0 0.0
      %6986 = vmatmul.mubr.f32.gmra.mrb[0].mxu0 %v6821
      %v6987 = vpop.f32.mrb[0].mxu0
      %v6988 = vadd.f32 %v6664, %v6987
      %v6989 = vpop.f32.mrb[0].mxu0
      %6990 = vmatprep.mubr.f32.mxu0 0.0
      %6991 = vmatmul.mubr.f32.gmra.mrb[0].mxu0 %v6824
      %v6992 = vpop.f32.mrb[0].mxu0
      %v6993 = vadd.f32 %v6669, %v6992
      %v6994 = vpop.f32.mrb[0].mxu0
      %6995 = vmatprep.mubr.f32.mxu0 0.0
      %6996 = vmatmul.mubr.f32.gmra.mrb[0].mxu0 %v6827
      %v6997 = vpop.f32.mrb[0].mxu0
      %v6998 = vadd.f32 %v6674, %v6997
      %v6999 = vpop.f32.mrb[0].mxu0
      %7000 = vmatprep.mubr.f32.mxu0 0.0
      %7001 = vmatmul.mubr.f32.gmra.mrb[0].mxu0 %v6830
      %v7002 = vpop.f32.mrb[0].mxu0
      %v7003 = vadd.f32 %v6679, %v7002
      %v7004 = vpop.f32.mrb[0].mxu0
      %7005 = vmatprep.mubr.f32.mxu0 0.0
      %7006 = vmatmul.mubr.f32.gmra.mrb[0].mxu0 %v6833
      %v7007 = vpop.f32.mrb[0].mxu0
      %v7008 = vadd.f32 %v6684, %v7007
      %v7009 = vpop.f32.mrb[0].mxu0
      %7010 = vmatprep.mubr.f32.mxu0 0.0
      %7011 = vmatmul.mubr.f32.gmra.mrb[0].mxu0 %v6836
      %v7012 = vpop.f32.mrb[0].mxu0
      %v7013 = vadd.f32 %v6689, %v7012
      %v7014 = vpop.f32.mrb[0].mxu0
      %7015 = vmatprep.mubr.f32.mxu0 0.0
      %7016 = vmatmul.mubr.f32.gmra.mrb[0].mxu0 %v6839
      %v7017 = vpop.f32.mrb[0].mxu0
      %v7018 = vadd.f32 %v6694, %v7017
      %v7019 = vpop.f32.mrb[0].mxu0
      %7020 = vmatprep.mubr.f32.mxu0 0.0
      %7021 = vmatmul.mubr.f32.gmra.mrb[0].mxu0 %v6842
      %v7022 = vpop.f32.mrb[0].mxu0
      %v7023 = vadd.f32 %v6699, %v7022
      %v7024 = vpop.f32.mrb[0].mxu0
      %7025 = vmatprep.mubr.f32.mxu0 0.0
      %7026 = vmatmul.mubr.f32.gmra.mrb[0].mxu0 %v6845
      %v7027 = vpop.f32.mrb[0].mxu0
      %v7028 = vadd.f32 %v6704, %v7027
      %v7029 = vpop.f32.mrb[0].mxu0
      %7030 = vmatprep.mubr.f32.mxu0 0.0
      %7031 = vmatmul.mubr.f32.gmra.mrb[0].mxu0 %v6848
      %v7032 = vpop.f32.mrb[0].mxu0
      %v7033 = vadd.f32 %v6709, %v7032
      %v7034 = vpop.f32.mrb[0].mxu0
      %7035 = vmatprep.mubr.f32.mxu0 0.0
      %7036 = vmatmul.mubr.f32.gmra.mrb[0].mxu0 %v6851
      %v7037 = vpop.f32.mrb[0].mxu0
      %v7038 = vadd.f32 %v6714, %v7037
      %v7039 = vpop.f32.mrb[0].mxu0
      %7040 = vmatprep.mubr.f32.mxu0 0.0
      %7041 = vmatmul.mubr.f32.gmra.mrb[0].mxu0 %v6854
      %v7042 = vpop.f32.mrb[0].mxu0
      %v7043 = vadd.f32 %v6719, %v7042
      %v7044 = vpop.f32.mrb[0].mxu0
      %7045 = vmatprep.mubr.f32.mxu0 0.0
      %7046 = vmatmul.mubr.f32.gmra.mrb[0].mxu0 %v6857
      %v7047 = vpop.f32.mrb[0].mxu0
      %v7048 = vadd.f32 %v6724, %v7047
      %v7049 = vpop.f32.mrb[0].mxu0
      %7050 = vmatprep.mubr.f32.mxu0 0.0
      %7051 = vmatmul.mubr.f32.gmra.mrb[0].mxu0 %v6860
      %v7052 = vpop.f32.mrb[0].mxu0
      %v7053 = vadd.f32 %v6729, %v7052
      %v7054 = vpop.f32.mrb[0].mxu0
      %7055 = vmatprep.mubr.f32.mxu0 0.0
      %7056 = vmatmul.mubr.f32.gmra.mrb[0].mxu0 %v6863
      %v7057 = vpop.f32.mrb[0].mxu0
      %v7058 = vadd.f32 %v6734, %v7057
      %v7059 = vpop.f32.mrb[0].mxu0
      %7060 = vmatprep.mubr.f32.mxu0 0.0
      %7061 = vmatmul.mubr.f32.gmra.mrb[0].mxu0 %v6866
      %v7062 = vpop.f32.mrb[0].mxu0
      %v7063 = vadd.f32 %v6739, %v7062
      %v7064 = vpop.f32.mrb[0].mxu0
      %7065 = vmatprep.mubr.f32.mxu0 0.0
      %7066 = vmatmul.mubr.f32.gmra.mrb[0].mxu0 %v6869
      %v7067 = vpop.f32.mrb[0].mxu0
      %v7068 = vadd.f32 %v6744, %v7067
      %v7069 = vpop.f32.mrb[0].mxu0
      %7070 = vmatprep.mubr.f32.mxu0 0.0
      %7071 = vmatmul.mubr.f32.gmra.mrb[0].mxu0 %v6872
      %v7072 = vpop.f32.mrb[0].mxu0
      %v7073 = vadd.f32 %v6749, %v7072
      %v7074 = vpop.f32.mrb[0].mxu0
      %7075 = vmatprep.mubr.f32.mxu0 0.0
      %7076 = vmatmul.mubr.f32.gmra.mrb[0].mxu0 %v6875
      %v7077 = vpop.f32.mrb[0].mxu0
      %v7078 = vadd.f32 %v6754, %v7077
      %v7079 = vpop.f32.mrb[0].mxu0
      %7080 = vmatprep.mubr.f32.mxu0 0.0
      %7081 = vmatmul.mubr.f32.gmra.mrb[0].mxu0 %v6878
      %v7082 = vpop.f32.mrb[0].mxu0
      %v7083 = vadd.f32 %v6759, %v7082
      %v7084 = vpop.f32.mrb[0].mxu0
      %7085 = vmatprep.mubr.f32.mxu0 0.0
      %7086 = vmatmul.mubr.f32.gmra.mrb[0].mxu0 %v6881
      %v7087 = vpop.f32.mrb[0].mxu0
      %v7088 = vadd.f32 %v6764, %v7087
      %v7089 = vpop.f32.mrb[0].mxu0
      %7090 = vmatprep.mubr.f32.mxu0 0.0
      %7091 = vmatmul.mubr.f32.gmra.mrb[0].mxu0 %v6884
      %v7092 = vpop.f32.mrb[0].mxu0
      %v7093 = vadd.f32 %v6769, %v7092
      %v7094 = vpop.f32.mrb[0].mxu0
      %7095 = vmatprep.mubr.f32.mxu0 0.0
      %7096 = vmatmul.mubr.f32.gmra.mrb[0].mxu0 %v6887
      %v7097 = vpop.f32.mrb[0].mxu0
      %v7098 = vadd.f32 %v6774, %v7097
      %v7099 = vpop.f32.mrb[0].mxu0
      %7100 = vmatprep.mubr.f32.mxu0 0.0
      %7101 = vmatmul.mubr.f32.gmra.mrb[0].mxu0 %v6890
      %v7102 = vpop.f32.mrb[0].mxu0
      %v7103 = vadd.f32 %v6779, %v7102
      %v7104 = vpop.f32.mrb[0].mxu0
      %7105 = vmatprep.mubr.f32.mxu0 0.0
      %7106 = vmatmul.mubr.f32.gmra.mrb[0].mxu0 %v6893
      %v7107 = vpop.f32.mrb[0].mxu0
      %v7108 = vadd.f32 %v6784, %v7107
      %v7109 = vpop.f32.mrb[0].mxu0
      %7110 = vmatprep.mubr.f32.mxu0 0.0
      %7111 = vmatmul.mubr.f32.gmra.mrb[0].mxu0 %v6896
      %v7112 = vpop.f32.mrb[0].mxu0
      %v7113 = vadd.f32 %v6789, %v7112
      %v7114 = vpop.f32.mrb[0].mxu0
      %7115 = vmatprep.mubr.f32.mxu0 0.0
      %7116 = vmatmul.mubr.f32.gmra.mrb[0].mxu0 %v6899
      %v7117 = vpop.f32.mrb[0].mxu0
      %v7118 = vadd.f32 %v6794, %v7117
      %v7119 = vpop.f32.mrb[0].mxu0
      %7120 = vmatprep.mubr.f32.mxu0 0.0
      %7121 = vmatmul.mubr.f32.gmra.mrb[0].mxu0 %v6902
      %v7122 = vpop.f32.mrb[0].mxu0
      %v7123 = vadd.f32 %v6799, %v7122
      %v7124 = vpop.f32.mrb[0].mxu0
      %7125 = vmatprep.mubr.f32.mxu0 0.0
      %7126 = vmatmul.mubr.f32.gmra.mrb[0].mxu0 %v6905
      %v7127 = vpop.f32.mrb[0].mxu0
      %v7128 = vadd.f32 %v6804, %v7127
      %v7129 = vpop.f32.mrb[0].mxu0
      %7130 = vmatprep.mubr.f32.mxu0 0.0
      %7131 = vmatmul.mubr.f32.gmra.mrb[0].mxu0 %v6908
      %v7132 = vpop.f32.mrb[0].mxu0
      %v7133 = vadd.f32 %v6809, %v7132
      %v7134 = vpop.f32.mrb[0].mxu0
      %7135 = vmatprep.mubr.f32.mxu0 0.0
      %7136 = vmatmul.mubr.f32.gmra.mrb[0].mxu0 %v6911
      %v7137 = vpop.f32.mrb[0].mxu0
      %v7138 = vadd.f32 %v6814, %v7137
      %v7139 = vpop.f32.mrb[0].mxu0
      %7140 = vdwg.mxu0
      %v7141 = vld [vmem:[#allocation2 + $0x9] sm:$0xff]
      %v7142 = vld [vmem:[#allocation2 + $0x11] sm:$0xff]
      %v7143 = vld [vmem:[#allocation2 + $0x19] sm:$0xff]
      %v7144 = vld [vmem:[#allocation2 + $0x21] sm:$0xff]
      %v7145 = vld [vmem:[#allocation2 + $0x29] sm:$0xff]
      %v7146 = vld [vmem:[#allocation2 + $0x31] sm:$0xff]
      %v7147 = vld [vmem:[#allocation2 + $0x39] sm:$0xff]
      %v7148 = vld [vmem:[#allocation2 + $0x41] sm:$0xff]
      %v7149 = vld [vmem:[#allocation2 + $0x49] sm:$0xff]
      %v7150 = vld [vmem:[#allocation2 + $0x51] sm:$0xff]
      %v7151 = vld [vmem:[#allocation2 + $0x59] sm:$0xff]
      %v7152 = vld [vmem:[#allocation2 + $0x61] sm:$0xff]
      %v7153 = vld [vmem:[#allocation2 + $0x69] sm:$0xff]
      %v7154 = vld [vmem:[#allocation2 + $0x71] sm:$0xff]
      %v7155 = vld [vmem:[#allocation2 + $0x79] sm:$0xff]
      %v7156 = vld [vmem:[#allocation2 + $0x81] sm:$0xff]
      %v7157 = vld [vmem:[#allocation2 + $0x89] sm:$0xff]
      %v7158 = vld [vmem:[#allocation2 + $0x91] sm:$0xff]
      %v7159 = vld [vmem:[#allocation2 + $0x99] sm:$0xff]
      %v7160 = vld [vmem:[#allocation2 + $0xa1] sm:$0xff]
      %v7161 = vld [vmem:[#allocation2 + $0xa9] sm:$0xff]
      %v7162 = vld [vmem:[#allocation2 + $0xb1] sm:$0xff]
      %v7163 = vld [vmem:[#allocation2 + $0xb9] sm:$0xff]
      %v7164 = vld [vmem:[#allocation2 + $0xc1] sm:$0xff]
      %v7165 = vld [vmem:[#allocation2 + $0xc9] sm:$0xff]
      %v7166 = vld [vmem:[#allocation2 + $0xd1] sm:$0xff]
      %v7167 = vld [vmem:[#allocation2 + $0xd9] sm:$0xff]
      %v7168 = vld [vmem:[#allocation2 + $0xe1] sm:$0xff]
      %v7169 = vld [vmem:[#allocation2 + $0xe9] sm:$0xff]
      %v7170 = vld [vmem:[#allocation2 + $0xf1] sm:$0xff]
      %v7171 = vld [vmem:[#allocation2 + $0xf9] sm:$0xff]
      %v7172 = vld [vmem:[#allocation2 + $0x101] sm:$0xff]
      %v7173 = vld [vmem:[%s1808] sm:$0xff]
      %v7174 = vld [vmem:[%s1808 + $0x8] sm:$0xff]
      %v7175 = vld [vmem:[%s1808 + $0x10] sm:$0xff]
      %v7176 = vld [vmem:[%s1808 + $0x18] sm:$0xff]
      %v7177 = vld [vmem:[%s1808 + $0x20] sm:$0xff]
      %v7178 = vld [vmem:[%s1808 + $0x28] sm:$0xff]
      %v7179 = vld [vmem:[%s1808 + $0x30] sm:$0xff]
      %v7180 = vld [vmem:[%s1808 + $0x38] sm:$0xff]
      %v7181 = vld [vmem:[%s1808 + $0x40] sm:$0xff]
      %v7182 = vld [vmem:[%s1808 + $0x48] sm:$0xff]
      %v7183 = vld [vmem:[%s1808 + $0x50] sm:$0xff]
      %v7184 = vld [vmem:[%s1808 + $0x58] sm:$0xff]
      %v7185 = vld [vmem:[%s1808 + $0x60] sm:$0xff]
      %v7186 = vld [vmem:[%s1808 + $0x68] sm:$0xff]
      %v7187 = vld [vmem:[%s1808 + $0x70] sm:$0xff]
      %v7188 = vld [vmem:[%s1808 + $0x78] sm:$0xff]
      %v7189 = vld [vmem:[%s1808 + $0x80] sm:$0xff]
      %v7190 = vld [vmem:[%s1808 + $0x88] sm:$0xff]
      %v7191 = vld [vmem:[%s1808 + $0x90] sm:$0xff]
      %v7192 = vld [vmem:[%s1808 + $0x98] sm:$0xff]
      %v7193 = vld [vmem:[%s1808 + $0xa0] sm:$0xff]
      %v7194 = vld [vmem:[%s1808 + $0xa8] sm:$0xff]
      %v7195 = vld [vmem:[%s1808 + $0xb0] sm:$0xff]
      %v7196 = vld [vmem:[%s1808 + $0xb8] sm:$0xff]
      %v7197 = vld [vmem:[%s1808 + $0xc0] sm:$0xff]
      %v7198 = vld [vmem:[%s1808 + $0xc8] sm:$0xff]
      %v7199 = vld [vmem:[%s1808 + $0xd0] sm:$0xff]
      %v7200 = vld [vmem:[%s1808 + $0xd8] sm:$0xff]
      %v7201 = vld [vmem:[%s1808 + $0xe0] sm:$0xff]
      %v7202 = vld [vmem:[%s1808 + $0xe8] sm:$0xff]
      %v7203 = vld [vmem:[%s1808 + $0xf0] sm:$0xff]
      %v7204 = vld [vmem:[%s1808 + $0xf8] sm:$0xff]
      %7206 = vset.pattern.permute.xlu0 0
      %7207 = vperm.xlu0 %7206, %v7173
      %v7208 = vpop.permute.xlu0 %7207
      %7211 = vset.pattern.permute.xlu0 0
      %7212 = vperm.xlu0 %7211, %v7174
      %v7213 = vpop.permute.xlu0 %7212
      %7216 = vset.pattern.permute.xlu0 0
      %7217 = vperm.xlu0 %7216, %v7175
      %v7218 = vpop.permute.xlu0 %7217
      %7221 = vset.pattern.permute.xlu0 0
      %7222 = vperm.xlu0 %7221, %v7176
      %v7223 = vpop.permute.xlu0 %7222
      %7226 = vset.pattern.permute.xlu0 0
      %7227 = vperm.xlu0 %7226, %v7177
      %v7228 = vpop.permute.xlu0 %7227
      %7231 = vset.pattern.permute.xlu0 0
      %7232 = vperm.xlu0 %7231, %v7178
      %v7233 = vpop.permute.xlu0 %7232
      %7236 = vset.pattern.permute.xlu0 0
      %7237 = vperm.xlu0 %7236, %v7179
      %v7238 = vpop.permute.xlu0 %7237
      %7241 = vset.pattern.permute.xlu0 0
      %7242 = vperm.xlu0 %7241, %v7180
      %v7243 = vpop.permute.xlu0 %7242
      %7246 = vset.pattern.permute.xlu0 0
      %7247 = vperm.xlu0 %7246, %v7181
      %v7248 = vpop.permute.xlu0 %7247
      %7251 = vset.pattern.permute.xlu0 0
      %7252 = vperm.xlu0 %7251, %v7182
      %v7253 = vpop.permute.xlu0 %7252
      %7256 = vset.pattern.permute.xlu0 0
      %7257 = vperm.xlu0 %7256, %v7183
      %v7258 = vpop.permute.xlu0 %7257
      %7261 = vset.pattern.permute.xlu0 0
      %7262 = vperm.xlu0 %7261, %v7184
      %v7263 = vpop.permute.xlu0 %7262
      %7266 = vset.pattern.permute.xlu0 0
      %7267 = vperm.xlu0 %7266, %v7185
      %v7268 = vpop.permute.xlu0 %7267
      %7271 = vset.pattern.permute.xlu0 0
      %7272 = vperm.xlu0 %7271, %v7186
      %v7273 = vpop.permute.xlu0 %7272
      %7276 = vset.pattern.permute.xlu0 0
      %7277 = vperm.xlu0 %7276, %v7187
      %v7278 = vpop.permute.xlu0 %7277
      %7281 = vset.pattern.permute.xlu0 0
      %7282 = vperm.xlu0 %7281, %v7188
      %v7283 = vpop.permute.xlu0 %7282
      %7286 = vset.pattern.permute.xlu0 0
      %7287 = vperm.xlu0 %7286, %v7189
      %v7288 = vpop.permute.xlu0 %7287
      %7291 = vset.pattern.permute.xlu0 0
      %7292 = vperm.xlu0 %7291, %v7190
      %v7293 = vpop.permute.xlu0 %7292
      %7296 = vset.pattern.permute.xlu0 0
      %7297 = vperm.xlu0 %7296, %v7191
      %v7298 = vpop.permute.xlu0 %7297
      %7301 = vset.pattern.permute.xlu0 0
      %7302 = vperm.xlu0 %7301, %v7192
      %v7303 = vpop.permute.xlu0 %7302
      %7306 = vset.pattern.permute.xlu0 0
      %7307 = vperm.xlu0 %7306, %v7193
      %v7308 = vpop.permute.xlu0 %7307
      %7311 = vset.pattern.permute.xlu0 0
      %7312 = vperm.xlu0 %7311, %v7194
      %v7313 = vpop.permute.xlu0 %7312
      %7316 = vset.pattern.permute.xlu0 0
      %7317 = vperm.xlu0 %7316, %v7195
      %v7318 = vpop.permute.xlu0 %7317
      %7321 = vset.pattern.permute.xlu0 0
      %7322 = vperm.xlu0 %7321, %v7196
      %v7323 = vpop.permute.xlu0 %7322
      %7326 = vset.pattern.permute.xlu0 0
      %7327 = vperm.xlu0 %7326, %v7197
      %v7328 = vpop.permute.xlu0 %7327
      %7331 = vset.pattern.permute.xlu0 0
      %7332 = vperm.xlu0 %7331, %v7198
      %v7333 = vpop.permute.xlu0 %7332
      %7336 = vset.pattern.permute.xlu0 0
      %7337 = vperm.xlu0 %7336, %v7199
      %v7338 = vpop.permute.xlu0 %7337
      %7341 = vset.pattern.permute.xlu0 0
      %7342 = vperm.xlu0 %7341, %v7200
      %v7343 = vpop.permute.xlu0 %7342
      %7346 = vset.pattern.permute.xlu0 0
      %7347 = vperm.xlu0 %7346, %v7201
      %v7348 = vpop.permute.xlu0 %7347
      %7351 = vset.pattern.permute.xlu0 0
      %7352 = vperm.xlu0 %7351, %v7202
      %v7353 = vpop.permute.xlu0 %7352
      %7356 = vset.pattern.permute.xlu0 0
      %7357 = vperm.xlu0 %7356, %v7203
      %v7358 = vpop.permute.xlu0 %7357
      %7361 = vset.pattern.permute.xlu0 0
      %7362 = vperm.xlu0 %7361, %v7204
      %v7363 = vpop.permute.xlu0 %7362
      %v7365 = vmul.f32 %v7141, %v7208
      %v7366 = vmul.f32 %v7142, %v7213
      %v7367 = vmul.f32 %v7143, %v7218
      %v7368 = vmul.f32 %v7144, %v7223
      %v7369 = vmul.f32 %v7145, %v7228
      %v7370 = vmul.f32 %v7146, %v7233
      %v7371 = vmul.f32 %v7147, %v7238
      %v7372 = vmul.f32 %v7148, %v7243
      %v7373 = vmul.f32 %v7149, %v7248
      %v7374 = vmul.f32 %v7150, %v7253
      %v7375 = vmul.f32 %v7151, %v7258
      %v7376 = vmul.f32 %v7152, %v7263
      %v7377 = vmul.f32 %v7153, %v7268
      %v7378 = vmul.f32 %v7154, %v7273
      %v7379 = vmul.f32 %v7155, %v7278
      %v7380 = vmul.f32 %v7156, %v7283
      %v7381 = vmul.f32 %v7157, %v7288
      %v7382 = vmul.f32 %v7158, %v7293
      %v7383 = vmul.f32 %v7159, %v7298
      %v7384 = vmul.f32 %v7160, %v7303
      %v7385 = vmul.f32 %v7161, %v7308
      %v7386 = vmul.f32 %v7162, %v7313
      %v7387 = vmul.f32 %v7163, %v7318
      %v7388 = vmul.f32 %v7164, %v7323
      %v7389 = vmul.f32 %v7165, %v7328
      %v7390 = vmul.f32 %v7166, %v7333
      %v7391 = vmul.f32 %v7167, %v7338
      %v7392 = vmul.f32 %v7168, %v7343
      %v7393 = vmul.f32 %v7169, %v7348
      %v7394 = vmul.f32 %v7170, %v7353
      %v7395 = vmul.f32 %v7171, %v7358
      %v7396 = vmul.f32 %v7172, %v7363
      %s7397 = scalar_lea.vmem %s6, 8
      %v7398 = vld [vmem:[%s7397] sm:$0xf]
      %v7400 = vsel %vm392, %v7365, 0
      %v7403 = vsel %vm392, %v7366, 0
      %v7406 = vsel %vm392, %v7367, 0
      %v7409 = vsel %vm392, %v7368, 0
      %v7412 = vsel %vm392, %v7369, 0
      %v7415 = vsel %vm392, %v7370, 0
      %v7418 = vsel %vm392, %v7371, 0
      %v7421 = vsel %vm392, %v7372, 0
      %v7424 = vsel %vm392, %v7373, 0
      %v7427 = vsel %vm392, %v7374, 0
      %v7430 = vsel %vm392, %v7375, 0
      %v7433 = vsel %vm392, %v7376, 0
      %v7436 = vsel %vm392, %v7377, 0
      %v7439 = vsel %vm392, %v7378, 0
      %v7442 = vsel %vm392, %v7379, 0
      %v7445 = vsel %vm392, %v7380, 0
      %v7448 = vsel %vm392, %v7381, 0
      %v7451 = vsel %vm392, %v7382, 0
      %v7454 = vsel %vm392, %v7383, 0
      %v7457 = vsel %vm392, %v7384, 0
      %v7460 = vsel %vm392, %v7385, 0
      %v7463 = vsel %vm392, %v7386, 0
      %v7466 = vsel %vm392, %v7387, 0
      %v7469 = vsel %vm392, %v7388, 0
      %v7472 = vsel %vm392, %v7389, 0
      %v7475 = vsel %vm392, %v7390, 0
      %v7478 = vsel %vm392, %v7391, 0
      %v7481 = vsel %vm392, %v7392, 0
      %v7484 = vsel %vm392, %v7393, 0
      %v7487 = vsel %vm392, %v7394, 0
      %v7490 = vsel %vm392, %v7395, 0
      %v7493 = vsel %vm392, %v7396, 0
      %v7496 = vsel %vm6588, %v7398, 0
      %7498 = vmatprep.subr.mxu0 0.0
      %7499 = vmatpush1.msra.mxu0 %v7496
      %7500 = vmatprep.subr.mxu0 0.0
      %7501 = vmatpush1.msra.mxu0 0.0
      %7502 = vmatprep.subr.mxu0 0.0
      %7503 = vmatpush1.msra.mxu0 0.0
      %7504 = vmatprep.subr.mxu0 0.0
      %7505 = vmatpush1.msra.mxu0 0.0
      %7506 = vmatprep.subr.mxu0 0.0
      %7507 = vmatpush1.msra.mxu0 0.0
      %7508 = vmatprep.subr.mxu0 0.0
      %7509 = vmatpush1.msra.mxu0 0.0
      %7510 = vmatprep.subr.mxu0 0.0
      %7511 = vmatpush1.msra.mxu0 0.0
      %7512 = vmatprep.subr.mxu0 0.0
      %7513 = vmatpush1.msra.mxu0 0.0
      %7514 = vmatprep.subr.mxu0 0.0
      %7515 = vmatpush1.msra.mxu0 0.0
      %7516 = vmatprep.subr.mxu0 0.0
      %7517 = vmatpush1.msra.mxu0 0.0
      %7518 = vmatprep.subr.mxu0 0.0
      %7519 = vmatpush1.msra.mxu0 0.0
      %7520 = vmatprep.subr.mxu0 0.0
      %7521 = vmatpush1.msra.mxu0 0.0
      %7522 = vmatprep.subr.mxu0 0.0
      %7523 = vmatpush1.msra.mxu0 0.0
      %7524 = vmatprep.subr.mxu0 0.0
      %7525 = vmatpush1.msra.mxu0 0.0
      %7526 = vmatprep.subr.mxu0 0.0
      %7527 = vmatpush1.msra.mxu0 0.0
      %7528 = vmatprep.subr.mxu0 0.0
      %7529 = vmatpush1.msra.mxu0 0.0
      %7530 = vmatprep.subr.mxu0 0.0
      %7531 = vmatpush1.msra.mxu0 0.0
      %7532 = vmatprep.subr.mxu0 0.0
      %7533 = vmatpush1.msra.mxu0 0.0
      %7534 = vmatprep.subr.mxu0 0.0
      %7535 = vmatpush1.msra.mxu0 0.0
      %7536 = vmatprep.subr.mxu0 0.0
      %7537 = vmatpush1.msra.mxu0 0.0
      %7538 = vmatprep.subr.mxu0 0.0
      %7539 = vmatpush1.msra.mxu0 0.0
      %7540 = vmatprep.subr.mxu0 0.0
      %7541 = vmatpush1.msra.mxu0 0.0
      %7542 = vmatprep.subr.mxu0 0.0
      %7543 = vmatpush1.msra.mxu0 0.0
      %7544 = vmatprep.subr.mxu0 0.0
      %7545 = vmatpush1.msra.mxu0 0.0
      %7546 = vmatprep.subr.mxu0 0.0
      %7547 = vmatpush1.msra.mxu0 0.0
      %7548 = vmatprep.subr.mxu0 0.0
      %7549 = vmatpush1.msra.mxu0 0.0
      %7550 = vmatprep.subr.mxu0 0.0
      %7551 = vmatpush1.msra.mxu0 0.0
      %7552 = vmatprep.subr.mxu0 0.0
      %7553 = vmatpush1.msra.mxu0 0.0
      %7554 = vmatprep.subr.mxu0 0.0
      %7555 = vmatpush1.msra.mxu0 0.0
      %7556 = vmatprep.subr.mxu0 0.0
      %7557 = vmatpush1.msra.mxu0 0.0
      %7558 = vmatprep.subr.mxu0 0.0
      %7559 = vmatpush1.msra.mxu0 0.0
      %7560 = vmatprep.subr.mxu0 0.0
      %7561 = vmatpush1.msra.mxu0 0.0
      %7562 = vmatprep.mubr.f32.mxu0 0.0
      %7563 = vmatmul.mubr.f32.gmra.mrb[0].mxu0 %v7400
      %v7564 = vpop.f32.mrb[0].mxu0
      %v7565 = vadd.f32 0.0, %v7564
      %v7566 = vpop.f32.mrb[0].mxu0
      %7567 = vmatprep.mubr.f32.mxu0 0.0
      %7568 = vmatmul.mubr.f32.gmra.mrb[0].mxu0 %v7403
      %v7569 = vpop.f32.mrb[0].mxu0
      %v7570 = vadd.f32 0.0, %v7569
      %v7571 = vpop.f32.mrb[0].mxu0
      %7572 = vmatprep.mubr.f32.mxu0 0.0
      %7573 = vmatmul.mubr.f32.gmra.mrb[0].mxu0 %v7406
      %v7574 = vpop.f32.mrb[0].mxu0
      %v7575 = vadd.f32 0.0, %v7574
      %v7576 = vpop.f32.mrb[0].mxu0
      %7577 = vmatprep.mubr.f32.mxu0 0.0
      %7578 = vmatmul.mubr.f32.gmra.mrb[0].mxu0 %v7409
      %v7579 = vpop.f32.mrb[0].mxu0
      %v7580 = vadd.f32 0.0, %v7579
      %v7581 = vpop.f32.mrb[0].mxu0
      %7582 = vmatprep.mubr.f32.mxu0 0.0
      %7583 = vmatmul.mubr.f32.gmra.mrb[0].mxu0 %v7412
      %v7584 = vpop.f32.mrb[0].mxu0
      %v7585 = vadd.f32 0.0, %v7584
      %v7586 = vpop.f32.mrb[0].mxu0
      %7587 = vmatprep.mubr.f32.mxu0 0.0
      %7588 = vmatmul.mubr.f32.gmra.mrb[0].mxu0 %v7415
      %v7589 = vpop.f32.mrb[0].mxu0
      %v7590 = vadd.f32 0.0, %v7589
      %v7591 = vpop.f32.mrb[0].mxu0
      %7592 = vmatprep.mubr.f32.mxu0 0.0
      %7593 = vmatmul.mubr.f32.gmra.mrb[0].mxu0 %v7418
      %v7594 = vpop.f32.mrb[0].mxu0
      %v7595 = vadd.f32 0.0, %v7594
      %v7596 = vpop.f32.mrb[0].mxu0
      %7597 = vmatprep.mubr.f32.mxu0 0.0
      %7598 = vmatmul.mubr.f32.gmra.mrb[0].mxu0 %v7421
      %v7599 = vpop.f32.mrb[0].mxu0
      %v7600 = vadd.f32 0.0, %v7599
      %v7601 = vpop.f32.mrb[0].mxu0
      %7602 = vmatprep.mubr.f32.mxu0 0.0
      %7603 = vmatmul.mubr.f32.gmra.mrb[0].mxu0 %v7424
      %v7604 = vpop.f32.mrb[0].mxu0
      %v7605 = vadd.f32 0.0, %v7604
      %v7606 = vpop.f32.mrb[0].mxu0
      %7607 = vmatprep.mubr.f32.mxu0 0.0
      %7608 = vmatmul.mubr.f32.gmra.mrb[0].mxu0 %v7427
      %v7609 = vpop.f32.mrb[0].mxu0
      %v7610 = vadd.f32 0.0, %v7609
      %v7611 = vpop.f32.mrb[0].mxu0
      %7612 = vmatprep.mubr.f32.mxu0 0.0
      %7613 = vmatmul.mubr.f32.gmra.mrb[0].mxu0 %v7430
      %v7614 = vpop.f32.mrb[0].mxu0
      %v7615 = vadd.f32 0.0, %v7614
      %v7616 = vpop.f32.mrb[0].mxu0
      %7617 = vmatprep.mubr.f32.mxu0 0.0
      %7618 = vmatmul.mubr.f32.gmra.mrb[0].mxu0 %v7433
      %v7619 = vpop.f32.mrb[0].mxu0
      %v7620 = vadd.f32 0.0, %v7619
      %v7621 = vpop.f32.mrb[0].mxu0
      %7622 = vmatprep.mubr.f32.mxu0 0.0
      %7623 = vmatmul.mubr.f32.gmra.mrb[0].mxu0 %v7436
      %v7624 = vpop.f32.mrb[0].mxu0
      %v7625 = vadd.f32 0.0, %v7624
      %v7626 = vpop.f32.mrb[0].mxu0
      %7627 = vmatprep.mubr.f32.mxu0 0.0
      %7628 = vmatmul.mubr.f32.gmra.mrb[0].mxu0 %v7439
      %v7629 = vpop.f32.mrb[0].mxu0
      %v7630 = vadd.f32 0.0, %v7629
      %v7631 = vpop.f32.mrb[0].mxu0
      %7632 = vmatprep.mubr.f32.mxu0 0.0
      %7633 = vmatmul.mubr.f32.gmra.mrb[0].mxu0 %v7442
      %v7634 = vpop.f32.mrb[0].mxu0
      %v7635 = vadd.f32 0.0, %v7634
      %v7636 = vpop.f32.mrb[0].mxu0
      %7637 = vmatprep.mubr.f32.mxu0 0.0
      %7638 = vmatmul.mubr.f32.gmra.mrb[0].mxu0 %v7445
      %v7639 = vpop.f32.mrb[0].mxu0
      %v7640 = vadd.f32 0.0, %v7639
      %v7641 = vpop.f32.mrb[0].mxu0
      %7642 = vmatprep.mubr.f32.mxu0 0.0
      %7643 = vmatmul.mubr.f32.gmra.mrb[0].mxu0 %v7448
      %v7644 = vpop.f32.mrb[0].mxu0
      %v7645 = vadd.f32 0.0, %v7644
      %v7646 = vpop.f32.mrb[0].mxu0
      %7647 = vmatprep.mubr.f32.mxu0 0.0
      %7648 = vmatmul.mubr.f32.gmra.mrb[0].mxu0 %v7451
      %v7649 = vpop.f32.mrb[0].mxu0
      %v7650 = vadd.f32 0.0, %v7649
      %v7651 = vpop.f32.mrb[0].mxu0
      %7652 = vmatprep.mubr.f32.mxu0 0.0
      %7653 = vmatmul.mubr.f32.gmra.mrb[0].mxu0 %v7454
      %v7654 = vpop.f32.mrb[0].mxu0
      %v7655 = vadd.f32 0.0, %v7654
      %v7656 = vpop.f32.mrb[0].mxu0
      %7657 = vmatprep.mubr.f32.mxu0 0.0
      %7658 = vmatmul.mubr.f32.gmra.mrb[0].mxu0 %v7457
      %v7659 = vpop.f32.mrb[0].mxu0
      %v7660 = vadd.f32 0.0, %v7659
      %v7661 = vpop.f32.mrb[0].mxu0
      %7662 = vmatprep.mubr.f32.mxu0 0.0
      %7663 = vmatmul.mubr.f32.gmra.mrb[0].mxu0 %v7460
      %v7664 = vpop.f32.mrb[0].mxu0
      %v7665 = vadd.f32 0.0, %v7664
      %v7666 = vpop.f32.mrb[0].mxu0
      %7667 = vmatprep.mubr.f32.mxu0 0.0
      %7668 = vmatmul.mubr.f32.gmra.mrb[0].mxu0 %v7463
      %v7669 = vpop.f32.mrb[0].mxu0
      %v7670 = vadd.f32 0.0, %v7669
      %v7671 = vpop.f32.mrb[0].mxu0
      %7672 = vmatprep.mubr.f32.mxu0 0.0
      %7673 = vmatmul.mubr.f32.gmra.mrb[0].mxu0 %v7466
      %v7674 = vpop.f32.mrb[0].mxu0
      %v7675 = vadd.f32 0.0, %v7674
      %v7676 = vpop.f32.mrb[0].mxu0
      %7677 = vmatprep.mubr.f32.mxu0 0.0
      %7678 = vmatmul.mubr.f32.gmra.mrb[0].mxu0 %v7469
      %v7679 = vpop.f32.mrb[0].mxu0
      %v7680 = vadd.f32 0.0, %v7679
      %v7681 = vpop.f32.mrb[0].mxu0
      %7682 = vmatprep.mubr.f32.mxu0 0.0
      %7683 = vmatmul.mubr.f32.gmra.mrb[0].mxu0 %v7472
      %v7684 = vpop.f32.mrb[0].mxu0
      %v7685 = vadd.f32 0.0, %v7684
      %v7686 = vpop.f32.mrb[0].mxu0
      %7687 = vmatprep.mubr.f32.mxu0 0.0
      %7688 = vmatmul.mubr.f32.gmra.mrb[0].mxu0 %v7475
      %v7689 = vpop.f32.mrb[0].mxu0
      %v7690 = vadd.f32 0.0, %v7689
      %v7691 = vpop.f32.mrb[0].mxu0
      %7692 = vmatprep.mubr.f32.mxu0 0.0
      %7693 = vmatmul.mubr.f32.gmra.mrb[0].mxu0 %v7478
      %v7694 = vpop.f32.mrb[0].mxu0
      %v7695 = vadd.f32 0.0, %v7694
      %v7696 = vpop.f32.mrb[0].mxu0
      %7697 = vmatprep.mubr.f32.mxu0 0.0
      %7698 = vmatmul.mubr.f32.gmra.mrb[0].mxu0 %v7481
      %v7699 = vpop.f32.mrb[0].mxu0
      %v7700 = vadd.f32 0.0, %v7699
      %v7701 = vpop.f32.mrb[0].mxu0
      %7702 = vmatprep.mubr.f32.mxu0 0.0
      %7703 = vmatmul.mubr.f32.gmra.mrb[0].mxu0 %v7484
      %v7704 = vpop.f32.mrb[0].mxu0
      %v7705 = vadd.f32 0.0, %v7704
      %v7706 = vpop.f32.mrb[0].mxu0
      %7707 = vmatprep.mubr.f32.mxu0 0.0
      %7708 = vmatmul.mubr.f32.gmra.mrb[0].mxu0 %v7487
      %v7709 = vpop.f32.mrb[0].mxu0
      %v7710 = vadd.f32 0.0, %v7709
      %v7711 = vpop.f32.mrb[0].mxu0
      %7712 = vmatprep.mubr.f32.mxu0 0.0
      %7713 = vmatmul.mubr.f32.gmra.mrb[0].mxu0 %v7490
      %v7714 = vpop.f32.mrb[0].mxu0
      %v7715 = vadd.f32 0.0, %v7714
      %v7716 = vpop.f32.mrb[0].mxu0
      %7717 = vmatprep.mubr.f32.mxu0 0.0
      %7718 = vmatmul.mubr.f32.gmra.mrb[0].mxu0 %v7493
      %v7719 = vpop.f32.mrb[0].mxu0
      %v7720 = vadd.f32 0.0, %v7719
      %v7721 = vpop.f32.mrb[0].mxu0
      %7722 = vdwg.mxu0
      %v7723 = vadd.f32 %v6983, %v7565
      %v7724 = vadd.f32 %v6988, %v7570
      %v7725 = vadd.f32 %v6993, %v7575
      %v7726 = vadd.f32 %v6998, %v7580
      %v7727 = vadd.f32 %v7003, %v7585
      %v7728 = vadd.f32 %v7008, %v7590
      %v7729 = vadd.f32 %v7013, %v7595
      %v7730 = vadd.f32 %v7018, %v7600
      %v7731 = vadd.f32 %v7023, %v7605
      %v7732 = vadd.f32 %v7028, %v7610
      %v7733 = vadd.f32 %v7033, %v7615
      %v7734 = vadd.f32 %v7038, %v7620
      %v7735 = vadd.f32 %v7043, %v7625
      %v7736 = vadd.f32 %v7048, %v7630
      %v7737 = vadd.f32 %v7053, %v7635
      %v7738 = vadd.f32 %v7058, %v7640
      %v7739 = vadd.f32 %v7063, %v7645
      %v7740 = vadd.f32 %v7068, %v7650
      %v7741 = vadd.f32 %v7073, %v7655
      %v7742 = vadd.f32 %v7078, %v7660
      %v7743 = vadd.f32 %v7083, %v7665
      %v7744 = vadd.f32 %v7088, %v7670
      %v7745 = vadd.f32 %v7093, %v7675
      %v7746 = vadd.f32 %v7098, %v7680
      %v7747 = vadd.f32 %v7103, %v7685
      %v7748 = vadd.f32 %v7108, %v7690
      %v7749 = vadd.f32 %v7113, %v7695
      %v7750 = vadd.f32 %v7118, %v7700
      %v7751 = vadd.f32 %v7123, %v7705
      %v7752 = vadd.f32 %v7128, %v7710
      %v7753 = vadd.f32 %v7133, %v7715
      %v7754 = vadd.f32 %v7138, %v7720
      %v7755 = vld [vmem:[#allocation2 + $0x17] sm:$0xff]
      %v7756 = vld [vmem:[#allocation2 + $0x1f] sm:$0xff]
      %v7757 = vld [vmem:[#allocation2 + $0x27] sm:$0xff]
      %v7758 = vld [vmem:[#allocation2 + $0x2f] sm:$0xff]
      %v7759 = vld [vmem:[#allocation2 + $0x37] sm:$0xff]
      %v7760 = vld [vmem:[#allocation2 + $0x3f] sm:$0xff]
      %v7761 = vld [vmem:[#allocation2 + $0x47] sm:$0xff]
      %v7762 = vld [vmem:[#allocation2 + $0x4f] sm:$0xff]
      %v7763 = vld [vmem:[#allocation2 + $0x57] sm:$0xff]
      %v7764 = vld [vmem:[#allocation2 + $0x5f] sm:$0xff]
      %v7765 = vld [vmem:[#allocation2 + $0x67] sm:$0xff]
      %v7766 = vld [vmem:[#allocation2 + $0x6f] sm:$0xff]
      %v7767 = vld [vmem:[#allocation2 + $0x77] sm:$0xff]
      %v7768 = vld [vmem:[#allocation2 + $0x7f] sm:$0xff]
      %v7769 = vld [vmem:[#allocation2 + $0x87] sm:$0xff]
      %v7770 = vld [vmem:[#allocation2 + $0x8f] sm:$0xff]
      %v7771 = vld [vmem:[#allocation2 + $0x97] sm:$0xff]
      %v7772 = vld [vmem:[#allocation2 + $0x9f] sm:$0xff]
      %v7773 = vld [vmem:[#allocation2 + $0xa7] sm:$0xff]
      %v7774 = vld [vmem:[#allocation2 + $0xaf] sm:$0xff]
      %v7775 = vld [vmem:[#allocation2 + $0xb7] sm:$0xff]
      %v7776 = vld [vmem:[#allocation2 + $0xbf] sm:$0xff]
      %v7777 = vld [vmem:[#allocation2 + $0xc7] sm:$0xff]
      %v7778 = vld [vmem:[#allocation2 + $0xcf] sm:$0xff]
      %v7779 = vld [vmem:[#allocation2 + $0xd7] sm:$0xff]
      %v7780 = vld [vmem:[#allocation2 + $0xdf] sm:$0xff]
      %v7781 = vld [vmem:[#allocation2 + $0xe7] sm:$0xff]
      %v7782 = vld [vmem:[#allocation2 + $0xef] sm:$0xff]
      %v7783 = vld [vmem:[#allocation2 + $0xf7] sm:$0xff]
      %v7784 = vld [vmem:[#allocation2 + $0xff] sm:$0xff]
      %v7785 = vld [vmem:[#allocation2 + $0x107] sm:$0xff]
      %v7786 = vld [vmem:[#allocation2 + $0x10f] sm:$0xff]
      %v7787 = vld [vmem:[%s2420] sm:$0xff]
      %v7788 = vld [vmem:[%s2420 + $0x8] sm:$0xff]
      %v7789 = vld [vmem:[%s2420 + $0x10] sm:$0xff]
      %v7790 = vld [vmem:[%s2420 + $0x18] sm:$0xff]
      %v7791 = vld [vmem:[%s2420 + $0x20] sm:$0xff]
      %v7792 = vld [vmem:[%s2420 + $0x28] sm:$0xff]
      %v7793 = vld [vmem:[%s2420 + $0x30] sm:$0xff]
      %v7794 = vld [vmem:[%s2420 + $0x38] sm:$0xff]
      %v7795 = vld [vmem:[%s2420 + $0x40] sm:$0xff]
      %v7796 = vld [vmem:[%s2420 + $0x48] sm:$0xff]
      %v7797 = vld [vmem:[%s2420 + $0x50] sm:$0xff]
      %v7798 = vld [vmem:[%s2420 + $0x58] sm:$0xff]
      %v7799 = vld [vmem:[%s2420 + $0x60] sm:$0xff]
      %v7800 = vld [vmem:[%s2420 + $0x68] sm:$0xff]
      %v7801 = vld [vmem:[%s2420 + $0x70] sm:$0xff]
      %v7802 = vld [vmem:[%s2420 + $0x78] sm:$0xff]
      %v7803 = vld [vmem:[%s2420 + $0x80] sm:$0xff]
      %v7804 = vld [vmem:[%s2420 + $0x88] sm:$0xff]
      %v7805 = vld [vmem:[%s2420 + $0x90] sm:$0xff]
      %v7806 = vld [vmem:[%s2420 + $0x98] sm:$0xff]
      %v7807 = vld [vmem:[%s2420 + $0xa0] sm:$0xff]
      %v7808 = vld [vmem:[%s2420 + $0xa8] sm:$0xff]
      %v7809 = vld [vmem:[%s2420 + $0xb0] sm:$0xff]
      %v7810 = vld [vmem:[%s2420 + $0xb8] sm:$0xff]
      %v7811 = vld [vmem:[%s2420 + $0xc0] sm:$0xff]
      %v7812 = vld [vmem:[%s2420 + $0xc8] sm:$0xff]
      %v7813 = vld [vmem:[%s2420 + $0xd0] sm:$0xff]
      %v7814 = vld [vmem:[%s2420 + $0xd8] sm:$0xff]
      %v7815 = vld [vmem:[%s2420 + $0xe0] sm:$0xff]
      %v7816 = vld [vmem:[%s2420 + $0xe8] sm:$0xff]
      %v7817 = vld [vmem:[%s2420 + $0xf0] sm:$0xff]
      %v7818 = vld [vmem:[%s2420 + $0xf8] sm:$0xff]
      %7820 = vset.pattern.permute.xlu0 0
      %7821 = vperm.xlu0 %7820, %v7787
      %v7822 = vpop.permute.xlu0 %7821
      %7825 = vset.pattern.permute.xlu0 0
      %7826 = vperm.xlu0 %7825, %v7788
      %v7827 = vpop.permute.xlu0 %7826
      %7830 = vset.pattern.permute.xlu0 0
      %7831 = vperm.xlu0 %7830, %v7789
      %v7832 = vpop.permute.xlu0 %7831
      %7835 = vset.pattern.permute.xlu0 0
      %7836 = vperm.xlu0 %7835, %v7790
      %v7837 = vpop.permute.xlu0 %7836
      %7840 = vset.pattern.permute.xlu0 0
      %7841 = vperm.xlu0 %7840, %v7791
      %v7842 = vpop.permute.xlu0 %7841
      %7845 = vset.pattern.permute.xlu0 0
      %7846 = vperm.xlu0 %7845, %v7792
      %v7847 = vpop.permute.xlu0 %7846
      %7850 = vset.pattern.permute.xlu0 0
      %7851 = vperm.xlu0 %7850, %v7793
      %v7852 = vpop.permute.xlu0 %7851
      %7855 = vset.pattern.permute.xlu0 0
      %7856 = vperm.xlu0 %7855, %v7794
      %v7857 = vpop.permute.xlu0 %7856
      %7860 = vset.pattern.permute.xlu0 0
      %7861 = vperm.xlu0 %7860, %v7795
      %v7862 = vpop.permute.xlu0 %7861
      %7865 = vset.pattern.permute.xlu0 0
      %7866 = vperm.xlu0 %7865, %v7796
      %v7867 = vpop.permute.xlu0 %7866
      %7870 = vset.pattern.permute.xlu0 0
      %7871 = vperm.xlu0 %7870, %v7797
      %v7872 = vpop.permute.xlu0 %7871
      %7875 = vset.pattern.permute.xlu0 0
      %7876 = vperm.xlu0 %7875, %v7798
      %v7877 = vpop.permute.xlu0 %7876
      %7880 = vset.pattern.permute.xlu0 0
      %7881 = vperm.xlu0 %7880, %v7799
      %v7882 = vpop.permute.xlu0 %7881
      %7885 = vset.pattern.permute.xlu0 0
      %7886 = vperm.xlu0 %7885, %v7800
      %v7887 = vpop.permute.xlu0 %7886
      %7890 = vset.pattern.permute.xlu0 0
      %7891 = vperm.xlu0 %7890, %v7801
      %v7892 = vpop.permute.xlu0 %7891
      %7895 = vset.pattern.permute.xlu0 0
      %7896 = vperm.xlu0 %7895, %v7802
      %v7897 = vpop.permute.xlu0 %7896
      %7900 = vset.pattern.permute.xlu0 0
      %7901 = vperm.xlu0 %7900, %v7803
      %v7902 = vpop.permute.xlu0 %7901
      %7905 = vset.pattern.permute.xlu0 0
      %7906 = vperm.xlu0 %7905, %v7804
      %v7907 = vpop.permute.xlu0 %7906
      %7910 = vset.pattern.permute.xlu0 0
      %7911 = vperm.xlu0 %7910, %v7805
      %v7912 = vpop.permute.xlu0 %7911
      %7915 = vset.pattern.permute.xlu0 0
      %7916 = vperm.xlu0 %7915, %v7806
      %v7917 = vpop.permute.xlu0 %7916
      %7920 = vset.pattern.permute.xlu0 0
      %7921 = vperm.xlu0 %7920, %v7807
      %v7922 = vpop.permute.xlu0 %7921
      %7925 = vset.pattern.permute.xlu0 0
      %7926 = vperm.xlu0 %7925, %v7808
      %v7927 = vpop.permute.xlu0 %7926
      %7930 = vset.pattern.permute.xlu0 0
      %7931 = vperm.xlu0 %7930, %v7809
      %v7932 = vpop.permute.xlu0 %7931
      %7935 = vset.pattern.permute.xlu0 0
      %7936 = vperm.xlu0 %7935, %v7810
      %v7937 = vpop.permute.xlu0 %7936
      %7940 = vset.pattern.permute.xlu0 0
      %7941 = vperm.xlu0 %7940, %v7811
      %v7942 = vpop.permute.xlu0 %7941
      %7945 = vset.pattern.permute.xlu0 0
      %7946 = vperm.xlu0 %7945, %v7812
      %v7947 = vpop.permute.xlu0 %7946
      %7950 = vset.pattern.permute.xlu0 0
      %7951 = vperm.xlu0 %7950, %v7813
      %v7952 = vpop.permute.xlu0 %7951
      %7955 = vset.pattern.permute.xlu0 0
      %7956 = vperm.xlu0 %7955, %v7814
      %v7957 = vpop.permute.xlu0 %7956
      %7960 = vset.pattern.permute.xlu0 0
      %7961 = vperm.xlu0 %7960, %v7815
      %v7962 = vpop.permute.xlu0 %7961
      %7965 = vset.pattern.permute.xlu0 0
      %7966 = vperm.xlu0 %7965, %v7816
      %v7967 = vpop.permute.xlu0 %7966
      %7970 = vset.pattern.permute.xlu0 0
      %7971 = vperm.xlu0 %7970, %v7817
      %v7972 = vpop.permute.xlu0 %7971
      %7975 = vset.pattern.permute.xlu0 0
      %7976 = vperm.xlu0 %7975, %v7818
      %v7977 = vpop.permute.xlu0 %7976
      %v7979 = vmul.f32 %v7755, %v7822
      %v7980 = vmul.f32 %v7756, %v7827
      %v7981 = vmul.f32 %v7757, %v7832
      %v7982 = vmul.f32 %v7758, %v7837
      %v7983 = vmul.f32 %v7759, %v7842
      %v7984 = vmul.f32 %v7760, %v7847
      %v7985 = vmul.f32 %v7761, %v7852
      %v7986 = vmul.f32 %v7762, %v7857
      %v7987 = vmul.f32 %v7763, %v7862
      %v7988 = vmul.f32 %v7764, %v7867
      %v7989 = vmul.f32 %v7765, %v7872
      %v7990 = vmul.f32 %v7766, %v7877
      %v7991 = vmul.f32 %v7767, %v7882
      %v7992 = vmul.f32 %v7768, %v7887
      %v7993 = vmul.f32 %v7769, %v7892
      %v7994 = vmul.f32 %v7770, %v7897
      %v7995 = vmul.f32 %v7771, %v7902
      %v7996 = vmul.f32 %v7772, %v7907
      %v7997 = vmul.f32 %v7773, %v7912
      %v7998 = vmul.f32 %v7774, %v7917
      %v7999 = vmul.f32 %v7775, %v7922
      %v8000 = vmul.f32 %v7776, %v7927
      %v8001 = vmul.f32 %v7777, %v7932
      %v8002 = vmul.f32 %v7778, %v7937
      %v8003 = vmul.f32 %v7779, %v7942
      %v8004 = vmul.f32 %v7780, %v7947
      %v8005 = vmul.f32 %v7781, %v7952
      %v8006 = vmul.f32 %v7782, %v7957
      %v8007 = vmul.f32 %v7783, %v7962
      %v8008 = vmul.f32 %v7784, %v7967
      %v8009 = vmul.f32 %v7785, %v7972
      %v8010 = vmul.f32 %v7786, %v7977
      %s8011 = scalar_lea.vmem %s6, 12
      %v8012 = vld [vmem:[%s8011] sm:$0xf]
      %v8014 = vsel %vm392, %v7979, 0
      %v8017 = vsel %vm392, %v7980, 0
      %v8020 = vsel %vm392, %v7981, 0
      %v8023 = vsel %vm392, %v7982, 0
      %v8026 = vsel %vm392, %v7983, 0
      %v8029 = vsel %vm392, %v7984, 0
      %v8032 = vsel %vm392, %v7985, 0
      %v8035 = vsel %vm392, %v7986, 0
      %v8038 = vsel %vm392, %v7987, 0
      %v8041 = vsel %vm392, %v7988, 0
      %v8044 = vsel %vm392, %v7989, 0
      %v8047 = vsel %vm392, %v7990, 0
      %v8050 = vsel %vm392, %v7991, 0
      %v8053 = vsel %vm392, %v7992, 0
      %v8056 = vsel %vm392, %v7993, 0
      %v8059 = vsel %vm392, %v7994, 0
      %v8062 = vsel %vm392, %v7995, 0
      %v8065 = vsel %vm392, %v7996, 0
      %v8068 = vsel %vm392, %v7997, 0
      %v8071 = vsel %vm392, %v7998, 0
      %v8074 = vsel %vm392, %v7999, 0
      %v8077 = vsel %vm392, %v8000, 0
      %v8080 = vsel %vm392, %v8001, 0
      %v8083 = vsel %vm392, %v8002, 0
      %v8086 = vsel %vm392, %v8003, 0
      %v8089 = vsel %vm392, %v8004, 0
      %v8092 = vsel %vm392, %v8005, 0
      %v8095 = vsel %vm392, %v8006, 0
      %v8098 = vsel %vm392, %v8007, 0
      %v8101 = vsel %vm392, %v8008, 0
      %v8104 = vsel %vm392, %v8009, 0
      %v8107 = vsel %vm392, %v8010, 0
      %v8110 = vsel %vm6588, %v8012, 0
      %8112 = vmatprep.subr.mxu0 0.0
      %8113 = vmatpush1.msra.mxu0 %v8110
      %8114 = vmatprep.subr.mxu0 0.0
      %8115 = vmatpush1.msra.mxu0 0.0
      %8116 = vmatprep.subr.mxu0 0.0
      %8117 = vmatpush1.msra.mxu0 0.0
      %8118 = vmatprep.subr.mxu0 0.0
      %8119 = vmatpush1.msra.mxu0 0.0
      %8120 = vmatprep.subr.mxu0 0.0
      %8121 = vmatpush1.msra.mxu0 0.0
      %8122 = vmatprep.subr.mxu0 0.0
      %8123 = vmatpush1.msra.mxu0 0.0
      %8124 = vmatprep.subr.mxu0 0.0
      %8125 = vmatpush1.msra.mxu0 0.0
      %8126 = vmatprep.subr.mxu0 0.0
      %8127 = vmatpush1.msra.mxu0 0.0
      %8128 = vmatprep.subr.mxu0 0.0
      %8129 = vmatpush1.msra.mxu0 0.0
      %8130 = vmatprep.subr.mxu0 0.0
      %8131 = vmatpush1.msra.mxu0 0.0
      %8132 = vmatprep.subr.mxu0 0.0
      %8133 = vmatpush1.msra.mxu0 0.0
      %8134 = vmatprep.subr.mxu0 0.0
      %8135 = vmatpush1.msra.mxu0 0.0
      %8136 = vmatprep.subr.mxu0 0.0
      %8137 = vmatpush1.msra.mxu0 0.0
      %8138 = vmatprep.subr.mxu0 0.0
      %8139 = vmatpush1.msra.mxu0 0.0
      %8140 = vmatprep.subr.mxu0 0.0
      %8141 = vmatpush1.msra.mxu0 0.0
      %8142 = vmatprep.subr.mxu0 0.0
      %8143 = vmatpush1.msra.mxu0 0.0
      %8144 = vmatprep.subr.mxu0 0.0
      %8145 = vmatpush1.msra.mxu0 0.0
      %8146 = vmatprep.subr.mxu0 0.0
      %8147 = vmatpush1.msra.mxu0 0.0
      %8148 = vmatprep.subr.mxu0 0.0
      %8149 = vmatpush1.msra.mxu0 0.0
      %8150 = vmatprep.subr.mxu0 0.0
      %8151 = vmatpush1.msra.mxu0 0.0
      %8152 = vmatprep.subr.mxu0 0.0
      %8153 = vmatpush1.msra.mxu0 0.0
      %8154 = vmatprep.subr.mxu0 0.0
      %8155 = vmatpush1.msra.mxu0 0.0
      %8156 = vmatprep.subr.mxu0 0.0
      %8157 = vmatpush1.msra.mxu0 0.0
      %8158 = vmatprep.subr.mxu0 0.0
      %8159 = vmatpush1.msra.mxu0 0.0
      %8160 = vmatprep.subr.mxu0 0.0
      %8161 = vmatpush1.msra.mxu0 0.0
      %8162 = vmatprep.subr.mxu0 0.0
      %8163 = vmatpush1.msra.mxu0 0.0
      %8164 = vmatprep.subr.mxu0 0.0
      %8165 = vmatpush1.msra.mxu0 0.0
      %8166 = vmatprep.subr.mxu0 0.0
      %8167 = vmatpush1.msra.mxu0 0.0
      %8168 = vmatprep.subr.mxu0 0.0
      %8169 = vmatpush1.msra.mxu0 0.0
      %8170 = vmatprep.subr.mxu0 0.0
      %8171 = vmatpush1.msra.mxu0 0.0
      %8172 = vmatprep.subr.mxu0 0.0
      %8173 = vmatpush1.msra.mxu0 0.0
      %8174 = vmatprep.subr.mxu0 0.0
      %8175 = vmatpush1.msra.mxu0 0.0
      %8176 = vmatprep.mubr.f32.mxu0 0.0
      %8177 = vmatmul.mubr.f32.gmra.mrb[0].mxu0 %v8014
      %v8178 = vpop.f32.mrb[0].mxu0
      %v8179 = vadd.f32 0.0, %v8178
      %v8180 = vpop.f32.mrb[0].mxu0
      %8181 = vmatprep.mubr.f32.mxu0 0.0
      %8182 = vmatmul.mubr.f32.gmra.mrb[0].mxu0 %v8017
      %v8183 = vpop.f32.mrb[0].mxu0
      %v8184 = vadd.f32 0.0, %v8183
      %v8185 = vpop.f32.mrb[0].mxu0
      %8186 = vmatprep.mubr.f32.mxu0 0.0
      %8187 = vmatmul.mubr.f32.gmra.mrb[0].mxu0 %v8020
      %v8188 = vpop.f32.mrb[0].mxu0
      %v8189 = vadd.f32 0.0, %v8188
      %v8190 = vpop.f32.mrb[0].mxu0
      %8191 = vmatprep.mubr.f32.mxu0 0.0
      %8192 = vmatmul.mubr.f32.gmra.mrb[0].mxu0 %v8023
      %v8193 = vpop.f32.mrb[0].mxu0
      %v8194 = vadd.f32 0.0, %v8193
      %v8195 = vpop.f32.mrb[0].mxu0
      %8196 = vmatprep.mubr.f32.mxu0 0.0
      %8197 = vmatmul.mubr.f32.gmra.mrb[0].mxu0 %v8026
      %v8198 = vpop.f32.mrb[0].mxu0
      %v8199 = vadd.f32 0.0, %v8198
      %v8200 = vpop.f32.mrb[0].mxu0
      %8201 = vmatprep.mubr.f32.mxu0 0.0
      %8202 = vmatmul.mubr.f32.gmra.mrb[0].mxu0 %v8029
      %v8203 = vpop.f32.mrb[0].mxu0
      %v8204 = vadd.f32 0.0, %v8203
      %v8205 = vpop.f32.mrb[0].mxu0
      %8206 = vmatprep.mubr.f32.mxu0 0.0
      %8207 = vmatmul.mubr.f32.gmra.mrb[0].mxu0 %v8032
      %v8208 = vpop.f32.mrb[0].mxu0
      %v8209 = vadd.f32 0.0, %v8208
      %v8210 = vpop.f32.mrb[0].mxu0
      %8211 = vmatprep.mubr.f32.mxu0 0.0
      %8212 = vmatmul.mubr.f32.gmra.mrb[0].mxu0 %v8035
      %v8213 = vpop.f32.mrb[0].mxu0
      %v8214 = vadd.f32 0.0, %v8213
      %v8215 = vpop.f32.mrb[0].mxu0
      %8216 = vmatprep.mubr.f32.mxu0 0.0
      %8217 = vmatmul.mubr.f32.gmra.mrb[0].mxu0 %v8038
      %v8218 = vpop.f32.mrb[0].mxu0
      %v8219 = vadd.f32 0.0, %v8218
      %v8220 = vpop.f32.mrb[0].mxu0
      %8221 = vmatprep.mubr.f32.mxu0 0.0
      %8222 = vmatmul.mubr.f32.gmra.mrb[0].mxu0 %v8041
      %v8223 = vpop.f32.mrb[0].mxu0
      %v8224 = vadd.f32 0.0, %v8223
      %v8225 = vpop.f32.mrb[0].mxu0
      %8226 = vmatprep.mubr.f32.mxu0 0.0
      %8227 = vmatmul.mubr.f32.gmra.mrb[0].mxu0 %v8044
      %v8228 = vpop.f32.mrb[0].mxu0
      %v8229 = vadd.f32 0.0, %v8228
      %v8230 = vpop.f32.mrb[0].mxu0
      %8231 = vmatprep.mubr.f32.mxu0 0.0
      %8232 = vmatmul.mubr.f32.gmra.mrb[0].mxu0 %v8047
      %v8233 = vpop.f32.mrb[0].mxu0
      %v8234 = vadd.f32 0.0, %v8233
      %v8235 = vpop.f32.mrb[0].mxu0
      %8236 = vmatprep.mubr.f32.mxu0 0.0
      %8237 = vmatmul.mubr.f32.gmra.mrb[0].mxu0 %v8050
      %v8238 = vpop.f32.mrb[0].mxu0
      %v8239 = vadd.f32 0.0, %v8238
      %v8240 = vpop.f32.mrb[0].mxu0
      %8241 = vmatprep.mubr.f32.mxu0 0.0
      %8242 = vmatmul.mubr.f32.gmra.mrb[0].mxu0 %v8053
      %v8243 = vpop.f32.mrb[0].mxu0
      %v8244 = vadd.f32 0.0, %v8243
      %v8245 = vpop.f32.mrb[0].mxu0
      %8246 = vmatprep.mubr.f32.mxu0 0.0
      %8247 = vmatmul.mubr.f32.gmra.mrb[0].mxu0 %v8056
      %v8248 = vpop.f32.mrb[0].mxu0
      %v8249 = vadd.f32 0.0, %v8248
      %v8250 = vpop.f32.mrb[0].mxu0
      %8251 = vmatprep.mubr.f32.mxu0 0.0
      %8252 = vmatmul.mubr.f32.gmra.mrb[0].mxu0 %v8059
      %v8253 = vpop.f32.mrb[0].mxu0
      %v8254 = vadd.f32 0.0, %v8253
      %v8255 = vpop.f32.mrb[0].mxu0
      %8256 = vmatprep.mubr.f32.mxu0 0.0
      %8257 = vmatmul.mubr.f32.gmra.mrb[0].mxu0 %v8062
      %v8258 = vpop.f32.mrb[0].mxu0
      %v8259 = vadd.f32 0.0, %v8258
      %v8260 = vpop.f32.mrb[0].mxu0
      %8261 = vmatprep.mubr.f32.mxu0 0.0
      %8262 = vmatmul.mubr.f32.gmra.mrb[0].mxu0 %v8065
      %v8263 = vpop.f32.mrb[0].mxu0
      %v8264 = vadd.f32 0.0, %v8263
      %v8265 = vpop.f32.mrb[0].mxu0
      %8266 = vmatprep.mubr.f32.mxu0 0.0
      %8267 = vmatmul.mubr.f32.gmra.mrb[0].mxu0 %v8068
      %v8268 = vpop.f32.mrb[0].mxu0
      %v8269 = vadd.f32 0.0, %v8268
      %v8270 = vpop.f32.mrb[0].mxu0
      %8271 = vmatprep.mubr.f32.mxu0 0.0
      %8272 = vmatmul.mubr.f32.gmra.mrb[0].mxu0 %v8071
      %v8273 = vpop.f32.mrb[0].mxu0
      %v8274 = vadd.f32 0.0, %v8273
      %v8275 = vpop.f32.mrb[0].mxu0
      %8276 = vmatprep.mubr.f32.mxu0 0.0
      %8277 = vmatmul.mubr.f32.gmra.mrb[0].mxu0 %v8074
      %v8278 = vpop.f32.mrb[0].mxu0
      %v8279 = vadd.f32 0.0, %v8278
      %v8280 = vpop.f32.mrb[0].mxu0
      %8281 = vmatprep.mubr.f32.mxu0 0.0
      %8282 = vmatmul.mubr.f32.gmra.mrb[0].mxu0 %v8077
      %v8283 = vpop.f32.mrb[0].mxu0
      %v8284 = vadd.f32 0.0, %v8283
      %v8285 = vpop.f32.mrb[0].mxu0
      %8286 = vmatprep.mubr.f32.mxu0 0.0
      %8287 = vmatmul.mubr.f32.gmra.mrb[0].mxu0 %v8080
      %v8288 = vpop.f32.mrb[0].mxu0
      %v8289 = vadd.f32 0.0, %v8288
      %v8290 = vpop.f32.mrb[0].mxu0
      %8291 = vmatprep.mubr.f32.mxu0 0.0
      %8292 = vmatmul.mubr.f32.gmra.mrb[0].mxu0 %v8083
      %v8293 = vpop.f32.mrb[0].mxu0
      %v8294 = vadd.f32 0.0, %v8293
      %v8295 = vpop.f32.mrb[0].mxu0
      %8296 = vmatprep.mubr.f32.mxu0 0.0
      %8297 = vmatmul.mubr.f32.gmra.mrb[0].mxu0 %v8086
      %v8298 = vpop.f32.mrb[0].mxu0
      %v8299 = vadd.f32 0.0, %v8298
      %v8300 = vpop.f32.mrb[0].mxu0
      %8301 = vmatprep.mubr.f32.mxu0 0.0
      %8302 = vmatmul.mubr.f32.gmra.mrb[0].mxu0 %v8089
      %v8303 = vpop.f32.mrb[0].mxu0
      %v8304 = vadd.f32 0.0, %v8303
      %v8305 = vpop.f32.mrb[0].mxu0
      %8306 = vmatprep.mubr.f32.mxu0 0.0
      %8307 = vmatmul.mubr.f32.gmra.mrb[0].mxu0 %v8092
      %v8308 = vpop.f32.mrb[0].mxu0
      %v8309 = vadd.f32 0.0, %v8308
      %v8310 = vpop.f32.mrb[0].mxu0
      %8311 = vmatprep.mubr.f32.mxu0 0.0
      %8312 = vmatmul.mubr.f32.gmra.mrb[0].mxu0 %v8095
      %v8313 = vpop.f32.mrb[0].mxu0
      %v8314 = vadd.f32 0.0, %v8313
      %v8315 = vpop.f32.mrb[0].mxu0
      %8316 = vmatprep.mubr.f32.mxu0 0.0
      %8317 = vmatmul.mubr.f32.gmra.mrb[0].mxu0 %v8098
      %v8318 = vpop.f32.mrb[0].mxu0
      %v8319 = vadd.f32 0.0, %v8318
      %v8320 = vpop.f32.mrb[0].mxu0
      %8321 = vmatprep.mubr.f32.mxu0 0.0
      %8322 = vmatmul.mubr.f32.gmra.mrb[0].mxu0 %v8101
      %v8323 = vpop.f32.mrb[0].mxu0
      %v8324 = vadd.f32 0.0, %v8323
      %v8325 = vpop.f32.mrb[0].mxu0
      %8326 = vmatprep.mubr.f32.mxu0 0.0
      %8327 = vmatmul.mubr.f32.gmra.mrb[0].mxu0 %v8104
      %v8328 = vpop.f32.mrb[0].mxu0
      %v8329 = vadd.f32 0.0, %v8328
      %v8330 = vpop.f32.mrb[0].mxu0
      %8331 = vmatprep.mubr.f32.mxu0 0.0
      %8332 = vmatmul.mubr.f32.gmra.mrb[0].mxu0 %v8107
      %v8333 = vpop.f32.mrb[0].mxu0
      %v8334 = vadd.f32 0.0, %v8333
      %v8335 = vpop.f32.mrb[0].mxu0
      %8336 = vdwg.mxu0
      %v8337 = vadd.f32 %v7723, %v8179
      %v8338 = vadd.f32 %v7724, %v8184
      %v8339 = vadd.f32 %v7725, %v8189
      %v8340 = vadd.f32 %v7726, %v8194
      %v8341 = vadd.f32 %v7727, %v8199
      %v8342 = vadd.f32 %v7728, %v8204
      %v8343 = vadd.f32 %v7729, %v8209
      %v8344 = vadd.f32 %v7730, %v8214
      %v8345 = vadd.f32 %v7731, %v8219
      %v8346 = vadd.f32 %v7732, %v8224
      %v8347 = vadd.f32 %v7733, %v8229
      %v8348 = vadd.f32 %v7734, %v8234
      %v8349 = vadd.f32 %v7735, %v8239
      %v8350 = vadd.f32 %v7736, %v8244
      %v8351 = vadd.f32 %v7737, %v8249
      %v8352 = vadd.f32 %v7738, %v8254
      %v8353 = vadd.f32 %v7739, %v8259
      %v8354 = vadd.f32 %v7740, %v8264
      %v8355 = vadd.f32 %v7741, %v8269
      %v8356 = vadd.f32 %v7742, %v8274
      %v8357 = vadd.f32 %v7743, %v8279
      %v8358 = vadd.f32 %v7744, %v8284
      %v8359 = vadd.f32 %v7745, %v8289
      %v8360 = vadd.f32 %v7746, %v8294
      %v8361 = vadd.f32 %v7747, %v8299
      %v8362 = vadd.f32 %v7748, %v8304
      %v8363 = vadd.f32 %v7749, %v8309
      %v8364 = vadd.f32 %v7750, %v8314
      %v8365 = vadd.f32 %v7751, %v8319
      %v8366 = vadd.f32 %v7752, %v8324
      %v8367 = vadd.f32 %v7753, %v8329
      %v8368 = vadd.f32 %v7754, %v8334
      %v8369 = vld [vmem:[#allocation2 + $0x18] sm:$0xff]
      %v8370 = vld [vmem:[#allocation2 + $0x20] sm:$0xff]
      %v8371 = vld [vmem:[#allocation2 + $0x28] sm:$0xff]
      %v8372 = vld [vmem:[#allocation2 + $0x30] sm:$0xff]
      %v8373 = vld [vmem:[#allocation2 + $0x38] sm:$0xff]
      %v8374 = vld [vmem:[#allocation2 + $0x40] sm:$0xff]
      %v8375 = vld [vmem:[#allocation2 + $0x48] sm:$0xff]
      %v8376 = vld [vmem:[#allocation2 + $0x50] sm:$0xff]
      %v8377 = vld [vmem:[#allocation2 + $0x58] sm:$0xff]
      %v8378 = vld [vmem:[#allocation2 + $0x60] sm:$0xff]
      %v8379 = vld [vmem:[#allocation2 + $0x68] sm:$0xff]
      %v8380 = vld [vmem:[#allocation2 + $0x70] sm:$0xff]
      %v8381 = vld [vmem:[#allocation2 + $0x78] sm:$0xff]
      %v8382 = vld [vmem:[#allocation2 + $0x80] sm:$0xff]
      %v8383 = vld [vmem:[#allocation2 + $0x88] sm:$0xff]
      %v8384 = vld [vmem:[#allocation2 + $0x90] sm:$0xff]
      %v8385 = vld [vmem:[#allocation2 + $0x98] sm:$0xff]
      %v8386 = vld [vmem:[#allocation2 + $0xa0] sm:$0xff]
      %v8387 = vld [vmem:[#allocation2 + $0xa8] sm:$0xff]
      %v8388 = vld [vmem:[#allocation2 + $0xb0] sm:$0xff]
      %v8389 = vld [vmem:[#allocation2 + $0xb8] sm:$0xff]
      %v8390 = vld [vmem:[#allocation2 + $0xc0] sm:$0xff]
      %v8391 = vld [vmem:[#allocation2 + $0xc8] sm:$0xff]
      %v8392 = vld [vmem:[#allocation2 + $0xd0] sm:$0xff]
      %v8393 = vld [vmem:[#allocation2 + $0xd8] sm:$0xff]
      %v8394 = vld [vmem:[#allocation2 + $0xe0] sm:$0xff]
      %v8395 = vld [vmem:[#allocation2 + $0xe8] sm:$0xff]
      %v8396 = vld [vmem:[#allocation2 + $0xf0] sm:$0xff]
      %v8397 = vld [vmem:[#allocation2 + $0xf8] sm:$0xff]
      %v8398 = vld [vmem:[#allocation2 + $0x100] sm:$0xff]
      %v8399 = vld [vmem:[#allocation2 + $0x108] sm:$0xff]
      %v8400 = vld [vmem:[#allocation2 + $0x110] sm:$0xff]
      %s8401 = scalar_lea.vmem %s6, 16
      %v8402 = vld [vmem:[%s8401] sm:$0xf]
      %v8404 = vsel %vm392, %v8369, 0
      %v8407 = vsel %vm392, %v8370, 0
      %v8410 = vsel %vm392, %v8371, 0
      %v8413 = vsel %vm392, %v8372, 0
      %v8416 = vsel %vm392, %v8373, 0
      %v8419 = vsel %vm392, %v8374, 0
      %v8422 = vsel %vm392, %v8375, 0
      %v8425 = vsel %vm392, %v8376, 0
      %v8428 = vsel %vm392, %v8377, 0
      %v8431 = vsel %vm392, %v8378, 0
      %v8434 = vsel %vm392, %v8379, 0
      %v8437 = vsel %vm392, %v8380, 0
      %v8440 = vsel %vm392, %v8381, 0
      %v8443 = vsel %vm392, %v8382, 0
      %v8446 = vsel %vm392, %v8383, 0
      %v8449 = vsel %vm392, %v8384, 0
      %v8452 = vsel %vm392, %v8385, 0
      %v8455 = vsel %vm392, %v8386, 0
      %v8458 = vsel %vm392, %v8387, 0
      %v8461 = vsel %vm392, %v8388, 0
      %v8464 = vsel %vm392, %v8389, 0
      %v8467 = vsel %vm392, %v8390, 0
      %v8470 = vsel %vm392, %v8391, 0
      %v8473 = vsel %vm392, %v8392, 0
      %v8476 = vsel %vm392, %v8393, 0
      %v8479 = vsel %vm392, %v8394, 0
      %v8482 = vsel %vm392, %v8395, 0
      %v8485 = vsel %vm392, %v8396, 0
      %v8488 = vsel %vm392, %v8397, 0
      %v8491 = vsel %vm392, %v8398, 0
      %v8494 = vsel %vm392, %v8399, 0
      %v8497 = vsel %vm392, %v8400, 0
      %v8500 = vsel %vm6588, %v8402, 0
      %8502 = vmatprep.subr.mxu0 0.0
      %8503 = vmatpush1.msra.mxu0 %v8500
      %8504 = vmatprep.subr.mxu0 0.0
      %8505 = vmatpush1.msra.mxu0 0.0
      %8506 = vmatprep.subr.mxu0 0.0
      %8507 = vmatpush1.msra.mxu0 0.0
      %8508 = vmatprep.subr.mxu0 0.0
      %8509 = vmatpush1.msra.mxu0 0.0
      %8510 = vmatprep.subr.mxu0 0.0
      %8511 = vmatpush1.msra.mxu0 0.0
      %8512 = vmatprep.subr.mxu0 0.0
      %8513 = vmatpush1.msra.mxu0 0.0
      %8514 = vmatprep.subr.mxu0 0.0
      %8515 = vmatpush1.msra.mxu0 0.0
      %8516 = vmatprep.subr.mxu0 0.0
      %8517 = vmatpush1.msra.mxu0 0.0
      %8518 = vmatprep.subr.mxu0 0.0
      %8519 = vmatpush1.msra.mxu0 0.0
      %8520 = vmatprep.subr.mxu0 0.0
      %8521 = vmatpush1.msra.mxu0 0.0
      %8522 = vmatprep.subr.mxu0 0.0
      %8523 = vmatpush1.msra.mxu0 0.0
      %8524 = vmatprep.subr.mxu0 0.0
      %8525 = vmatpush1.msra.mxu0 0.0
      %8526 = vmatprep.subr.mxu0 0.0
      %8527 = vmatpush1.msra.mxu0 0.0
      %8528 = vmatprep.subr.mxu0 0.0
      %8529 = vmatpush1.msra.mxu0 0.0
      %8530 = vmatprep.subr.mxu0 0.0
      %8531 = vmatpush1.msra.mxu0 0.0
      %8532 = vmatprep.subr.mxu0 0.0
      %8533 = vmatpush1.msra.mxu0 0.0
      %8534 = vmatprep.subr.mxu0 0.0
      %8535 = vmatpush1.msra.mxu0 0.0
      %8536 = vmatprep.subr.mxu0 0.0
      %8537 = vmatpush1.msra.mxu0 0.0
      %8538 = vmatprep.subr.mxu0 0.0
      %8539 = vmatpush1.msra.mxu0 0.0
      %8540 = vmatprep.subr.mxu0 0.0
      %8541 = vmatpush1.msra.mxu0 0.0
      %8542 = vmatprep.subr.mxu0 0.0
      %8543 = vmatpush1.msra.mxu0 0.0
      %8544 = vmatprep.subr.mxu0 0.0
      %8545 = vmatpush1.msra.mxu0 0.0
      %8546 = vmatprep.subr.mxu0 0.0
      %8547 = vmatpush1.msra.mxu0 0.0
      %8548 = vmatprep.subr.mxu0 0.0
      %8549 = vmatpush1.msra.mxu0 0.0
      %8550 = vmatprep.subr.mxu0 0.0
      %8551 = vmatpush1.msra.mxu0 0.0
      %8552 = vmatprep.subr.mxu0 0.0
      %8553 = vmatpush1.msra.mxu0 0.0
      %8554 = vmatprep.subr.mxu0 0.0
      %8555 = vmatpush1.msra.mxu0 0.0
      %8556 = vmatprep.subr.mxu0 0.0
      %8557 = vmatpush1.msra.mxu0 0.0
      %8558 = vmatprep.subr.mxu0 0.0
      %8559 = vmatpush1.msra.mxu0 0.0
      %8560 = vmatprep.subr.mxu0 0.0
      %8561 = vmatpush1.msra.mxu0 0.0
      %8562 = vmatprep.subr.mxu0 0.0
      %8563 = vmatpush1.msra.mxu0 0.0
      %8564 = vmatprep.subr.mxu0 0.0
      %8565 = vmatpush1.msra.mxu0 0.0
      %8566 = vmatprep.mubr.f32.mxu0 0.0
      %8567 = vmatmul.mubr.f32.gmra.mrb[0].mxu0 %v8404
      %v8568 = vpop.f32.mrb[0].mxu0
      %v8569 = vadd.f32 0.0, %v8568
      %v8570 = vpop.f32.mrb[0].mxu0
      %8571 = vmatprep.mubr.f32.mxu0 0.0
      %8572 = vmatmul.mubr.f32.gmra.mrb[0].mxu0 %v8407
      %v8573 = vpop.f32.mrb[0].mxu0
      %v8574 = vadd.f32 0.0, %v8573
      %v8575 = vpop.f32.mrb[0].mxu0
      %8576 = vmatprep.mubr.f32.mxu0 0.0
      %8577 = vmatmul.mubr.f32.gmra.mrb[0].mxu0 %v8410
      %v8578 = vpop.f32.mrb[0].mxu0
      %v8579 = vadd.f32 0.0, %v8578
      %v8580 = vpop.f32.mrb[0].mxu0
      %8581 = vmatprep.mubr.f32.mxu0 0.0
      %8582 = vmatmul.mubr.f32.gmra.mrb[0].mxu0 %v8413
      %v8583 = vpop.f32.mrb[0].mxu0
      %v8584 = vadd.f32 0.0, %v8583
      %v8585 = vpop.f32.mrb[0].mxu0
      %8586 = vmatprep.mubr.f32.mxu0 0.0
      %8587 = vmatmul.mubr.f32.gmra.mrb[0].mxu0 %v8416
      %v8588 = vpop.f32.mrb[0].mxu0
      %v8589 = vadd.f32 0.0, %v8588
      %v8590 = vpop.f32.mrb[0].mxu0
      %8591 = vmatprep.mubr.f32.mxu0 0.0
      %8592 = vmatmul.mubr.f32.gmra.mrb[0].mxu0 %v8419
      %v8593 = vpop.f32.mrb[0].mxu0
      %v8594 = vadd.f32 0.0, %v8593
      %v8595 = vpop.f32.mrb[0].mxu0
      %8596 = vmatprep.mubr.f32.mxu0 0.0
      %8597 = vmatmul.mubr.f32.gmra.mrb[0].mxu0 %v8422
      %v8598 = vpop.f32.mrb[0].mxu0
      %v8599 = vadd.f32 0.0, %v8598
      %v8600 = vpop.f32.mrb[0].mxu0
      %8601 = vmatprep.mubr.f32.mxu0 0.0
      %8602 = vmatmul.mubr.f32.gmra.mrb[0].mxu0 %v8425
      %v8603 = vpop.f32.mrb[0].mxu0
      %v8604 = vadd.f32 0.0, %v8603
      %v8605 = vpop.f32.mrb[0].mxu0
      %8606 = vmatprep.mubr.f32.mxu0 0.0
      %8607 = vmatmul.mubr.f32.gmra.mrb[0].mxu0 %v8428
      %v8608 = vpop.f32.mrb[0].mxu0
      %v8609 = vadd.f32 0.0, %v8608
      %v8610 = vpop.f32.mrb[0].mxu0
      %8611 = vmatprep.mubr.f32.mxu0 0.0
      %8612 = vmatmul.mubr.f32.gmra.mrb[0].mxu0 %v8431
      %v8613 = vpop.f32.mrb[0].mxu0
      %v8614 = vadd.f32 0.0, %v8613
      %v8615 = vpop.f32.mrb[0].mxu0
      %8616 = vmatprep.mubr.f32.mxu0 0.0
      %8617 = vmatmul.mubr.f32.gmra.mrb[0].mxu0 %v8434
      %v8618 = vpop.f32.mrb[0].mxu0
      %v8619 = vadd.f32 0.0, %v8618
      %v8620 = vpop.f32.mrb[0].mxu0
      %8621 = vmatprep.mubr.f32.mxu0 0.0
      %8622 = vmatmul.mubr.f32.gmra.mrb[0].mxu0 %v8437
      %v8623 = vpop.f32.mrb[0].mxu0
      %v8624 = vadd.f32 0.0, %v8623
      %v8625 = vpop.f32.mrb[0].mxu0
      %8626 = vmatprep.mubr.f32.mxu0 0.0
      %8627 = vmatmul.mubr.f32.gmra.mrb[0].mxu0 %v8440
      %v8628 = vpop.f32.mrb[0].mxu0
      %v8629 = vadd.f32 0.0, %v8628
      %v8630 = vpop.f32.mrb[0].mxu0
      %8631 = vmatprep.mubr.f32.mxu0 0.0
      %8632 = vmatmul.mubr.f32.gmra.mrb[0].mxu0 %v8443
      %v8633 = vpop.f32.mrb[0].mxu0
      %v8634 = vadd.f32 0.0, %v8633
      %v8635 = vpop.f32.mrb[0].mxu0
      %8636 = vmatprep.mubr.f32.mxu0 0.0
      %8637 = vmatmul.mubr.f32.gmra.mrb[0].mxu0 %v8446
      %v8638 = vpop.f32.mrb[0].mxu0
      %v8639 = vadd.f32 0.0, %v8638
      %v8640 = vpop.f32.mrb[0].mxu0
      %8641 = vmatprep.mubr.f32.mxu0 0.0
      %8642 = vmatmul.mubr.f32.gmra.mrb[0].mxu0 %v8449
      %v8643 = vpop.f32.mrb[0].mxu0
      %v8644 = vadd.f32 0.0, %v8643
      %v8645 = vpop.f32.mrb[0].mxu0
      %8646 = vmatprep.mubr.f32.mxu0 0.0
      %8647 = vmatmul.mubr.f32.gmra.mrb[0].mxu0 %v8452
      %v8648 = vpop.f32.mrb[0].mxu0
      %v8649 = vadd.f32 0.0, %v8648
      %v8650 = vpop.f32.mrb[0].mxu0
      %8651 = vmatprep.mubr.f32.mxu0 0.0
      %8652 = vmatmul.mubr.f32.gmra.mrb[0].mxu0 %v8455
      %v8653 = vpop.f32.mrb[0].mxu0
      %v8654 = vadd.f32 0.0, %v8653
      %v8655 = vpop.f32.mrb[0].mxu0
      %8656 = vmatprep.mubr.f32.mxu0 0.0
      %8657 = vmatmul.mubr.f32.gmra.mrb[0].mxu0 %v8458
      %v8658 = vpop.f32.mrb[0].mxu0
      %v8659 = vadd.f32 0.0, %v8658
      %v8660 = vpop.f32.mrb[0].mxu0
      %8661 = vmatprep.mubr.f32.mxu0 0.0
      %8662 = vmatmul.mubr.f32.gmra.mrb[0].mxu0 %v8461
      %v8663 = vpop.f32.mrb[0].mxu0
      %v8664 = vadd.f32 0.0, %v8663
      %v8665 = vpop.f32.mrb[0].mxu0
      %8666 = vmatprep.mubr.f32.mxu0 0.0
      %8667 = vmatmul.mubr.f32.gmra.mrb[0].mxu0 %v8464
      %v8668 = vpop.f32.mrb[0].mxu0
      %v8669 = vadd.f32 0.0, %v8668
      %v8670 = vpop.f32.mrb[0].mxu0
      %8671 = vmatprep.mubr.f32.mxu0 0.0
      %8672 = vmatmul.mubr.f32.gmra.mrb[0].mxu0 %v8467
      %v8673 = vpop.f32.mrb[0].mxu0
      %v8674 = vadd.f32 0.0, %v8673
      %v8675 = vpop.f32.mrb[0].mxu0
      %8676 = vmatprep.mubr.f32.mxu0 0.0
      %8677 = vmatmul.mubr.f32.gmra.mrb[0].mxu0 %v8470
      %v8678 = vpop.f32.mrb[0].mxu0
      %v8679 = vadd.f32 0.0, %v8678
      %v8680 = vpop.f32.mrb[0].mxu0
      %8681 = vmatprep.mubr.f32.mxu0 0.0
      %8682 = vmatmul.mubr.f32.gmra.mrb[0].mxu0 %v8473
      %v8683 = vpop.f32.mrb[0].mxu0
      %v8684 = vadd.f32 0.0, %v8683
      %v8685 = vpop.f32.mrb[0].mxu0
      %8686 = vmatprep.mubr.f32.mxu0 0.0
      %8687 = vmatmul.mubr.f32.gmra.mrb[0].mxu0 %v8476
      %v8688 = vpop.f32.mrb[0].mxu0
      %v8689 = vadd.f32 0.0, %v8688
      %v8690 = vpop.f32.mrb[0].mxu0
      %8691 = vmatprep.mubr.f32.mxu0 0.0
      %8692 = vmatmul.mubr.f32.gmra.mrb[0].mxu0 %v8479
      %v8693 = vpop.f32.mrb[0].mxu0
      %v8694 = vadd.f32 0.0, %v8693
      %v8695 = vpop.f32.mrb[0].mxu0
      %8696 = vmatprep.mubr.f32.mxu0 0.0
      %8697 = vmatmul.mubr.f32.gmra.mrb[0].mxu0 %v8482
      %v8698 = vpop.f32.mrb[0].mxu0
      %v8699 = vadd.f32 0.0, %v8698
      %v8700 = vpop.f32.mrb[0].mxu0
      %8701 = vmatprep.mubr.f32.mxu0 0.0
      %8702 = vmatmul.mubr.f32.gmra.mrb[0].mxu0 %v8485
      %v8703 = vpop.f32.mrb[0].mxu0
      %v8704 = vadd.f32 0.0, %v8703
      %v8705 = vpop.f32.mrb[0].mxu0
      %8706 = vmatprep.mubr.f32.mxu0 0.0
      %8707 = vmatmul.mubr.f32.gmra.mrb[0].mxu0 %v8488
      %v8708 = vpop.f32.mrb[0].mxu0
      %v8709 = vadd.f32 0.0, %v8708
      %v8710 = vpop.f32.mrb[0].mxu0
      %8711 = vmatprep.mubr.f32.mxu0 0.0
      %8712 = vmatmul.mubr.f32.gmra.mrb[0].mxu0 %v8491
      %v8713 = vpop.f32.mrb[0].mxu0
      %v8714 = vadd.f32 0.0, %v8713
      %v8715 = vpop.f32.mrb[0].mxu0
      %8716 = vmatprep.mubr.f32.mxu0 0.0
      %8717 = vmatmul.mubr.f32.gmra.mrb[0].mxu0 %v8494
      %v8718 = vpop.f32.mrb[0].mxu0
      %v8719 = vadd.f32 0.0, %v8718
      %v8720 = vpop.f32.mrb[0].mxu0
      %8721 = vmatprep.mubr.f32.mxu0 0.0
      %8722 = vmatmul.mubr.f32.gmra.mrb[0].mxu0 %v8497
      %v8723 = vpop.f32.mrb[0].mxu0
      %v8724 = vadd.f32 0.0, %v8723
      %v8725 = vpop.f32.mrb[0].mxu0
      %8726 = vdwg.mxu0
      %v8727 = vadd.f32 %v8337, %v8569
      %v8728 = vadd.f32 %v8338, %v8574
      %v8729 = vadd.f32 %v8339, %v8579
      %v8730 = vadd.f32 %v8340, %v8584
      %v8731 = vadd.f32 %v8341, %v8589
      %v8732 = vadd.f32 %v8342, %v8594
      %v8733 = vadd.f32 %v8343, %v8599
      %v8734 = vadd.f32 %v8344, %v8604
      %v8735 = vadd.f32 %v8345, %v8609
      %v8736 = vadd.f32 %v8346, %v8614
      %v8737 = vadd.f32 %v8347, %v8619
      %v8738 = vadd.f32 %v8348, %v8624
      %v8739 = vadd.f32 %v8349, %v8629
      %v8740 = vadd.f32 %v8350, %v8634
      %v8741 = vadd.f32 %v8351, %v8639
      %v8742 = vadd.f32 %v8352, %v8644
      %v8743 = vadd.f32 %v8353, %v8649
      %v8744 = vadd.f32 %v8354, %v8654
      %v8745 = vadd.f32 %v8355, %v8659
      %v8746 = vadd.f32 %v8356, %v8664
      %v8747 = vadd.f32 %v8357, %v8669
      %v8748 = vadd.f32 %v8358, %v8674
      %v8749 = vadd.f32 %v8359, %v8679
      %v8750 = vadd.f32 %v8360, %v8684
      %v8751 = vadd.f32 %v8361, %v8689
      %v8752 = vadd.f32 %v8362, %v8694
      %v8753 = vadd.f32 %v8363, %v8699
      %v8754 = vadd.f32 %v8364, %v8704
      %v8755 = vadd.f32 %v8365, %v8709
      %v8756 = vadd.f32 %v8366, %v8714
      %v8757 = vadd.f32 %v8367, %v8719
      %v8758 = vadd.f32 %v8368, %v8724
      %v8759 = vld [vmem:[#allocation2 + $0x19] sm:$0xff]
      %v8760 = vld [vmem:[#allocation2 + $0x21] sm:$0xff]
      %v8761 = vld [vmem:[#allocation2 + $0x29] sm:$0xff]
      %v8762 = vld [vmem:[#allocation2 + $0x31] sm:$0xff]
      %v8763 = vld [vmem:[#allocation2 + $0x39] sm:$0xff]
      %v8764 = vld [vmem:[#allocation2 + $0x41] sm:$0xff]
      %v8765 = vld [vmem:[#allocation2 + $0x49] sm:$0xff]
      %v8766 = vld [vmem:[#allocation2 + $0x51] sm:$0xff]
      %v8767 = vld [vmem:[#allocation2 + $0x59] sm:$0xff]
      %v8768 = vld [vmem:[#allocation2 + $0x61] sm:$0xff]
      %v8769 = vld [vmem:[#allocation2 + $0x69] sm:$0xff]
      %v8770 = vld [vmem:[#allocation2 + $0x71] sm:$0xff]
      %v8771 = vld [vmem:[#allocation2 + $0x79] sm:$0xff]
      %v8772 = vld [vmem:[#allocation2 + $0x81] sm:$0xff]
      %v8773 = vld [vmem:[#allocation2 + $0x89] sm:$0xff]
      %v8774 = vld [vmem:[#allocation2 + $0x91] sm:$0xff]
      %v8775 = vld [vmem:[#allocation2 + $0x99] sm:$0xff]
      %v8776 = vld [vmem:[#allocation2 + $0xa1] sm:$0xff]
      %v8777 = vld [vmem:[#allocation2 + $0xa9] sm:$0xff]
      %v8778 = vld [vmem:[#allocation2 + $0xb1] sm:$0xff]
      %v8779 = vld [vmem:[#allocation2 + $0xb9] sm:$0xff]
      %v8780 = vld [vmem:[#allocation2 + $0xc1] sm:$0xff]
      %v8781 = vld [vmem:[#allocation2 + $0xc9] sm:$0xff]
      %v8782 = vld [vmem:[#allocation2 + $0xd1] sm:$0xff]
      %v8783 = vld [vmem:[#allocation2 + $0xd9] sm:$0xff]
      %v8784 = vld [vmem:[#allocation2 + $0xe1] sm:$0xff]
      %v8785 = vld [vmem:[#allocation2 + $0xe9] sm:$0xff]
      %v8786 = vld [vmem:[#allocation2 + $0xf1] sm:$0xff]
      %v8787 = vld [vmem:[#allocation2 + $0xf9] sm:$0xff]
      %v8788 = vld [vmem:[#allocation2 + $0x101] sm:$0xff]
      %v8789 = vld [vmem:[#allocation2 + $0x109] sm:$0xff]
      %v8790 = vld [vmem:[#allocation2 + $0x111] sm:$0xff]
      %v8791 = vld [vmem:[%s3419] sm:$0xff]
      %v8792 = vld [vmem:[%s3419 + $0x8] sm:$0xff]
      %v8793 = vld [vmem:[%s3419 + $0x10] sm:$0xff]
      %v8794 = vld [vmem:[%s3419 + $0x18] sm:$0xff]
      %v8795 = vld [vmem:[%s3419 + $0x20] sm:$0xff]
      %v8796 = vld [vmem:[%s3419 + $0x28] sm:$0xff]
      %v8797 = vld [vmem:[%s3419 + $0x30] sm:$0xff]
      %v8798 = vld [vmem:[%s3419 + $0x38] sm:$0xff]
      %v8799 = vld [vmem:[%s3419 + $0x40] sm:$0xff]
      %v8800 = vld [vmem:[%s3419 + $0x48] sm:$0xff]
      %v8801 = vld [vmem:[%s3419 + $0x50] sm:$0xff]
      %v8802 = vld [vmem:[%s3419 + $0x58] sm:$0xff]
      %v8803 = vld [vmem:[%s3419 + $0x60] sm:$0xff]
      %v8804 = vld [vmem:[%s3419 + $0x68] sm:$0xff]
      %v8805 = vld [vmem:[%s3419 + $0x70] sm:$0xff]
      %v8806 = vld [vmem:[%s3419 + $0x78] sm:$0xff]
      %v8807 = vld [vmem:[%s3419 + $0x80] sm:$0xff]
      %v8808 = vld [vmem:[%s3419 + $0x88] sm:$0xff]
      %v8809 = vld [vmem:[%s3419 + $0x90] sm:$0xff]
      %v8810 = vld [vmem:[%s3419 + $0x98] sm:$0xff]
      %v8811 = vld [vmem:[%s3419 + $0xa0] sm:$0xff]
      %v8812 = vld [vmem:[%s3419 + $0xa8] sm:$0xff]
      %v8813 = vld [vmem:[%s3419 + $0xb0] sm:$0xff]
      %v8814 = vld [vmem:[%s3419 + $0xb8] sm:$0xff]
      %v8815 = vld [vmem:[%s3419 + $0xc0] sm:$0xff]
      %v8816 = vld [vmem:[%s3419 + $0xc8] sm:$0xff]
      %v8817 = vld [vmem:[%s3419 + $0xd0] sm:$0xff]
      %v8818 = vld [vmem:[%s3419 + $0xd8] sm:$0xff]
      %v8819 = vld [vmem:[%s3419 + $0xe0] sm:$0xff]
      %v8820 = vld [vmem:[%s3419 + $0xe8] sm:$0xff]
      %v8821 = vld [vmem:[%s3419 + $0xf0] sm:$0xff]
      %v8822 = vld [vmem:[%s3419 + $0xf8] sm:$0xff]
      %8824 = vset.pattern.permute.xlu0 0
      %8825 = vperm.xlu0 %8824, %v8791
      %v8826 = vpop.permute.xlu0 %8825
      %8829 = vset.pattern.permute.xlu0 0
      %8830 = vperm.xlu0 %8829, %v8792
      %v8831 = vpop.permute.xlu0 %8830
      %8834 = vset.pattern.permute.xlu0 0
      %8835 = vperm.xlu0 %8834, %v8793
      %v8836 = vpop.permute.xlu0 %8835
      %8839 = vset.pattern.permute.xlu0 0
      %8840 = vperm.xlu0 %8839, %v8794
      %v8841 = vpop.permute.xlu0 %8840
      %8844 = vset.pattern.permute.xlu0 0
      %8845 = vperm.xlu0 %8844, %v8795
      %v8846 = vpop.permute.xlu0 %8845
      %8849 = vset.pattern.permute.xlu0 0
      %8850 = vperm.xlu0 %8849, %v8796
      %v8851 = vpop.permute.xlu0 %8850
      %8854 = vset.pattern.permute.xlu0 0
      %8855 = vperm.xlu0 %8854, %v8797
      %v8856 = vpop.permute.xlu0 %8855
      %8859 = vset.pattern.permute.xlu0 0
      %8860 = vperm.xlu0 %8859, %v8798
      %v8861 = vpop.permute.xlu0 %8860
      %8864 = vset.pattern.permute.xlu0 0
      %8865 = vperm.xlu0 %8864, %v8799
      %v8866 = vpop.permute.xlu0 %8865
      %8869 = vset.pattern.permute.xlu0 0
      %8870 = vperm.xlu0 %8869, %v8800
      %v8871 = vpop.permute.xlu0 %8870
      %8874 = vset.pattern.permute.xlu0 0
      %8875 = vperm.xlu0 %8874, %v8801
      %v8876 = vpop.permute.xlu0 %8875
      %8879 = vset.pattern.permute.xlu0 0
      %8880 = vperm.xlu0 %8879, %v8802
      %v8881 = vpop.permute.xlu0 %8880
      %8884 = vset.pattern.permute.xlu0 0
      %8885 = vperm.xlu0 %8884, %v8803
      %v8886 = vpop.permute.xlu0 %8885
      %8889 = vset.pattern.permute.xlu0 0
      %8890 = vperm.xlu0 %8889, %v8804
      %v8891 = vpop.permute.xlu0 %8890
      %8894 = vset.pattern.permute.xlu0 0
      %8895 = vperm.xlu0 %8894, %v8805
      %v8896 = vpop.permute.xlu0 %8895
      %8899 = vset.pattern.permute.xlu0 0
      %8900 = vperm.xlu0 %8899, %v8806
      %v8901 = vpop.permute.xlu0 %8900
      %8904 = vset.pattern.permute.xlu0 0
      %8905 = vperm.xlu0 %8904, %v8807
      %v8906 = vpop.permute.xlu0 %8905
      %8909 = vset.pattern.permute.xlu0 0
      %8910 = vperm.xlu0 %8909, %v8808
      %v8911 = vpop.permute.xlu0 %8910
      %8914 = vset.pattern.permute.xlu0 0
      %8915 = vperm.xlu0 %8914, %v8809
      %v8916 = vpop.permute.xlu0 %8915
      %8919 = vset.pattern.permute.xlu0 0
      %8920 = vperm.xlu0 %8919, %v8810
      %v8921 = vpop.permute.xlu0 %8920
      %8924 = vset.pattern.permute.xlu0 0
      %8925 = vperm.xlu0 %8924, %v8811
      %v8926 = vpop.permute.xlu0 %8925
      %8929 = vset.pattern.permute.xlu0 0
      %8930 = vperm.xlu0 %8929, %v8812
      %v8931 = vpop.permute.xlu0 %8930
      %8934 = vset.pattern.permute.xlu0 0
      %8935 = vperm.xlu0 %8934, %v8813
      %v8936 = vpop.permute.xlu0 %8935
      %8939 = vset.pattern.permute.xlu0 0
      %8940 = vperm.xlu0 %8939, %v8814
      %v8941 = vpop.permute.xlu0 %8940
      %8944 = vset.pattern.permute.xlu0 0
      %8945 = vperm.xlu0 %8944, %v8815
      %v8946 = vpop.permute.xlu0 %8945
      %8949 = vset.pattern.permute.xlu0 0
      %8950 = vperm.xlu0 %8949, %v8816
      %v8951 = vpop.permute.xlu0 %8950
      %8954 = vset.pattern.permute.xlu0 0
      %8955 = vperm.xlu0 %8954, %v8817
      %v8956 = vpop.permute.xlu0 %8955
      %8959 = vset.pattern.permute.xlu0 0
      %8960 = vperm.xlu0 %8959, %v8818
      %v8961 = vpop.permute.xlu0 %8960
      %8964 = vset.pattern.permute.xlu0 0
      %8965 = vperm.xlu0 %8964, %v8819
      %v8966 = vpop.permute.xlu0 %8965
      %8969 = vset.pattern.permute.xlu0 0
      %8970 = vperm.xlu0 %8969, %v8820
      %v8971 = vpop.permute.xlu0 %8970
      %8974 = vset.pattern.permute.xlu0 0
      %8975 = vperm.xlu0 %8974, %v8821
      %v8976 = vpop.permute.xlu0 %8975
      %8979 = vset.pattern.permute.xlu0 0
      %8980 = vperm.xlu0 %8979, %v8822
      %v8981 = vpop.permute.xlu0 %8980
      %v8983 = vmul.f32 %v8759, %v8826
      %v8984 = vmul.f32 %v8760, %v8831
      %v8985 = vmul.f32 %v8761, %v8836
      %v8986 = vmul.f32 %v8762, %v8841
      %v8987 = vmul.f32 %v8763, %v8846
      %v8988 = vmul.f32 %v8764, %v8851
      %v8989 = vmul.f32 %v8765, %v8856
      %v8990 = vmul.f32 %v8766, %v8861
      %v8991 = vmul.f32 %v8767, %v8866
      %v8992 = vmul.f32 %v8768, %v8871
      %v8993 = vmul.f32 %v8769, %v8876
      %v8994 = vmul.f32 %v8770, %v8881
      %v8995 = vmul.f32 %v8771, %v8886
      %v8996 = vmul.f32 %v8772, %v8891
      %v8997 = vmul.f32 %v8773, %v8896
      %v8998 = vmul.f32 %v8774, %v8901
      %v8999 = vmul.f32 %v8775, %v8906
      %v9000 = vmul.f32 %v8776, %v8911
      %v9001 = vmul.f32 %v8777, %v8916
      %v9002 = vmul.f32 %v8778, %v8921
      %v9003 = vmul.f32 %v8779, %v8926
      %v9004 = vmul.f32 %v8780, %v8931
      %v9005 = vmul.f32 %v8781, %v8936
      %v9006 = vmul.f32 %v8782, %v8941
      %v9007 = vmul.f32 %v8783, %v8946
      %v9008 = vmul.f32 %v8784, %v8951
      %v9009 = vmul.f32 %v8785, %v8956
      %v9010 = vmul.f32 %v8786, %v8961
      %v9011 = vmul.f32 %v8787, %v8966
      %v9012 = vmul.f32 %v8788, %v8971
      %v9013 = vmul.f32 %v8789, %v8976
      %v9014 = vmul.f32 %v8790, %v8981
      %s9015 = scalar_lea.vmem %s6, 20
      %v9016 = vld [vmem:[%s9015] sm:$0xf]
      %v9018 = vsel %vm392, %v8983, 0
      %v9021 = vsel %vm392, %v8984, 0
      %v9024 = vsel %vm392, %v8985, 0
      %v9027 = vsel %vm392, %v8986, 0
      %v9030 = vsel %vm392, %v8987, 0
      %v9033 = vsel %vm392, %v8988, 0
      %v9036 = vsel %vm392, %v8989, 0
      %v9039 = vsel %vm392, %v8990, 0
      %v9042 = vsel %vm392, %v8991, 0
      %v9045 = vsel %vm392, %v8992, 0
      %v9048 = vsel %vm392, %v8993, 0
      %v9051 = vsel %vm392, %v8994, 0
      %v9054 = vsel %vm392, %v8995, 0
      %v9057 = vsel %vm392, %v8996, 0
      %v9060 = vsel %vm392, %v8997, 0
      %v9063 = vsel %vm392, %v8998, 0
      %v9066 = vsel %vm392, %v8999, 0
      %v9069 = vsel %vm392, %v9000, 0
      %v9072 = vsel %vm392, %v9001, 0
      %v9075 = vsel %vm392, %v9002, 0
      %v9078 = vsel %vm392, %v9003, 0
      %v9081 = vsel %vm392, %v9004, 0
      %v9084 = vsel %vm392, %v9005, 0
      %v9087 = vsel %vm392, %v9006, 0
      %v9090 = vsel %vm392, %v9007, 0
      %v9093 = vsel %vm392, %v9008, 0
      %v9096 = vsel %vm392, %v9009, 0
      %v9099 = vsel %vm392, %v9010, 0
      %v9102 = vsel %vm392, %v9011, 0
      %v9105 = vsel %vm392, %v9012, 0
      %v9108 = vsel %vm392, %v9013, 0
      %v9111 = vsel %vm392, %v9014, 0
      %v9114 = vsel %vm6588, %v9016, 0
      %9116 = vmatprep.subr.mxu0 0.0
      %9117 = vmatpush1.msra.mxu0 %v9114
      %9118 = vmatprep.subr.mxu0 0.0
      %9119 = vmatpush1.msra.mxu0 0.0
      %9120 = vmatprep.subr.mxu0 0.0
      %9121 = vmatpush1.msra.mxu0 0.0
      %9122 = vmatprep.subr.mxu0 0.0
      %9123 = vmatpush1.msra.mxu0 0.0
      %9124 = vmatprep.subr.mxu0 0.0
      %9125 = vmatpush1.msra.mxu0 0.0
      %9126 = vmatprep.subr.mxu0 0.0
      %9127 = vmatpush1.msra.mxu0 0.0
      %9128 = vmatprep.subr.mxu0 0.0
      %9129 = vmatpush1.msra.mxu0 0.0
      %9130 = vmatprep.subr.mxu0 0.0
      %9131 = vmatpush1.msra.mxu0 0.0
      %9132 = vmatprep.subr.mxu0 0.0
      %9133 = vmatpush1.msra.mxu0 0.0
      %9134 = vmatprep.subr.mxu0 0.0
      %9135 = vmatpush1.msra.mxu0 0.0
      %9136 = vmatprep.subr.mxu0 0.0
      %9137 = vmatpush1.msra.mxu0 0.0
      %9138 = vmatprep.subr.mxu0 0.0
      %9139 = vmatpush1.msra.mxu0 0.0
      %9140 = vmatprep.subr.mxu0 0.0
      %9141 = vmatpush1.msra.mxu0 0.0
      %9142 = vmatprep.subr.mxu0 0.0
      %9143 = vmatpush1.msra.mxu0 0.0
      %9144 = vmatprep.subr.mxu0 0.0
      %9145 = vmatpush1.msra.mxu0 0.0
      %9146 = vmatprep.subr.mxu0 0.0
      %9147 = vmatpush1.msra.mxu0 0.0
      %9148 = vmatprep.subr.mxu0 0.0
      %9149 = vmatpush1.msra.mxu0 0.0
      %9150 = vmatprep.subr.mxu0 0.0
      %9151 = vmatpush1.msra.mxu0 0.0
      %9152 = vmatprep.subr.mxu0 0.0
      %9153 = vmatpush1.msra.mxu0 0.0
      %9154 = vmatprep.subr.mxu0 0.0
      %9155 = vmatpush1.msra.mxu0 0.0
      %9156 = vmatprep.subr.mxu0 0.0
      %9157 = vmatpush1.msra.mxu0 0.0
      %9158 = vmatprep.subr.mxu0 0.0
      %9159 = vmatpush1.msra.mxu0 0.0
      %9160 = vmatprep.subr.mxu0 0.0
      %9161 = vmatpush1.msra.mxu0 0.0
      %9162 = vmatprep.subr.mxu0 0.0
      %9163 = vmatpush1.msra.mxu0 0.0
      %9164 = vmatprep.subr.mxu0 0.0
      %9165 = vmatpush1.msra.mxu0 0.0
      %9166 = vmatprep.subr.mxu0 0.0
      %9167 = vmatpush1.msra.mxu0 0.0
      %9168 = vmatprep.subr.mxu0 0.0
      %9169 = vmatpush1.msra.mxu0 0.0
      %9170 = vmatprep.subr.mxu0 0.0
      %9171 = vmatpush1.msra.mxu0 0.0
      %9172 = vmatprep.subr.mxu0 0.0
      %9173 = vmatpush1.msra.mxu0 0.0
      %9174 = vmatprep.subr.mxu0 0.0
      %9175 = vmatpush1.msra.mxu0 0.0
      %9176 = vmatprep.subr.mxu0 0.0
      %9177 = vmatpush1.msra.mxu0 0.0
      %9178 = vmatprep.subr.mxu0 0.0
      %9179 = vmatpush1.msra.mxu0 0.0
      %9180 = vmatprep.mubr.f32.mxu0 0.0
      %9181 = vmatmul.mubr.f32.gmra.mrb[0].mxu0 %v9018
      %v9182 = vpop.f32.mrb[0].mxu0
      %v9183 = vadd.f32 0.0, %v9182
      %v9184 = vpop.f32.mrb[0].mxu0
      %9185 = vmatprep.mubr.f32.mxu0 0.0
      %9186 = vmatmul.mubr.f32.gmra.mrb[0].mxu0 %v9021
      %v9187 = vpop.f32.mrb[0].mxu0
      %v9188 = vadd.f32 0.0, %v9187
      %v9189 = vpop.f32.mrb[0].mxu0
      %9190 = vmatprep.mubr.f32.mxu0 0.0
      %9191 = vmatmul.mubr.f32.gmra.mrb[0].mxu0 %v9024
      %v9192 = vpop.f32.mrb[0].mxu0
      %v9193 = vadd.f32 0.0, %v9192
      %v9194 = vpop.f32.mrb[0].mxu0
      %9195 = vmatprep.mubr.f32.mxu0 0.0
      %9196 = vmatmul.mubr.f32.gmra.mrb[0].mxu0 %v9027
      %v9197 = vpop.f32.mrb[0].mxu0
      %v9198 = vadd.f32 0.0, %v9197
      %v9199 = vpop.f32.mrb[0].mxu0
      %9200 = vmatprep.mubr.f32.mxu0 0.0
      %9201 = vmatmul.mubr.f32.gmra.mrb[0].mxu0 %v9030
      %v9202 = vpop.f32.mrb[0].mxu0
      %v9203 = vadd.f32 0.0, %v9202
      %v9204 = vpop.f32.mrb[0].mxu0
      %9205 = vmatprep.mubr.f32.mxu0 0.0
      %9206 = vmatmul.mubr.f32.gmra.mrb[0].mxu0 %v9033
      %v9207 = vpop.f32.mrb[0].mxu0
      %v9208 = vadd.f32 0.0, %v9207
      %v9209 = vpop.f32.mrb[0].mxu0
      %9210 = vmatprep.mubr.f32.mxu0 0.0
      %9211 = vmatmul.mubr.f32.gmra.mrb[0].mxu0 %v9036
      %v9212 = vpop.f32.mrb[0].mxu0
      %v9213 = vadd.f32 0.0, %v9212
      %v9214 = vpop.f32.mrb[0].mxu0
      %9215 = vmatprep.mubr.f32.mxu0 0.0
      %9216 = vmatmul.mubr.f32.gmra.mrb[0].mxu0 %v9039
      %v9217 = vpop.f32.mrb[0].mxu0
      %v9218 = vadd.f32 0.0, %v9217
      %v9219 = vpop.f32.mrb[0].mxu0
      %9220 = vmatprep.mubr.f32.mxu0 0.0
      %9221 = vmatmul.mubr.f32.gmra.mrb[0].mxu0 %v9042
      %v9222 = vpop.f32.mrb[0].mxu0
      %v9223 = vadd.f32 0.0, %v9222
      %v9224 = vpop.f32.mrb[0].mxu0
      %9225 = vmatprep.mubr.f32.mxu0 0.0
      %9226 = vmatmul.mubr.f32.gmra.mrb[0].mxu0 %v9045
      %v9227 = vpop.f32.mrb[0].mxu0
      %v9228 = vadd.f32 0.0, %v9227
      %v9229 = vpop.f32.mrb[0].mxu0
      %9230 = vmatprep.mubr.f32.mxu0 0.0
      %9231 = vmatmul.mubr.f32.gmra.mrb[0].mxu0 %v9048
      %v9232 = vpop.f32.mrb[0].mxu0
      %v9233 = vadd.f32 0.0, %v9232
      %v9234 = vpop.f32.mrb[0].mxu0
      %9235 = vmatprep.mubr.f32.mxu0 0.0
      %9236 = vmatmul.mubr.f32.gmra.mrb[0].mxu0 %v9051
      %v9237 = vpop.f32.mrb[0].mxu0
      %v9238 = vadd.f32 0.0, %v9237
      %v9239 = vpop.f32.mrb[0].mxu0
      %9240 = vmatprep.mubr.f32.mxu0 0.0
      %9241 = vmatmul.mubr.f32.gmra.mrb[0].mxu0 %v9054
      %v9242 = vpop.f32.mrb[0].mxu0
      %v9243 = vadd.f32 0.0, %v9242
      %v9244 = vpop.f32.mrb[0].mxu0
      %9245 = vmatprep.mubr.f32.mxu0 0.0
      %9246 = vmatmul.mubr.f32.gmra.mrb[0].mxu0 %v9057
      %v9247 = vpop.f32.mrb[0].mxu0
      %v9248 = vadd.f32 0.0, %v9247
      %v9249 = vpop.f32.mrb[0].mxu0
      %9250 = vmatprep.mubr.f32.mxu0 0.0
      %9251 = vmatmul.mubr.f32.gmra.mrb[0].mxu0 %v9060
      %v9252 = vpop.f32.mrb[0].mxu0
      %v9253 = vadd.f32 0.0, %v9252
      %v9254 = vpop.f32.mrb[0].mxu0
      %9255 = vmatprep.mubr.f32.mxu0 0.0
      %9256 = vmatmul.mubr.f32.gmra.mrb[0].mxu0 %v9063
      %v9257 = vpop.f32.mrb[0].mxu0
      %v9258 = vadd.f32 0.0, %v9257
      %v9259 = vpop.f32.mrb[0].mxu0
      %9260 = vmatprep.mubr.f32.mxu0 0.0
      %9261 = vmatmul.mubr.f32.gmra.mrb[0].mxu0 %v9066
      %v9262 = vpop.f32.mrb[0].mxu0
      %v9263 = vadd.f32 0.0, %v9262
      %v9264 = vpop.f32.mrb[0].mxu0
      %9265 = vmatprep.mubr.f32.mxu0 0.0
      %9266 = vmatmul.mubr.f32.gmra.mrb[0].mxu0 %v9069
      %v9267 = vpop.f32.mrb[0].mxu0
      %v9268 = vadd.f32 0.0, %v9267
      %v9269 = vpop.f32.mrb[0].mxu0
      %9270 = vmatprep.mubr.f32.mxu0 0.0
      %9271 = vmatmul.mubr.f32.gmra.mrb[0].mxu0 %v9072
      %v9272 = vpop.f32.mrb[0].mxu0
      %v9273 = vadd.f32 0.0, %v9272
      %v9274 = vpop.f32.mrb[0].mxu0
      %9275 = vmatprep.mubr.f32.mxu0 0.0
      %9276 = vmatmul.mubr.f32.gmra.mrb[0].mxu0 %v9075
      %v9277 = vpop.f32.mrb[0].mxu0
      %v9278 = vadd.f32 0.0, %v9277
      %v9279 = vpop.f32.mrb[0].mxu0
      %9280 = vmatprep.mubr.f32.mxu0 0.0
      %9281 = vmatmul.mubr.f32.gmra.mrb[0].mxu0 %v9078
      %v9282 = vpop.f32.mrb[0].mxu0
      %v9283 = vadd.f32 0.0, %v9282
      %v9284 = vpop.f32.mrb[0].mxu0
      %9285 = vmatprep.mubr.f32.mxu0 0.0
      %9286 = vmatmul.mubr.f32.gmra.mrb[0].mxu0 %v9081
      %v9287 = vpop.f32.mrb[0].mxu0
      %v9288 = vadd.f32 0.0, %v9287
      %v9289 = vpop.f32.mrb[0].mxu0
      %9290 = vmatprep.mubr.f32.mxu0 0.0
      %9291 = vmatmul.mubr.f32.gmra.mrb[0].mxu0 %v9084
      %v9292 = vpop.f32.mrb[0].mxu0
      %v9293 = vadd.f32 0.0, %v9292
      %v9294 = vpop.f32.mrb[0].mxu0
      %9295 = vmatprep.mubr.f32.mxu0 0.0
      %9296 = vmatmul.mubr.f32.gmra.mrb[0].mxu0 %v9087
      %v9297 = vpop.f32.mrb[0].mxu0
      %v9298 = vadd.f32 0.0, %v9297
      %v9299 = vpop.f32.mrb[0].mxu0
      %9300 = vmatprep.mubr.f32.mxu0 0.0
      %9301 = vmatmul.mubr.f32.gmra.mrb[0].mxu0 %v9090
      %v9302 = vpop.f32.mrb[0].mxu0
      %v9303 = vadd.f32 0.0, %v9302
      %v9304 = vpop.f32.mrb[0].mxu0
      %9305 = vmatprep.mubr.f32.mxu0 0.0
      %9306 = vmatmul.mubr.f32.gmra.mrb[0].mxu0 %v9093
      %v9307 = vpop.f32.mrb[0].mxu0
      %v9308 = vadd.f32 0.0, %v9307
      %v9309 = vpop.f32.mrb[0].mxu0
      %9310 = vmatprep.mubr.f32.mxu0 0.0
      %9311 = vmatmul.mubr.f32.gmra.mrb[0].mxu0 %v9096
      %v9312 = vpop.f32.mrb[0].mxu0
      %v9313 = vadd.f32 0.0, %v9312
      %v9314 = vpop.f32.mrb[0].mxu0
      %9315 = vmatprep.mubr.f32.mxu0 0.0
      %9316 = vmatmul.mubr.f32.gmra.mrb[0].mxu0 %v9099
      %v9317 = vpop.f32.mrb[0].mxu0
      %v9318 = vadd.f32 0.0, %v9317
      %v9319 = vpop.f32.mrb[0].mxu0
      %9320 = vmatprep.mubr.f32.mxu0 0.0
      %9321 = vmatmul.mubr.f32.gmra.mrb[0].mxu0 %v9102
      %v9322 = vpop.f32.mrb[0].mxu0
      %v9323 = vadd.f32 0.0, %v9322
      %v9324 = vpop.f32.mrb[0].mxu0
      %9325 = vmatprep.mubr.f32.mxu0 0.0
      %9326 = vmatmul.mubr.f32.gmra.mrb[0].mxu0 %v9105
      %v9327 = vpop.f32.mrb[0].mxu0
      %v9328 = vadd.f32 0.0, %v9327
      %v9329 = vpop.f32.mrb[0].mxu0
      %9330 = vmatprep.mubr.f32.mxu0 0.0
      %9331 = vmatmul.mubr.f32.gmra.mrb[0].mxu0 %v9108
      %v9332 = vpop.f32.mrb[0].mxu0
      %v9333 = vadd.f32 0.0, %v9332
      %v9334 = vpop.f32.mrb[0].mxu0
      %9335 = vmatprep.mubr.f32.mxu0 0.0
      %9336 = vmatmul.mubr.f32.gmra.mrb[0].mxu0 %v9111
      %v9337 = vpop.f32.mrb[0].mxu0
      %v9338 = vadd.f32 0.0, %v9337
      %v9339 = vpop.f32.mrb[0].mxu0
      %9340 = vdwg.mxu0
      %v9341 = vadd.f32 %v8727, %v9183
      %v9342 = vadd.f32 %v8728, %v9188
      %v9343 = vadd.f32 %v8729, %v9193
      %v9344 = vadd.f32 %v8730, %v9198
      %v9345 = vadd.f32 %v8731, %v9203
      %v9346 = vadd.f32 %v8732, %v9208
      %v9347 = vadd.f32 %v8733, %v9213
      %v9348 = vadd.f32 %v8734, %v9218
      %v9349 = vadd.f32 %v8735, %v9223
      %v9350 = vadd.f32 %v8736, %v9228
      %v9351 = vadd.f32 %v8737, %v9233
      %v9352 = vadd.f32 %v8738, %v9238
      %v9353 = vadd.f32 %v8739, %v9243
      %v9354 = vadd.f32 %v8740, %v9248
      %v9355 = vadd.f32 %v8741, %v9253
      %v9356 = vadd.f32 %v8742, %v9258
      %v9357 = vadd.f32 %v8743, %v9263
      %v9358 = vadd.f32 %v8744, %v9268
      %v9359 = vadd.f32 %v8745, %v9273
      %v9360 = vadd.f32 %v8746, %v9278
      %v9361 = vadd.f32 %v8747, %v9283
      %v9362 = vadd.f32 %v8748, %v9288
      %v9363 = vadd.f32 %v8749, %v9293
      %v9364 = vadd.f32 %v8750, %v9298
      %v9365 = vadd.f32 %v8751, %v9303
      %v9366 = vadd.f32 %v8752, %v9308
      %v9367 = vadd.f32 %v8753, %v9313
      %v9368 = vadd.f32 %v8754, %v9318
      %v9369 = vadd.f32 %v8755, %v9323
      %v9370 = vadd.f32 %v8756, %v9328
      %v9371 = vadd.f32 %v8757, %v9333
      %v9372 = vadd.f32 %v8758, %v9338
      %v9373 = vld [vmem:[#allocation2 + $0x27] sm:$0xff]
      %v9374 = vld [vmem:[#allocation2 + $0x2f] sm:$0xff]
      %v9375 = vld [vmem:[#allocation2 + $0x37] sm:$0xff]
      %v9376 = vld [vmem:[#allocation2 + $0x3f] sm:$0xff]
      %v9377 = vld [vmem:[#allocation2 + $0x47] sm:$0xff]
      %v9378 = vld [vmem:[#allocation2 + $0x4f] sm:$0xff]
      %v9379 = vld [vmem:[#allocation2 + $0x57] sm:$0xff]
      %v9380 = vld [vmem:[#allocation2 + $0x5f] sm:$0xff]
      %v9381 = vld [vmem:[#allocation2 + $0x67] sm:$0xff]
      %v9382 = vld [vmem:[#allocation2 + $0x6f] sm:$0xff]
      %v9383 = vld [vmem:[#allocation2 + $0x77] sm:$0xff]
      %v9384 = vld [vmem:[#allocation2 + $0x7f] sm:$0xff]
      %v9385 = vld [vmem:[#allocation2 + $0x87] sm:$0xff]
      %v9386 = vld [vmem:[#allocation2 + $0x8f] sm:$0xff]
      %v9387 = vld [vmem:[#allocation2 + $0x97] sm:$0xff]
      %v9388 = vld [vmem:[#allocation2 + $0x9f] sm:$0xff]
      %v9389 = vld [vmem:[#allocation2 + $0xa7] sm:$0xff]
      %v9390 = vld [vmem:[#allocation2 + $0xaf] sm:$0xff]
      %v9391 = vld [vmem:[#allocation2 + $0xb7] sm:$0xff]
      %v9392 = vld [vmem:[#allocation2 + $0xbf] sm:$0xff]
      %v9393 = vld [vmem:[#allocation2 + $0xc7] sm:$0xff]
      %v9394 = vld [vmem:[#allocation2 + $0xcf] sm:$0xff]
      %v9395 = vld [vmem:[#allocation2 + $0xd7] sm:$0xff]
      %v9396 = vld [vmem:[#allocation2 + $0xdf] sm:$0xff]
      %v9397 = vld [vmem:[#allocation2 + $0xe7] sm:$0xff]
      %v9398 = vld [vmem:[#allocation2 + $0xef] sm:$0xff]
      %v9399 = vld [vmem:[#allocation2 + $0xf7] sm:$0xff]
      %v9400 = vld [vmem:[#allocation2 + $0xff] sm:$0xff]
      %v9401 = vld [vmem:[#allocation2 + $0x107] sm:$0xff]
      %v9402 = vld [vmem:[#allocation2 + $0x10f] sm:$0xff]
      %v9403 = vld [vmem:[#allocation2 + $0x117] sm:$0xff]
      %v9404 = vld [vmem:[#allocation2 + $0x11f] sm:$0xff]
      %v9405 = vld [vmem:[%s4031] sm:$0xff]
      %v9406 = vld [vmem:[%s4031 + $0x8] sm:$0xff]
      %v9407 = vld [vmem:[%s4031 + $0x10] sm:$0xff]
      %v9408 = vld [vmem:[%s4031 + $0x18] sm:$0xff]
      %v9409 = vld [vmem:[%s4031 + $0x20] sm:$0xff]
      %v9410 = vld [vmem:[%s4031 + $0x28] sm:$0xff]
      %v9411 = vld [vmem:[%s4031 + $0x30] sm:$0xff]
      %v9412 = vld [vmem:[%s4031 + $0x38] sm:$0xff]
      %v9413 = vld [vmem:[%s4031 + $0x40] sm:$0xff]
      %v9414 = vld [vmem:[%s4031 + $0x48] sm:$0xff]
      %v9415 = vld [vmem:[%s4031 + $0x50] sm:$0xff]
      %v9416 = vld [vmem:[%s4031 + $0x58] sm:$0xff]
      %v9417 = vld [vmem:[%s4031 + $0x60] sm:$0xff]
      %v9418 = vld [vmem:[%s4031 + $0x68] sm:$0xff]
      %v9419 = vld [vmem:[%s4031 + $0x70] sm:$0xff]
      %v9420 = vld [vmem:[%s4031 + $0x78] sm:$0xff]
      %v9421 = vld [vmem:[%s4031 + $0x80] sm:$0xff]
      %v9422 = vld [vmem:[%s4031 + $0x88] sm:$0xff]
      %v9423 = vld [vmem:[%s4031 + $0x90] sm:$0xff]
      %v9424 = vld [vmem:[%s4031 + $0x98] sm:$0xff]
      %v9425 = vld [vmem:[%s4031 + $0xa0] sm:$0xff]
      %v9426 = vld [vmem:[%s4031 + $0xa8] sm:$0xff]
      %v9427 = vld [vmem:[%s4031 + $0xb0] sm:$0xff]
      %v9428 = vld [vmem:[%s4031 + $0xb8] sm:$0xff]
      %v9429 = vld [vmem:[%s4031 + $0xc0] sm:$0xff]
      %v9430 = vld [vmem:[%s4031 + $0xc8] sm:$0xff]
      %v9431 = vld [vmem:[%s4031 + $0xd0] sm:$0xff]
      %v9432 = vld [vmem:[%s4031 + $0xd8] sm:$0xff]
      %v9433 = vld [vmem:[%s4031 + $0xe0] sm:$0xff]
      %v9434 = vld [vmem:[%s4031 + $0xe8] sm:$0xff]
      %v9435 = vld [vmem:[%s4031 + $0xf0] sm:$0xff]
      %v9436 = vld [vmem:[%s4031 + $0xf8] sm:$0xff]
      %9438 = vset.pattern.permute.xlu0 0
      %9439 = vperm.xlu0 %9438, %v9405
      %v9440 = vpop.permute.xlu0 %9439
      %9443 = vset.pattern.permute.xlu0 0
      %9444 = vperm.xlu0 %9443, %v9406
      %v9445 = vpop.permute.xlu0 %9444
      %9448 = vset.pattern.permute.xlu0 0
      %9449 = vperm.xlu0 %9448, %v9407
      %v9450 = vpop.permute.xlu0 %9449
      %9453 = vset.pattern.permute.xlu0 0
      %9454 = vperm.xlu0 %9453, %v9408
      %v9455 = vpop.permute.xlu0 %9454
      %9458 = vset.pattern.permute.xlu0 0
      %9459 = vperm.xlu0 %9458, %v9409
      %v9460 = vpop.permute.xlu0 %9459
      %9463 = vset.pattern.permute.xlu0 0
      %9464 = vperm.xlu0 %9463, %v9410
      %v9465 = vpop.permute.xlu0 %9464
      %9468 = vset.pattern.permute.xlu0 0
      %9469 = vperm.xlu0 %9468, %v9411
      %v9470 = vpop.permute.xlu0 %9469
      %9473 = vset.pattern.permute.xlu0 0
      %9474 = vperm.xlu0 %9473, %v9412
      %v9475 = vpop.permute.xlu0 %9474
      %9478 = vset.pattern.permute.xlu0 0
      %9479 = vperm.xlu0 %9478, %v9413
      %v9480 = vpop.permute.xlu0 %9479
      %9483 = vset.pattern.permute.xlu0 0
      %9484 = vperm.xlu0 %9483, %v9414
      %v9485 = vpop.permute.xlu0 %9484
      %9488 = vset.pattern.permute.xlu0 0
      %9489 = vperm.xlu0 %9488, %v9415
      %v9490 = vpop.permute.xlu0 %9489
      %9493 = vset.pattern.permute.xlu0 0
      %9494 = vperm.xlu0 %9493, %v9416
      %v9495 = vpop.permute.xlu0 %9494
      %9498 = vset.pattern.permute.xlu0 0
      %9499 = vperm.xlu0 %9498, %v9417
      %v9500 = vpop.permute.xlu0 %9499
      %9503 = vset.pattern.permute.xlu0 0
      %9504 = vperm.xlu0 %9503, %v9418
      %v9505 = vpop.permute.xlu0 %9504
      %9508 = vset.pattern.permute.xlu0 0
      %9509 = vperm.xlu0 %9508, %v9419
      %v9510 = vpop.permute.xlu0 %9509
      %9513 = vset.pattern.permute.xlu0 0
      %9514 = vperm.xlu0 %9513, %v9420
      %v9515 = vpop.permute.xlu0 %9514
      %9518 = vset.pattern.permute.xlu0 0
      %9519 = vperm.xlu0 %9518, %v9421
      %v9520 = vpop.permute.xlu0 %9519
      %9523 = vset.pattern.permute.xlu0 0
      %9524 = vperm.xlu0 %9523, %v9422
      %v9525 = vpop.permute.xlu0 %9524
      %9528 = vset.pattern.permute.xlu0 0
      %9529 = vperm.xlu0 %9528, %v9423
      %v9530 = vpop.permute.xlu0 %9529
      %9533 = vset.pattern.permute.xlu0 0
      %9534 = vperm.xlu0 %9533, %v9424
      %v9535 = vpop.permute.xlu0 %9534
      %9538 = vset.pattern.permute.xlu0 0
      %9539 = vperm.xlu0 %9538, %v9425
      %v9540 = vpop.permute.xlu0 %9539
      %9543 = vset.pattern.permute.xlu0 0
      %9544 = vperm.xlu0 %9543, %v9426
      %v9545 = vpop.permute.xlu0 %9544
      %9548 = vset.pattern.permute.xlu0 0
      %9549 = vperm.xlu0 %9548, %v9427
      %v9550 = vpop.permute.xlu0 %9549
      %9553 = vset.pattern.permute.xlu0 0
      %9554 = vperm.xlu0 %9553, %v9428
      %v9555 = vpop.permute.xlu0 %9554
      %9558 = vset.pattern.permute.xlu0 0
      %9559 = vperm.xlu0 %9558, %v9429
      %v9560 = vpop.permute.xlu0 %9559
      %9563 = vset.pattern.permute.xlu0 0
      %9564 = vperm.xlu0 %9563, %v9430
      %v9565 = vpop.permute.xlu0 %9564
      %9568 = vset.pattern.permute.xlu0 0
      %9569 = vperm.xlu0 %9568, %v9431
      %v9570 = vpop.permute.xlu0 %9569
      %9573 = vset.pattern.permute.xlu0 0
      %9574 = vperm.xlu0 %9573, %v9432
      %v9575 = vpop.permute.xlu0 %9574
      %9578 = vset.pattern.permute.xlu0 0
      %9579 = vperm.xlu0 %9578, %v9433
      %v9580 = vpop.permute.xlu0 %9579
      %9583 = vset.pattern.permute.xlu0 0
      %9584 = vperm.xlu0 %9583, %v9434
      %v9585 = vpop.permute.xlu0 %9584
      %9588 = vset.pattern.permute.xlu0 0
      %9589 = vperm.xlu0 %9588, %v9435
      %v9590 = vpop.permute.xlu0 %9589
      %9593 = vset.pattern.permute.xlu0 0
      %9594 = vperm.xlu0 %9593, %v9436
      %v9595 = vpop.permute.xlu0 %9594
      %v9597 = vmul.f32 %v9373, %v9440
      %v9598 = vmul.f32 %v9374, %v9445
      %v9599 = vmul.f32 %v9375, %v9450
      %v9600 = vmul.f32 %v9376, %v9455
      %v9601 = vmul.f32 %v9377, %v9460
      %v9602 = vmul.f32 %v9378, %v9465
      %v9603 = vmul.f32 %v9379, %v9470
      %v9604 = vmul.f32 %v9380, %v9475
      %v9605 = vmul.f32 %v9381, %v9480
      %v9606 = vmul.f32 %v9382, %v9485
      %v9607 = vmul.f32 %v9383, %v9490
      %v9608 = vmul.f32 %v9384, %v9495
      %v9609 = vmul.f32 %v9385, %v9500
      %v9610 = vmul.f32 %v9386, %v9505
      %v9611 = vmul.f32 %v9387, %v9510
      %v9612 = vmul.f32 %v9388, %v9515
      %v9613 = vmul.f32 %v9389, %v9520
      %v9614 = vmul.f32 %v9390, %v9525
      %v9615 = vmul.f32 %v9391, %v9530
      %v9616 = vmul.f32 %v9392, %v9535
      %v9617 = vmul.f32 %v9393, %v9540
      %v9618 = vmul.f32 %v9394, %v9545
      %v9619 = vmul.f32 %v9395, %v9550
      %v9620 = vmul.f32 %v9396, %v9555
      %v9621 = vmul.f32 %v9397, %v9560
      %v9622 = vmul.f32 %v9398, %v9565
      %v9623 = vmul.f32 %v9399, %v9570
      %v9624 = vmul.f32 %v9400, %v9575
      %v9625 = vmul.f32 %v9401, %v9580
      %v9626 = vmul.f32 %v9402, %v9585
      %v9627 = vmul.f32 %v9403, %v9590
      %v9628 = vmul.f32 %v9404, %v9595
      %s9629 = scalar_lea.vmem %s6, 24
      %v9630 = vld [vmem:[%s9629] sm:$0xf]
      %v9632 = vsel %vm392, %v9597, 0
      %v9635 = vsel %vm392, %v9598, 0
      %v9638 = vsel %vm392, %v9599, 0
      %v9641 = vsel %vm392, %v9600, 0
      %v9644 = vsel %vm392, %v9601, 0
      %v9647 = vsel %vm392, %v9602, 0
      %v9650 = vsel %vm392, %v9603, 0
      %v9653 = vsel %vm392, %v9604, 0
      %v9656 = vsel %vm392, %v9605, 0
      %v9659 = vsel %vm392, %v9606, 0
      %v9662 = vsel %vm392, %v9607, 0
      %v9665 = vsel %vm392, %v9608, 0
      %v9668 = vsel %vm392, %v9609, 0
      %v9671 = vsel %vm392, %v9610, 0
      %v9674 = vsel %vm392, %v9611, 0
      %v9677 = vsel %vm392, %v9612, 0
      %v9680 = vsel %vm392, %v9613, 0
      %v9683 = vsel %vm392, %v9614, 0
      %v9686 = vsel %vm392, %v9615, 0
      %v9689 = vsel %vm392, %v9616, 0
      %v9692 = vsel %vm392, %v9617, 0
      %v9695 = vsel %vm392, %v9618, 0
      %v9698 = vsel %vm392, %v9619, 0
      %v9701 = vsel %vm392, %v9620, 0
      %v9704 = vsel %vm392, %v9621, 0
      %v9707 = vsel %vm392, %v9622, 0
      %v9710 = vsel %vm392, %v9623, 0
      %v9713 = vsel %vm392, %v9624, 0
      %v9716 = vsel %vm392, %v9625, 0
      %v9719 = vsel %vm392, %v9626, 0
      %v9722 = vsel %vm392, %v9627, 0
      %v9725 = vsel %vm392, %v9628, 0
      %v9728 = vsel %vm6588, %v9630, 0
      %9730 = vmatprep.subr.mxu0 0.0
      %9731 = vmatpush1.msra.mxu0 %v9728
      %9732 = vmatprep.subr.mxu0 0.0
      %9733 = vmatpush1.msra.mxu0 0.0
      %9734 = vmatprep.subr.mxu0 0.0
      %9735 = vmatpush1.msra.mxu0 0.0
      %9736 = vmatprep.subr.mxu0 0.0
      %9737 = vmatpush1.msra.mxu0 0.0
      %9738 = vmatprep.subr.mxu0 0.0
      %9739 = vmatpush1.msra.mxu0 0.0
      %9740 = vmatprep.subr.mxu0 0.0
      %9741 = vmatpush1.msra.mxu0 0.0
      %9742 = vmatprep.subr.mxu0 0.0
      %9743 = vmatpush1.msra.mxu0 0.0
      %9744 = vmatprep.subr.mxu0 0.0
      %9745 = vmatpush1.msra.mxu0 0.0
      %9746 = vmatprep.subr.mxu0 0.0
      %9747 = vmatpush1.msra.mxu0 0.0
      %9748 = vmatprep.subr.mxu0 0.0
      %9749 = vmatpush1.msra.mxu0 0.0
      %9750 = vmatprep.subr.mxu0 0.0
      %9751 = vmatpush1.msra.mxu0 0.0
      %9752 = vmatprep.subr.mxu0 0.0
      %9753 = vmatpush1.msra.mxu0 0.0
      %9754 = vmatprep.subr.mxu0 0.0
      %9755 = vmatpush1.msra.mxu0 0.0
      %9756 = vmatprep.subr.mxu0 0.0
      %9757 = vmatpush1.msra.mxu0 0.0
      %9758 = vmatprep.subr.mxu0 0.0
      %9759 = vmatpush1.msra.mxu0 0.0
      %9760 = vmatprep.subr.mxu0 0.0
      %9761 = vmatpush1.msra.mxu0 0.0
      %9762 = vmatprep.subr.mxu0 0.0
      %9763 = vmatpush1.msra.mxu0 0.0
      %9764 = vmatprep.subr.mxu0 0.0
      %9765 = vmatpush1.msra.mxu0 0.0
      %9766 = vmatprep.subr.mxu0 0.0
      %9767 = vmatpush1.msra.mxu0 0.0
      %9768 = vmatprep.subr.mxu0 0.0
      %9769 = vmatpush1.msra.mxu0 0.0
      %9770 = vmatprep.subr.mxu0 0.0
      %9771 = vmatpush1.msra.mxu0 0.0
      %9772 = vmatprep.subr.mxu0 0.0
      %9773 = vmatpush1.msra.mxu0 0.0
      %9774 = vmatprep.subr.mxu0 0.0
      %9775 = vmatpush1.msra.mxu0 0.0
      %9776 = vmatprep.subr.mxu0 0.0
      %9777 = vmatpush1.msra.mxu0 0.0
      %9778 = vmatprep.subr.mxu0 0.0
      %9779 = vmatpush1.msra.mxu0 0.0
      %9780 = vmatprep.subr.mxu0 0.0
      %9781 = vmatpush1.msra.mxu0 0.0
      %9782 = vmatprep.subr.mxu0 0.0
      %9783 = vmatpush1.msra.mxu0 0.0
      %9784 = vmatprep.subr.mxu0 0.0
      %9785 = vmatpush1.msra.mxu0 0.0
      %9786 = vmatprep.subr.mxu0 0.0
      %9787 = vmatpush1.msra.mxu0 0.0
      %9788 = vmatprep.subr.mxu0 0.0
      %9789 = vmatpush1.msra.mxu0 0.0
      %9790 = vmatprep.subr.mxu0 0.0
      %9791 = vmatpush1.msra.mxu0 0.0
      %9792 = vmatprep.subr.mxu0 0.0
      %9793 = vmatpush1.msra.mxu0 0.0
      %9794 = vmatprep.mubr.f32.mxu0 0.0
      %9795 = vmatmul.mubr.f32.gmra.mrb[0].mxu0 %v9632
      %v9796 = vpop.f32.mrb[0].mxu0
      %v9797 = vadd.f32 0.0, %v9796
      %v9798 = vpop.f32.mrb[0].mxu0
      %9799 = vmatprep.mubr.f32.mxu0 0.0
      %9800 = vmatmul.mubr.f32.gmra.mrb[0].mxu0 %v9635
      %v9801 = vpop.f32.mrb[0].mxu0
      %v9802 = vadd.f32 0.0, %v9801
      %v9803 = vpop.f32.mrb[0].mxu0
      %9804 = vmatprep.mubr.f32.mxu0 0.0
      %9805 = vmatmul.mubr.f32.gmra.mrb[0].mxu0 %v9638
      %v9806 = vpop.f32.mrb[0].mxu0
      %v9807 = vadd.f32 0.0, %v9806
      %v9808 = vpop.f32.mrb[0].mxu0
      %9809 = vmatprep.mubr.f32.mxu0 0.0
      %9810 = vmatmul.mubr.f32.gmra.mrb[0].mxu0 %v9641
      %v9811 = vpop.f32.mrb[0].mxu0
      %v9812 = vadd.f32 0.0, %v9811
      %v9813 = vpop.f32.mrb[0].mxu0
      %9814 = vmatprep.mubr.f32.mxu0 0.0
      %9815 = vmatmul.mubr.f32.gmra.mrb[0].mxu0 %v9644
      %v9816 = vpop.f32.mrb[0].mxu0
      %v9817 = vadd.f32 0.0, %v9816
      %v9818 = vpop.f32.mrb[0].mxu0
      %9819 = vmatprep.mubr.f32.mxu0 0.0
      %9820 = vmatmul.mubr.f32.gmra.mrb[0].mxu0 %v9647
      %v9821 = vpop.f32.mrb[0].mxu0
      %v9822 = vadd.f32 0.0, %v9821
      %v9823 = vpop.f32.mrb[0].mxu0
      %9824 = vmatprep.mubr.f32.mxu0 0.0
      %9825 = vmatmul.mubr.f32.gmra.mrb[0].mxu0 %v9650
      %v9826 = vpop.f32.mrb[0].mxu0
      %v9827 = vadd.f32 0.0, %v9826
      %v9828 = vpop.f32.mrb[0].mxu0
      %9829 = vmatprep.mubr.f32.mxu0 0.0
      %9830 = vmatmul.mubr.f32.gmra.mrb[0].mxu0 %v9653
      %v9831 = vpop.f32.mrb[0].mxu0
      %v9832 = vadd.f32 0.0, %v9831
      %v9833 = vpop.f32.mrb[0].mxu0
      %9834 = vmatprep.mubr.f32.mxu0 0.0
      %9835 = vmatmul.mubr.f32.gmra.mrb[0].mxu0 %v9656
      %v9836 = vpop.f32.mrb[0].mxu0
      %v9837 = vadd.f32 0.0, %v9836
      %v9838 = vpop.f32.mrb[0].mxu0
      %9839 = vmatprep.mubr.f32.mxu0 0.0
      %9840 = vmatmul.mubr.f32.gmra.mrb[0].mxu0 %v9659
      %v9841 = vpop.f32.mrb[0].mxu0
      %v9842 = vadd.f32 0.0, %v9841
      %v9843 = vpop.f32.mrb[0].mxu0
      %9844 = vmatprep.mubr.f32.mxu0 0.0
      %9845 = vmatmul.mubr.f32.gmra.mrb[0].mxu0 %v9662
      %v9846 = vpop.f32.mrb[0].mxu0
      %v9847 = vadd.f32 0.0, %v9846
      %v9848 = vpop.f32.mrb[0].mxu0
      %9849 = vmatprep.mubr.f32.mxu0 0.0
      %9850 = vmatmul.mubr.f32.gmra.mrb[0].mxu0 %v9665
      %v9851 = vpop.f32.mrb[0].mxu0
      %v9852 = vadd.f32 0.0, %v9851
      %v9853 = vpop.f32.mrb[0].mxu0
      %9854 = vmatprep.mubr.f32.mxu0 0.0
      %9855 = vmatmul.mubr.f32.gmra.mrb[0].mxu0 %v9668
      %v9856 = vpop.f32.mrb[0].mxu0
      %v9857 = vadd.f32 0.0, %v9856
      %v9858 = vpop.f32.mrb[0].mxu0
      %9859 = vmatprep.mubr.f32.mxu0 0.0
      %9860 = vmatmul.mubr.f32.gmra.mrb[0].mxu0 %v9671
      %v9861 = vpop.f32.mrb[0].mxu0
      %v9862 = vadd.f32 0.0, %v9861
      %v9863 = vpop.f32.mrb[0].mxu0
      %9864 = vmatprep.mubr.f32.mxu0 0.0
      %9865 = vmatmul.mubr.f32.gmra.mrb[0].mxu0 %v9674
      %v9866 = vpop.f32.mrb[0].mxu0
      %v9867 = vadd.f32 0.0, %v9866
      %v9868 = vpop.f32.mrb[0].mxu0
      %9869 = vmatprep.mubr.f32.mxu0 0.0
      %9870 = vmatmul.mubr.f32.gmra.mrb[0].mxu0 %v9677
      %v9871 = vpop.f32.mrb[0].mxu0
      %v9872 = vadd.f32 0.0, %v9871
      %v9873 = vpop.f32.mrb[0].mxu0
      %9874 = vmatprep.mubr.f32.mxu0 0.0
      %9875 = vmatmul.mubr.f32.gmra.mrb[0].mxu0 %v9680
      %v9876 = vpop.f32.mrb[0].mxu0
      %v9877 = vadd.f32 0.0, %v9876
      %v9878 = vpop.f32.mrb[0].mxu0
      %9879 = vmatprep.mubr.f32.mxu0 0.0
      %9880 = vmatmul.mubr.f32.gmra.mrb[0].mxu0 %v9683
      %v9881 = vpop.f32.mrb[0].mxu0
      %v9882 = vadd.f32 0.0, %v9881
      %v9883 = vpop.f32.mrb[0].mxu0
      %9884 = vmatprep.mubr.f32.mxu0 0.0
      %9885 = vmatmul.mubr.f32.gmra.mrb[0].mxu0 %v9686
      %v9886 = vpop.f32.mrb[0].mxu0
      %v9887 = vadd.f32 0.0, %v9886
      %v9888 = vpop.f32.mrb[0].mxu0
      %9889 = vmatprep.mubr.f32.mxu0 0.0
      %9890 = vmatmul.mubr.f32.gmra.mrb[0].mxu0 %v9689
      %v9891 = vpop.f32.mrb[0].mxu0
      %v9892 = vadd.f32 0.0, %v9891
      %v9893 = vpop.f32.mrb[0].mxu0
      %9894 = vmatprep.mubr.f32.mxu0 0.0
      %9895 = vmatmul.mubr.f32.gmra.mrb[0].mxu0 %v9692
      %v9896 = vpop.f32.mrb[0].mxu0
      %v9897 = vadd.f32 0.0, %v9896
      %v9898 = vpop.f32.mrb[0].mxu0
      %9899 = vmatprep.mubr.f32.mxu0 0.0
      %9900 = vmatmul.mubr.f32.gmra.mrb[0].mxu0 %v9695
      %v9901 = vpop.f32.mrb[0].mxu0
      %v9902 = vadd.f32 0.0, %v9901
      %v9903 = vpop.f32.mrb[0].mxu0
      %9904 = vmatprep.mubr.f32.mxu0 0.0
      %9905 = vmatmul.mubr.f32.gmra.mrb[0].mxu0 %v9698
      %v9906 = vpop.f32.mrb[0].mxu0
      %v9907 = vadd.f32 0.0, %v9906
      %v9908 = vpop.f32.mrb[0].mxu0
      %9909 = vmatprep.mubr.f32.mxu0 0.0
      %9910 = vmatmul.mubr.f32.gmra.mrb[0].mxu0 %v9701
      %v9911 = vpop.f32.mrb[0].mxu0
      %v9912 = vadd.f32 0.0, %v9911
      %v9913 = vpop.f32.mrb[0].mxu0
      %9914 = vmatprep.mubr.f32.mxu0 0.0
      %9915 = vmatmul.mubr.f32.gmra.mrb[0].mxu0 %v9704
      %v9916 = vpop.f32.mrb[0].mxu0
      %v9917 = vadd.f32 0.0, %v9916
      %v9918 = vpop.f32.mrb[0].mxu0
      %9919 = vmatprep.mubr.f32.mxu0 0.0
      %9920 = vmatmul.mubr.f32.gmra.mrb[0].mxu0 %v9707
      %v9921 = vpop.f32.mrb[0].mxu0
      %v9922 = vadd.f32 0.0, %v9921
      %v9923 = vpop.f32.mrb[0].mxu0
      %9924 = vmatprep.mubr.f32.mxu0 0.0
      %9925 = vmatmul.mubr.f32.gmra.mrb[0].mxu0 %v9710
      %v9926 = vpop.f32.mrb[0].mxu0
      %v9927 = vadd.f32 0.0, %v9926
      %v9928 = vpop.f32.mrb[0].mxu0
      %9929 = vmatprep.mubr.f32.mxu0 0.0
      %9930 = vmatmul.mubr.f32.gmra.mrb[0].mxu0 %v9713
      %v9931 = vpop.f32.mrb[0].mxu0
      %v9932 = vadd.f32 0.0, %v9931
      %v9933 = vpop.f32.mrb[0].mxu0
      %9934 = vmatprep.mubr.f32.mxu0 0.0
      %9935 = vmatmul.mubr.f32.gmra.mrb[0].mxu0 %v9716
      %v9936 = vpop.f32.mrb[0].mxu0
      %v9937 = vadd.f32 0.0, %v9936
      %v9938 = vpop.f32.mrb[0].mxu0
      %9939 = vmatprep.mubr.f32.mxu0 0.0
      %9940 = vmatmul.mubr.f32.gmra.mrb[0].mxu0 %v9719
      %v9941 = vpop.f32.mrb[0].mxu0
      %v9942 = vadd.f32 0.0, %v9941
      %v9943 = vpop.f32.mrb[0].mxu0
      %9944 = vmatprep.mubr.f32.mxu0 0.0
      %9945 = vmatmul.mubr.f32.gmra.mrb[0].mxu0 %v9722
      %v9946 = vpop.f32.mrb[0].mxu0
      %v9947 = vadd.f32 0.0, %v9946
      %v9948 = vpop.f32.mrb[0].mxu0
      %9949 = vmatprep.mubr.f32.mxu0 0.0
      %9950 = vmatmul.mubr.f32.gmra.mrb[0].mxu0 %v9725
      %v9951 = vpop.f32.mrb[0].mxu0
      %v9952 = vadd.f32 0.0, %v9951
      %v9953 = vpop.f32.mrb[0].mxu0
      %9954 = vdwg.mxu0
      %v9955 = vadd.f32 %v9341, %v9797
      %v9956 = vadd.f32 %v9342, %v9802
      %v9957 = vadd.f32 %v9343, %v9807
      %v9958 = vadd.f32 %v9344, %v9812
      %v9959 = vadd.f32 %v9345, %v9817
      %v9960 = vadd.f32 %v9346, %v9822
      %v9961 = vadd.f32 %v9347, %v9827
      %v9962 = vadd.f32 %v9348, %v9832
      %v9963 = vadd.f32 %v9349, %v9837
      %v9964 = vadd.f32 %v9350, %v9842
      %v9965 = vadd.f32 %v9351, %v9847
      %v9966 = vadd.f32 %v9352, %v9852
      %v9967 = vadd.f32 %v9353, %v9857
      %v9968 = vadd.f32 %v9354, %v9862
      %v9969 = vadd.f32 %v9355, %v9867
      %v9970 = vadd.f32 %v9356, %v9872
      %v9971 = vadd.f32 %v9357, %v9877
      %v9972 = vadd.f32 %v9358, %v9882
      %v9973 = vadd.f32 %v9359, %v9887
      %v9974 = vadd.f32 %v9360, %v9892
      %v9975 = vadd.f32 %v9361, %v9897
      %v9976 = vadd.f32 %v9362, %v9902
      %v9977 = vadd.f32 %v9363, %v9907
      %v9978 = vadd.f32 %v9364, %v9912
      %v9979 = vadd.f32 %v9365, %v9917
      %v9980 = vadd.f32 %v9366, %v9922
      %v9981 = vadd.f32 %v9367, %v9927
      %v9982 = vadd.f32 %v9368, %v9932
      %v9983 = vadd.f32 %v9369, %v9937
      %v9984 = vadd.f32 %v9370, %v9942
      %v9985 = vadd.f32 %v9371, %v9947
      %v9986 = vadd.f32 %v9372, %v9952
      %v9987 = vld [vmem:[#allocation2 + $0x28] sm:$0xff]
      %v9988 = vld [vmem:[#allocation2 + $0x30] sm:$0xff]
      %v9989 = vld [vmem:[#allocation2 + $0x38] sm:$0xff]
      %v9990 = vld [vmem:[#allocation2 + $0x40] sm:$0xff]
      %v9991 = vld [vmem:[#allocation2 + $0x48] sm:$0xff]
      %v9992 = vld [vmem:[#allocation2 + $0x50] sm:$0xff]
      %v9993 = vld [vmem:[#allocation2 + $0x58] sm:$0xff]
      %v9994 = vld [vmem:[#allocation2 + $0x60] sm:$0xff]
      %v9995 = vld [vmem:[#allocation2 + $0x68] sm:$0xff]
      %v9996 = vld [vmem:[#allocation2 + $0x70] sm:$0xff]
      %v9997 = vld [vmem:[#allocation2 + $0x78] sm:$0xff]
      %v9998 = vld [vmem:[#allocation2 + $0x80] sm:$0xff]
      %v9999 = vld [vmem:[#allocation2 + $0x88] sm:$0xff]
      %v10000 = vld [vmem:[#allocation2 + $0x90] sm:$0xff]
      %v10001 = vld [vmem:[#allocation2 + $0x98] sm:$0xff]
      %v10002 = vld [vmem:[#allocation2 + $0xa0] sm:$0xff]
      %v10003 = vld [vmem:[#allocation2 + $0xa8] sm:$0xff]
      %v10004 = vld [vmem:[#allocation2 + $0xb0] sm:$0xff]
      %v10005 = vld [vmem:[#allocation2 + $0xb8] sm:$0xff]
      %v10006 = vld [vmem:[#allocation2 + $0xc0] sm:$0xff]
      %v10007 = vld [vmem:[#allocation2 + $0xc8] sm:$0xff]
      %v10008 = vld [vmem:[#allocation2 + $0xd0] sm:$0xff]
      %v10009 = vld [vmem:[#allocation2 + $0xd8] sm:$0xff]
      %v10010 = vld [vmem:[#allocation2 + $0xe0] sm:$0xff]
      %v10011 = vld [vmem:[#allocation2 + $0xe8] sm:$0xff]
      %v10012 = vld [vmem:[#allocation2 + $0xf0] sm:$0xff]
      %v10013 = vld [vmem:[#allocation2 + $0xf8] sm:$0xff]
      %v10014 = vld [vmem:[#allocation2 + $0x100] sm:$0xff]
      %v10015 = vld [vmem:[#allocation2 + $0x108] sm:$0xff]
      %v10016 = vld [vmem:[#allocation2 + $0x110] sm:$0xff]
      %v10017 = vld [vmem:[#allocation2 + $0x118] sm:$0xff]
      %v10018 = vld [vmem:[#allocation2 + $0x120] sm:$0xff]
      %v10019 = vld [vmem:[%s4643] sm:$0xff]
      %v10020 = vld [vmem:[%s4643 + $0x8] sm:$0xff]
      %v10021 = vld [vmem:[%s4643 + $0x10] sm:$0xff]
      %v10022 = vld [vmem:[%s4643 + $0x18] sm:$0xff]
      %v10023 = vld [vmem:[%s4643 + $0x20] sm:$0xff]
      %v10024 = vld [vmem:[%s4643 + $0x28] sm:$0xff]
      %v10025 = vld [vmem:[%s4643 + $0x30] sm:$0xff]
      %v10026 = vld [vmem:[%s4643 + $0x38] sm:$0xff]
      %v10027 = vld [vmem:[%s4643 + $0x40] sm:$0xff]
      %v10028 = vld [vmem:[%s4643 + $0x48] sm:$0xff]
      %v10029 = vld [vmem:[%s4643 + $0x50] sm:$0xff]
      %v10030 = vld [vmem:[%s4643 + $0x58] sm:$0xff]
      %v10031 = vld [vmem:[%s4643 + $0x60] sm:$0xff]
      %v10032 = vld [vmem:[%s4643 + $0x68] sm:$0xff]
      %v10033 = vld [vmem:[%s4643 + $0x70] sm:$0xff]
      %v10034 = vld [vmem:[%s4643 + $0x78] sm:$0xff]
      %v10035 = vld [vmem:[%s4643 + $0x80] sm:$0xff]
      %v10036 = vld [vmem:[%s4643 + $0x88] sm:$0xff]
      %v10037 = vld [vmem:[%s4643 + $0x90] sm:$0xff]
      %v10038 = vld [vmem:[%s4643 + $0x98] sm:$0xff]
      %v10039 = vld [vmem:[%s4643 + $0xa0] sm:$0xff]
      %v10040 = vld [vmem:[%s4643 + $0xa8] sm:$0xff]
      %v10041 = vld [vmem:[%s4643 + $0xb0] sm:$0xff]
      %v10042 = vld [vmem:[%s4643 + $0xb8] sm:$0xff]
      %v10043 = vld [vmem:[%s4643 + $0xc0] sm:$0xff]
      %v10044 = vld [vmem:[%s4643 + $0xc8] sm:$0xff]
      %v10045 = vld [vmem:[%s4643 + $0xd0] sm:$0xff]
      %v10046 = vld [vmem:[%s4643 + $0xd8] sm:$0xff]
      %v10047 = vld [vmem:[%s4643 + $0xe0] sm:$0xff]
      %v10048 = vld [vmem:[%s4643 + $0xe8] sm:$0xff]
      %v10049 = vld [vmem:[%s4643 + $0xf0] sm:$0xff]
      %v10050 = vld [vmem:[%s4643 + $0xf8] sm:$0xff]
      %10052 = vset.pattern.permute.xlu0 0
      %10053 = vperm.xlu0 %10052, %v10019
      %v10054 = vpop.permute.xlu0 %10053
      %10057 = vset.pattern.permute.xlu0 0
      %10058 = vperm.xlu0 %10057, %v10020
      %v10059 = vpop.permute.xlu0 %10058
      %10062 = vset.pattern.permute.xlu0 0
      %10063 = vperm.xlu0 %10062, %v10021
      %v10064 = vpop.permute.xlu0 %10063
      %10067 = vset.pattern.permute.xlu0 0
      %10068 = vperm.xlu0 %10067, %v10022
      %v10069 = vpop.permute.xlu0 %10068
      %10072 = vset.pattern.permute.xlu0 0
      %10073 = vperm.xlu0 %10072, %v10023
      %v10074 = vpop.permute.xlu0 %10073
      %10077 = vset.pattern.permute.xlu0 0
      %10078 = vperm.xlu0 %10077, %v10024
      %v10079 = vpop.permute.xlu0 %10078
      %10082 = vset.pattern.permute.xlu0 0
      %10083 = vperm.xlu0 %10082, %v10025
      %v10084 = vpop.permute.xlu0 %10083
      %10087 = vset.pattern.permute.xlu0 0
      %10088 = vperm.xlu0 %10087, %v10026
      %v10089 = vpop.permute.xlu0 %10088
      %10092 = vset.pattern.permute.xlu0 0
      %10093 = vperm.xlu0 %10092, %v10027
      %v10094 = vpop.permute.xlu0 %10093
      %10097 = vset.pattern.permute.xlu0 0
      %10098 = vperm.xlu0 %10097, %v10028
      %v10099 = vpop.permute.xlu0 %10098
      %10102 = vset.pattern.permute.xlu0 0
      %10103 = vperm.xlu0 %10102, %v10029
      %v10104 = vpop.permute.xlu0 %10103
      %10107 = vset.pattern.permute.xlu0 0
      %10108 = vperm.xlu0 %10107, %v10030
      %v10109 = vpop.permute.xlu0 %10108
      %10112 = vset.pattern.permute.xlu0 0
      %10113 = vperm.xlu0 %10112, %v10031
      %v10114 = vpop.permute.xlu0 %10113
      %10117 = vset.pattern.permute.xlu0 0
      %10118 = vperm.xlu0 %10117, %v10032
      %v10119 = vpop.permute.xlu0 %10118
      %10122 = vset.pattern.permute.xlu0 0
      %10123 = vperm.xlu0 %10122, %v10033
      %v10124 = vpop.permute.xlu0 %10123
      %10127 = vset.pattern.permute.xlu0 0
      %10128 = vperm.xlu0 %10127, %v10034
      %v10129 = vpop.permute.xlu0 %10128
      %10132 = vset.pattern.permute.xlu0 0
      %10133 = vperm.xlu0 %10132, %v10035
      %v10134 = vpop.permute.xlu0 %10133
      %10137 = vset.pattern.permute.xlu0 0
      %10138 = vperm.xlu0 %10137, %v10036
      %v10139 = vpop.permute.xlu0 %10138
      %10142 = vset.pattern.permute.xlu0 0
      %10143 = vperm.xlu0 %10142, %v10037
      %v10144 = vpop.permute.xlu0 %10143
      %10147 = vset.pattern.permute.xlu0 0
      %10148 = vperm.xlu0 %10147, %v10038
      %v10149 = vpop.permute.xlu0 %10148
      %10152 = vset.pattern.permute.xlu0 0
      %10153 = vperm.xlu0 %10152, %v10039
      %v10154 = vpop.permute.xlu0 %10153
      %10157 = vset.pattern.permute.xlu0 0
      %10158 = vperm.xlu0 %10157, %v10040
      %v10159 = vpop.permute.xlu0 %10158
      %10162 = vset.pattern.permute.xlu0 0
      %10163 = vperm.xlu0 %10162, %v10041
      %v10164 = vpop.permute.xlu0 %10163
      %10167 = vset.pattern.permute.xlu0 0
      %10168 = vperm.xlu0 %10167, %v10042
      %v10169 = vpop.permute.xlu0 %10168
      %10172 = vset.pattern.permute.xlu0 0
      %10173 = vperm.xlu0 %10172, %v10043
      %v10174 = vpop.permute.xlu0 %10173
      %10177 = vset.pattern.permute.xlu0 0
      %10178 = vperm.xlu0 %10177, %v10044
      %v10179 = vpop.permute.xlu0 %10178
      %10182 = vset.pattern.permute.xlu0 0
      %10183 = vperm.xlu0 %10182, %v10045
      %v10184 = vpop.permute.xlu0 %10183
      %10187 = vset.pattern.permute.xlu0 0
      %10188 = vperm.xlu0 %10187, %v10046
      %v10189 = vpop.permute.xlu0 %10188
      %10192 = vset.pattern.permute.xlu0 0
      %10193 = vperm.xlu0 %10192, %v10047
      %v10194 = vpop.permute.xlu0 %10193
      %10197 = vset.pattern.permute.xlu0 0
      %10198 = vperm.xlu0 %10197, %v10048
      %v10199 = vpop.permute.xlu0 %10198
      %10202 = vset.pattern.permute.xlu0 0
      %10203 = vperm.xlu0 %10202, %v10049
      %v10204 = vpop.permute.xlu0 %10203
      %10207 = vset.pattern.permute.xlu0 0
      %10208 = vperm.xlu0 %10207, %v10050
      %v10209 = vpop.permute.xlu0 %10208
      %v10211 = vmul.f32 %v9987, %v10054
      %v10212 = vmul.f32 %v9988, %v10059
      %v10213 = vmul.f32 %v9989, %v10064
      %v10214 = vmul.f32 %v9990, %v10069
      %v10215 = vmul.f32 %v9991, %v10074
      %v10216 = vmul.f32 %v9992, %v10079
      %v10217 = vmul.f32 %v9993, %v10084
      %v10218 = vmul.f32 %v9994, %v10089
      %v10219 = vmul.f32 %v9995, %v10094
      %v10220 = vmul.f32 %v9996, %v10099
      %v10221 = vmul.f32 %v9997, %v10104
      %v10222 = vmul.f32 %v9998, %v10109
      %v10223 = vmul.f32 %v9999, %v10114
      %v10224 = vmul.f32 %v10000, %v10119
      %v10225 = vmul.f32 %v10001, %v10124
      %v10226 = vmul.f32 %v10002, %v10129
      %v10227 = vmul.f32 %v10003, %v10134
      %v10228 = vmul.f32 %v10004, %v10139
      %v10229 = vmul.f32 %v10005, %v10144
      %v10230 = vmul.f32 %v10006, %v10149
      %v10231 = vmul.f32 %v10007, %v10154
      %v10232 = vmul.f32 %v10008, %v10159
      %v10233 = vmul.f32 %v10009, %v10164
      %v10234 = vmul.f32 %v10010, %v10169
      %v10235 = vmul.f32 %v10011, %v10174
      %v10236 = vmul.f32 %v10012, %v10179
      %v10237 = vmul.f32 %v10013, %v10184
      %v10238 = vmul.f32 %v10014, %v10189
      %v10239 = vmul.f32 %v10015, %v10194
      %v10240 = vmul.f32 %v10016, %v10199
      %v10241 = vmul.f32 %v10017, %v10204
      %v10242 = vmul.f32 %v10018, %v10209
      %s10243 = scalar_lea.vmem %s6, 28
      %v10244 = vld [vmem:[%s10243] sm:$0xf]
      %v10246 = vsel %vm392, %v10211, 0
      %v10249 = vsel %vm392, %v10212, 0
      %v10252 = vsel %vm392, %v10213, 0
      %v10255 = vsel %vm392, %v10214, 0
      %v10258 = vsel %vm392, %v10215, 0
      %v10261 = vsel %vm392, %v10216, 0
      %v10264 = vsel %vm392, %v10217, 0
      %v10267 = vsel %vm392, %v10218, 0
      %v10270 = vsel %vm392, %v10219, 0
      %v10273 = vsel %vm392, %v10220, 0
      %v10276 = vsel %vm392, %v10221, 0
      %v10279 = vsel %vm392, %v10222, 0
      %v10282 = vsel %vm392, %v10223, 0
      %v10285 = vsel %vm392, %v10224, 0
      %v10288 = vsel %vm392, %v10225, 0
      %v10291 = vsel %vm392, %v10226, 0
      %v10294 = vsel %vm392, %v10227, 0
      %v10297 = vsel %vm392, %v10228, 0
      %v10300 = vsel %vm392, %v10229, 0
      %v10303 = vsel %vm392, %v10230, 0
      %v10306 = vsel %vm392, %v10231, 0
      %v10309 = vsel %vm392, %v10232, 0
      %v10312 = vsel %vm392, %v10233, 0
      %v10315 = vsel %vm392, %v10234, 0
      %v10318 = vsel %vm392, %v10235, 0
      %v10321 = vsel %vm392, %v10236, 0
      %v10324 = vsel %vm392, %v10237, 0
      %v10327 = vsel %vm392, %v10238, 0
      %v10330 = vsel %vm392, %v10239, 0
      %v10333 = vsel %vm392, %v10240, 0
      %v10336 = vsel %vm392, %v10241, 0
      %v10339 = vsel %vm392, %v10242, 0
      %v10342 = vsel %vm6588, %v10244, 0
      %10344 = vmatprep.subr.mxu0 0.0
      %10345 = vmatpush1.msra.mxu0 %v10342
      %10346 = vmatprep.subr.mxu0 0.0
      %10347 = vmatpush1.msra.mxu0 0.0
      %10348 = vmatprep.subr.mxu0 0.0
      %10349 = vmatpush1.msra.mxu0 0.0
      %10350 = vmatprep.subr.mxu0 0.0
      %10351 = vmatpush1.msra.mxu0 0.0
      %10352 = vmatprep.subr.mxu0 0.0
      %10353 = vmatpush1.msra.mxu0 0.0
      %10354 = vmatprep.subr.mxu0 0.0
      %10355 = vmatpush1.msra.mxu0 0.0
      %10356 = vmatprep.subr.mxu0 0.0
      %10357 = vmatpush1.msra.mxu0 0.0
      %10358 = vmatprep.subr.mxu0 0.0
      %10359 = vmatpush1.msra.mxu0 0.0
      %10360 = vmatprep.subr.mxu0 0.0
      %10361 = vmatpush1.msra.mxu0 0.0
      %10362 = vmatprep.subr.mxu0 0.0
      %10363 = vmatpush1.msra.mxu0 0.0
      %10364 = vmatprep.subr.mxu0 0.0
      %10365 = vmatpush1.msra.mxu0 0.0
      %10366 = vmatprep.subr.mxu0 0.0
      %10367 = vmatpush1.msra.mxu0 0.0
      %10368 = vmatprep.subr.mxu0 0.0
      %10369 = vmatpush1.msra.mxu0 0.0
      %10370 = vmatprep.subr.mxu0 0.0
      %10371 = vmatpush1.msra.mxu0 0.0
      %10372 = vmatprep.subr.mxu0 0.0
      %10373 = vmatpush1.msra.mxu0 0.0
      %10374 = vmatprep.subr.mxu0 0.0
      %10375 = vmatpush1.msra.mxu0 0.0
      %10376 = vmatprep.subr.mxu0 0.0
      %10377 = vmatpush1.msra.mxu0 0.0
      %10378 = vmatprep.subr.mxu0 0.0
      %10379 = vmatpush1.msra.mxu0 0.0
      %10380 = vmatprep.subr.mxu0 0.0
      %10381 = vmatpush1.msra.mxu0 0.0
      %10382 = vmatprep.subr.mxu0 0.0
      %10383 = vmatpush1.msra.mxu0 0.0
      %10384 = vmatprep.subr.mxu0 0.0
      %10385 = vmatpush1.msra.mxu0 0.0
      %10386 = vmatprep.subr.mxu0 0.0
      %10387 = vmatpush1.msra.mxu0 0.0
      %10388 = vmatprep.subr.mxu0 0.0
      %10389 = vmatpush1.msra.mxu0 0.0
      %10390 = vmatprep.subr.mxu0 0.0
      %10391 = vmatpush1.msra.mxu0 0.0
      %10392 = vmatprep.subr.mxu0 0.0
      %10393 = vmatpush1.msra.mxu0 0.0
      %10394 = vmatprep.subr.mxu0 0.0
      %10395 = vmatpush1.msra.mxu0 0.0
      %10396 = vmatprep.subr.mxu0 0.0
      %10397 = vmatpush1.msra.mxu0 0.0
      %10398 = vmatprep.subr.mxu0 0.0
      %10399 = vmatpush1.msra.mxu0 0.0
      %10400 = vmatprep.subr.mxu0 0.0
      %10401 = vmatpush1.msra.mxu0 0.0
      %10402 = vmatprep.subr.mxu0 0.0
      %10403 = vmatpush1.msra.mxu0 0.0
      %10404 = vmatprep.subr.mxu0 0.0
      %10405 = vmatpush1.msra.mxu0 0.0
      %10406 = vmatprep.subr.mxu0 0.0
      %10407 = vmatpush1.msra.mxu0 0.0
      %10408 = vmatprep.mubr.f32.mxu0 0.0
      %10409 = vmatmul.mubr.f32.gmra.mrb[0].mxu0 %v10246
      %v10410 = vpop.f32.mrb[0].mxu0
      %v10411 = vadd.f32 0.0, %v10410
      %v10412 = vpop.f32.mrb[0].mxu0
      %10413 = vmatprep.mubr.f32.mxu0 0.0
      %10414 = vmatmul.mubr.f32.gmra.mrb[0].mxu0 %v10249
      %v10415 = vpop.f32.mrb[0].mxu0
      %v10416 = vadd.f32 0.0, %v10415
      %v10417 = vpop.f32.mrb[0].mxu0
      %10418 = vmatprep.mubr.f32.mxu0 0.0
      %10419 = vmatmul.mubr.f32.gmra.mrb[0].mxu0 %v10252
      %v10420 = vpop.f32.mrb[0].mxu0
      %v10421 = vadd.f32 0.0, %v10420
      %v10422 = vpop.f32.mrb[0].mxu0
      %10423 = vmatprep.mubr.f32.mxu0 0.0
      %10424 = vmatmul.mubr.f32.gmra.mrb[0].mxu0 %v10255
      %v10425 = vpop.f32.mrb[0].mxu0
      %v10426 = vadd.f32 0.0, %v10425
      %v10427 = vpop.f32.mrb[0].mxu0
      %10428 = vmatprep.mubr.f32.mxu0 0.0
      %10429 = vmatmul.mubr.f32.gmra.mrb[0].mxu0 %v10258
      %v10430 = vpop.f32.mrb[0].mxu0
      %v10431 = vadd.f32 0.0, %v10430
      %v10432 = vpop.f32.mrb[0].mxu0
      %10433 = vmatprep.mubr.f32.mxu0 0.0
      %10434 = vmatmul.mubr.f32.gmra.mrb[0].mxu0 %v10261
      %v10435 = vpop.f32.mrb[0].mxu0
      %v10436 = vadd.f32 0.0, %v10435
      %v10437 = vpop.f32.mrb[0].mxu0
      %10438 = vmatprep.mubr.f32.mxu0 0.0
      %10439 = vmatmul.mubr.f32.gmra.mrb[0].mxu0 %v10264
      %v10440 = vpop.f32.mrb[0].mxu0
      %v10441 = vadd.f32 0.0, %v10440
      %v10442 = vpop.f32.mrb[0].mxu0
      %10443 = vmatprep.mubr.f32.mxu0 0.0
      %10444 = vmatmul.mubr.f32.gmra.mrb[0].mxu0 %v10267
      %v10445 = vpop.f32.mrb[0].mxu0
      %v10446 = vadd.f32 0.0, %v10445
      %v10447 = vpop.f32.mrb[0].mxu0
      %10448 = vmatprep.mubr.f32.mxu0 0.0
      %10449 = vmatmul.mubr.f32.gmra.mrb[0].mxu0 %v10270
      %v10450 = vpop.f32.mrb[0].mxu0
      %v10451 = vadd.f32 0.0, %v10450
      %v10452 = vpop.f32.mrb[0].mxu0
      %10453 = vmatprep.mubr.f32.mxu0 0.0
      %10454 = vmatmul.mubr.f32.gmra.mrb[0].mxu0 %v10273
      %v10455 = vpop.f32.mrb[0].mxu0
      %v10456 = vadd.f32 0.0, %v10455
      %v10457 = vpop.f32.mrb[0].mxu0
      %10458 = vmatprep.mubr.f32.mxu0 0.0
      %10459 = vmatmul.mubr.f32.gmra.mrb[0].mxu0 %v10276
      %v10460 = vpop.f32.mrb[0].mxu0
      %v10461 = vadd.f32 0.0, %v10460
      %v10462 = vpop.f32.mrb[0].mxu0
      %10463 = vmatprep.mubr.f32.mxu0 0.0
      %10464 = vmatmul.mubr.f32.gmra.mrb[0].mxu0 %v10279
      %v10465 = vpop.f32.mrb[0].mxu0
      %v10466 = vadd.f32 0.0, %v10465
      %v10467 = vpop.f32.mrb[0].mxu0
      %10468 = vmatprep.mubr.f32.mxu0 0.0
      %10469 = vmatmul.mubr.f32.gmra.mrb[0].mxu0 %v10282
      %v10470 = vpop.f32.mrb[0].mxu0
      %v10471 = vadd.f32 0.0, %v10470
      %v10472 = vpop.f32.mrb[0].mxu0
      %10473 = vmatprep.mubr.f32.mxu0 0.0
      %10474 = vmatmul.mubr.f32.gmra.mrb[0].mxu0 %v10285
      %v10475 = vpop.f32.mrb[0].mxu0
      %v10476 = vadd.f32 0.0, %v10475
      %v10477 = vpop.f32.mrb[0].mxu0
      %10478 = vmatprep.mubr.f32.mxu0 0.0
      %10479 = vmatmul.mubr.f32.gmra.mrb[0].mxu0 %v10288
      %v10480 = vpop.f32.mrb[0].mxu0
      %v10481 = vadd.f32 0.0, %v10480
      %v10482 = vpop.f32.mrb[0].mxu0
      %10483 = vmatprep.mubr.f32.mxu0 0.0
      %10484 = vmatmul.mubr.f32.gmra.mrb[0].mxu0 %v10291
      %v10485 = vpop.f32.mrb[0].mxu0
      %v10486 = vadd.f32 0.0, %v10485
      %v10487 = vpop.f32.mrb[0].mxu0
      %10488 = vmatprep.mubr.f32.mxu0 0.0
      %10489 = vmatmul.mubr.f32.gmra.mrb[0].mxu0 %v10294
      %v10490 = vpop.f32.mrb[0].mxu0
      %v10491 = vadd.f32 0.0, %v10490
      %v10492 = vpop.f32.mrb[0].mxu0
      %10493 = vmatprep.mubr.f32.mxu0 0.0
      %10494 = vmatmul.mubr.f32.gmra.mrb[0].mxu0 %v10297
      %v10495 = vpop.f32.mrb[0].mxu0
      %v10496 = vadd.f32 0.0, %v10495
      %v10497 = vpop.f32.mrb[0].mxu0
      %10498 = vmatprep.mubr.f32.mxu0 0.0
      %10499 = vmatmul.mubr.f32.gmra.mrb[0].mxu0 %v10300
      %v10500 = vpop.f32.mrb[0].mxu0
      %v10501 = vadd.f32 0.0, %v10500
      %v10502 = vpop.f32.mrb[0].mxu0
      %10503 = vmatprep.mubr.f32.mxu0 0.0
      %10504 = vmatmul.mubr.f32.gmra.mrb[0].mxu0 %v10303
      %v10505 = vpop.f32.mrb[0].mxu0
      %v10506 = vadd.f32 0.0, %v10505
      %v10507 = vpop.f32.mrb[0].mxu0
      %10508 = vmatprep.mubr.f32.mxu0 0.0
      %10509 = vmatmul.mubr.f32.gmra.mrb[0].mxu0 %v10306
      %v10510 = vpop.f32.mrb[0].mxu0
      %v10511 = vadd.f32 0.0, %v10510
      %v10512 = vpop.f32.mrb[0].mxu0
      %10513 = vmatprep.mubr.f32.mxu0 0.0
      %10514 = vmatmul.mubr.f32.gmra.mrb[0].mxu0 %v10309
      %v10515 = vpop.f32.mrb[0].mxu0
      %v10516 = vadd.f32 0.0, %v10515
      %v10517 = vpop.f32.mrb[0].mxu0
      %10518 = vmatprep.mubr.f32.mxu0 0.0
      %10519 = vmatmul.mubr.f32.gmra.mrb[0].mxu0 %v10312
      %v10520 = vpop.f32.mrb[0].mxu0
      %v10521 = vadd.f32 0.0, %v10520
      %v10522 = vpop.f32.mrb[0].mxu0
      %10523 = vmatprep.mubr.f32.mxu0 0.0
      %10524 = vmatmul.mubr.f32.gmra.mrb[0].mxu0 %v10315
      %v10525 = vpop.f32.mrb[0].mxu0
      %v10526 = vadd.f32 0.0, %v10525
      %v10527 = vpop.f32.mrb[0].mxu0
      %10528 = vmatprep.mubr.f32.mxu0 0.0
      %10529 = vmatmul.mubr.f32.gmra.mrb[0].mxu0 %v10318
      %v10530 = vpop.f32.mrb[0].mxu0
      %v10531 = vadd.f32 0.0, %v10530
      %v10532 = vpop.f32.mrb[0].mxu0
      %10533 = vmatprep.mubr.f32.mxu0 0.0
      %10534 = vmatmul.mubr.f32.gmra.mrb[0].mxu0 %v10321
      %v10535 = vpop.f32.mrb[0].mxu0
      %v10536 = vadd.f32 0.0, %v10535
      %v10537 = vpop.f32.mrb[0].mxu0
      %10538 = vmatprep.mubr.f32.mxu0 0.0
      %10539 = vmatmul.mubr.f32.gmra.mrb[0].mxu0 %v10324
      %v10540 = vpop.f32.mrb[0].mxu0
      %v10541 = vadd.f32 0.0, %v10540
      %v10542 = vpop.f32.mrb[0].mxu0
      %10543 = vmatprep.mubr.f32.mxu0 0.0
      %10544 = vmatmul.mubr.f32.gmra.mrb[0].mxu0 %v10327
      %v10545 = vpop.f32.mrb[0].mxu0
      %v10546 = vadd.f32 0.0, %v10545
      %v10547 = vpop.f32.mrb[0].mxu0
      %10548 = vmatprep.mubr.f32.mxu0 0.0
      %10549 = vmatmul.mubr.f32.gmra.mrb[0].mxu0 %v10330
      %v10550 = vpop.f32.mrb[0].mxu0
      %v10551 = vadd.f32 0.0, %v10550
      %v10552 = vpop.f32.mrb[0].mxu0
      %10553 = vmatprep.mubr.f32.mxu0 0.0
      %10554 = vmatmul.mubr.f32.gmra.mrb[0].mxu0 %v10333
      %v10555 = vpop.f32.mrb[0].mxu0
      %v10556 = vadd.f32 0.0, %v10555
      %v10557 = vpop.f32.mrb[0].mxu0
      %10558 = vmatprep.mubr.f32.mxu0 0.0
      %10559 = vmatmul.mubr.f32.gmra.mrb[0].mxu0 %v10336
      %v10560 = vpop.f32.mrb[0].mxu0
      %v10561 = vadd.f32 0.0, %v10560
      %v10562 = vpop.f32.mrb[0].mxu0
      %10563 = vmatprep.mubr.f32.mxu0 0.0
      %10564 = vmatmul.mubr.f32.gmra.mrb[0].mxu0 %v10339
      %v10565 = vpop.f32.mrb[0].mxu0
      %v10566 = vadd.f32 0.0, %v10565
      %v10567 = vpop.f32.mrb[0].mxu0
      %10568 = vdwg.mxu0
      %v10569 = vadd.f32 %v9955, %v10411
      %v10570 = vadd.f32 %v9956, %v10416
      %v10571 = vadd.f32 %v9957, %v10421
      %v10572 = vadd.f32 %v9958, %v10426
      %v10573 = vadd.f32 %v9959, %v10431
      %v10574 = vadd.f32 %v9960, %v10436
      %v10575 = vadd.f32 %v9961, %v10441
      %v10576 = vadd.f32 %v9962, %v10446
      %v10577 = vadd.f32 %v9963, %v10451
      %v10578 = vadd.f32 %v9964, %v10456
      %v10579 = vadd.f32 %v9965, %v10461
      %v10580 = vadd.f32 %v9966, %v10466
      %v10581 = vadd.f32 %v9967, %v10471
      %v10582 = vadd.f32 %v9968, %v10476
      %v10583 = vadd.f32 %v9969, %v10481
      %v10584 = vadd.f32 %v9970, %v10486
      %v10585 = vadd.f32 %v9971, %v10491
      %v10586 = vadd.f32 %v9972, %v10496
      %v10587 = vadd.f32 %v9973, %v10501
      %v10588 = vadd.f32 %v9974, %v10506
      %v10589 = vadd.f32 %v9975, %v10511
      %v10590 = vadd.f32 %v9976, %v10516
      %v10591 = vadd.f32 %v9977, %v10521
      %v10592 = vadd.f32 %v9978, %v10526
      %v10593 = vadd.f32 %v9979, %v10531
      %v10594 = vadd.f32 %v9980, %v10536
      %v10595 = vadd.f32 %v9981, %v10541
      %v10596 = vadd.f32 %v9982, %v10546
      %v10597 = vadd.f32 %v9983, %v10551
      %v10598 = vadd.f32 %v9984, %v10556
      %v10599 = vadd.f32 %v9985, %v10561
      %v10600 = vadd.f32 %v9986, %v10566
      %v10601 = vld [vmem:[#allocation2 + $0x29] sm:$0xff]
      %v10602 = vld [vmem:[#allocation2 + $0x31] sm:$0xff]
      %v10603 = vld [vmem:[#allocation2 + $0x39] sm:$0xff]
      %v10604 = vld [vmem:[#allocation2 + $0x41] sm:$0xff]
      %v10605 = vld [vmem:[#allocation2 + $0x49] sm:$0xff]
      %v10606 = vld [vmem:[#allocation2 + $0x51] sm:$0xff]
      %v10607 = vld [vmem:[#allocation2 + $0x59] sm:$0xff]
      %v10608 = vld [vmem:[#allocation2 + $0x61] sm:$0xff]
      %v10609 = vld [vmem:[#allocation2 + $0x69] sm:$0xff]
      %v10610 = vld [vmem:[#allocation2 + $0x71] sm:$0xff]
      %v10611 = vld [vmem:[#allocation2 + $0x79] sm:$0xff]
      %v10612 = vld [vmem:[#allocation2 + $0x81] sm:$0xff]
      %v10613 = vld [vmem:[#allocation2 + $0x89] sm:$0xff]
      %v10614 = vld [vmem:[#allocation2 + $0x91] sm:$0xff]
      %v10615 = vld [vmem:[#allocation2 + $0x99] sm:$0xff]
      %v10616 = vld [vmem:[#allocation2 + $0xa1] sm:$0xff]
      %v10617 = vld [vmem:[#allocation2 + $0xa9] sm:$0xff]
      %v10618 = vld [vmem:[#allocation2 + $0xb1] sm:$0xff]
      %v10619 = vld [vmem:[#allocation2 + $0xb9] sm:$0xff]
      %v10620 = vld [vmem:[#allocation2 + $0xc1] sm:$0xff]
      %v10621 = vld [vmem:[#allocation2 + $0xc9] sm:$0xff]
      %v10622 = vld [vmem:[#allocation2 + $0xd1] sm:$0xff]
      %v10623 = vld [vmem:[#allocation2 + $0xd9] sm:$0xff]
      %v10624 = vld [vmem:[#allocation2 + $0xe1] sm:$0xff]
      %v10625 = vld [vmem:[#allocation2 + $0xe9] sm:$0xff]
      %v10626 = vld [vmem:[#allocation2 + $0xf1] sm:$0xff]
      %v10627 = vld [vmem:[#allocation2 + $0xf9] sm:$0xff]
      %v10628 = vld [vmem:[#allocation2 + $0x101] sm:$0xff]
      %v10629 = vld [vmem:[#allocation2 + $0x109] sm:$0xff]
      %v10630 = vld [vmem:[#allocation2 + $0x111] sm:$0xff]
      %v10631 = vld [vmem:[#allocation2 + $0x119] sm:$0xff]
      %v10632 = vld [vmem:[#allocation2 + $0x121] sm:$0xff]
      %v10633 = vld [vmem:[%s5255] sm:$0xff]
      %v10634 = vld [vmem:[%s5255 + $0x8] sm:$0xff]
      %v10635 = vld [vmem:[%s5255 + $0x10] sm:$0xff]
      %v10636 = vld [vmem:[%s5255 + $0x18] sm:$0xff]
      %v10637 = vld [vmem:[%s5255 + $0x20] sm:$0xff]
      %v10638 = vld [vmem:[%s5255 + $0x28] sm:$0xff]
      %v10639 = vld [vmem:[%s5255 + $0x30] sm:$0xff]
      %v10640 = vld [vmem:[%s5255 + $0x38] sm:$0xff]
      %v10641 = vld [vmem:[%s5255 + $0x40] sm:$0xff]
      %v10642 = vld [vmem:[%s5255 + $0x48] sm:$0xff]
      %v10643 = vld [vmem:[%s5255 + $0x50] sm:$0xff]
      %v10644 = vld [vmem:[%s5255 + $0x58] sm:$0xff]
      %v10645 = vld [vmem:[%s5255 + $0x60] sm:$0xff]
      %v10646 = vld [vmem:[%s5255 + $0x68] sm:$0xff]
      %v10647 = vld [vmem:[%s5255 + $0x70] sm:$0xff]
      %v10648 = vld [vmem:[%s5255 + $0x78] sm:$0xff]
      %v10649 = vld [vmem:[%s5255 + $0x80] sm:$0xff]
      %v10650 = vld [vmem:[%s5255 + $0x88] sm:$0xff]
      %v10651 = vld [vmem:[%s5255 + $0x90] sm:$0xff]
      %v10652 = vld [vmem:[%s5255 + $0x98] sm:$0xff]
      %v10653 = vld [vmem:[%s5255 + $0xa0] sm:$0xff]
      %v10654 = vld [vmem:[%s5255 + $0xa8] sm:$0xff]
      %v10655 = vld [vmem:[%s5255 + $0xb0] sm:$0xff]
      %v10656 = vld [vmem:[%s5255 + $0xb8] sm:$0xff]
      %v10657 = vld [vmem:[%s5255 + $0xc0] sm:$0xff]
      %v10658 = vld [vmem:[%s5255 + $0xc8] sm:$0xff]
      %v10659 = vld [vmem:[%s5255 + $0xd0] sm:$0xff]
      %v10660 = vld [vmem:[%s5255 + $0xd8] sm:$0xff]
      %v10661 = vld [vmem:[%s5255 + $0xe0] sm:$0xff]
      %v10662 = vld [vmem:[%s5255 + $0xe8] sm:$0xff]
      %v10663 = vld [vmem:[%s5255 + $0xf0] sm:$0xff]
      %v10664 = vld [vmem:[%s5255 + $0xf8] sm:$0xff]
      %10666 = vset.pattern.permute.xlu0 0
      %10667 = vperm.xlu0 %10666, %v10633
      %v10668 = vpop.permute.xlu0 %10667
      %10671 = vset.pattern.permute.xlu0 0
      %10672 = vperm.xlu0 %10671, %v10634
      %v10673 = vpop.permute.xlu0 %10672
      %10676 = vset.pattern.permute.xlu0 0
      %10677 = vperm.xlu0 %10676, %v10635
      %v10678 = vpop.permute.xlu0 %10677
      %10681 = vset.pattern.permute.xlu0 0
      %10682 = vperm.xlu0 %10681, %v10636
      %v10683 = vpop.permute.xlu0 %10682
      %10686 = vset.pattern.permute.xlu0 0
      %10687 = vperm.xlu0 %10686, %v10637
      %v10688 = vpop.permute.xlu0 %10687
      %10691 = vset.pattern.permute.xlu0 0
      %10692 = vperm.xlu0 %10691, %v10638
      %v10693 = vpop.permute.xlu0 %10692
      %10696 = vset.pattern.permute.xlu0 0
      %10697 = vperm.xlu0 %10696, %v10639
      %v10698 = vpop.permute.xlu0 %10697
      %10701 = vset.pattern.permute.xlu0 0
      %10702 = vperm.xlu0 %10701, %v10640
      %v10703 = vpop.permute.xlu0 %10702
      %10706 = vset.pattern.permute.xlu0 0
      %10707 = vperm.xlu0 %10706, %v10641
      %v10708 = vpop.permute.xlu0 %10707
      %10711 = vset.pattern.permute.xlu0 0
      %10712 = vperm.xlu0 %10711, %v10642
      %v10713 = vpop.permute.xlu0 %10712
      %10716 = vset.pattern.permute.xlu0 0
      %10717 = vperm.xlu0 %10716, %v10643
      %v10718 = vpop.permute.xlu0 %10717
      %10721 = vset.pattern.permute.xlu0 0
      %10722 = vperm.xlu0 %10721, %v10644
      %v10723 = vpop.permute.xlu0 %10722
      %10726 = vset.pattern.permute.xlu0 0
      %10727 = vperm.xlu0 %10726, %v10645
      %v10728 = vpop.permute.xlu0 %10727
      %10731 = vset.pattern.permute.xlu0 0
      %10732 = vperm.xlu0 %10731, %v10646
      %v10733 = vpop.permute.xlu0 %10732
      %10736 = vset.pattern.permute.xlu0 0
      %10737 = vperm.xlu0 %10736, %v10647
      %v10738 = vpop.permute.xlu0 %10737
      %10741 = vset.pattern.permute.xlu0 0
      %10742 = vperm.xlu0 %10741, %v10648
      %v10743 = vpop.permute.xlu0 %10742
      %10746 = vset.pattern.permute.xlu0 0
      %10747 = vperm.xlu0 %10746, %v10649
      %v10748 = vpop.permute.xlu0 %10747
      %10751 = vset.pattern.permute.xlu0 0
      %10752 = vperm.xlu0 %10751, %v10650
      %v10753 = vpop.permute.xlu0 %10752
      %10756 = vset.pattern.permute.xlu0 0
      %10757 = vperm.xlu0 %10756, %v10651
      %v10758 = vpop.permute.xlu0 %10757
      %10761 = vset.pattern.permute.xlu0 0
      %10762 = vperm.xlu0 %10761, %v10652
      %v10763 = vpop.permute.xlu0 %10762
      %10766 = vset.pattern.permute.xlu0 0
      %10767 = vperm.xlu0 %10766, %v10653
      %v10768 = vpop.permute.xlu0 %10767
      %10771 = vset.pattern.permute.xlu0 0
      %10772 = vperm.xlu0 %10771, %v10654
      %v10773 = vpop.permute.xlu0 %10772
      %10776 = vset.pattern.permute.xlu0 0
      %10777 = vperm.xlu0 %10776, %v10655
      %v10778 = vpop.permute.xlu0 %10777
      %10781 = vset.pattern.permute.xlu0 0
      %10782 = vperm.xlu0 %10781, %v10656
      %v10783 = vpop.permute.xlu0 %10782
      %10786 = vset.pattern.permute.xlu0 0
      %10787 = vperm.xlu0 %10786, %v10657
      %v10788 = vpop.permute.xlu0 %10787
      %10791 = vset.pattern.permute.xlu0 0
      %10792 = vperm.xlu0 %10791, %v10658
      %v10793 = vpop.permute.xlu0 %10792
      %10796 = vset.pattern.permute.xlu0 0
      %10797 = vperm.xlu0 %10796, %v10659
      %v10798 = vpop.permute.xlu0 %10797
      %10801 = vset.pattern.permute.xlu0 0
      %10802 = vperm.xlu0 %10801, %v10660
      %v10803 = vpop.permute.xlu0 %10802
      %10806 = vset.pattern.permute.xlu0 0
      %10807 = vperm.xlu0 %10806, %v10661
      %v10808 = vpop.permute.xlu0 %10807
      %10811 = vset.pattern.permute.xlu0 0
      %10812 = vperm.xlu0 %10811, %v10662
      %v10813 = vpop.permute.xlu0 %10812
      %10816 = vset.pattern.permute.xlu0 0
      %10817 = vperm.xlu0 %10816, %v10663
      %v10818 = vpop.permute.xlu0 %10817
      %10821 = vset.pattern.permute.xlu0 0
      %10822 = vperm.xlu0 %10821, %v10664
      %v10823 = vpop.permute.xlu0 %10822
      %v10825 = vmul.f32 %v10601, %v10668
      %v10826 = vmul.f32 %v10602, %v10673
      %v10827 = vmul.f32 %v10603, %v10678
      %v10828 = vmul.f32 %v10604, %v10683
      %v10829 = vmul.f32 %v10605, %v10688
      %v10830 = vmul.f32 %v10606, %v10693
      %v10831 = vmul.f32 %v10607, %v10698
      %v10832 = vmul.f32 %v10608, %v10703
      %v10833 = vmul.f32 %v10609, %v10708
      %v10834 = vmul.f32 %v10610, %v10713
      %v10835 = vmul.f32 %v10611, %v10718
      %v10836 = vmul.f32 %v10612, %v10723
      %v10837 = vmul.f32 %v10613, %v10728
      %v10838 = vmul.f32 %v10614, %v10733
      %v10839 = vmul.f32 %v10615, %v10738
      %v10840 = vmul.f32 %v10616, %v10743
      %v10841 = vmul.f32 %v10617, %v10748
      %v10842 = vmul.f32 %v10618, %v10753
      %v10843 = vmul.f32 %v10619, %v10758
      %v10844 = vmul.f32 %v10620, %v10763
      %v10845 = vmul.f32 %v10621, %v10768
      %v10846 = vmul.f32 %v10622, %v10773
      %v10847 = vmul.f32 %v10623, %v10778
      %v10848 = vmul.f32 %v10624, %v10783
      %v10849 = vmul.f32 %v10625, %v10788
      %v10850 = vmul.f32 %v10626, %v10793
      %v10851 = vmul.f32 %v10627, %v10798
      %v10852 = vmul.f32 %v10628, %v10803
      %v10853 = vmul.f32 %v10629, %v10808
      %v10854 = vmul.f32 %v10630, %v10813
      %v10855 = vmul.f32 %v10631, %v10818
      %v10856 = vmul.f32 %v10632, %v10823
      %s10857 = scalar_lea.vmem %s6, 32
      %v10858 = vld [vmem:[%s10857] sm:$0xf]
      %v10860 = vsel %vm392, %v10825, 0
      %v10863 = vsel %vm392, %v10826, 0
      %v10866 = vsel %vm392, %v10827, 0
      %v10869 = vsel %vm392, %v10828, 0
      %v10872 = vsel %vm392, %v10829, 0
      %v10875 = vsel %vm392, %v10830, 0
      %v10878 = vsel %vm392, %v10831, 0
      %v10881 = vsel %vm392, %v10832, 0
      %v10884 = vsel %vm392, %v10833, 0
      %v10887 = vsel %vm392, %v10834, 0
      %v10890 = vsel %vm392, %v10835, 0
      %v10893 = vsel %vm392, %v10836, 0
      %v10896 = vsel %vm392, %v10837, 0
      %v10899 = vsel %vm392, %v10838, 0
      %v10902 = vsel %vm392, %v10839, 0
      %v10905 = vsel %vm392, %v10840, 0
      %v10908 = vsel %vm392, %v10841, 0
      %v10911 = vsel %vm392, %v10842, 0
      %v10914 = vsel %vm392, %v10843, 0
      %v10917 = vsel %vm392, %v10844, 0
      %v10920 = vsel %vm392, %v10845, 0
      %v10923 = vsel %vm392, %v10846, 0
      %v10926 = vsel %vm392, %v10847, 0
      %v10929 = vsel %vm392, %v10848, 0
      %v10932 = vsel %vm392, %v10849, 0
      %v10935 = vsel %vm392, %v10850, 0
      %v10938 = vsel %vm392, %v10851, 0
      %v10941 = vsel %vm392, %v10852, 0
      %v10944 = vsel %vm392, %v10853, 0
      %v10947 = vsel %vm392, %v10854, 0
      %v10950 = vsel %vm392, %v10855, 0
      %v10953 = vsel %vm392, %v10856, 0
      %v10956 = vsel %vm6588, %v10858, 0
      %10958 = vmatprep.subr.mxu0 0.0
      %10959 = vmatpush1.msra.mxu0 %v10956
      %10960 = vmatprep.subr.mxu0 0.0
      %10961 = vmatpush1.msra.mxu0 0.0
      %10962 = vmatprep.subr.mxu0 0.0
      %10963 = vmatpush1.msra.mxu0 0.0
      %10964 = vmatprep.subr.mxu0 0.0
      %10965 = vmatpush1.msra.mxu0 0.0
      %10966 = vmatprep.subr.mxu0 0.0
      %10967 = vmatpush1.msra.mxu0 0.0
      %10968 = vmatprep.subr.mxu0 0.0
      %10969 = vmatpush1.msra.mxu0 0.0
      %10970 = vmatprep.subr.mxu0 0.0
      %10971 = vmatpush1.msra.mxu0 0.0
      %10972 = vmatprep.subr.mxu0 0.0
      %10973 = vmatpush1.msra.mxu0 0.0
      %10974 = vmatprep.subr.mxu0 0.0
      %10975 = vmatpush1.msra.mxu0 0.0
      %10976 = vmatprep.subr.mxu0 0.0
      %10977 = vmatpush1.msra.mxu0 0.0
      %10978 = vmatprep.subr.mxu0 0.0
      %10979 = vmatpush1.msra.mxu0 0.0
      %10980 = vmatprep.subr.mxu0 0.0
      %10981 = vmatpush1.msra.mxu0 0.0
      %10982 = vmatprep.subr.mxu0 0.0
      %10983 = vmatpush1.msra.mxu0 0.0
      %10984 = vmatprep.subr.mxu0 0.0
      %10985 = vmatpush1.msra.mxu0 0.0
      %10986 = vmatprep.subr.mxu0 0.0
      %10987 = vmatpush1.msra.mxu0 0.0
      %10988 = vmatprep.subr.mxu0 0.0
      %10989 = vmatpush1.msra.mxu0 0.0
      %10990 = vmatprep.subr.mxu0 0.0
      %10991 = vmatpush1.msra.mxu0 0.0
      %10992 = vmatprep.subr.mxu0 0.0
      %10993 = vmatpush1.msra.mxu0 0.0
      %10994 = vmatprep.subr.mxu0 0.0
      %10995 = vmatpush1.msra.mxu0 0.0
      %10996 = vmatprep.subr.mxu0 0.0
      %10997 = vmatpush1.msra.mxu0 0.0
      %10998 = vmatprep.subr.mxu0 0.0
      %10999 = vmatpush1.msra.mxu0 0.0
      %11000 = vmatprep.subr.mxu0 0.0
      %11001 = vmatpush1.msra.mxu0 0.0
      %11002 = vmatprep.subr.mxu0 0.0
      %11003 = vmatpush1.msra.mxu0 0.0
      %11004 = vmatprep.subr.mxu0 0.0
      %11005 = vmatpush1.msra.mxu0 0.0
      %11006 = vmatprep.subr.mxu0 0.0
      %11007 = vmatpush1.msra.mxu0 0.0
      %11008 = vmatprep.subr.mxu0 0.0
      %11009 = vmatpush1.msra.mxu0 0.0
      %11010 = vmatprep.subr.mxu0 0.0
      %11011 = vmatpush1.msra.mxu0 0.0
      %11012 = vmatprep.subr.mxu0 0.0
      %11013 = vmatpush1.msra.mxu0 0.0
      %11014 = vmatprep.subr.mxu0 0.0
      %11015 = vmatpush1.msra.mxu0 0.0
      %11016 = vmatprep.subr.mxu0 0.0
      %11017 = vmatpush1.msra.mxu0 0.0
      %11018 = vmatprep.subr.mxu0 0.0
      %11019 = vmatpush1.msra.mxu0 0.0
      %11020 = vmatprep.subr.mxu0 0.0
      %11021 = vmatpush1.msra.mxu0 0.0
      %11022 = vmatprep.mubr.f32.mxu0 0.0
      %11023 = vmatmul.mubr.f32.gmra.mrb[0].mxu0 %v10860
      %v11024 = vpop.f32.mrb[0].mxu0
      %v11025 = vadd.f32 0.0, %v11024
      %v11026 = vpop.f32.mrb[0].mxu0
      %11027 = vmatprep.mubr.f32.mxu0 0.0
      %11028 = vmatmul.mubr.f32.gmra.mrb[0].mxu0 %v10863
      %v11029 = vpop.f32.mrb[0].mxu0
      %v11030 = vadd.f32 0.0, %v11029
      %v11031 = vpop.f32.mrb[0].mxu0
      %11032 = vmatprep.mubr.f32.mxu0 0.0
      %11033 = vmatmul.mubr.f32.gmra.mrb[0].mxu0 %v10866
      %v11034 = vpop.f32.mrb[0].mxu0
      %v11035 = vadd.f32 0.0, %v11034
      %v11036 = vpop.f32.mrb[0].mxu0
      %11037 = vmatprep.mubr.f32.mxu0 0.0
      %11038 = vmatmul.mubr.f32.gmra.mrb[0].mxu0 %v10869
      %v11039 = vpop.f32.mrb[0].mxu0
      %v11040 = vadd.f32 0.0, %v11039
      %v11041 = vpop.f32.mrb[0].mxu0
      %11042 = vmatprep.mubr.f32.mxu0 0.0
      %11043 = vmatmul.mubr.f32.gmra.mrb[0].mxu0 %v10872
      %v11044 = vpop.f32.mrb[0].mxu0
      %v11045 = vadd.f32 0.0, %v11044
      %v11046 = vpop.f32.mrb[0].mxu0
      %11047 = vmatprep.mubr.f32.mxu0 0.0
      %11048 = vmatmul.mubr.f32.gmra.mrb[0].mxu0 %v10875
      %v11049 = vpop.f32.mrb[0].mxu0
      %v11050 = vadd.f32 0.0, %v11049
      %v11051 = vpop.f32.mrb[0].mxu0
      %11052 = vmatprep.mubr.f32.mxu0 0.0
      %11053 = vmatmul.mubr.f32.gmra.mrb[0].mxu0 %v10878
      %v11054 = vpop.f32.mrb[0].mxu0
      %v11055 = vadd.f32 0.0, %v11054
      %v11056 = vpop.f32.mrb[0].mxu0
      %11057 = vmatprep.mubr.f32.mxu0 0.0
      %11058 = vmatmul.mubr.f32.gmra.mrb[0].mxu0 %v10881
      %v11059 = vpop.f32.mrb[0].mxu0
      %v11060 = vadd.f32 0.0, %v11059
      %v11061 = vpop.f32.mrb[0].mxu0
      %11062 = vmatprep.mubr.f32.mxu0 0.0
      %11063 = vmatmul.mubr.f32.gmra.mrb[0].mxu0 %v10884
      %v11064 = vpop.f32.mrb[0].mxu0
      %v11065 = vadd.f32 0.0, %v11064
      %v11066 = vpop.f32.mrb[0].mxu0
      %11067 = vmatprep.mubr.f32.mxu0 0.0
      %11068 = vmatmul.mubr.f32.gmra.mrb[0].mxu0 %v10887
      %v11069 = vpop.f32.mrb[0].mxu0
      %v11070 = vadd.f32 0.0, %v11069
      %v11071 = vpop.f32.mrb[0].mxu0
      %11072 = vmatprep.mubr.f32.mxu0 0.0
      %11073 = vmatmul.mubr.f32.gmra.mrb[0].mxu0 %v10890
      %v11074 = vpop.f32.mrb[0].mxu0
      %v11075 = vadd.f32 0.0, %v11074
      %v11076 = vpop.f32.mrb[0].mxu0
      %11077 = vmatprep.mubr.f32.mxu0 0.0
      %11078 = vmatmul.mubr.f32.gmra.mrb[0].mxu0 %v10893
      %v11079 = vpop.f32.mrb[0].mxu0
      %v11080 = vadd.f32 0.0, %v11079
      %v11081 = vpop.f32.mrb[0].mxu0
      %11082 = vmatprep.mubr.f32.mxu0 0.0
      %11083 = vmatmul.mubr.f32.gmra.mrb[0].mxu0 %v10896
      %v11084 = vpop.f32.mrb[0].mxu0
      %v11085 = vadd.f32 0.0, %v11084
      %v11086 = vpop.f32.mrb[0].mxu0
      %11087 = vmatprep.mubr.f32.mxu0 0.0
      %11088 = vmatmul.mubr.f32.gmra.mrb[0].mxu0 %v10899
      %v11089 = vpop.f32.mrb[0].mxu0
      %v11090 = vadd.f32 0.0, %v11089
      %v11091 = vpop.f32.mrb[0].mxu0
      %11092 = vmatprep.mubr.f32.mxu0 0.0
      %11093 = vmatmul.mubr.f32.gmra.mrb[0].mxu0 %v10902
      %v11094 = vpop.f32.mrb[0].mxu0
      %v11095 = vadd.f32 0.0, %v11094
      %v11096 = vpop.f32.mrb[0].mxu0
      %11097 = vmatprep.mubr.f32.mxu0 0.0
      %11098 = vmatmul.mubr.f32.gmra.mrb[0].mxu0 %v10905
      %v11099 = vpop.f32.mrb[0].mxu0
      %v11100 = vadd.f32 0.0, %v11099
      %v11101 = vpop.f32.mrb[0].mxu0
      %11102 = vmatprep.mubr.f32.mxu0 0.0
      %11103 = vmatmul.mubr.f32.gmra.mrb[0].mxu0 %v10908
      %v11104 = vpop.f32.mrb[0].mxu0
      %v11105 = vadd.f32 0.0, %v11104
      %v11106 = vpop.f32.mrb[0].mxu0
      %11107 = vmatprep.mubr.f32.mxu0 0.0
      %11108 = vmatmul.mubr.f32.gmra.mrb[0].mxu0 %v10911
      %v11109 = vpop.f32.mrb[0].mxu0
      %v11110 = vadd.f32 0.0, %v11109
      %v11111 = vpop.f32.mrb[0].mxu0
      %11112 = vmatprep.mubr.f32.mxu0 0.0
      %11113 = vmatmul.mubr.f32.gmra.mrb[0].mxu0 %v10914
      %v11114 = vpop.f32.mrb[0].mxu0
      %v11115 = vadd.f32 0.0, %v11114
      %v11116 = vpop.f32.mrb[0].mxu0
      %11117 = vmatprep.mubr.f32.mxu0 0.0
      %11118 = vmatmul.mubr.f32.gmra.mrb[0].mxu0 %v10917
      %v11119 = vpop.f32.mrb[0].mxu0
      %v11120 = vadd.f32 0.0, %v11119
      %v11121 = vpop.f32.mrb[0].mxu0
      %11122 = vmatprep.mubr.f32.mxu0 0.0
      %11123 = vmatmul.mubr.f32.gmra.mrb[0].mxu0 %v10920
      %v11124 = vpop.f32.mrb[0].mxu0
      %v11125 = vadd.f32 0.0, %v11124
      %v11126 = vpop.f32.mrb[0].mxu0
      %11127 = vmatprep.mubr.f32.mxu0 0.0
      %11128 = vmatmul.mubr.f32.gmra.mrb[0].mxu0 %v10923
      %v11129 = vpop.f32.mrb[0].mxu0
      %v11130 = vadd.f32 0.0, %v11129
      %v11131 = vpop.f32.mrb[0].mxu0
      %11132 = vmatprep.mubr.f32.mxu0 0.0
      %11133 = vmatmul.mubr.f32.gmra.mrb[0].mxu0 %v10926
      %v11134 = vpop.f32.mrb[0].mxu0
      %v11135 = vadd.f32 0.0, %v11134
      %v11136 = vpop.f32.mrb[0].mxu0
      %11137 = vmatprep.mubr.f32.mxu0 0.0
      %11138 = vmatmul.mubr.f32.gmra.mrb[0].mxu0 %v10929
      %v11139 = vpop.f32.mrb[0].mxu0
      %v11140 = vadd.f32 0.0, %v11139
      %v11141 = vpop.f32.mrb[0].mxu0
      %11142 = vmatprep.mubr.f32.mxu0 0.0
      %11143 = vmatmul.mubr.f32.gmra.mrb[0].mxu0 %v10932
      %v11144 = vpop.f32.mrb[0].mxu0
      %v11145 = vadd.f32 0.0, %v11144
      %v11146 = vpop.f32.mrb[0].mxu0
      %11147 = vmatprep.mubr.f32.mxu0 0.0
      %11148 = vmatmul.mubr.f32.gmra.mrb[0].mxu0 %v10935
      %v11149 = vpop.f32.mrb[0].mxu0
      %v11150 = vadd.f32 0.0, %v11149
      %v11151 = vpop.f32.mrb[0].mxu0
      %11152 = vmatprep.mubr.f32.mxu0 0.0
      %11153 = vmatmul.mubr.f32.gmra.mrb[0].mxu0 %v10938
      %v11154 = vpop.f32.mrb[0].mxu0
      %v11155 = vadd.f32 0.0, %v11154
      %v11156 = vpop.f32.mrb[0].mxu0
      %11157 = vmatprep.mubr.f32.mxu0 0.0
      %11158 = vmatmul.mubr.f32.gmra.mrb[0].mxu0 %v10941
      %v11159 = vpop.f32.mrb[0].mxu0
      %v11160 = vadd.f32 0.0, %v11159
      %v11161 = vpop.f32.mrb[0].mxu0
      %11162 = vmatprep.mubr.f32.mxu0 0.0
      %11163 = vmatmul.mubr.f32.gmra.mrb[0].mxu0 %v10944
      %v11164 = vpop.f32.mrb[0].mxu0
      %v11165 = vadd.f32 0.0, %v11164
      %v11166 = vpop.f32.mrb[0].mxu0
      %11167 = vmatprep.mubr.f32.mxu0 0.0
      %11168 = vmatmul.mubr.f32.gmra.mrb[0].mxu0 %v10947
      %v11169 = vpop.f32.mrb[0].mxu0
      %v11170 = vadd.f32 0.0, %v11169
      %v11171 = vpop.f32.mrb[0].mxu0
      %11172 = vmatprep.mubr.f32.mxu0 0.0
      %11173 = vmatmul.mubr.f32.gmra.mrb[0].mxu0 %v10950
      %v11174 = vpop.f32.mrb[0].mxu0
      %v11175 = vadd.f32 0.0, %v11174
      %v11176 = vpop.f32.mrb[0].mxu0
      %11177 = vmatprep.mubr.f32.mxu0 0.0
      %11178 = vmatmul.mubr.f32.gmra.mrb[0].mxu0 %v10953
      %v11179 = vpop.f32.mrb[0].mxu0
      %v11180 = vadd.f32 0.0, %v11179
      %v11181 = vpop.f32.mrb[0].mxu0
      %11182 = vdwg.mxu0
      %v11183 = vadd.f32 %v10569, %v11025
      %v11184 = vadd.f32 %v10570, %v11030
      %v11185 = vadd.f32 %v10571, %v11035
      %v11186 = vadd.f32 %v10572, %v11040
      %v11187 = vadd.f32 %v10573, %v11045
      %v11188 = vadd.f32 %v10574, %v11050
      %v11189 = vadd.f32 %v10575, %v11055
      %v11190 = vadd.f32 %v10576, %v11060
      %v11191 = vadd.f32 %v10577, %v11065
      %v11192 = vadd.f32 %v10578, %v11070
      %v11193 = vadd.f32 %v10579, %v11075
      %v11194 = vadd.f32 %v10580, %v11080
      %v11195 = vadd.f32 %v10581, %v11085
      %v11196 = vadd.f32 %v10582, %v11090
      %v11197 = vadd.f32 %v10583, %v11095
      %v11198 = vadd.f32 %v10584, %v11100
      %v11199 = vadd.f32 %v10585, %v11105
      %v11200 = vadd.f32 %v10586, %v11110
      %v11201 = vadd.f32 %v10587, %v11115
      %v11202 = vadd.f32 %v10588, %v11120
      %v11203 = vadd.f32 %v10589, %v11125
      %v11204 = vadd.f32 %v10590, %v11130
      %v11205 = vadd.f32 %v10591, %v11135
      %v11206 = vadd.f32 %v10592, %v11140
      %v11207 = vadd.f32 %v10593, %v11145
      %v11208 = vadd.f32 %v10594, %v11150
      %v11209 = vadd.f32 %v10595, %v11155
      %v11210 = vadd.f32 %v10596, %v11160
      %v11211 = vadd.f32 %v10597, %v11165
      %v11212 = vadd.f32 %v10598, %v11170
      %v11213 = vadd.f32 %v10599, %v11175
      %v11214 = vadd.f32 %v10600, %v11180
      %v11215 = vld [vmem:[%s7] sm:$0x1]
      %v11217 = vlaneseq
      %v11218 = vshrl.u32 %v11217, 7
      %v11219 = vsub.s32 0, %v11218
      %v11220 = vrot.slane %v11215, %v11219
      %v11222 = vmul.f32 %v11183, %v11220
      %v11223 = vmul.f32 %v11184, %v11220
      %v11224 = vmul.f32 %v11185, %v11220
      %v11225 = vmul.f32 %v11186, %v11220
      %v11226 = vmul.f32 %v11187, %v11220
      %v11227 = vmul.f32 %v11188, %v11220
      %v11228 = vmul.f32 %v11189, %v11220
      %v11229 = vmul.f32 %v11190, %v11220
      %v11230 = vmul.f32 %v11191, %v11220
      %v11231 = vmul.f32 %v11192, %v11220
      %v11232 = vmul.f32 %v11193, %v11220
      %v11233 = vmul.f32 %v11194, %v11220
      %v11234 = vmul.f32 %v11195, %v11220
      %v11235 = vmul.f32 %v11196, %v11220
      %v11236 = vmul.f32 %v11197, %v11220
      %v11237 = vmul.f32 %v11198, %v11220
      %v11238 = vmul.f32 %v11199, %v11220
      %v11239 = vmul.f32 %v11200, %v11220
      %v11240 = vmul.f32 %v11201, %v11220
      %v11241 = vmul.f32 %v11202, %v11220
      %v11242 = vmul.f32 %v11203, %v11220
      %v11243 = vmul.f32 %v11204, %v11220
      %v11244 = vmul.f32 %v11205, %v11220
      %v11245 = vmul.f32 %v11206, %v11220
      %v11246 = vmul.f32 %v11207, %v11220
      %v11247 = vmul.f32 %v11208, %v11220
      %v11248 = vmul.f32 %v11209, %v11220
      %v11249 = vmul.f32 %v11210, %v11220
      %v11250 = vmul.f32 %v11211, %v11220
      %v11251 = vmul.f32 %v11212, %v11220
      %v11252 = vmul.f32 %v11213, %v11220
      %v11253 = vmul.f32 %v11214, %v11220
      %v11254 = vld [vmem:[%s8] sm:$0x1]
      %v11256 = vlaneseq
      %v11257 = vshrl.u32 %v11256, 7
      %v11258 = vsub.s32 0, %v11257
      %v11259 = vrot.slane %v11254, %v11258
      %v11261 = vadd.f32 %v11222, %v11259
      %v11262 = vadd.f32 %v11223, %v11259
      %v11263 = vadd.f32 %v11224, %v11259
      %v11264 = vadd.f32 %v11225, %v11259
      %v11265 = vadd.f32 %v11226, %v11259
      %v11266 = vadd.f32 %v11227, %v11259
      %v11267 = vadd.f32 %v11228, %v11259
      %v11268 = vadd.f32 %v11229, %v11259
      %v11269 = vadd.f32 %v11230, %v11259
      %v11270 = vadd.f32 %v11231, %v11259
      %v11271 = vadd.f32 %v11232, %v11259
      %v11272 = vadd.f32 %v11233, %v11259
      %v11273 = vadd.f32 %v11234, %v11259
      %v11274 = vadd.f32 %v11235, %v11259
      %v11275 = vadd.f32 %v11236, %v11259
      %v11276 = vadd.f32 %v11237, %v11259
      %v11277 = vadd.f32 %v11238, %v11259
      %v11278 = vadd.f32 %v11239, %v11259
      %v11279 = vadd.f32 %v11240, %v11259
      %v11280 = vadd.f32 %v11241, %v11259
      %v11281 = vadd.f32 %v11242, %v11259
      %v11282 = vadd.f32 %v11243, %v11259
      %v11283 = vadd.f32 %v11244, %v11259
      %v11284 = vadd.f32 %v11245, %v11259
      %v11285 = vadd.f32 %v11246, %v11259
      %v11286 = vadd.f32 %v11247, %v11259
      %v11287 = vadd.f32 %v11248, %v11259
      %v11288 = vadd.f32 %v11249, %v11259
      %v11289 = vadd.f32 %v11250, %v11259
      %v11290 = vadd.f32 %v11251, %v11259
      %v11291 = vadd.f32 %v11252, %v11259
      %v11292 = vadd.f32 %v11253, %v11259
      %v11293 = vmax.f32 %v11261, 0.0
      %v11294 = vmax.f32 %v11262, 0.0
      %v11295 = vmax.f32 %v11263, 0.0
      %v11296 = vmax.f32 %v11264, 0.0
      %v11297 = vmax.f32 %v11265, 0.0
      %v11298 = vmax.f32 %v11266, 0.0
      %v11299 = vmax.f32 %v11267, 0.0
      %v11300 = vmax.f32 %v11268, 0.0
      %v11301 = vmax.f32 %v11269, 0.0
      %v11302 = vmax.f32 %v11270, 0.0
      %v11303 = vmax.f32 %v11271, 0.0
      %v11304 = vmax.f32 %v11272, 0.0
      %v11305 = vmax.f32 %v11273, 0.0
      %v11306 = vmax.f32 %v11274, 0.0
      %v11307 = vmax.f32 %v11275, 0.0
      %v11308 = vmax.f32 %v11276, 0.0
      %v11309 = vmax.f32 %v11277, 0.0
      %v11310 = vmax.f32 %v11278, 0.0
      %v11311 = vmax.f32 %v11279, 0.0
      %v11312 = vmax.f32 %v11280, 0.0
      %v11313 = vmax.f32 %v11281, 0.0
      %v11314 = vmax.f32 %v11282, 0.0
      %v11315 = vmax.f32 %v11283, 0.0
      %v11316 = vmax.f32 %v11284, 0.0
      %v11317 = vmax.f32 %v11285, 0.0
      %v11318 = vmax.f32 %v11286, 0.0
      %v11319 = vmax.f32 %v11287, 0.0
      %v11320 = vmax.f32 %v11288, 0.0
      %v11321 = vmax.f32 %v11289, 0.0
      %v11322 = vmax.f32 %v11290, 0.0
      %v11323 = vmax.f32 %v11291, 0.0
      %v11324 = vmax.f32 %v11292, 0.0
      %11325 = vst.msk [vmem:[%s352] sm:$0xff] %vm353, %v11293
      %11326 = vst.msk [vmem:[%s352 + $0x8] sm:$0xff] %vm353, %v11294
      %11327 = vst.msk [vmem:[%s352 + $0x10] sm:$0xff] %vm353, %v11295
      %11328 = vst.msk [vmem:[%s352 + $0x18] sm:$0xff] %vm353, %v11296
      %11329 = vst.msk [vmem:[%s352 + $0x20] sm:$0xff] %vm353, %v11297
      %11330 = vst.msk [vmem:[%s352 + $0x28] sm:$0xff] %vm353, %v11298
      %11331 = vst.msk [vmem:[%s352 + $0x30] sm:$0xff] %vm353, %v11299
      %11332 = vst.msk [vmem:[%s352 + $0x38] sm:$0xff] %vm353, %v11300
      %11333 = vst.msk [vmem:[%s352 + $0x40] sm:$0xff] %vm353, %v11301
      %11334 = vst.msk [vmem:[%s352 + $0x48] sm:$0xff] %vm353, %v11302
      %11335 = vst.msk [vmem:[%s352 + $0x50] sm:$0xff] %vm353, %v11303
      %11336 = vst.msk [vmem:[%s352 + $0x58] sm:$0xff] %vm353, %v11304
      %11337 = vst.msk [vmem:[%s352 + $0x60] sm:$0xff] %vm353, %v11305
      %11338 = vst.msk [vmem:[%s352 + $0x68] sm:$0xff] %vm353, %v11306
      %11339 = vst.msk [vmem:[%s352 + $0x70] sm:$0xff] %vm353, %v11307
      %11340 = vst.msk [vmem:[%s352 + $0x78] sm:$0xff] %vm353, %v11308
      %11341 = vst.msk [vmem:[%s352 + $0x80] sm:$0xff] %vm353, %v11309
      %11342 = vst.msk [vmem:[%s352 + $0x88] sm:$0xff] %vm353, %v11310
      %11343 = vst.msk [vmem:[%s352 + $0x90] sm:$0xff] %vm353, %v11311
      %11344 = vst.msk [vmem:[%s352 + $0x98] sm:$0xff] %vm353, %v11312
      %11345 = vst.msk [vmem:[%s352 + $0xa0] sm:$0xff] %vm353, %v11313
      %11346 = vst.msk [vmem:[%s352 + $0xa8] sm:$0xff] %vm353, %v11314
      %11347 = vst.msk [vmem:[%s352 + $0xb0] sm:$0xff] %vm353, %v11315
      %11348 = vst.msk [vmem:[%s352 + $0xb8] sm:$0xff] %vm353, %v11316
      %11349 = vst.msk [vmem:[%s352 + $0xc0] sm:$0xff] %vm353, %v11317
      %11350 = vst.msk [vmem:[%s352 + $0xc8] sm:$0xff] %vm353, %v11318
      %11351 = vst.msk [vmem:[%s352 + $0xd0] sm:$0xff] %vm353, %v11319
      %11352 = vst.msk [vmem:[%s352 + $0xd8] sm:$0xff] %vm353, %v11320
      %11353 = vst.msk [vmem:[%s352 + $0xe0] sm:$0xff] %vm353, %v11321
      %11354 = vst.msk [vmem:[%s352 + $0xe8] sm:$0xff] %vm353, %v11322
      %11355 = vst.msk [vmem:[%s352 + $0xf0] sm:$0xff] %vm353, %v11323
      %11356 = vst.msk [vmem:[%s352 + $0xf8] sm:$0xff] %vm353, %v11324
      %p11357 = scmp.lt.s32.totalorder %s20, 1
      %s11358 = scalar_select %p11357, %s20, 1
      %s11359 = smul.addr %s11358, 32
      %s11360 = smul.addr %s11359, 8
      %s11361 = scalar_lea.vmem %s9, %s11360
      // Predicated region
      $region57: #{decoder_block_forward.3} parent=55 // pred_check
        %p11362 = pneg %p237
      $region58: #{decoder_block_forward.3} parent=55 // pred_check_branch
        %11364 = sbr.rel (%p11362) target = $region60
      $region59: #{decoder_block_forward.3} parent=55 // pred_region
        _
      $region60: #{decoder_block_forward.3} parent=55 // pred_fallthru
        _
    $region56: #{decoder_block_forward.3} parent=5 // pred_fallthru
      _
    %p11365 = scmp.le.s32.totalorder 2, %s15
    // Predicated region
    $region61: #{decoder_block_forward.3} parent=5 // pred_check
      %p11366 = pneg %p11365
    $region62: #{decoder_block_forward.3} parent=5 // pred_check_branch
      %11368 = sbr.rel (%p11366) target = $region64
    $region63: #{decoder_block_forward.3} parent=5 // pred_region
      %s11369 = ssub.s32 %s15, 2
      // Predicated region
      $region65: #{decoder_block_forward.3} parent=63 // pred_check
        %p11370 = pneg %p243
      $region66: #{decoder_block_forward.3} parent=63 // pred_check_branch
        %11372 = sbr.rel (%p11370) target = $region68
      $region67: #{decoder_block_forward.3} parent=63 // pred_region
        %p11373 = scmp.lt.s32.totalorder %s21, 1
        %s11374 = scalar_select %p11373, %s21, 1
        %s11375 = smul.addr %s11374, 32
        %s11376 = smul.addr %s11375, 8
        %s11377 = scalar_lea.vmem %s9, %s11376
      $region68: #{decoder_block_forward.3} parent=63 // pred_fallthru
        _
    $region64: #{decoder_block_forward.3} parent=5 // pred_fallthru
      _
  $region6: #{decoder_block_forward.3} parent=0 // loop_footer
    %s19 = sadd.s32 1, %s15
  $region7: #{decoder_block_forward.3} parent=0 // loop_footer_branch
    %14 = sbr.rel target = $region3
  $region8: #{decoder_block_forward.3} parent=0 // loop_exit
    _

</llo_original>
